<compile_context>
chip_gen: v7x
topology: tpu7x:2x2x1
jax: 0.10.0
libtpu: 0.0.40
codegen_flags: <defaults>
</compile_context>

<pallas_src>
import numpy as np
import jax
import jax.numpy as jnp
from jax.experimental import pallas as pl
from jax.experimental.pallas import tpu as pltpu  # noqa: F401  (TPU backend)


# ------------------------------ fused kernel -------------------------------

def _filmednet_fused_kernel(x0_ref, src0_ref, w0_ref, cb0_ref, g0_ref, bb0_ref,
                            src1_ref, w1_ref, cb1_ref, g1_ref, bb1_ref,
                            gsel_ref, wh_ref, bh_ref, o_ref):
    f32 = jnp.float32

    def conv3x3_bn_relu(x, src_ref, w_ref, cb_ref, g_ref, bb_ref):
        # x:       (n_in_rows, c_in) activation, rows = flattened (b, h, w) NHWC
        # src_ref: (n_out_rows, 9) int32 source row per tap, -1 => zero padding
        # w_ref:   (9, c_in, c_out) per-tap conv weights
        n_in = x.shape[0]
        n_out = src_ref.shape[0]
        c_out = w_ref.shape[2]
        col_ids = jax.lax.broadcasted_iota(jnp.int32, (n_out, n_in), 1)
        acc = jnp.zeros((n_out, c_out), f32)
        for k in range(9):                                   # static unroll
            src = src_ref[:, k:k + 1]                        # (n_out, 1)
            # one-hot row-selection matrix (padding rows are all-zero)
            sel = jnp.where(col_ids == src, 1.0, 0.0).astype(f32)
            patch = jnp.dot(sel, x, preferred_element_type=f32)          # (n_out, c_in)
            acc = acc + jnp.dot(patch, w_ref[k], preferred_element_type=f32)
        acc = acc + cb_ref[...]                              # conv bias
        # BatchNorm2d train mode: biased batch stats over all B*OH*OW rows.
        mean = jnp.mean(acc, axis=0, keepdims=True)
        var = jnp.mean((acc - mean) ** 2, axis=0, keepdims=True)
        xhat = (acc - mean) * jax.lax.rsqrt(var + 1e-5)
        return jnp.maximum(xhat * g_ref[...] + bb_ref[...], 0.0)         # ReLU

    x0 = x0_ref[...]                                         # (B*H*W, Cin)
    a0 = conv3x3_bn_relu(x0, src0_ref, w0_ref, cb0_ref, g0_ref, bb0_ref)
    a1 = conv3x3_bn_relu(a0, src1_ref, w1_ref, cb1_ref, g1_ref, bb1_ref)

    # Global average pool over spatial (gsel holds 1/(OH*OW) block pattern),
    # then the head 1x1 conv -- the two linear ops commute exactly.
    gap = jnp.dot(gsel_ref[...], a1, preferred_element_type=f32)          # (B, C)
    logits = jnp.dot(gap, wh_ref[...], preferred_element_type=f32) + bh_ref[...]
    # top_modulator disabled in this config -> identity modulation (1+0)*x + 0.
    o_ref[...] = logits


# --------------------------- wrapper / param prep --------------------------

def _conv_src_table(batch, h, w, kernel, stride, pad):
    """int32 table (B*OH*OW, k*k): flattened NHWC source row per tap, -1 = pad."""
    oh = (h + 2 * pad - kernel) // stride + 1
    ow = (w + 2 * pad - kernel) // stride + 1
    tab = np.full((batch * oh * ow, kernel * kernel), -1, dtype=np.int32)
    for b in range(batch):
        for i in range(oh):
            for j in range(ow):
                r = (b * oh + i) * ow + j
                for ki in range(kernel):
                    for kj in range(kernel):
                        hi = i * stride + ki - pad
                        wj = j * stride + kj - pad
                        if 0 <= hi < h and 0 <= wj < w:
                            tab[r, ki * kernel + kj] = (b * h + hi) * w + wj
    return jnp.asarray(tab), oh, ow


def _gap_matrix(batch, spatial):
    m = np.zeros((batch, batch * spatial), dtype=np.float32)
    for b in range(batch):
        m[b, b * spatial:(b + 1) * spatial] = 1.0 / spatial
    return jnp.asarray(m)


def prepare_kernel_params(p, batch, h, w):
    """Rearrange torch-layout params into kernel-ready slabs (done once)."""
    cout0, cin0, k, _ = p["conv0_w"].shape
    cout1, cin1 = p["conv1_w"].shape[0], p["conv1_w"].shape[1]
    src0, oh0, ow0 = _conv_src_table(batch, h, w, k, stride=2, pad=1)
    src1, oh1, ow1 = _conv_src_table(batch, oh0, ow0, k, stride=2, pad=1)
    ncls = p["head_w"].shape[0]
    kp = {
        "src0": src0,
        "w0": jnp.transpose(p["conv0_w"], (2, 3, 1, 0)).reshape(k * k, cin0, cout0),
        "cb0": p["conv0_b"].reshape(1, -1),
        "g0": p["bn0_g"].reshape(1, -1),
        "bb0": p["bn0_b"].reshape(1, -1),
        "src1": src1,
        "w1": jnp.transpose(p["conv1_w"], (2, 3, 1, 0)).reshape(k * k, cin1, cout1),
        "cb1": p["conv1_b"].reshape(1, -1),
        "g1": p["bn1_g"].reshape(1, -1),
        "bb1": p["bn1_b"].reshape(1, -1),
        "gsel": _gap_matrix(batch, oh1 * ow1),
        "wh": p["head_w"].reshape(ncls, cin1).T,
        "bh": p["head_b"].reshape(1, -1),
    }
    return kp, (batch, ncls)


def _full_spec(shape):
    nd = len(shape)
    return pl.BlockSpec(shape, lambda i, _nd=nd: (0,) * _nd)


@jax.jit
def clf_forward(kp, vision, second_modality):
    """FilmedNet.forward({'vision': vision, 'second_modality': second_modality}).

    second_modality is accepted for interface parity but unused: with
    modulate_top all False the top_modulator is identity, so the Linear(1, 32)
    encoding never affects the classification output (dead compute removed)."""
    del second_modality
    b, c, h, w = vision.shape
    # NCHW -> flattened NHWC rows (b, h, w); the only wrapper-side data prep.
    x0 = jnp.transpose(vision, (0, 2, 3, 1)).reshape(b * h * w, c).astype(jnp.float32)
    n_class = kp["wh"].shape[1]

    operands = (x0, kp["src0"], kp["w0"], kp["cb0"], kp["g0"], kp["bb0"],
                kp["src1"], kp["w1"], kp["cb1"], kp["g1"], kp["bb1"],
                kp["gsel"], kp["wh"], kp["bh"])
    return pl.pallas_call(
        _filmednet_fused_kernel,
        grid=(1,),
        in_specs=[_full_spec(op.shape) for op in operands],
        out_specs=pl.BlockSpec((b, n_class), lambda i: (0, 0)),
        out_shape=jax.ShapeDtypeStruct((b, n_class), jnp.float32),
    )(*operands)


# ------------------------------- parameters --------------------------------

def init_params(key):
    n_feat, cin, ncls, emb = 16, 4, 10, 32
    ks = jax.random.split(key, 6)
    return {
        "conv0_w": 0.1 * jax.random.normal(ks[0], (n_feat, cin, 3, 3), jnp.float32),
        "conv0_b": jnp.zeros((n_feat,), jnp.float32),
        "bn0_g": jnp.ones((n_feat,), jnp.float32),
        "bn0_b": jnp.zeros((n_feat,), jnp.float32),
        "conv1_w": 0.1 * jax.random.normal(ks[1], (n_feat, n_feat, 3, 3), jnp.float32),
        "conv1_b": jnp.zeros((n_feat,), jnp.float32),
        "bn1_g": jnp.ones((n_feat,), jnp.float32),
        "bn1_b": jnp.zeros((n_feat,), jnp.float32),
        "head_w": 0.1 * jax.random.normal(ks[2], (ncls, n_feat, 1, 1), jnp.float32),
        "head_b": 0.01 * jax.random.normal(ks[3], (ncls,), jnp.float32),
        # Linear(1, emb) text encoder params (unused: identity top modulation).
        "task_w": 0.1 * jax.random.normal(ks[4], (emb, 1), jnp.float32),
        "task_b": jnp.zeros((emb,), jnp.float32),
    }


if __name__ == "__main__":
    key = jax.random.PRNGKey(0)
    kparam, kvis, ksec = jax.random.split(key, 3)
    raw = init_params(kparam)

    B, C_IN, H, W = 2, 4, 16, 16
    kp, (batch, n_class) = prepare_kernel_params(raw, B, H, W)

    vision = jax.random.normal(kvis, (B, C_IN, H, W), jnp.float32)          # NCHW
    second_modality = jax.random.normal(ksec, (B, 1), jnp.float32)

    out = clf_forward(kp, vision, second_modality)
    out = jax.block_until_ready(out)
    assert out.shape == (batch, n_class) and out.dtype == jnp.float32
    print("KERNEL_OK")
</pallas_src>

<mosaic_0001>
module attributes {stable_mosaic.version = 11 : i64} {
  func.func @_filmednet_fused_kernel(%arg0: i32, %arg1: memref<512x4xf32, #tpu.memory_space<vmem>>, %arg2: memref<128x9xi32, #tpu.memory_space<vmem>>, %arg3: memref<9x4x16xf32, #tpu.memory_space<vmem>>, %arg4: memref<1x16xf32, #tpu.memory_space<vmem>>, %arg5: memref<1x16xf32, #tpu.memory_space<vmem>>, %arg6: memref<1x16xf32, #tpu.memory_space<vmem>>, %arg7: memref<32x9xi32, #tpu.memory_space<vmem>>, %arg8: memref<9x16x16xf32, #tpu.memory_space<vmem>>, %arg9: memref<1x16xf32, #tpu.memory_space<vmem>>, %arg10: memref<1x16xf32, #tpu.memory_space<vmem>>, %arg11: memref<1x16xf32, #tpu.memory_space<vmem>>, %arg12: memref<2x32xf32, #tpu.memory_space<vmem>>, %arg13: memref<16x10xf32, #tpu.memory_space<vmem>>, %arg14: memref<1x10xf32, #tpu.memory_space<vmem>>, %arg15: memref<2x10xf32, #tpu.memory_space<vmem>>) attributes {dimension_semantics = [#tpu.dimension_semantics<arbitrary>], iteration_bounds = array<i64: 1>, scalar_prefetch = 0 : i64, scratch_operands = 0 : i64, tpu.core_type = #tpu.core_type<tc>, window_params = [{pipeline_mode = #tpu.pipeline_mode<synchronous>, transform_indices = @transform_0, window_bounds = array<i64: 512, 4>}, {pipeline_mode = #tpu.pipeline_mode<synchronous>, transform_indices = @transform_1, window_bounds = array<i64: 128, 9>}, {pipeline_mode = #tpu.pipeline_mode<synchronous>, transform_indices = @transform_2, window_bounds = array<i64: 9, 4, 16>}, {pipeline_mode = #tpu.pipeline_mode<synchronous>, transform_indices = @transform_3, window_bounds = array<i64: 1, 16>}, {pipeline_mode = #tpu.pipeline_mode<synchronous>, transform_indices = @transform_4, window_bounds = array<i64: 1, 16>}, {pipeline_mode = #tpu.pipeline_mode<synchronous>, transform_indices = @transform_5, window_bounds = array<i64: 1, 16>}, {pipeline_mode = #tpu.pipeline_mode<synchronous>, transform_indices = @transform_6, window_bounds = array<i64: 32, 9>}, {pipeline_mode = #tpu.pipeline_mode<synchronous>, transform_indices = @transform_7, window_bounds = array<i64: 9, 16, 16>}, {pipeline_mode = #tpu.pipeline_mode<synchronous>, transform_indices = @transform_8, window_bounds = array<i64: 1, 16>}, {pipeline_mode = #tpu.pipeline_mode<synchronous>, transform_indices = @transform_9, window_bounds = array<i64: 1, 16>}, {pipeline_mode = #tpu.pipeline_mode<synchronous>, transform_indices = @transform_10, window_bounds = array<i64: 1, 16>}, {pipeline_mode = #tpu.pipeline_mode<synchronous>, transform_indices = @transform_11, window_bounds = array<i64: 2, 32>}, {pipeline_mode = #tpu.pipeline_mode<synchronous>, transform_indices = @transform_12, window_bounds = array<i64: 16, 10>}, {pipeline_mode = #tpu.pipeline_mode<synchronous>, transform_indices = @transform_13, window_bounds = array<i64: 1, 10>}, {pipeline_mode = #tpu.pipeline_mode<synchronous>, transform_indices = @transform_14, window_bounds = array<i64: 2, 10>}]} {
    %c0 = arith.constant 0 : index
    %c0_0 = arith.constant 0 : index
    %0 = vector.load %arg1[%c0, %c0_0] : memref<512x4xf32, #tpu.memory_space<vmem>>, vector<512x4xf32>
    %1 = tpu.iota {dimensions = array<i32: 1>} : vector<128x512xi32>
    %cst = arith.constant 0.000000e+00 : f32
    %2 = vector.broadcast %cst : f32 to vector<128x16xf32>
    %c0_1 = arith.constant 0 : index
    %c0_2 = arith.constant 0 : index
    %3 = vector.load %arg2[%c0_1, %c0_2] : memref<128x9xi32, #tpu.memory_space<vmem>>, vector<128x1xi32>
    %4 = vector.broadcast %3 : vector<128x1xi32> to vector<128x512xi32>
    %5 = arith.cmpi eq, %1, %4 : vector<128x512xi32>
    %cst_3 = arith.constant 1.000000e+00 : f32
    %cst_4 = arith.constant 0.000000e+00 : f32
    %6 = vector.broadcast %cst_3 : f32 to vector<128x512xf32>
    %7 = vector.broadcast %cst_4 : f32 to vector<128x512xf32>
    %8 = arith.select %5, %6, %7 : vector<128x512xi1>, vector<128x512xf32>
    %cst_5 = arith.constant dense<0.000000e+00> : vector<128x4xf32>
    %9 = tpu.matmul %8, %0, %cst_5 {dimension_numbers = #tpu.dot_dimension_numbers<[1], [0], [0], [1], [0, 0, 1, 1], [], []>} : vector<128x512xf32>, vector<512x4xf32>, vector<128x4xf32> -> vector<128x4xf32>
    %c0_6 = arith.constant 0 : index
    %c0_7 = arith.constant 0 : index
    %c0_8 = arith.constant 0 : index
    %10 = vector.load %arg3[%c0_6, %c0_7, %c0_8] : memref<9x4x16xf32, #tpu.memory_space<vmem>>, vector<1x4x16xf32>
    %11 = vector.shape_cast %10 : vector<1x4x16xf32> to vector<4x16xf32>
    %cst_9 = arith.constant dense<0.000000e+00> : vector<128x16xf32>
    %12 = tpu.matmul %9, %11, %cst_9 {dimension_numbers = #tpu.dot_dimension_numbers<[1], [0], [0], [1], [0, 0, 1, 1], [], []>} : vector<128x4xf32>, vector<4x16xf32>, vector<128x16xf32> -> vector<128x16xf32>
    %13 = arith.addf %2, %12 : vector<128x16xf32>
    %c0_10 = arith.constant 0 : index
    %c1 = arith.constant 1 : index
    %14 = vector.load %arg2[%c0_10, %c1] : memref<128x9xi32, #tpu.memory_space<vmem>>, vector<128x1xi32>
    %15 = vector.broadcast %14 : vector<128x1xi32> to vector<128x512xi32>
    %16 = arith.cmpi eq, %1, %15 : vector<128x512xi32>
    %cst_11 = arith.constant 1.000000e+00 : f32
    %cst_12 = arith.constant 0.000000e+00 : f32
    %17 = vector.broadcast %cst_11 : f32 to vector<128x512xf32>
    %18 = vector.broadcast %cst_12 : f32 to vector<128x512xf32>
    %19 = arith.select %16, %17, %18 : vector<128x512xi1>, vector<128x512xf32>
    %cst_13 = arith.constant dense<0.000000e+00> : vector<128x4xf32>
    %20 = tpu.matmul %19, %0, %cst_13 {dimension_numbers = #tpu.dot_dimension_numbers<[1], [0], [0], [1], [0, 0, 1, 1], [], []>} : vector<128x512xf32>, vector<512x4xf32>, vector<128x4xf32> -> vector<128x4xf32>
    %c1_14 = arith.constant 1 : index
    %c0_15 = arith.constant 0 : index
    %c0_16 = arith.constant 0 : index
    %21 = vector.load %arg3[%c1_14, %c0_15, %c0_16] : memref<9x4x16xf32, #tpu.memory_space<vmem>>, vector<1x4x16xf32>
    %22 = vector.shape_cast %21 : vector<1x4x16xf32> to vector<4x16xf32>
    %cst_17 = arith.constant dense<0.000000e+00> : vector<128x16xf32>
    %23 = tpu.matmul %20, %22, %cst_17 {dimension_numbers = #tpu.dot_dimension_numbers<[1], [0], [0], [1], [0, 0, 1, 1], [], []>} : vector<128x4xf32>, vector<4x16xf32>, vector<128x16xf32> -> vector<128x16xf32>
    %24 = arith.addf %13, %23 : vector<128x16xf32>
    %c0_18 = arith.constant 0 : index
    %c2 = arith.constant 2 : index
    %25 = vector.load %arg2[%c0_18, %c2] : memref<128x9xi32, #tpu.memory_space<vmem>>, vector<128x1xi32>
    %26 = vector.broadcast %25 : vector<128x1xi32> to vector<128x512xi32>
    %27 = arith.cmpi eq, %1, %26 : vector<128x512xi32>
    %cst_19 = arith.constant 1.000000e+00 : f32
    %cst_20 = arith.constant 0.000000e+00 : f32
    %28 = vector.broadcast %cst_19 : f32 to vector<128x512xf32>
    %29 = vector.broadcast %cst_20 : f32 to vector<128x512xf32>
    %30 = arith.select %27, %28, %29 : vector<128x512xi1>, vector<128x512xf32>
    %cst_21 = arith.constant dense<0.000000e+00> : vector<128x4xf32>
    %31 = tpu.matmul %30, %0, %cst_21 {dimension_numbers = #tpu.dot_dimension_numbers<[1], [0], [0], [1], [0, 0, 1, 1], [], []>} : vector<128x512xf32>, vector<512x4xf32>, vector<128x4xf32> -> vector<128x4xf32>
    %c2_22 = arith.constant 2 : index
    %c0_23 = arith.constant 0 : index
    %c0_24 = arith.constant 0 : index
    %32 = vector.load %arg3[%c2_22, %c0_23, %c0_24] : memref<9x4x16xf32, #tpu.memory_space<vmem>>, vector<1x4x16xf32>
    %33 = vector.shape_cast %32 : vector<1x4x16xf32> to vector<4x16xf32>
    %cst_25 = arith.constant dense<0.000000e+00> : vector<128x16xf32>
    %34 = tpu.matmul %31, %33, %cst_25 {dimension_numbers = #tpu.dot_dimension_numbers<[1], [0], [0], [1], [0, 0, 1, 1], [], []>} : vector<128x4xf32>, vector<4x16xf32>, vector<128x16xf32> -> vector<128x16xf32>
    %35 = arith.addf %24, %34 : vector<128x16xf32>
    %c0_26 = arith.constant 0 : index
    %c3 = arith.constant 3 : index
    %36 = vector.load %arg2[%c0_26, %c3] : memref<128x9xi32, #tpu.memory_space<vmem>>, vector<128x1xi32>
    %37 = vector.broadcast %36 : vector<128x1xi32> to vector<128x512xi32>
    %38 = arith.cmpi eq, %1, %37 : vector<128x512xi32>
    %cst_27 = arith.constant 1.000000e+00 : f32
    %cst_28 = arith.constant 0.000000e+00 : f32
    %39 = vector.broadcast %cst_27 : f32 to vector<128x512xf32>
    %40 = vector.broadcast %cst_28 : f32 to vector<128x512xf32>
    %41 = arith.select %38, %39, %40 : vector<128x512xi1>, vector<128x512xf32>
    %cst_29 = arith.constant dense<0.000000e+00> : vector<128x4xf32>
    %42 = tpu.matmul %41, %0, %cst_29 {dimension_numbers = #tpu.dot_dimension_numbers<[1], [0], [0], [1], [0, 0, 1, 1], [], []>} : vector<128x512xf32>, vector<512x4xf32>, vector<128x4xf32> -> vector<128x4xf32>
    %c3_30 = arith.constant 3 : index
    %c0_31 = arith.constant 0 : index
    %c0_32 = arith.constant 0 : index
    %43 = vector.load %arg3[%c3_30, %c0_31, %c0_32] : memref<9x4x16xf32, #tpu.memory_space<vmem>>, vector<1x4x16xf32>
    %44 = vector.shape_cast %43 : vector<1x4x16xf32> to vector<4x16xf32>
    %cst_33 = arith.constant dense<0.000000e+00> : vector<128x16xf32>
    %45 = tpu.matmul %42, %44, %cst_33 {dimension_numbers = #tpu.dot_dimension_numbers<[1], [0], [0], [1], [0, 0, 1, 1], [], []>} : vector<128x4xf32>, vector<4x16xf32>, vector<128x16xf32> -> vector<128x16xf32>
    %46 = arith.addf %35, %45 : vector<128x16xf32>
    %c0_34 = arith.constant 0 : index
    %c4 = arith.constant 4 : index
    %47 = vector.load %arg2[%c0_34, %c4] : memref<128x9xi32, #tpu.memory_space<vmem>>, vector<128x1xi32>
    %48 = vector.broadcast %47 : vector<128x1xi32> to vector<128x512xi32>
    %49 = arith.cmpi eq, %1, %48 : vector<128x512xi32>
    %cst_35 = arith.constant 1.000000e+00 : f32
    %cst_36 = arith.constant 0.000000e+00 : f32
    %50 = vector.broadcast %cst_35 : f32 to vector<128x512xf32>
    %51 = vector.broadcast %cst_36 : f32 to vector<128x512xf32>
    %52 = arith.select %49, %50, %51 : vector<128x512xi1>, vector<128x512xf32>
    %cst_37 = arith.constant dense<0.000000e+00> : vector<128x4xf32>
    %53 = tpu.matmul %52, %0, %cst_37 {dimension_numbers = #tpu.dot_dimension_numbers<[1], [0], [0], [1], [0, 0, 1, 1], [], []>} : vector<128x512xf32>, vector<512x4xf32>, vector<128x4xf32> -> vector<128x4xf32>
    %c4_38 = arith.constant 4 : index
    %c0_39 = arith.constant 0 : index
    %c0_40 = arith.constant 0 : index
    %54 = vector.load %arg3[%c4_38, %c0_39, %c0_40] : memref<9x4x16xf32, #tpu.memory_space<vmem>>, vector<1x4x16xf32>
    %55 = vector.shape_cast %54 : vector<1x4x16xf32> to vector<4x16xf32>
    %cst_41 = arith.constant dense<0.000000e+00> : vector<128x16xf32>
    %56 = tpu.matmul %53, %55, %cst_41 {dimension_numbers = #tpu.dot_dimension_numbers<[1], [0], [0], [1], [0, 0, 1, 1], [], []>} : vector<128x4xf32>, vector<4x16xf32>, vector<128x16xf32> -> vector<128x16xf32>
    %57 = arith.addf %46, %56 : vector<128x16xf32>
    %c0_42 = arith.constant 0 : index
    %c5 = arith.constant 5 : index
    %58 = vector.load %arg2[%c0_42, %c5] : memref<128x9xi32, #tpu.memory_space<vmem>>, vector<128x1xi32>
    %59 = vector.broadcast %58 : vector<128x1xi32> to vector<128x512xi32>
    %60 = arith.cmpi eq, %1, %59 : vector<128x512xi32>
    %cst_43 = arith.constant 1.000000e+00 : f32
    %cst_44 = arith.constant 0.000000e+00 : f32
    %61 = vector.broadcast %cst_43 : f32 to vector<128x512xf32>
    %62 = vector.broadcast %cst_44 : f32 to vector<128x512xf32>
    %63 = arith.select %60, %61, %62 : vector<128x512xi1>, vector<128x512xf32>
    %cst_45 = arith.constant dense<0.000000e+00> : vector<128x4xf32>
    %64 = tpu.matmul %63, %0, %cst_45 {dimension_numbers = #tpu.dot_dimension_numbers<[1], [0], [0], [1], [0, 0, 1, 1], [], []>} : vector<128x512xf32>, vector<512x4xf32>, vector<128x4xf32> -> vector<128x4xf32>
    %c5_46 = arith.constant 5 : index
    %c0_47 = arith.constant 0 : index
    %c0_48 = arith.constant 0 : index
    %65 = vector.load %arg3[%c5_46, %c0_47, %c0_48] : memref<9x4x16xf32, #tpu.memory_space<vmem>>, vector<1x4x16xf32>
    %66 = vector.shape_cast %65 : vector<1x4x16xf32> to vector<4x16xf32>
    %cst_49 = arith.constant dense<0.000000e+00> : vector<128x16xf32>
    %67 = tpu.matmul %64, %66, %cst_49 {dimension_numbers = #tpu.dot_dimension_numbers<[1], [0], [0], [1], [0, 0, 1, 1], [], []>} : vector<128x4xf32>, vector<4x16xf32>, vector<128x16xf32> -> vector<128x16xf32>
    %68 = arith.addf %57, %67 : vector<128x16xf32>
    %c0_50 = arith.constant 0 : index
    %c6 = arith.constant 6 : index
    %69 = vector.load %arg2[%c0_50, %c6] : memref<128x9xi32, #tpu.memory_space<vmem>>, vector<128x1xi32>
    %70 = vector.broadcast %69 : vector<128x1xi32> to vector<128x512xi32>
    %71 = arith.cmpi eq, %1, %70 : vector<128x512xi32>
    %cst_51 = arith.constant 1.000000e+00 : f32
    %cst_52 = arith.constant 0.000000e+00 : f32
    %72 = vector.broadcast %cst_51 : f32 to vector<128x512xf32>
    %73 = vector.broadcast %cst_52 : f32 to vector<128x512xf32>
    %74 = arith.select %71, %72, %73 : vector<128x512xi1>, vector<128x512xf32>
    %cst_53 = arith.constant dense<0.000000e+00> : vector<128x4xf32>
    %75 = tpu.matmul %74, %0, %cst_53 {dimension_numbers = #tpu.dot_dimension_numbers<[1], [0], [0], [1], [0, 0, 1, 1], [], []>} : vector<128x512xf32>, vector<512x4xf32>, vector<128x4xf32> -> vector<128x4xf32>
    %c6_54 = arith.constant 6 : index
    %c0_55 = arith.constant 0 : index
    %c0_56 = arith.constant 0 : index
    %76 = vector.load %arg3[%c6_54, %c0_55, %c0_56] : memref<9x4x16xf32, #tpu.memory_space<vmem>>, vector<1x4x16xf32>
    %77 = vector.shape_cast %76 : vector<1x4x16xf32> to vector<4x16xf32>
    %cst_57 = arith.constant dense<0.000000e+00> : vector<128x16xf32>
    %78 = tpu.matmul %75, %77, %cst_57 {dimension_numbers = #tpu.dot_dimension_numbers<[1], [0], [0], [1], [0, 0, 1, 1], [], []>} : vector<128x4xf32>, vector<4x16xf32>, vector<128x16xf32> -> vector<128x16xf32>
    %79 = arith.addf %68, %78 : vector<128x16xf32>
    %c0_58 = arith.constant 0 : index
    %c7 = arith.constant 7 : index
    %80 = vector.load %arg2[%c0_58, %c7] : memref<128x9xi32, #tpu.memory_space<vmem>>, vector<128x1xi32>
    %81 = vector.broadcast %80 : vector<128x1xi32> to vector<128x512xi32>
    %82 = arith.cmpi eq, %1, %81 : vector<128x512xi32>
    %cst_59 = arith.constant 1.000000e+00 : f32
    %cst_60 = arith.constant 0.000000e+00 : f32
    %83 = vector.broadcast %cst_59 : f32 to vector<128x512xf32>
    %84 = vector.broadcast %cst_60 : f32 to vector<128x512xf32>
    %85 = arith.select %82, %83, %84 : vector<128x512xi1>, vector<128x512xf32>
    %cst_61 = arith.constant dense<0.000000e+00> : vector<128x4xf32>
    %86 = tpu.matmul %85, %0, %cst_61 {dimension_numbers = #tpu.dot_dimension_numbers<[1], [0], [0], [1], [0, 0, 1, 1], [], []>} : vector<128x512xf32>, vector<512x4xf32>, vector<128x4xf32> -> vector<128x4xf32>
    %c7_62 = arith.constant 7 : index
    %c0_63 = arith.constant 0 : index
    %c0_64 = arith.constant 0 : index
    %87 = vector.load %arg3[%c7_62, %c0_63, %c0_64] : memref<9x4x16xf32, #tpu.memory_space<vmem>>, vector<1x4x16xf32>
    %88 = vector.shape_cast %87 : vector<1x4x16xf32> to vector<4x16xf32>
    %cst_65 = arith.constant dense<0.000000e+00> : vector<128x16xf32>
    %89 = tpu.matmul %86, %88, %cst_65 {dimension_numbers = #tpu.dot_dimension_numbers<[1], [0], [0], [1], [0, 0, 1, 1], [], []>} : vector<128x4xf32>, vector<4x16xf32>, vector<128x16xf32> -> vector<128x16xf32>
    %90 = arith.addf %79, %89 : vector<128x16xf32>
    %c0_66 = arith.constant 0 : index
    %c8 = arith.constant 8 : index
    %91 = vector.load %arg2[%c0_66, %c8] : memref<128x9xi32, #tpu.memory_space<vmem>>, vector<128x1xi32>
    %92 = vector.broadcast %91 : vector<128x1xi32> to vector<128x512xi32>
    %93 = arith.cmpi eq, %1, %92 : vector<128x512xi32>
    %cst_67 = arith.constant 1.000000e+00 : f32
    %cst_68 = arith.constant 0.000000e+00 : f32
    %94 = vector.broadcast %cst_67 : f32 to vector<128x512xf32>
    %95 = vector.broadcast %cst_68 : f32 to vector<128x512xf32>
    %96 = arith.select %93, %94, %95 : vector<128x512xi1>, vector<128x512xf32>
    %cst_69 = arith.constant dense<0.000000e+00> : vector<128x4xf32>
    %97 = tpu.matmul %96, %0, %cst_69 {dimension_numbers = #tpu.dot_dimension_numbers<[1], [0], [0], [1], [0, 0, 1, 1], [], []>} : vector<128x512xf32>, vector<512x4xf32>, vector<128x4xf32> -> vector<128x4xf32>
    %c8_70 = arith.constant 8 : index
    %c0_71 = arith.constant 0 : index
    %c0_72 = arith.constant 0 : index
    %98 = vector.load %arg3[%c8_70, %c0_71, %c0_72] : memref<9x4x16xf32, #tpu.memory_space<vmem>>, vector<1x4x16xf32>
    %99 = vector.shape_cast %98 : vector<1x4x16xf32> to vector<4x16xf32>
    %cst_73 = arith.constant dense<0.000000e+00> : vector<128x16xf32>
    %100 = tpu.matmul %97, %99, %cst_73 {dimension_numbers = #tpu.dot_dimension_numbers<[1], [0], [0], [1], [0, 0, 1, 1], [], []>} : vector<128x4xf32>, vector<4x16xf32>, vector<128x16xf32> -> vector<128x16xf32>
    %101 = arith.addf %90, %100 : vector<128x16xf32>
    %c0_74 = arith.constant 0 : index
    %c0_75 = arith.constant 0 : index
    %102 = vector.load %arg4[%c0_74, %c0_75] : memref<1x16xf32, #tpu.memory_space<vmem>>, vector<1x16xf32>
    %103 = vector.broadcast %102 : vector<1x16xf32> to vector<128x16xf32>
    %104 = arith.addf %101, %103 : vector<128x16xf32>
    %cst_76 = arith.constant dense<0.000000e+00> : vector<16xf32>
    %105 = vector.multi_reduction <add>, %104, %cst_76 [0] : vector<128x16xf32> to vector<16xf32>
    %106 = vector.shape_cast %105 : vector<16xf32> to vector<1x16xf32>
    %cst_77 = arith.constant 1.280000e+02 : f32
    %107 = vector.broadcast %cst_77 : f32 to vector<1x16xf32>
    %108 = arith.divf %106, %107 : vector<1x16xf32>
    %109 = vector.broadcast %108 : vector<1x16xf32> to vector<128x16xf32>
    %110 = arith.subf %104, %109 : vector<128x16xf32>
    %111 = arith.mulf %110, %110 : vector<128x16xf32>
    %cst_78 = arith.constant dense<0.000000e+00> : vector<16xf32>
    %112 = vector.multi_reduction <add>, %111, %cst_78 [0] : vector<128x16xf32> to vector<16xf32>
    %113 = vector.shape_cast %112 : vector<16xf32> to vector<1x16xf32>
    %cst_79 = arith.constant 1.280000e+02 : f32
    %114 = vector.broadcast %cst_79 : f32 to vector<1x16xf32>
    %115 = arith.divf %113, %114 : vector<1x16xf32>
    %116 = vector.broadcast %108 : vector<1x16xf32> to vector<128x16xf32>
    %117 = arith.subf %104, %116 : vector<128x16xf32>
    %cst_80 = arith.constant 9.99999974E-6 : f32
    %118 = vector.broadcast %cst_80 : f32 to vector<1x16xf32>
    %119 = arith.addf %115, %118 : vector<1x16xf32>
    %120 = math.rsqrt %119 : vector<1x16xf32>
    %121 = vector.broadcast %120 : vector<1x16xf32> to vector<128x16xf32>
    %122 = arith.mulf %117, %121 : vector<128x16xf32>
    %c0_81 = arith.constant 0 : index
    %c0_82 = arith.constant 0 : index
    %123 = vector.load %arg5[%c0_81, %c0_82] : memref<1x16xf32, #tpu.memory_space<vmem>>, vector<1x16xf32>
    %124 = vector.broadcast %123 : vector<1x16xf32> to vector<128x16xf32>
    %125 = arith.mulf %122, %124 : vector<128x16xf32>
    %c0_83 = arith.constant 0 : index
    %c0_84 = arith.constant 0 : index
    %126 = vector.load %arg6[%c0_83, %c0_84] : memref<1x16xf32, #tpu.memory_space<vmem>>, vector<1x16xf32>
    %127 = vector.broadcast %126 : vector<1x16xf32> to vector<128x16xf32>
    %128 = arith.addf %125, %127 : vector<128x16xf32>
    %cst_85 = arith.constant 0.000000e+00 : f32
    %129 = vector.broadcast %cst_85 : f32 to vector<128x16xf32>
    %130 = arith.maximumf %128, %129 : vector<128x16xf32>
    %131 = tpu.iota {dimensions = array<i32: 1>} : vector<32x128xi32>
    %cst_86 = arith.constant 0.000000e+00 : f32
    %132 = vector.broadcast %cst_86 : f32 to vector<32x16xf32>
    %c0_87 = arith.constant 0 : index
    %c0_88 = arith.constant 0 : index
    %133 = vector.load %arg7[%c0_87, %c0_88] : memref<32x9xi32, #tpu.memory_space<vmem>>, vector<32x1xi32>
    %134 = vector.broadcast %133 : vector<32x1xi32> to vector<32x128xi32>
    %135 = arith.cmpi eq, %131, %134 : vector<32x128xi32>
    %cst_89 = arith.constant 1.000000e+00 : f32
    %cst_90 = arith.constant 0.000000e+00 : f32
    %136 = vector.broadcast %cst_89 : f32 to vector<32x128xf32>
    %137 = vector.broadcast %cst_90 : f32 to vector<32x128xf32>
    %138 = arith.select %135, %136, %137 : vector<32x128xi1>, vector<32x128xf32>
    %cst_91 = arith.constant dense<0.000000e+00> : vector<32x16xf32>
    %139 = tpu.matmul %138, %130, %cst_91 {dimension_numbers = #tpu.dot_dimension_numbers<[1], [0], [0], [1], [0, 0, 1, 1], [], []>} : vector<32x128xf32>, vector<128x16xf32>, vector<32x16xf32> -> vector<32x16xf32>
    %c0_92 = arith.constant 0 : index
    %c0_93 = arith.constant 0 : index
    %c0_94 = arith.constant 0 : index
    %140 = vector.load %arg8[%c0_92, %c0_93, %c0_94] : memref<9x16x16xf32, #tpu.memory_space<vmem>>, vector<1x16x16xf32>
    %141 = vector.shape_cast %140 : vector<1x16x16xf32> to vector<16x16xf32>
    %cst_95 = arith.constant dense<0.000000e+00> : vector<32x16xf32>
    %142 = tpu.matmul %139, %141, %cst_95 {dimension_numbers = #tpu.dot_dimension_numbers<[1], [0], [0], [1], [0, 0, 1, 1], [], []>} : vector<32x16xf32>, vector<16x16xf32>, vector<32x16xf32> -> vector<32x16xf32>
    %143 = arith.addf %132, %142 : vector<32x16xf32>
    %c0_96 = arith.constant 0 : index
    %c1_97 = arith.constant 1 : index
    %144 = vector.load %arg7[%c0_96, %c1_97] : memref<32x9xi32, #tpu.memory_space<vmem>>, vector<32x1xi32>
    %145 = vector.broadcast %144 : vector<32x1xi32> to vector<32x128xi32>
    %146 = arith.cmpi eq, %131, %145 : vector<32x128xi32>
    %cst_98 = arith.constant 1.000000e+00 : f32
    %cst_99 = arith.constant 0.000000e+00 : f32
    %147 = vector.broadcast %cst_98 : f32 to vector<32x128xf32>
    %148 = vector.broadcast %cst_99 : f32 to vector<32x128xf32>
    %149 = arith.select %146, %147, %148 : vector<32x128xi1>, vector<32x128xf32>
    %cst_100 = arith.constant dense<0.000000e+00> : vector<32x16xf32>
    %150 = tpu.matmul %149, %130, %cst_100 {dimension_numbers = #tpu.dot_dimension_numbers<[1], [0], [0], [1], [0, 0, 1, 1], [], []>} : vector<32x128xf32>, vector<128x16xf32>, vector<32x16xf32> -> vector<32x16xf32>
    %c1_101 = arith.constant 1 : index
    %c0_102 = arith.constant 0 : index
    %c0_103 = arith.constant 0 : index
    %151 = vector.load %arg8[%c1_101, %c0_102, %c0_103] : memref<9x16x16xf32, #tpu.memory_space<vmem>>, vector<1x16x16xf32>
    %152 = vector.shape_cast %151 : vector<1x16x16xf32> to vector<16x16xf32>
    %cst_104 = arith.constant dense<0.000000e+00> : vector<32x16xf32>
    %153 = tpu.matmul %150, %152, %cst_104 {dimension_numbers = #tpu.dot_dimension_numbers<[1], [0], [0], [1], [0, 0, 1, 1], [], []>} : vector<32x16xf32>, vector<16x16xf32>, vector<32x16xf32> -> vector<32x16xf32>
    %154 = arith.addf %143, %153 : vector<32x16xf32>
    %c0_105 = arith.constant 0 : index
    %c2_106 = arith.constant 2 : index
    %155 = vector.load %arg7[%c0_105, %c2_106] : memref<32x9xi32, #tpu.memory_space<vmem>>, vector<32x1xi32>
    %156 = vector.broadcast %155 : vector<32x1xi32> to vector<32x128xi32>
    %157 = arith.cmpi eq, %131, %156 : vector<32x128xi32>
    %cst_107 = arith.constant 1.000000e+00 : f32
    %cst_108 = arith.constant 0.000000e+00 : f32
    %158 = vector.broadcast %cst_107 : f32 to vector<32x128xf32>
    %159 = vector.broadcast %cst_108 : f32 to vector<32x128xf32>
    %160 = arith.select %157, %158, %159 : vector<32x128xi1>, vector<32x128xf32>
    %cst_109 = arith.constant dense<0.000000e+00> : vector<32x16xf32>
    %161 = tpu.matmul %160, %130, %cst_109 {dimension_numbers = #tpu.dot_dimension_numbers<[1], [0], [0], [1], [0, 0, 1, 1], [], []>} : vector<32x128xf32>, vector<128x16xf32>, vector<32x16xf32> -> vector<32x16xf32>
    %c2_110 = arith.constant 2 : index
    %c0_111 = arith.constant 0 : index
    %c0_112 = arith.constant 0 : index
    %162 = vector.load %arg8[%c2_110, %c0_111, %c0_112] : memref<9x16x16xf32, #tpu.memory_space<vmem>>, vector<1x16x16xf32>
    %163 = vector.shape_cast %162 : vector<1x16x16xf32> to vector<16x16xf32>
    %cst_113 = arith.constant dense<0.000000e+00> : vector<32x16xf32>
    %164 = tpu.matmul %161, %163, %cst_113 {dimension_numbers = #tpu.dot_dimension_numbers<[1], [0], [0], [1], [0, 0, 1, 1], [], []>} : vector<32x16xf32>, vector<16x16xf32>, vector<32x16xf32> -> vector<32x16xf32>
    %165 = arith.addf %154, %164 : vector<32x16xf32>
    %c0_114 = arith.constant 0 : index
    %c3_115 = arith.constant 3 : index
    %166 = vector.load %arg7[%c0_114, %c3_115] : memref<32x9xi32, #tpu.memory_space<vmem>>, vector<32x1xi32>
    %167 = vector.broadcast %166 : vector<32x1xi32> to vector<32x128xi32>
    %168 = arith.cmpi eq, %131, %167 : vector<32x128xi32>
    %cst_116 = arith.constant 1.000000e+00 : f32
    %cst_117 = arith.constant 0.000000e+00 : f32
    %169 = vector.broadcast %cst_116 : f32 to vector<32x128xf32>
    %170 = vector.broadcast %cst_117 : f32 to vector<32x128xf32>
    %171 = arith.select %168, %169, %170 : vector<32x128xi1>, vector<32x128xf32>
    %cst_118 = arith.constant dense<0.000000e+00> : vector<32x16xf32>
    %172 = tpu.matmul %171, %130, %cst_118 {dimension_numbers = #tpu.dot_dimension_numbers<[1], [0], [0], [1], [0, 0, 1, 1], [], []>} : vector<32x128xf32>, vector<128x16xf32>, vector<32x16xf32> -> vector<32x16xf32>
    %c3_119 = arith.constant 3 : index
    %c0_120 = arith.constant 0 : index
    %c0_121 = arith.constant 0 : index
    %173 = vector.load %arg8[%c3_119, %c0_120, %c0_121] : memref<9x16x16xf32, #tpu.memory_space<vmem>>, vector<1x16x16xf32>
    %174 = vector.shape_cast %173 : vector<1x16x16xf32> to vector<16x16xf32>
    %cst_122 = arith.constant dense<0.000000e+00> : vector<32x16xf32>
    %175 = tpu.matmul %172, %174, %cst_122 {dimension_numbers = #tpu.dot_dimension_numbers<[1], [0], [0], [1], [0, 0, 1, 1], [], []>} : vector<32x16xf32>, vector<16x16xf32>, vector<32x16xf32> -> vector<32x16xf32>
    %176 = arith.addf %165, %175 : vector<32x16xf32>
    %c0_123 = arith.constant 0 : index
    %c4_124 = arith.constant 4 : index
    %177 = vector.load %arg7[%c0_123, %c4_124] : memref<32x9xi32, #tpu.memory_space<vmem>>, vector<32x1xi32>
    %178 = vector.broadcast %177 : vector<32x1xi32> to vector<32x128xi32>
    %179 = arith.cmpi eq, %131, %178 : vector<32x128xi32>
    %cst_125 = arith.constant 1.000000e+00 : f32
    %cst_126 = arith.constant 0.000000e+00 : f32
    %180 = vector.broadcast %cst_125 : f32 to vector<32x128xf32>
    %181 = vector.broadcast %cst_126 : f32 to vector<32x128xf32>
    %182 = arith.select %179, %180, %181 : vector<32x128xi1>, vector<32x128xf32>
    %cst_127 = arith.constant dense<0.000000e+00> : vector<32x16xf32>
    %183 = tpu.matmul %182, %130, %cst_127 {dimension_numbers = #tpu.dot_dimension_numbers<[1], [0], [0], [1], [0, 0, 1, 1], [], []>} : vector<32x128xf32>, vector<128x16xf32>, vector<32x16xf32> -> vector<32x16xf32>
    %c4_128 = arith.constant 4 : index
    %c0_129 = arith.constant 0 : index
    %c0_130 = arith.constant 0 : index
    %184 = vector.load %arg8[%c4_128, %c0_129, %c0_130] : memref<9x16x16xf32, #tpu.memory_space<vmem>>, vector<1x16x16xf32>
    %185 = vector.shape_cast %184 : vector<1x16x16xf32> to vector<16x16xf32>
    %cst_131 = arith.constant dense<0.000000e+00> : vector<32x16xf32>
    %186 = tpu.matmul %183, %185, %cst_131 {dimension_numbers = #tpu.dot_dimension_numbers<[1], [0], [0], [1], [0, 0, 1, 1], [], []>} : vector<32x16xf32>, vector<16x16xf32>, vector<32x16xf32> -> vector<32x16xf32>
    %187 = arith.addf %176, %186 : vector<32x16xf32>
    %c0_132 = arith.constant 0 : index
    %c5_133 = arith.constant 5 : index
    %188 = vector.load %arg7[%c0_132, %c5_133] : memref<32x9xi32, #tpu.memory_space<vmem>>, vector<32x1xi32>
    %189 = vector.broadcast %188 : vector<32x1xi32> to vector<32x128xi32>
    %190 = arith.cmpi eq, %131, %189 : vector<32x128xi32>
    %cst_134 = arith.constant 1.000000e+00 : f32
    %cst_135 = arith.constant 0.000000e+00 : f32
    %191 = vector.broadcast %cst_134 : f32 to vector<32x128xf32>
    %192 = vector.broadcast %cst_135 : f32 to vector<32x128xf32>
    %193 = arith.select %190, %191, %192 : vector<32x128xi1>, vector<32x128xf32>
    %cst_136 = arith.constant dense<0.000000e+00> : vector<32x16xf32>
    %194 = tpu.matmul %193, %130, %cst_136 {dimension_numbers = #tpu.dot_dimension_numbers<[1], [0], [0], [1], [0, 0, 1, 1], [], []>} : vector<32x128xf32>, vector<128x16xf32>, vector<32x16xf32> -> vector<32x16xf32>
    %c5_137 = arith.constant 5 : index
    %c0_138 = arith.constant 0 : index
    %c0_139 = arith.constant 0 : index
    %195 = vector.load %arg8[%c5_137, %c0_138, %c0_139] : memref<9x16x16xf32, #tpu.memory_space<vmem>>, vector<1x16x16xf32>
    %196 = vector.shape_cast %195 : vector<1x16x16xf32> to vector<16x16xf32>
    %cst_140 = arith.constant dense<0.000000e+00> : vector<32x16xf32>
    %197 = tpu.matmul %194, %196, %cst_140 {dimension_numbers = #tpu.dot_dimension_numbers<[1], [0], [0], [1], [0, 0, 1, 1], [], []>} : vector<32x16xf32>, vector<16x16xf32>, vector<32x16xf32> -> vector<32x16xf32>
    %198 = arith.addf %187, %197 : vector<32x16xf32>
    %c0_141 = arith.constant 0 : index
    %c6_142 = arith.constant 6 : index
    %199 = vector.load %arg7[%c0_141, %c6_142] : memref<32x9xi32, #tpu.memory_space<vmem>>, vector<32x1xi32>
    %200 = vector.broadcast %199 : vector<32x1xi32> to vector<32x128xi32>
    %201 = arith.cmpi eq, %131, %200 : vector<32x128xi32>
    %cst_143 = arith.constant 1.000000e+00 : f32
    %cst_144 = arith.constant 0.000000e+00 : f32
    %202 = vector.broadcast %cst_143 : f32 to vector<32x128xf32>
    %203 = vector.broadcast %cst_144 : f32 to vector<32x128xf32>
    %204 = arith.select %201, %202, %203 : vector<32x128xi1>, vector<32x128xf32>
    %cst_145 = arith.constant dense<0.000000e+00> : vector<32x16xf32>
    %205 = tpu.matmul %204, %130, %cst_145 {dimension_numbers = #tpu.dot_dimension_numbers<[1], [0], [0], [1], [0, 0, 1, 1], [], []>} : vector<32x128xf32>, vector<128x16xf32>, vector<32x16xf32> -> vector<32x16xf32>
    %c6_146 = arith.constant 6 : index
    %c0_147 = arith.constant 0 : index
    %c0_148 = arith.constant 0 : index
    %206 = vector.load %arg8[%c6_146, %c0_147, %c0_148] : memref<9x16x16xf32, #tpu.memory_space<vmem>>, vector<1x16x16xf32>
    %207 = vector.shape_cast %206 : vector<1x16x16xf32> to vector<16x16xf32>
    %cst_149 = arith.constant dense<0.000000e+00> : vector<32x16xf32>
    %208 = tpu.matmul %205, %207, %cst_149 {dimension_numbers = #tpu.dot_dimension_numbers<[1], [0], [0], [1], [0, 0, 1, 1], [], []>} : vector<32x16xf32>, vector<16x16xf32>, vector<32x16xf32> -> vector<32x16xf32>
    %209 = arith.addf %198, %208 : vector<32x16xf32>
    %c0_150 = arith.constant 0 : index
    %c7_151 = arith.constant 7 : index
    %210 = vector.load %arg7[%c0_150, %c7_151] : memref<32x9xi32, #tpu.memory_space<vmem>>, vector<32x1xi32>
    %211 = vector.broadcast %210 : vector<32x1xi32> to vector<32x128xi32>
    %212 = arith.cmpi eq, %131, %211 : vector<32x128xi32>
    %cst_152 = arith.constant 1.000000e+00 : f32
    %cst_153 = arith.constant 0.000000e+00 : f32
    %213 = vector.broadcast %cst_152 : f32 to vector<32x128xf32>
    %214 = vector.broadcast %cst_153 : f32 to vector<32x128xf32>
    %215 = arith.select %212, %213, %214 : vector<32x128xi1>, vector<32x128xf32>
    %cst_154 = arith.constant dense<0.000000e+00> : vector<32x16xf32>
    %216 = tpu.matmul %215, %130, %cst_154 {dimension_numbers = #tpu.dot_dimension_numbers<[1], [0], [0], [1], [0, 0, 1, 1], [], []>} : vector<32x128xf32>, vector<128x16xf32>, vector<32x16xf32> -> vector<32x16xf32>
    %c7_155 = arith.constant 7 : index
    %c0_156 = arith.constant 0 : index
    %c0_157 = arith.constant 0 : index
    %217 = vector.load %arg8[%c7_155, %c0_156, %c0_157] : memref<9x16x16xf32, #tpu.memory_space<vmem>>, vector<1x16x16xf32>
    %218 = vector.shape_cast %217 : vector<1x16x16xf32> to vector<16x16xf32>
    %cst_158 = arith.constant dense<0.000000e+00> : vector<32x16xf32>
    %219 = tpu.matmul %216, %218, %cst_158 {dimension_numbers = #tpu.dot_dimension_numbers<[1], [0], [0], [1], [0, 0, 1, 1], [], []>} : vector<32x16xf32>, vector<16x16xf32>, vector<32x16xf32> -> vector<32x16xf32>
    %220 = arith.addf %209, %219 : vector<32x16xf32>
    %c0_159 = arith.constant 0 : index
    %c8_160 = arith.constant 8 : index
    %221 = vector.load %arg7[%c0_159, %c8_160] : memref<32x9xi32, #tpu.memory_space<vmem>>, vector<32x1xi32>
    %222 = vector.broadcast %221 : vector<32x1xi32> to vector<32x128xi32>
    %223 = arith.cmpi eq, %131, %222 : vector<32x128xi32>
    %cst_161 = arith.constant 1.000000e+00 : f32
    %cst_162 = arith.constant 0.000000e+00 : f32
    %224 = vector.broadcast %cst_161 : f32 to vector<32x128xf32>
    %225 = vector.broadcast %cst_162 : f32 to vector<32x128xf32>
    %226 = arith.select %223, %224, %225 : vector<32x128xi1>, vector<32x128xf32>
    %cst_163 = arith.constant dense<0.000000e+00> : vector<32x16xf32>
    %227 = tpu.matmul %226, %130, %cst_163 {dimension_numbers = #tpu.dot_dimension_numbers<[1], [0], [0], [1], [0, 0, 1, 1], [], []>} : vector<32x128xf32>, vector<128x16xf32>, vector<32x16xf32> -> vector<32x16xf32>
    %c8_164 = arith.constant 8 : index
    %c0_165 = arith.constant 0 : index
    %c0_166 = arith.constant 0 : index
    %228 = vector.load %arg8[%c8_164, %c0_165, %c0_166] : memref<9x16x16xf32, #tpu.memory_space<vmem>>, vector<1x16x16xf32>
    %229 = vector.shape_cast %228 : vector<1x16x16xf32> to vector<16x16xf32>
    %cst_167 = arith.constant dense<0.000000e+00> : vector<32x16xf32>
    %230 = tpu.matmul %227, %229, %cst_167 {dimension_numbers = #tpu.dot_dimension_numbers<[1], [0], [0], [1], [0, 0, 1, 1], [], []>} : vector<32x16xf32>, vector<16x16xf32>, vector<32x16xf32> -> vector<32x16xf32>
    %231 = arith.addf %220, %230 : vector<32x16xf32>
    %c0_168 = arith.constant 0 : index
    %c0_169 = arith.constant 0 : index
    %232 = vector.load %arg9[%c0_168, %c0_169] : memref<1x16xf32, #tpu.memory_space<vmem>>, vector<1x16xf32>
    %233 = vector.broadcast %232 : vector<1x16xf32> to vector<32x16xf32>
    %234 = arith.addf %231, %233 : vector<32x16xf32>
    %cst_170 = arith.constant dense<0.000000e+00> : vector<16xf32>
    %235 = vector.multi_reduction <add>, %234, %cst_170 [0] : vector<32x16xf32> to vector<16xf32>
    %236 = vector.shape_cast %235 : vector<16xf32> to vector<1x16xf32>
    %cst_171 = arith.constant 3.200000e+01 : f32
    %237 = vector.broadcast %cst_171 : f32 to vector<1x16xf32>
    %238 = arith.divf %236, %237 : vector<1x16xf32>
    %239 = vector.broadcast %238 : vector<1x16xf32> to vector<32x16xf32>
    %240 = arith.subf %234, %239 : vector<32x16xf32>
    %241 = arith.mulf %240, %240 : vector<32x16xf32>
    %cst_172 = arith.constant dense<0.000000e+00> : vector<16xf32>
    %242 = vector.multi_reduction <add>, %241, %cst_172 [0] : vector<32x16xf32> to vector<16xf32>
    %243 = vector.shape_cast %242 : vector<16xf32> to vector<1x16xf32>
    %cst_173 = arith.constant 3.200000e+01 : f32
    %244 = vector.broadcast %cst_173 : f32 to vector<1x16xf32>
    %245 = arith.divf %243, %244 : vector<1x16xf32>
    %246 = vector.broadcast %238 : vector<1x16xf32> to vector<32x16xf32>
    %247 = arith.subf %234, %246 : vector<32x16xf32>
    %cst_174 = arith.constant 9.99999974E-6 : f32
    %248 = vector.broadcast %cst_174 : f32 to vector<1x16xf32>
    %249 = arith.addf %245, %248 : vector<1x16xf32>
    %250 = math.rsqrt %249 : vector<1x16xf32>
    %251 = vector.broadcast %250 : vector<1x16xf32> to vector<32x16xf32>
    %252 = arith.mulf %247, %251 : vector<32x16xf32>
    %c0_175 = arith.constant 0 : index
    %c0_176 = arith.constant 0 : index
    %253 = vector.load %arg10[%c0_175, %c0_176] : memref<1x16xf32, #tpu.memory_space<vmem>>, vector<1x16xf32>
    %254 = vector.broadcast %253 : vector<1x16xf32> to vector<32x16xf32>
    %255 = arith.mulf %252, %254 : vector<32x16xf32>
    %c0_177 = arith.constant 0 : index
    %c0_178 = arith.constant 0 : index
    %256 = vector.load %arg11[%c0_177, %c0_178] : memref<1x16xf32, #tpu.memory_space<vmem>>, vector<1x16xf32>
    %257 = vector.broadcast %256 : vector<1x16xf32> to vector<32x16xf32>
    %258 = arith.addf %255, %257 : vector<32x16xf32>
    %cst_179 = arith.constant 0.000000e+00 : f32
    %259 = vector.broadcast %cst_179 : f32 to vector<32x16xf32>
    %260 = arith.maximumf %258, %259 : vector<32x16xf32>
    %c0_180 = arith.constant 0 : index
    %c0_181 = arith.constant 0 : index
    %261 = vector.load %arg12[%c0_180, %c0_181] : memref<2x32xf32, #tpu.memory_space<vmem>>, vector<2x32xf32>
    %cst_182 = arith.constant dense<0.000000e+00> : vector<2x16xf32>
    %262 = tpu.matmul %261, %260, %cst_182 {dimension_numbers = #tpu.dot_dimension_numbers<[1], [0], [0], [1], [0, 0, 1, 1], [], []>} : vector<2x32xf32>, vector<32x16xf32>, vector<2x16xf32> -> vector<2x16xf32>
    %c0_183 = arith.constant 0 : index
    %c0_184 = arith.constant 0 : index
    %263 = vector.load %arg13[%c0_183, %c0_184] : memref<16x10xf32, #tpu.memory_space<vmem>>, vector<16x10xf32>
    %cst_185 = arith.constant dense<0.000000e+00> : vector<2x10xf32>
    %264 = tpu.matmul %262, %263, %cst_185 {dimension_numbers = #tpu.dot_dimension_numbers<[1], [0], [0], [1], [0, 0, 1, 1], [], []>} : vector<2x16xf32>, vector<16x10xf32>, vector<2x10xf32> -> vector<2x10xf32>
    %c0_186 = arith.constant 0 : index
    %c0_187 = arith.constant 0 : index
    %265 = vector.load %arg14[%c0_186, %c0_187] : memref<1x10xf32, #tpu.memory_space<vmem>>, vector<1x10xf32>
    %266 = vector.broadcast %265 : vector<1x10xf32> to vector<2x10xf32>
    %267 = arith.addf %264, %266 : vector<2x10xf32>
    %c0_188 = arith.constant 0 : index
    %c0_189 = arith.constant 0 : index
    %268 = vector.load %arg15[%c0_188, %c0_189] : memref<2x10xf32, #tpu.memory_space<vmem>>, vector<2x10xf32>
    tpu.vector_store %arg15[%c0_188, %c0_189], %267 {strides = array<i32>} : memref<2x10xf32, #tpu.memory_space<vmem>>, vector<2x10xf32>,
    return
  }
  func.func @transform_0(%arg0: i32) -> (i32, i32) {
    %c0_i32 = arith.constant 0 : i32
    %c0_i32_0 = arith.constant 0 : i32
    %c0_i32_1 = arith.constant 0 : i32
    return %c0_i32, %c0_i32_0 : i32, i32
  }
  func.func @transform_1(%arg0: i32) -> (i32, i32) {
    %c0_i32 = arith.constant 0 : i32
    %c0_i32_0 = arith.constant 0 : i32
    %c0_i32_1 = arith.constant 0 : i32
    return %c0_i32, %c0_i32_0 : i32, i32
  }
  func.func @transform_2(%arg0: i32) -> (i32, i32, i32) {
    %c0_i32 = arith.constant 0 : i32
    %c0_i32_0 = arith.constant 0 : i32
    %c0_i32_1 = arith.constant 0 : i32
    %c0_i32_2 = arith.constant 0 : i32
    return %c0_i32, %c0_i32_0, %c0_i32_1 : i32, i32, i32
  }
  func.func @transform_3(%arg0: i32) -> (i32, i32) {
    %c0_i32 = arith.constant 0 : i32
    %c0_i32_0 = arith.constant 0 : i32
    %c0_i32_1 = arith.constant 0 : i32
    return %c0_i32, %c0_i32_0 : i32, i32
  }
  func.func @transform_4(%arg0: i32) -> (i32, i32) {
    %c0_i32 = arith.constant 0 : i32
    %c0_i32_0 = arith.constant 0 : i32
    %c0_i32_1 = arith.constant 0 : i32
    return %c0_i32, %c0_i32_0 : i32, i32
  }
  func.func @transform_5(%arg0: i32) -> (i32, i32) {
    %c0_i32 = arith.constant 0 : i32
    %c0_i32_0 = arith.constant 0 : i32
    %c0_i32_1 = arith.constant 0 : i32
    return %c0_i32, %c0_i32_0 : i32, i32
  }
  func.func @transform_6(%arg0: i32) -> (i32, i32) {
    %c0_i32 = arith.constant 0 : i32
    %c0_i32_0 = arith.constant 0 : i32
    %c0_i32_1 = arith.constant 0 : i32
    return %c0_i32, %c0_i32_0 : i32, i32
  }
  func.func @transform_7(%arg0: i32) -> (i32, i32, i32) {
    %c0_i32 = arith.constant 0 : i32
    %c0_i32_0 = arith.constant 0 : i32
    %c0_i32_1 = arith.constant 0 : i32
    %c0_i32_2 = arith.constant 0 : i32
    return %c0_i32, %c0_i32_0, %c0_i32_1 : i32, i32, i32
  }
  func.func @transform_8(%arg0: i32) -> (i32, i32) {
    %c0_i32 = arith.constant 0 : i32
    %c0_i32_0 = arith.constant 0 : i32
    %c0_i32_1 = arith.constant 0 : i32
    return %c0_i32, %c0_i32_0 : i32, i32
  }
  func.func @transform_9(%arg0: i32) -> (i32, i32) {
    %c0_i32 = arith.constant 0 : i32
    %c0_i32_0 = arith.constant 0 : i32
    %c0_i32_1 = arith.constant 0 : i32
    return %c0_i32, %c0_i32_0 : i32, i32
  }
  func.func @transform_10(%arg0: i32) -> (i32, i32) {
    %c0_i32 = arith.constant 0 : i32
    %c0_i32_0 = arith.constant 0 : i32
    %c0_i32_1 = arith.constant 0 : i32
    return %c0_i32, %c0_i32_0 : i32, i32
  }
  func.func @transform_11(%arg0: i32) -> (i32, i32) {
    %c0_i32 = arith.constant 0 : i32
    %c0_i32_0 = arith.constant 0 : i32
    %c0_i32_1 = arith.constant 0 : i32
    return %c0_i32, %c0_i32_0 : i32, i32
  }
  func.func @transform_12(%arg0: i32) -> (i32, i32) {
    %c0_i32 = arith.constant 0 : i32
    %c0_i32_0 = arith.constant 0 : i32
    %c0_i32_1 = arith.constant 0 : i32
    return %c0_i32, %c0_i32_0 : i32, i32
  }
  func.func @transform_13(%arg0: i32) -> (i32, i32) {
    %c0_i32 = arith.constant 0 : i32
    %c0_i32_0 = arith.constant 0 : i32
    %c0_i32_1 = arith.constant 0 : i32
    return %c0_i32, %c0_i32_0 : i32, i32
  }
  func.func @transform_14(%arg0: i32) -> (i32, i32) {
    %c0_i32 = arith.constant 0 : i32
    %c0_i32_0 = arith.constant 0 : i32
    %c0_i32_1 = arith.constant 0 : i32
    return %c0_i32, %c0_i32_0 : i32, i32
  }
}

</mosaic_0001>

<llo_original>
// kernel: clf_forward.1
$region0: #{clf_forward.1}
  #allocation0 [shape = 'u32[]', space=smem, size = 0x4, offset = 0x4, fixed_abs, tag = 'smem constant byte address 0x4 - core index']
  #allocation1 [shape = 'u32[144,128]{1,0:T(1,128)}', space=vmem, size = 0x12000, scoped, tag = 'internal scratch']
  %s0 = inlined_call_operand.vmem [shape: f32[512,4], index: 0, kind: input, shape index: {}]
  %s1 = inlined_call_operand.vmem [shape: s32[128,9], index: 1, kind: input, shape index: {}]
  %s2 = inlined_call_operand.vmem [shape: f32[9,4,16], index: 2, kind: input, shape index: {}]
  %s3 = inlined_call_operand.vmem [shape: f32[1,16], index: 3, kind: input, shape index: {}]
  %s4 = inlined_call_operand.vmem [shape: f32[1,16], index: 4, kind: input, shape index: {}]
  %s5 = inlined_call_operand.vmem [shape: f32[1,16], index: 5, kind: input, shape index: {}]
  %s6 = inlined_call_operand.vmem [shape: s32[32,9], index: 6, kind: input, shape index: {}]
  %s7 = inlined_call_operand.vmem [shape: f32[9,16,16], index: 7, kind: input, shape index: {}]
  %s8 = inlined_call_operand.vmem [shape: f32[1,16], index: 8, kind: input, shape index: {}]
  %s9 = inlined_call_operand.vmem [shape: f32[1,16], index: 9, kind: input, shape index: {}]
  %s10 = inlined_call_operand.vmem [shape: f32[1,16], index: 10, kind: input, shape index: {}]
  %s11 = inlined_call_operand.vmem [shape: f32[2,32], index: 11, kind: input, shape index: {}]
  %s12 = inlined_call_operand.vmem [shape: f32[16,10], index: 12, kind: input, shape index: {}]
  %s13 = inlined_call_operand.vmem [shape: f32[1,10], index: 13, kind: input, shape index: {}]
  %s14 = inlined_call_operand.hbm [shape: f32[2,10], index: 14, kind: output, shape index: {}]
  %s15 = sld [smem:[#allocation0]]
  $region66: #{clf_forward.1} parent=0
    _
  %s17 = ssub.s32 1, %s15
  %s18 = scalar_select 0, %s17, %s15
  $region1: #{clf_forward.1} parent=0
    #allocation2 [shape = 'u8[1024]{0}', space=vmem, size = 0x400, scoped, tag = 'output window, operand 0, single buffered']
    #allocation3 [shape = 's32[1]{0}', space=sflag, size = 0x4, scoped, tag = 'scoped memory for clf_forward.1']
    %19 = vsyncpa [#allocation3], 0
    // Predicated region
    $region2: #{clf_forward.1} parent=1 // pred_check
      _
    $region3: #{clf_forward.1} parent=1 // pred_check_branch
      %21 = sbr.rel (0) target = $region5
    $region4: #{clf_forward.1} parent=1 // pred_region
      _
    $region5: #{clf_forward.1} parent=1 // pred_fallthru
      _
    // Predicated region
    $region6: #{clf_forward.1} parent=1 // pred_check
      _
    $region7: #{clf_forward.1} parent=1 // pred_check_branch
      %23 = sbr.rel (0) target = $region9
    $region8: #{clf_forward.1} parent=1 // pred_region
      _
    $region9: #{clf_forward.1} parent=1 // pred_fallthru
      _
    // Predicated region
    $region10: #{clf_forward.1} parent=1 // pred_check
      _
    $region11: #{clf_forward.1} parent=1 // pred_check_branch
      %25 = sbr.rel (0) target = $region13
    $region12: #{clf_forward.1} parent=1 // pred_region
      _
    $region13: #{clf_forward.1} parent=1 // pred_fallthru
      _
    // Predicated region
    $region14: #{clf_forward.1} parent=1 // pred_check
      _
    $region15: #{clf_forward.1} parent=1 // pred_check_branch
      %27 = sbr.rel (0) target = $region17
    $region16: #{clf_forward.1} parent=1 // pred_region
      _
    $region17: #{clf_forward.1} parent=1 // pred_fallthru
      _
    // Predicated region
    $region18: #{clf_forward.1} parent=1 // pred_check
      _
    $region19: #{clf_forward.1} parent=1 // pred_check_branch
      %29 = sbr.rel (0) target = $region21
    $region20: #{clf_forward.1} parent=1 // pred_region
      _
    $region21: #{clf_forward.1} parent=1 // pred_fallthru
      _
    // Predicated region
    $region22: #{clf_forward.1} parent=1 // pred_check
      _
    $region23: #{clf_forward.1} parent=1 // pred_check_branch
      %31 = sbr.rel (0) target = $region25
    $region24: #{clf_forward.1} parent=1 // pred_region
      _
    $region25: #{clf_forward.1} parent=1 // pred_fallthru
      _
    // Predicated region
    $region26: #{clf_forward.1} parent=1 // pred_check
      _
    $region27: #{clf_forward.1} parent=1 // pred_check_branch
      %33 = sbr.rel (0) target = $region29
    $region28: #{clf_forward.1} parent=1 // pred_region
      _
    $region29: #{clf_forward.1} parent=1 // pred_fallthru
      _
    // Predicated region
    $region30: #{clf_forward.1} parent=1 // pred_check
      _
    $region31: #{clf_forward.1} parent=1 // pred_check_branch
      %35 = sbr.rel (0) target = $region33
    $region32: #{clf_forward.1} parent=1 // pred_region
      _
    $region33: #{clf_forward.1} parent=1 // pred_fallthru
      _
    // Predicated region
    $region34: #{clf_forward.1} parent=1 // pred_check
      _
    $region35: #{clf_forward.1} parent=1 // pred_check_branch
      %37 = sbr.rel (0) target = $region37
    $region36: #{clf_forward.1} parent=1 // pred_region
      _
    $region37: #{clf_forward.1} parent=1 // pred_fallthru
      _
    // Predicated region
    $region38: #{clf_forward.1} parent=1 // pred_check
      _
    $region39: #{clf_forward.1} parent=1 // pred_check_branch
      %39 = sbr.rel (0) target = $region41
    $region40: #{clf_forward.1} parent=1 // pred_region
      _
    $region41: #{clf_forward.1} parent=1 // pred_fallthru
      _
    // Predicated region
    $region42: #{clf_forward.1} parent=1 // pred_check
      _
    $region43: #{clf_forward.1} parent=1 // pred_check_branch
      %41 = sbr.rel (0) target = $region45
    $region44: #{clf_forward.1} parent=1 // pred_region
      _
    $region45: #{clf_forward.1} parent=1 // pred_fallthru
      _
    // Predicated region
    $region46: #{clf_forward.1} parent=1 // pred_check
      _
    $region47: #{clf_forward.1} parent=1 // pred_check_branch
      %43 = sbr.rel (0) target = $region49
    $region48: #{clf_forward.1} parent=1 // pred_region
      _
    $region49: #{clf_forward.1} parent=1 // pred_fallthru
      _
    // Predicated region
    $region50: #{clf_forward.1} parent=1 // pred_check
      _
    $region51: #{clf_forward.1} parent=1 // pred_check_branch
      %45 = sbr.rel (0) target = $region53
    $region52: #{clf_forward.1} parent=1 // pred_region
      _
    $region53: #{clf_forward.1} parent=1 // pred_fallthru
      _
    // Predicated region
    $region54: #{clf_forward.1} parent=1 // pred_check
      _
    $region55: #{clf_forward.1} parent=1 // pred_check_branch
      %47 = sbr.rel (0) target = $region57
    $region56: #{clf_forward.1} parent=1 // pred_region
      _
    $region57: #{clf_forward.1} parent=1 // pred_fallthru
      _
    %v48 = vld [vmem:[%s0] sm:$0xff]
    %v49 = vld [vmem:[%s0 + $0x8] sm:$0xff]
    %v50 = vld [vmem:[%s0 + $0x10] sm:$0xff]
    %v51 = vld [vmem:[%s0 + $0x18] sm:$0xff]
    %v52 = vld [vmem:[%s0 + $0x20] sm:$0xff]
    %v53 = vld [vmem:[%s0 + $0x28] sm:$0xff]
    %v54 = vld [vmem:[%s0 + $0x30] sm:$0xff]
    %v55 = vld [vmem:[%s0 + $0x38] sm:$0xff]
    %v56 = vld [vmem:[%s0 + $0x40] sm:$0xff]
    %v57 = vld [vmem:[%s0 + $0x48] sm:$0xff]
    %v58 = vld [vmem:[%s0 + $0x50] sm:$0xff]
    %v59 = vld [vmem:[%s0 + $0x58] sm:$0xff]
    %v60 = vld [vmem:[%s0 + $0x60] sm:$0xff]
    %v61 = vld [vmem:[%s0 + $0x68] sm:$0xff]
    %v62 = vld [vmem:[%s0 + $0x70] sm:$0xff]
    %v63 = vld [vmem:[%s0 + $0x78] sm:$0xff]
    %v64 = vld [vmem:[%s0 + $0x80] sm:$0xff]
    %v65 = vld [vmem:[%s0 + $0x88] sm:$0xff]
    %v66 = vld [vmem:[%s0 + $0x90] sm:$0xff]
    %v67 = vld [vmem:[%s0 + $0x98] sm:$0xff]
    %v68 = vld [vmem:[%s0 + $0xa0] sm:$0xff]
    %v69 = vld [vmem:[%s0 + $0xa8] sm:$0xff]
    %v70 = vld [vmem:[%s0 + $0xb0] sm:$0xff]
    %v71 = vld [vmem:[%s0 + $0xb8] sm:$0xff]
    %v72 = vld [vmem:[%s0 + $0xc0] sm:$0xff]
    %v73 = vld [vmem:[%s0 + $0xc8] sm:$0xff]
    %v74 = vld [vmem:[%s0 + $0xd0] sm:$0xff]
    %v75 = vld [vmem:[%s0 + $0xd8] sm:$0xff]
    %v76 = vld [vmem:[%s0 + $0xe0] sm:$0xff]
    %v77 = vld [vmem:[%s0 + $0xe8] sm:$0xff]
    %v78 = vld [vmem:[%s0 + $0xf0] sm:$0xff]
    %v79 = vld [vmem:[%s0 + $0xf8] sm:$0xff]
    %v80 = vld [vmem:[%s0 + $0x100] sm:$0xff]
    %v81 = vld [vmem:[%s0 + $0x108] sm:$0xff]
    %v82 = vld [vmem:[%s0 + $0x110] sm:$0xff]
    %v83 = vld [vmem:[%s0 + $0x118] sm:$0xff]
    %v84 = vld [vmem:[%s0 + $0x120] sm:$0xff]
    %v85 = vld [vmem:[%s0 + $0x128] sm:$0xff]
    %v86 = vld [vmem:[%s0 + $0x130] sm:$0xff]
    %v87 = vld [vmem:[%s0 + $0x138] sm:$0xff]
    %v88 = vld [vmem:[%s0 + $0x140] sm:$0xff]
    %v89 = vld [vmem:[%s0 + $0x148] sm:$0xff]
    %v90 = vld [vmem:[%s0 + $0x150] sm:$0xff]
    %v91 = vld [vmem:[%s0 + $0x158] sm:$0xff]
    %v92 = vld [vmem:[%s0 + $0x160] sm:$0xff]
    %v93 = vld [vmem:[%s0 + $0x168] sm:$0xff]
    %v94 = vld [vmem:[%s0 + $0x170] sm:$0xff]
    %v95 = vld [vmem:[%s0 + $0x178] sm:$0xff]
    %v96 = vld [vmem:[%s0 + $0x180] sm:$0xff]
    %v97 = vld [vmem:[%s0 + $0x188] sm:$0xff]
    %v98 = vld [vmem:[%s0 + $0x190] sm:$0xff]
    %v99 = vld [vmem:[%s0 + $0x198] sm:$0xff]
    %v100 = vld [vmem:[%s0 + $0x1a0] sm:$0xff]
    %v101 = vld [vmem:[%s0 + $0x1a8] sm:$0xff]
    %v102 = vld [vmem:[%s0 + $0x1b0] sm:$0xff]
    %v103 = vld [vmem:[%s0 + $0x1b8] sm:$0xff]
    %v104 = vld [vmem:[%s0 + $0x1c0] sm:$0xff]
    %v105 = vld [vmem:[%s0 + $0x1c8] sm:$0xff]
    %v106 = vld [vmem:[%s0 + $0x1d0] sm:$0xff]
    %v107 = vld [vmem:[%s0 + $0x1d8] sm:$0xff]
    %v108 = vld [vmem:[%s0 + $0x1e0] sm:$0xff]
    %v109 = vld [vmem:[%s0 + $0x1e8] sm:$0xff]
    %v110 = vld [vmem:[%s0 + $0x1f0] sm:$0xff]
    %v111 = vld [vmem:[%s0 + $0x1f8] sm:$0xff]
    %v112 = vlaneseq
    %v113 = vand.u32 %v112, 127
    %v114 = vadd.s32 %v113, 128
    %v115 = vadd.s32 %v113, 256
    %v116 = vadd.s32 %v113, 384
    %v117 = vld [vmem:[%s1] sm:$0xff]
    %v118 = vld [vmem:[%s1 + $0x8] sm:$0xff]
    %v119 = vld [vmem:[%s1 + $0x10] sm:$0xff]
    %v120 = vld [vmem:[%s1 + $0x18] sm:$0xff]
    %v121 = vld [vmem:[%s1 + $0x20] sm:$0xff]
    %v122 = vld [vmem:[%s1 + $0x28] sm:$0xff]
    %v123 = vld [vmem:[%s1 + $0x30] sm:$0xff]
    %v124 = vld [vmem:[%s1 + $0x38] sm:$0xff]
    %v125 = vld [vmem:[%s1 + $0x40] sm:$0xff]
    %v126 = vld [vmem:[%s1 + $0x48] sm:$0xff]
    %v127 = vld [vmem:[%s1 + $0x50] sm:$0xff]
    %v128 = vld [vmem:[%s1 + $0x58] sm:$0xff]
    %v129 = vld [vmem:[%s1 + $0x60] sm:$0xff]
    %v130 = vld [vmem:[%s1 + $0x68] sm:$0xff]
    %v131 = vld [vmem:[%s1 + $0x70] sm:$0xff]
    %v132 = vld [vmem:[%s1 + $0x78] sm:$0xff]
    %133 = vset.pattern.permute.xlu0 0
    %134 = vperm.xlu0 %133, %v117
    %v135 = vpop.permute.xlu0 %134
    %136 = vset.pattern.permute.xlu0 0
    %137 = vperm.xlu0 %136, %v118
    %v138 = vpop.permute.xlu0 %137
    %139 = vset.pattern.permute.xlu0 0
    %140 = vperm.xlu0 %139, %v119
    %v141 = vpop.permute.xlu0 %140
    %142 = vset.pattern.permute.xlu0 0
    %143 = vperm.xlu0 %142, %v120
    %v144 = vpop.permute.xlu0 %143
    %145 = vset.pattern.permute.xlu0 0
    %146 = vperm.xlu0 %145, %v121
    %v147 = vpop.permute.xlu0 %146
    %148 = vset.pattern.permute.xlu0 0
    %149 = vperm.xlu0 %148, %v122
    %v150 = vpop.permute.xlu0 %149
    %151 = vset.pattern.permute.xlu0 0
    %152 = vperm.xlu0 %151, %v123
    %v153 = vpop.permute.xlu0 %152
    %154 = vset.pattern.permute.xlu0 0
    %155 = vperm.xlu0 %154, %v124
    %v156 = vpop.permute.xlu0 %155
    %157 = vset.pattern.permute.xlu0 0
    %158 = vperm.xlu0 %157, %v125
    %v159 = vpop.permute.xlu0 %158
    %160 = vset.pattern.permute.xlu0 0
    %161 = vperm.xlu0 %160, %v126
    %v162 = vpop.permute.xlu0 %161
    %163 = vset.pattern.permute.xlu0 0
    %164 = vperm.xlu0 %163, %v127
    %v165 = vpop.permute.xlu0 %164
    %166 = vset.pattern.permute.xlu0 0
    %167 = vperm.xlu0 %166, %v128
    %v168 = vpop.permute.xlu0 %167
    %169 = vset.pattern.permute.xlu0 0
    %170 = vperm.xlu0 %169, %v129
    %v171 = vpop.permute.xlu0 %170
    %172 = vset.pattern.permute.xlu0 0
    %173 = vperm.xlu0 %172, %v130
    %v174 = vpop.permute.xlu0 %173
    %175 = vset.pattern.permute.xlu0 0
    %176 = vperm.xlu0 %175, %v131
    %v177 = vpop.permute.xlu0 %176
    %178 = vset.pattern.permute.xlu0 0
    %179 = vperm.xlu0 %178, %v132
    %v180 = vpop.permute.xlu0 %179
    %vm181 = vcmp.eq.s32.totalorder %v113, %v135
    %vm182 = vcmp.eq.s32.totalorder %v114, %v135
    %vm183 = vcmp.eq.s32.totalorder %v115, %v135
    %vm184 = vcmp.eq.s32.totalorder %v116, %v135
    %vm185 = vcmp.eq.s32.totalorder %v113, %v138
    %vm186 = vcmp.eq.s32.totalorder %v114, %v138
    %vm187 = vcmp.eq.s32.totalorder %v115, %v138
    %vm188 = vcmp.eq.s32.totalorder %v116, %v138
    %vm189 = vcmp.eq.s32.totalorder %v113, %v141
    %vm190 = vcmp.eq.s32.totalorder %v114, %v141
    %vm191 = vcmp.eq.s32.totalorder %v115, %v141
    %vm192 = vcmp.eq.s32.totalorder %v116, %v141
    %vm193 = vcmp.eq.s32.totalorder %v113, %v144
    %vm194 = vcmp.eq.s32.totalorder %v114, %v144
    %vm195 = vcmp.eq.s32.totalorder %v115, %v144
    %vm196 = vcmp.eq.s32.totalorder %v116, %v144
    %vm197 = vcmp.eq.s32.totalorder %v113, %v147
    %vm198 = vcmp.eq.s32.totalorder %v114, %v147
    %vm199 = vcmp.eq.s32.totalorder %v115, %v147
    %vm200 = vcmp.eq.s32.totalorder %v116, %v147
    %vm201 = vcmp.eq.s32.totalorder %v113, %v150
    %vm202 = vcmp.eq.s32.totalorder %v114, %v150
    %vm203 = vcmp.eq.s32.totalorder %v115, %v150
    %vm204 = vcmp.eq.s32.totalorder %v116, %v150
    %vm205 = vcmp.eq.s32.totalorder %v113, %v153
    %vm206 = vcmp.eq.s32.totalorder %v114, %v153
    %vm207 = vcmp.eq.s32.totalorder %v115, %v153
    %vm208 = vcmp.eq.s32.totalorder %v116, %v153
    %vm209 = vcmp.eq.s32.totalorder %v113, %v156
    %vm210 = vcmp.eq.s32.totalorder %v114, %v156
    %vm211 = vcmp.eq.s32.totalorder %v115, %v156
    %vm212 = vcmp.eq.s32.totalorder %v116, %v156
    %vm213 = vcmp.eq.s32.totalorder %v113, %v159
    %vm214 = vcmp.eq.s32.totalorder %v114, %v159
    %vm215 = vcmp.eq.s32.totalorder %v115, %v159
    %vm216 = vcmp.eq.s32.totalorder %v116, %v159
    %vm217 = vcmp.eq.s32.totalorder %v113, %v162
    %vm218 = vcmp.eq.s32.totalorder %v114, %v162
    %vm219 = vcmp.eq.s32.totalorder %v115, %v162
    %vm220 = vcmp.eq.s32.totalorder %v116, %v162
    %vm221 = vcmp.eq.s32.totalorder %v113, %v165
    %vm222 = vcmp.eq.s32.totalorder %v114, %v165
    %vm223 = vcmp.eq.s32.totalorder %v115, %v165
    %vm224 = vcmp.eq.s32.totalorder %v116, %v165
    %vm225 = vcmp.eq.s32.totalorder %v113, %v168
    %vm226 = vcmp.eq.s32.totalorder %v114, %v168
    %vm227 = vcmp.eq.s32.totalorder %v115, %v168
    %vm228 = vcmp.eq.s32.totalorder %v116, %v168
    %vm229 = vcmp.eq.s32.totalorder %v113, %v171
    %vm230 = vcmp.eq.s32.totalorder %v114, %v171
    %vm231 = vcmp.eq.s32.totalorder %v115, %v171
    %vm232 = vcmp.eq.s32.totalorder %v116, %v171
    %vm233 = vcmp.eq.s32.totalorder %v113, %v174
    %vm234 = vcmp.eq.s32.totalorder %v114, %v174
    %vm235 = vcmp.eq.s32.totalorder %v115, %v174
    %vm236 = vcmp.eq.s32.totalorder %v116, %v174
    %vm237 = vcmp.eq.s32.totalorder %v113, %v177
    %vm238 = vcmp.eq.s32.totalorder %v114, %v177
    %vm239 = vcmp.eq.s32.totalorder %v115, %v177
    %vm240 = vcmp.eq.s32.totalorder %v116, %v177
    %vm241 = vcmp.eq.s32.totalorder %v113, %v180
    %vm242 = vcmp.eq.s32.totalorder %v114, %v180
    %vm243 = vcmp.eq.s32.totalorder %v115, %v180
    %vm244 = vcmp.eq.s32.totalorder %v116, %v180
    %v245 = vsel %vm181, 1.0, 0.0
    %v246 = vsel %vm182, 1.0, 0.0
    %v247 = vsel %vm183, 1.0, 0.0
    %v248 = vsel %vm184, 1.0, 0.0
    %v249 = vsel %vm185, 1.0, 0.0
    %v250 = vsel %vm186, 1.0, 0.0
    %v251 = vsel %vm187, 1.0, 0.0
    %v252 = vsel %vm188, 1.0, 0.0
    %v253 = vsel %vm189, 1.0, 0.0
    %v254 = vsel %vm190, 1.0, 0.0
    %v255 = vsel %vm191, 1.0, 0.0
    %v256 = vsel %vm192, 1.0, 0.0
    %v257 = vsel %vm193, 1.0, 0.0
    %v258 = vsel %vm194, 1.0, 0.0
    %v259 = vsel %vm195, 1.0, 0.0
    %v260 = vsel %vm196, 1.0, 0.0
    %v261 = vsel %vm197, 1.0, 0.0
    %v262 = vsel %vm198, 1.0, 0.0
    %v263 = vsel %vm199, 1.0, 0.0
    %v264 = vsel %vm200, 1.0, 0.0
    %v265 = vsel %vm201, 1.0, 0.0
    %v266 = vsel %vm202, 1.0, 0.0
    %v267 = vsel %vm203, 1.0, 0.0
    %v268 = vsel %vm204, 1.0, 0.0
    %v269 = vsel %vm205, 1.0, 0.0
    %v270 = vsel %vm206, 1.0, 0.0
    %v271 = vsel %vm207, 1.0, 0.0
    %v272 = vsel %vm208, 1.0, 0.0
    %v273 = vsel %vm209, 1.0, 0.0
    %v274 = vsel %vm210, 1.0, 0.0
    %v275 = vsel %vm211, 1.0, 0.0
    %v276 = vsel %vm212, 1.0, 0.0
    %v277 = vsel %vm213, 1.0, 0.0
    %v278 = vsel %vm214, 1.0, 0.0
    %v279 = vsel %vm215, 1.0, 0.0
    %v280 = vsel %vm216, 1.0, 0.0
    %v281 = vsel %vm217, 1.0, 0.0
    %v282 = vsel %vm218, 1.0, 0.0
    %v283 = vsel %vm219, 1.0, 0.0
    %v284 = vsel %vm220, 1.0, 0.0
    %v285 = vsel %vm221, 1.0, 0.0
    %v286 = vsel %vm222, 1.0, 0.0
    %v287 = vsel %vm223, 1.0, 0.0
    %v288 = vsel %vm224, 1.0, 0.0
    %v289 = vsel %vm225, 1.0, 0.0
    %v290 = vsel %vm226, 1.0, 0.0
    %v291 = vsel %vm227, 1.0, 0.0
    %v292 = vsel %vm228, 1.0, 0.0
    %v293 = vsel %vm229, 1.0, 0.0
    %v294 = vsel %vm230, 1.0, 0.0
    %v295 = vsel %vm231, 1.0, 0.0
    %v296 = vsel %vm232, 1.0, 0.0
    %v297 = vsel %vm233, 1.0, 0.0
    %v298 = vsel %vm234, 1.0, 0.0
    %v299 = vsel %vm235, 1.0, 0.0
    %v300 = vsel %vm236, 1.0, 0.0
    %v301 = vsel %vm237, 1.0, 0.0
    %v302 = vsel %vm238, 1.0, 0.0
    %v303 = vsel %vm239, 1.0, 0.0
    %v304 = vsel %vm240, 1.0, 0.0
    %v305 = vsel %vm241, 1.0, 0.0
    %v306 = vsel %vm242, 1.0, 0.0
    %v307 = vsel %vm243, 1.0, 0.0
    %v308 = vsel %vm244, 1.0, 0.0
    %309 = vmatprep.subr.mxu0 0.0
    %310 = vmatpush1.msra.mxu0 %v48
    %311 = vmatprep.subr.mxu0 0.0
    %312 = vmatpush1.msra.mxu0 %v49
    %313 = vmatprep.subr.mxu0 0.0
    %314 = vmatpush1.msra.mxu0 %v50
    %315 = vmatprep.subr.mxu0 0.0
    %316 = vmatpush1.msra.mxu0 %v51
    %317 = vmatprep.subr.mxu0 0.0
    %318 = vmatpush1.msra.mxu0 %v52
    %319 = vmatprep.subr.mxu0 0.0
    %320 = vmatpush1.msra.mxu0 %v53
    %321 = vmatprep.subr.mxu0 0.0
    %322 = vmatpush1.msra.mxu0 %v54
    %323 = vmatprep.subr.mxu0 0.0
    %324 = vmatpush1.msra.mxu0 %v55
    %325 = vmatprep.subr.mxu0 0.0
    %326 = vmatpush1.msra.mxu0 %v56
    %327 = vmatprep.subr.mxu0 0.0
    %328 = vmatpush1.msra.mxu0 %v57
    %329 = vmatprep.subr.mxu0 0.0
    %330 = vmatpush1.msra.mxu0 %v58
    %331 = vmatprep.subr.mxu0 0.0
    %332 = vmatpush1.msra.mxu0 %v59
    %333 = vmatprep.subr.mxu0 0.0
    %334 = vmatpush1.msra.mxu0 %v60
    %335 = vmatprep.subr.mxu0 0.0
    %336 = vmatpush1.msra.mxu0 %v61
    %337 = vmatprep.subr.mxu0 0.0
    %338 = vmatpush1.msra.mxu0 %v62
    %339 = vmatprep.subr.mxu0 0.0
    %340 = vmatpush1.msra.mxu0 %v63
    %341 = vmatprep.subr.mxu0 0.0
    %342 = vmatpush1.msra.mxu0 %v64
    %343 = vmatprep.subr.mxu0 0.0
    %344 = vmatpush1.msra.mxu0 %v65
    %345 = vmatprep.subr.mxu0 0.0
    %346 = vmatpush1.msra.mxu0 %v66
    %347 = vmatprep.subr.mxu0 0.0
    %348 = vmatpush1.msra.mxu0 %v67
    %349 = vmatprep.subr.mxu0 0.0
    %350 = vmatpush1.msra.mxu0 %v68
    %351 = vmatprep.subr.mxu0 0.0
    %352 = vmatpush1.msra.mxu0 %v69
    %353 = vmatprep.subr.mxu0 0.0
    %354 = vmatpush1.msra.mxu0 %v70
    %355 = vmatprep.subr.mxu0 0.0
    %356 = vmatpush1.msra.mxu0 %v71
    %357 = vmatprep.subr.mxu0 0.0
    %358 = vmatpush1.msra.mxu0 %v72
    %359 = vmatprep.subr.mxu0 0.0
    %360 = vmatpush1.msra.mxu0 %v73
    %361 = vmatprep.subr.mxu0 0.0
    %362 = vmatpush1.msra.mxu0 %v74
    %363 = vmatprep.subr.mxu0 0.0
    %364 = vmatpush1.msra.mxu0 %v75
    %365 = vmatprep.subr.mxu0 0.0
    %366 = vmatpush1.msra.mxu0 %v76
    %367 = vmatprep.subr.mxu0 0.0
    %368 = vmatpush1.msra.mxu0 %v77
    %369 = vmatprep.subr.mxu0 0.0
    %370 = vmatpush1.msra.mxu0 %v78
    %371 = vmatprep.subr.mxu0 0.0
    %372 = vmatpush1.msra.mxu0 %v79
    %373 = vmatprep.mubr.f32.mxu0 %v246
    %374 = vmatmul.mubr.f32.gmra.mrb[0].mxu0 %v245
    %v375 = vpop.f32.mrb[0].mxu0
    %v376 = vadd.f32 0.0, %v375
    %v377 = vpop.f32.mrb[0].mxu0
    %378 = vmatprep.mubr.f32.mxu0 %v250
    %379 = vmatmul.mubr.f32.gmra.mrb[0].mxu0 %v249
    %v380 = vpop.f32.mrb[0].mxu0
    %v381 = vadd.f32 0.0, %v380
    %v382 = vpop.f32.mrb[0].mxu0
    %383 = vmatprep.mubr.f32.mxu0 %v254
    %384 = vmatmul.mubr.f32.gmra.mrb[0].mxu0 %v253
    %v385 = vpop.f32.mrb[0].mxu0
    %v386 = vadd.f32 0.0, %v385
    %v387 = vpop.f32.mrb[0].mxu0
    %388 = vmatprep.mubr.f32.mxu0 %v258
    %389 = vmatmul.mubr.f32.gmra.mrb[0].mxu0 %v257
    %v390 = vpop.f32.mrb[0].mxu0
    %v391 = vadd.f32 0.0, %v390
    %v392 = vpop.f32.mrb[0].mxu0
    %393 = vmatprep.mubr.f32.mxu0 %v262
    %394 = vmatmul.mubr.f32.gmra.mrb[0].mxu0 %v261
    %v395 = vpop.f32.mrb[0].mxu0
    %v396 = vadd.f32 0.0, %v395
    %v397 = vpop.f32.mrb[0].mxu0
    %398 = vmatprep.mubr.f32.mxu0 %v266
    %399 = vmatmul.mubr.f32.gmra.mrb[0].mxu0 %v265
    %v400 = vpop.f32.mrb[0].mxu0
    %v401 = vadd.f32 0.0, %v400
    %v402 = vpop.f32.mrb[0].mxu0
    %403 = vmatprep.mubr.f32.mxu0 %v270
    %404 = vmatmul.mubr.f32.gmra.mrb[0].mxu0 %v269
    %v405 = vpop.f32.mrb[0].mxu0
    %v406 = vadd.f32 0.0, %v405
    %v407 = vpop.f32.mrb[0].mxu0
    %408 = vmatprep.mubr.f32.mxu0 %v274
    %409 = vmatmul.mubr.f32.gmra.mrb[0].mxu0 %v273
    %v410 = vpop.f32.mrb[0].mxu0
    %v411 = vadd.f32 0.0, %v410
    %v412 = vpop.f32.mrb[0].mxu0
    %413 = vmatprep.mubr.f32.mxu0 %v278
    %414 = vmatmul.mubr.f32.gmra.mrb[0].mxu0 %v277
    %v415 = vpop.f32.mrb[0].mxu0
    %v416 = vadd.f32 0.0, %v415
    %v417 = vpop.f32.mrb[0].mxu0
    %418 = vmatprep.mubr.f32.mxu0 %v282
    %419 = vmatmul.mubr.f32.gmra.mrb[0].mxu0 %v281
    %v420 = vpop.f32.mrb[0].mxu0
    %v421 = vadd.f32 0.0, %v420
    %v422 = vpop.f32.mrb[0].mxu0
    %423 = vmatprep.mubr.f32.mxu0 %v286
    %424 = vmatmul.mubr.f32.gmra.mrb[0].mxu0 %v285
    %v425 = vpop.f32.mrb[0].mxu0
    %v426 = vadd.f32 0.0, %v425
    %v427 = vpop.f32.mrb[0].mxu0
    %428 = vmatprep.mubr.f32.mxu0 %v290
    %429 = vmatmul.mubr.f32.gmra.mrb[0].mxu0 %v289
    %v430 = vpop.f32.mrb[0].mxu0
    %v431 = vadd.f32 0.0, %v430
    %v432 = vpop.f32.mrb[0].mxu0
    %433 = vmatprep.mubr.f32.mxu0 %v294
    %434 = vmatmul.mubr.f32.gmra.mrb[0].mxu0 %v293
    %v435 = vpop.f32.mrb[0].mxu0
    %v436 = vadd.f32 0.0, %v435
    %v437 = vpop.f32.mrb[0].mxu0
    %438 = vmatprep.mubr.f32.mxu0 %v298
    %439 = vmatmul.mubr.f32.gmra.mrb[0].mxu0 %v297
    %v440 = vpop.f32.mrb[0].mxu0
    %v441 = vadd.f32 0.0, %v440
    %v442 = vpop.f32.mrb[0].mxu0
    %443 = vmatprep.mubr.f32.mxu0 %v302
    %444 = vmatmul.mubr.f32.gmra.mrb[0].mxu0 %v301
    %v445 = vpop.f32.mrb[0].mxu0
    %v446 = vadd.f32 0.0, %v445
    %v447 = vpop.f32.mrb[0].mxu0
    %448 = vmatprep.mubr.f32.mxu0 %v306
    %449 = vmatmul.mubr.f32.gmra.mrb[0].mxu0 %v305
    %v450 = vpop.f32.mrb[0].mxu0
    %v451 = vadd.f32 0.0, %v450
    %v452 = vpop.f32.mrb[0].mxu0
    %453 = vdwg.mxu0
    %454 = vmatprep.subr.mxu0 0.0
    %455 = vmatpush1.msra.mxu0 %v80
    %456 = vmatprep.subr.mxu0 0.0
    %457 = vmatpush1.msra.mxu0 %v81
    %458 = vmatprep.subr.mxu0 0.0
    %459 = vmatpush1.msra.mxu0 %v82
    %460 = vmatprep.subr.mxu0 0.0
    %461 = vmatpush1.msra.mxu0 %v83
    %462 = vmatprep.subr.mxu0 0.0
    %463 = vmatpush1.msra.mxu0 %v84
    %464 = vmatprep.subr.mxu0 0.0
    %465 = vmatpush1.msra.mxu0 %v85
    %466 = vmatprep.subr.mxu0 0.0
    %467 = vmatpush1.msra.mxu0 %v86
    %468 = vmatprep.subr.mxu0 0.0
    %469 = vmatpush1.msra.mxu0 %v87
    %470 = vmatprep.subr.mxu0 0.0
    %471 = vmatpush1.msra.mxu0 %v88
    %472 = vmatprep.subr.mxu0 0.0
    %473 = vmatpush1.msra.mxu0 %v89
    %474 = vmatprep.subr.mxu0 0.0
    %475 = vmatpush1.msra.mxu0 %v90
    %476 = vmatprep.subr.mxu0 0.0
    %477 = vmatpush1.msra.mxu0 %v91
    %478 = vmatprep.subr.mxu0 0.0
    %479 = vmatpush1.msra.mxu0 %v92
    %480 = vmatprep.subr.mxu0 0.0
    %481 = vmatpush1.msra.mxu0 %v93
    %482 = vmatprep.subr.mxu0 0.0
    %483 = vmatpush1.msra.mxu0 %v94
    %484 = vmatprep.subr.mxu0 0.0
    %485 = vmatpush1.msra.mxu0 %v95
    %486 = vmatprep.subr.mxu0 0.0
    %487 = vmatpush1.msra.mxu0 %v96
    %488 = vmatprep.subr.mxu0 0.0
    %489 = vmatpush1.msra.mxu0 %v97
    %490 = vmatprep.subr.mxu0 0.0
    %491 = vmatpush1.msra.mxu0 %v98
    %492 = vmatprep.subr.mxu0 0.0
    %493 = vmatpush1.msra.mxu0 %v99
    %494 = vmatprep.subr.mxu0 0.0
    %495 = vmatpush1.msra.mxu0 %v100
    %496 = vmatprep.subr.mxu0 0.0
    %497 = vmatpush1.msra.mxu0 %v101
    %498 = vmatprep.subr.mxu0 0.0
    %499 = vmatpush1.msra.mxu0 %v102
    %500 = vmatprep.subr.mxu0 0.0
    %501 = vmatpush1.msra.mxu0 %v103
    %502 = vmatprep.subr.mxu0 0.0
    %503 = vmatpush1.msra.mxu0 %v104
    %504 = vmatprep.subr.mxu0 0.0
    %505 = vmatpush1.msra.mxu0 %v105
    %506 = vmatprep.subr.mxu0 0.0
    %507 = vmatpush1.msra.mxu0 %v106
    %508 = vmatprep.subr.mxu0 0.0
    %509 = vmatpush1.msra.mxu0 %v107
    %510 = vmatprep.subr.mxu0 0.0
    %511 = vmatpush1.msra.mxu0 %v108
    %512 = vmatprep.subr.mxu0 0.0
    %513 = vmatpush1.msra.mxu0 %v109
    %514 = vmatprep.subr.mxu0 0.0
    %515 = vmatpush1.msra.mxu0 %v110
    %516 = vmatprep.subr.mxu0 0.0
    %517 = vmatpush1.msra.mxu0 %v111
    %518 = vmatprep.mubr.f32.mxu0 %v248
    %519 = vmatmul.mubr.f32.gmra.mrb[0].mxu0 %v247
    %v520 = vpop.f32.mrb[0].mxu0
    %v521 = vadd.f32 %v376, %v520
    %v522 = vpop.f32.mrb[0].mxu0
    %523 = vmatprep.mubr.f32.mxu0 %v252
    %524 = vmatmul.mubr.f32.gmra.mrb[0].mxu0 %v251
    %v525 = vpop.f32.mrb[0].mxu0
    %v526 = vadd.f32 %v381, %v525
    %v527 = vpop.f32.mrb[0].mxu0
    %528 = vmatprep.mubr.f32.mxu0 %v256
    %529 = vmatmul.mubr.f32.gmra.mrb[0].mxu0 %v255
    %v530 = vpop.f32.mrb[0].mxu0
    %v531 = vadd.f32 %v386, %v530
    %v532 = vpop.f32.mrb[0].mxu0
    %533 = vmatprep.mubr.f32.mxu0 %v260
    %534 = vmatmul.mubr.f32.gmra.mrb[0].mxu0 %v259
    %v535 = vpop.f32.mrb[0].mxu0
    %v536 = vadd.f32 %v391, %v535
    %v537 = vpop.f32.mrb[0].mxu0
    %538 = vmatprep.mubr.f32.mxu0 %v264
    %539 = vmatmul.mubr.f32.gmra.mrb[0].mxu0 %v263
    %v540 = vpop.f32.mrb[0].mxu0
    %v541 = vadd.f32 %v396, %v540
    %v542 = vpop.f32.mrb[0].mxu0
    %543 = vmatprep.mubr.f32.mxu0 %v268
    %544 = vmatmul.mubr.f32.gmra.mrb[0].mxu0 %v267
    %v545 = vpop.f32.mrb[0].mxu0
    %v546 = vadd.f32 %v401, %v545
    %v547 = vpop.f32.mrb[0].mxu0
    %548 = vmatprep.mubr.f32.mxu0 %v272
    %549 = vmatmul.mubr.f32.gmra.mrb[0].mxu0 %v271
    %v550 = vpop.f32.mrb[0].mxu0
    %v551 = vadd.f32 %v406, %v550
    %v552 = vpop.f32.mrb[0].mxu0
    %553 = vmatprep.mubr.f32.mxu0 %v276
    %554 = vmatmul.mubr.f32.gmra.mrb[0].mxu0 %v275
    %v555 = vpop.f32.mrb[0].mxu0
    %v556 = vadd.f32 %v411, %v555
    %v557 = vpop.f32.mrb[0].mxu0
    %558 = vmatprep.mubr.f32.mxu0 %v280
    %559 = vmatmul.mubr.f32.gmra.mrb[0].mxu0 %v279
    %v560 = vpop.f32.mrb[0].mxu0
    %v561 = vadd.f32 %v416, %v560
    %v562 = vpop.f32.mrb[0].mxu0
    %563 = vmatprep.mubr.f32.mxu0 %v284
    %564 = vmatmul.mubr.f32.gmra.mrb[0].mxu0 %v283
    %v565 = vpop.f32.mrb[0].mxu0
    %v566 = vadd.f32 %v421, %v565
    %v567 = vpop.f32.mrb[0].mxu0
    %568 = vmatprep.mubr.f32.mxu0 %v288
    %569 = vmatmul.mubr.f32.gmra.mrb[0].mxu0 %v287
    %v570 = vpop.f32.mrb[0].mxu0
    %v571 = vadd.f32 %v426, %v570
    %v572 = vpop.f32.mrb[0].mxu0
    %573 = vmatprep.mubr.f32.mxu0 %v292
    %574 = vmatmul.mubr.f32.gmra.mrb[0].mxu0 %v291
    %v575 = vpop.f32.mrb[0].mxu0
    %v576 = vadd.f32 %v431, %v575
    %v577 = vpop.f32.mrb[0].mxu0
    %578 = vmatprep.mubr.f32.mxu0 %v296
    %579 = vmatmul.mubr.f32.gmra.mrb[0].mxu0 %v295
    %v580 = vpop.f32.mrb[0].mxu0
    %v581 = vadd.f32 %v436, %v580
    %v582 = vpop.f32.mrb[0].mxu0
    %583 = vmatprep.mubr.f32.mxu0 %v300
    %584 = vmatmul.mubr.f32.gmra.mrb[0].mxu0 %v299
    %v585 = vpop.f32.mrb[0].mxu0
    %v586 = vadd.f32 %v441, %v585
    %v587 = vpop.f32.mrb[0].mxu0
    %588 = vmatprep.mubr.f32.mxu0 %v304
    %589 = vmatmul.mubr.f32.gmra.mrb[0].mxu0 %v303
    %v590 = vpop.f32.mrb[0].mxu0
    %v591 = vadd.f32 %v446, %v590
    %v592 = vpop.f32.mrb[0].mxu0
    %593 = vmatprep.mubr.f32.mxu0 %v308
    %594 = vmatmul.mubr.f32.gmra.mrb[0].mxu0 %v307
    %v595 = vpop.f32.mrb[0].mxu0
    %v596 = vadd.f32 %v451, %v595
    %v597 = vpop.f32.mrb[0].mxu0
    %598 = vdwg.mxu0
    %v599 = vld [vmem:[%s2] sm:$0xf]
    %600 = vset.pattern.permute.xlu0 1
    %601 = vperm.xlu0 %600, %v117
    %v602 = vpop.permute.xlu0 %601
    %603 = vset.pattern.permute.xlu0 1
    %604 = vperm.xlu0 %603, %v118
    %v605 = vpop.permute.xlu0 %604
    %606 = vset.pattern.permute.xlu0 1
    %607 = vperm.xlu0 %606, %v119
    %v608 = vpop.permute.xlu0 %607
    %609 = vset.pattern.permute.xlu0 1
    %610 = vperm.xlu0 %609, %v120
    %v611 = vpop.permute.xlu0 %610
    %612 = vset.pattern.permute.xlu0 1
    %613 = vperm.xlu0 %612, %v121
    %v614 = vpop.permute.xlu0 %613
    %615 = vset.pattern.permute.xlu0 1
    %616 = vperm.xlu0 %615, %v122
    %v617 = vpop.permute.xlu0 %616
    %618 = vset.pattern.permute.xlu0 1
    %619 = vperm.xlu0 %618, %v123
    %v620 = vpop.permute.xlu0 %619
    %621 = vset.pattern.permute.xlu0 1
    %622 = vperm.xlu0 %621, %v124
    %v623 = vpop.permute.xlu0 %622
    %624 = vset.pattern.permute.xlu0 1
    %625 = vperm.xlu0 %624, %v125
    %v626 = vpop.permute.xlu0 %625
    %627 = vset.pattern.permute.xlu0 1
    %628 = vperm.xlu0 %627, %v126
    %v629 = vpop.permute.xlu0 %628
    %630 = vset.pattern.permute.xlu0 1
    %631 = vperm.xlu0 %630, %v127
    %v632 = vpop.permute.xlu0 %631
    %633 = vset.pattern.permute.xlu0 1
    %634 = vperm.xlu0 %633, %v128
    %v635 = vpop.permute.xlu0 %634
    %636 = vset.pattern.permute.xlu0 1
    %637 = vperm.xlu0 %636, %v129
    %v638 = vpop.permute.xlu0 %637
    %639 = vset.pattern.permute.xlu0 1
    %640 = vperm.xlu0 %639, %v130
    %v641 = vpop.permute.xlu0 %640
    %642 = vset.pattern.permute.xlu0 1
    %643 = vperm.xlu0 %642, %v131
    %v644 = vpop.permute.xlu0 %643
    %645 = vset.pattern.permute.xlu0 1
    %646 = vperm.xlu0 %645, %v132
    %v647 = vpop.permute.xlu0 %646
    %vm648 = vcmp.eq.s32.totalorder %v113, %v602
    %vm649 = vcmp.eq.s32.totalorder %v114, %v602
    %vm650 = vcmp.eq.s32.totalorder %v115, %v602
    %vm651 = vcmp.eq.s32.totalorder %v116, %v602
    %vm652 = vcmp.eq.s32.totalorder %v113, %v605
    %vm653 = vcmp.eq.s32.totalorder %v114, %v605
    %vm654 = vcmp.eq.s32.totalorder %v115, %v605
    %vm655 = vcmp.eq.s32.totalorder %v116, %v605
    %vm656 = vcmp.eq.s32.totalorder %v113, %v608
    %vm657 = vcmp.eq.s32.totalorder %v114, %v608
    %vm658 = vcmp.eq.s32.totalorder %v115, %v608
    %vm659 = vcmp.eq.s32.totalorder %v116, %v608
    %vm660 = vcmp.eq.s32.totalorder %v113, %v611
    %vm661 = vcmp.eq.s32.totalorder %v114, %v611
    %vm662 = vcmp.eq.s32.totalorder %v115, %v611
    %vm663 = vcmp.eq.s32.totalorder %v116, %v611
    %vm664 = vcmp.eq.s32.totalorder %v113, %v614
    %vm665 = vcmp.eq.s32.totalorder %v114, %v614
    %vm666 = vcmp.eq.s32.totalorder %v115, %v614
    %vm667 = vcmp.eq.s32.totalorder %v116, %v614
    %vm668 = vcmp.eq.s32.totalorder %v113, %v617
    %vm669 = vcmp.eq.s32.totalorder %v114, %v617
    %vm670 = vcmp.eq.s32.totalorder %v115, %v617
    %vm671 = vcmp.eq.s32.totalorder %v116, %v617
    %vm672 = vcmp.eq.s32.totalorder %v113, %v620
    %vm673 = vcmp.eq.s32.totalorder %v114, %v620
    %vm674 = vcmp.eq.s32.totalorder %v115, %v620
    %vm675 = vcmp.eq.s32.totalorder %v116, %v620
    %vm676 = vcmp.eq.s32.totalorder %v113, %v623
    %vm677 = vcmp.eq.s32.totalorder %v114, %v623
    %vm678 = vcmp.eq.s32.totalorder %v115, %v623
    %vm679 = vcmp.eq.s32.totalorder %v116, %v623
    %vm680 = vcmp.eq.s32.totalorder %v113, %v626
    %vm681 = vcmp.eq.s32.totalorder %v114, %v626
    %vm682 = vcmp.eq.s32.totalorder %v115, %v626
    %vm683 = vcmp.eq.s32.totalorder %v116, %v626
    %vm684 = vcmp.eq.s32.totalorder %v113, %v629
    %vm685 = vcmp.eq.s32.totalorder %v114, %v629
    %vm686 = vcmp.eq.s32.totalorder %v115, %v629
    %vm687 = vcmp.eq.s32.totalorder %v116, %v629
    %vm688 = vcmp.eq.s32.totalorder %v113, %v632
    %vm689 = vcmp.eq.s32.totalorder %v114, %v632
    %vm690 = vcmp.eq.s32.totalorder %v115, %v632
    %vm691 = vcmp.eq.s32.totalorder %v116, %v632
    %vm692 = vcmp.eq.s32.totalorder %v113, %v635
    %vm693 = vcmp.eq.s32.totalorder %v114, %v635
    %vm694 = vcmp.eq.s32.totalorder %v115, %v635
    %vm695 = vcmp.eq.s32.totalorder %v116, %v635
    %vm696 = vcmp.eq.s32.totalorder %v113, %v638
    %vm697 = vcmp.eq.s32.totalorder %v114, %v638
    %vm698 = vcmp.eq.s32.totalorder %v115, %v638
    %vm699 = vcmp.eq.s32.totalorder %v116, %v638
    %vm700 = vcmp.eq.s32.totalorder %v113, %v641
    %vm701 = vcmp.eq.s32.totalorder %v114, %v641
    %vm702 = vcmp.eq.s32.totalorder %v115, %v641
    %vm703 = vcmp.eq.s32.totalorder %v116, %v641
    %vm704 = vcmp.eq.s32.totalorder %v113, %v644
    %vm705 = vcmp.eq.s32.totalorder %v114, %v644
    %vm706 = vcmp.eq.s32.totalorder %v115, %v644
    %vm707 = vcmp.eq.s32.totalorder %v116, %v644
    %vm708 = vcmp.eq.s32.totalorder %v113, %v647
    %vm709 = vcmp.eq.s32.totalorder %v114, %v647
    %vm710 = vcmp.eq.s32.totalorder %v115, %v647
    %vm711 = vcmp.eq.s32.totalorder %v116, %v647
    %v712 = vsel %vm648, 1.0, 0.0
    %v713 = vsel %vm649, 1.0, 0.0
    %v714 = vsel %vm650, 1.0, 0.0
    %v715 = vsel %vm651, 1.0, 0.0
    %v716 = vsel %vm652, 1.0, 0.0
    %v717 = vsel %vm653, 1.0, 0.0
    %v718 = vsel %vm654, 1.0, 0.0
    %v719 = vsel %vm655, 1.0, 0.0
    %v720 = vsel %vm656, 1.0, 0.0
    %v721 = vsel %vm657, 1.0, 0.0
    %v722 = vsel %vm658, 1.0, 0.0
    %v723 = vsel %vm659, 1.0, 0.0
    %v724 = vsel %vm660, 1.0, 0.0
    %v725 = vsel %vm661, 1.0, 0.0
    %v726 = vsel %vm662, 1.0, 0.0
    %v727 = vsel %vm663, 1.0, 0.0
    %v728 = vsel %vm664, 1.0, 0.0
    %v729 = vsel %vm665, 1.0, 0.0
    %v730 = vsel %vm666, 1.0, 0.0
    %v731 = vsel %vm667, 1.0, 0.0
    %v732 = vsel %vm668, 1.0, 0.0
    %v733 = vsel %vm669, 1.0, 0.0
    %v734 = vsel %vm670, 1.0, 0.0
    %v735 = vsel %vm671, 1.0, 0.0
    %v736 = vsel %vm672, 1.0, 0.0
    %v737 = vsel %vm673, 1.0, 0.0
    %v738 = vsel %vm674, 1.0, 0.0
    %v739 = vsel %vm675, 1.0, 0.0
    %v740 = vsel %vm676, 1.0, 0.0
    %v741 = vsel %vm677, 1.0, 0.0
    %v742 = vsel %vm678, 1.0, 0.0
    %v743 = vsel %vm679, 1.0, 0.0
    %v744 = vsel %vm680, 1.0, 0.0
    %v745 = vsel %vm681, 1.0, 0.0
    %v746 = vsel %vm682, 1.0, 0.0
    %v747 = vsel %vm683, 1.0, 0.0
    %v748 = vsel %vm684, 1.0, 0.0
    %v749 = vsel %vm685, 1.0, 0.0
    %v750 = vsel %vm686, 1.0, 0.0
    %v751 = vsel %vm687, 1.0, 0.0
    %v752 = vsel %vm688, 1.0, 0.0
    %v753 = vsel %vm689, 1.0, 0.0
    %v754 = vsel %vm690, 1.0, 0.0
    %v755 = vsel %vm691, 1.0, 0.0
    %v756 = vsel %vm692, 1.0, 0.0
    %v757 = vsel %vm693, 1.0, 0.0
    %v758 = vsel %vm694, 1.0, 0.0
    %v759 = vsel %vm695, 1.0, 0.0
    %v760 = vsel %vm696, 1.0, 0.0
    %v761 = vsel %vm697, 1.0, 0.0
    %v762 = vsel %vm698, 1.0, 0.0
    %v763 = vsel %vm699, 1.0, 0.0
    %v764 = vsel %vm700, 1.0, 0.0
    %v765 = vsel %vm701, 1.0, 0.0
    %v766 = vsel %vm702, 1.0, 0.0
    %v767 = vsel %vm703, 1.0, 0.0
    %v768 = vsel %vm704, 1.0, 0.0
    %v769 = vsel %vm705, 1.0, 0.0
    %v770 = vsel %vm706, 1.0, 0.0
    %v771 = vsel %vm707, 1.0, 0.0
    %v772 = vsel %vm708, 1.0, 0.0
    %v773 = vsel %vm709, 1.0, 0.0
    %v774 = vsel %vm710, 1.0, 0.0
    %v775 = vsel %vm711, 1.0, 0.0
    %776 = vmatprep.subr.mxu0 0.0
    %777 = vmatpush1.msra.mxu0 %v48
    %778 = vmatprep.subr.mxu0 0.0
    %779 = vmatpush1.msra.mxu0 %v49
    %780 = vmatprep.subr.mxu0 0.0
    %781 = vmatpush1.msra.mxu0 %v50
    %782 = vmatprep.subr.mxu0 0.0
    %783 = vmatpush1.msra.mxu0 %v51
    %784 = vmatprep.subr.mxu0 0.0
    %785 = vmatpush1.msra.mxu0 %v52
    %786 = vmatprep.subr.mxu0 0.0
    %787 = vmatpush1.msra.mxu0 %v53
    %788 = vmatprep.subr.mxu0 0.0
    %789 = vmatpush1.msra.mxu0 %v54
    %790 = vmatprep.subr.mxu0 0.0
    %791 = vmatpush1.msra.mxu0 %v55
    %792 = vmatprep.subr.mxu0 0.0
    %793 = vmatpush1.msra.mxu0 %v56
    %794 = vmatprep.subr.mxu0 0.0
    %795 = vmatpush1.msra.mxu0 %v57
    %796 = vmatprep.subr.mxu0 0.0
    %797 = vmatpush1.msra.mxu0 %v58
    %798 = vmatprep.subr.mxu0 0.0
    %799 = vmatpush1.msra.mxu0 %v59
    %800 = vmatprep.subr.mxu0 0.0
    %801 = vmatpush1.msra.mxu0 %v60
    %802 = vmatprep.subr.mxu0 0.0
    %803 = vmatpush1.msra.mxu0 %v61
    %804 = vmatprep.subr.mxu0 0.0
    %805 = vmatpush1.msra.mxu0 %v62
    %806 = vmatprep.subr.mxu0 0.0
    %807 = vmatpush1.msra.mxu0 %v63
    %808 = vmatprep.subr.mxu0 0.0
    %809 = vmatpush1.msra.mxu0 %v64
    %810 = vmatprep.subr.mxu0 0.0
    %811 = vmatpush1.msra.mxu0 %v65
    %812 = vmatprep.subr.mxu0 0.0
    %813 = vmatpush1.msra.mxu0 %v66
    %814 = vmatprep.subr.mxu0 0.0
    %815 = vmatpush1.msra.mxu0 %v67
    %816 = vmatprep.subr.mxu0 0.0
    %817 = vmatpush1.msra.mxu0 %v68
    %818 = vmatprep.subr.mxu0 0.0
    %819 = vmatpush1.msra.mxu0 %v69
    %820 = vmatprep.subr.mxu0 0.0
    %821 = vmatpush1.msra.mxu0 %v70
    %822 = vmatprep.subr.mxu0 0.0
    %823 = vmatpush1.msra.mxu0 %v71
    %824 = vmatprep.subr.mxu0 0.0
    %825 = vmatpush1.msra.mxu0 %v72
    %826 = vmatprep.subr.mxu0 0.0
    %827 = vmatpush1.msra.mxu0 %v73
    %828 = vmatprep.subr.mxu0 0.0
    %829 = vmatpush1.msra.mxu0 %v74
    %830 = vmatprep.subr.mxu0 0.0
    %831 = vmatpush1.msra.mxu0 %v75
    %832 = vmatprep.subr.mxu0 0.0
    %833 = vmatpush1.msra.mxu0 %v76
    %834 = vmatprep.subr.mxu0 0.0
    %835 = vmatpush1.msra.mxu0 %v77
    %836 = vmatprep.subr.mxu0 0.0
    %837 = vmatpush1.msra.mxu0 %v78
    %838 = vmatprep.subr.mxu0 0.0
    %839 = vmatpush1.msra.mxu0 %v79
    %840 = vmatprep.mubr.f32.mxu0 %v713
    %841 = vmatmul.mubr.f32.gmra.mrb[0].mxu0 %v712
    %v842 = vpop.f32.mrb[0].mxu0
    %v843 = vadd.f32 0.0, %v842
    %v844 = vpop.f32.mrb[0].mxu0
    %845 = vmatprep.mubr.f32.mxu0 %v717
    %846 = vmatmul.mubr.f32.gmra.mrb[0].mxu0 %v716
    %v847 = vpop.f32.mrb[0].mxu0
    %v848 = vadd.f32 0.0, %v847
    %v849 = vpop.f32.mrb[0].mxu0
    %850 = vmatprep.mubr.f32.mxu0 %v721
    %851 = vmatmul.mubr.f32.gmra.mrb[0].mxu0 %v720
    %v852 = vpop.f32.mrb[0].mxu0
    %v853 = vadd.f32 0.0, %v852
    %v854 = vpop.f32.mrb[0].mxu0
    %855 = vmatprep.mubr.f32.mxu0 %v725
    %856 = vmatmul.mubr.f32.gmra.mrb[0].mxu0 %v724
    %v857 = vpop.f32.mrb[0].mxu0
    %v858 = vadd.f32 0.0, %v857
    %v859 = vpop.f32.mrb[0].mxu0
    %860 = vmatprep.mubr.f32.mxu0 %v729
    %861 = vmatmul.mubr.f32.gmra.mrb[0].mxu0 %v728
    %v862 = vpop.f32.mrb[0].mxu0
    %v863 = vadd.f32 0.0, %v862
    %v864 = vpop.f32.mrb[0].mxu0
    %865 = vmatprep.mubr.f32.mxu0 %v733
    %866 = vmatmul.mubr.f32.gmra.mrb[0].mxu0 %v732
    %v867 = vpop.f32.mrb[0].mxu0
    %v868 = vadd.f32 0.0, %v867
    %v869 = vpop.f32.mrb[0].mxu0
    %870 = vmatprep.mubr.f32.mxu0 %v737
    %871 = vmatmul.mubr.f32.gmra.mrb[0].mxu0 %v736
    %v872 = vpop.f32.mrb[0].mxu0
    %v873 = vadd.f32 0.0, %v872
    %v874 = vpop.f32.mrb[0].mxu0
    %875 = vmatprep.mubr.f32.mxu0 %v741
    %876 = vmatmul.mubr.f32.gmra.mrb[0].mxu0 %v740
    %v877 = vpop.f32.mrb[0].mxu0
    %v878 = vadd.f32 0.0, %v877
    %v879 = vpop.f32.mrb[0].mxu0
    %880 = vmatprep.mubr.f32.mxu0 %v745
    %881 = vmatmul.mubr.f32.gmra.mrb[0].mxu0 %v744
    %v882 = vpop.f32.mrb[0].mxu0
    %v883 = vadd.f32 0.0, %v882
    %v884 = vpop.f32.mrb[0].mxu0
    %885 = vmatprep.mubr.f32.mxu0 %v749
    %886 = vmatmul.mubr.f32.gmra.mrb[0].mxu0 %v748
    %v887 = vpop.f32.mrb[0].mxu0
    %v888 = vadd.f32 0.0, %v887
    %v889 = vpop.f32.mrb[0].mxu0
    %890 = vmatprep.mubr.f32.mxu0 %v753
    %891 = vmatmul.mubr.f32.gmra.mrb[0].mxu0 %v752
    %v892 = vpop.f32.mrb[0].mxu0
    %v893 = vadd.f32 0.0, %v892
    %v894 = vpop.f32.mrb[0].mxu0
    %895 = vmatprep.mubr.f32.mxu0 %v757
    %896 = vmatmul.mubr.f32.gmra.mrb[0].mxu0 %v756
    %v897 = vpop.f32.mrb[0].mxu0
    %v898 = vadd.f32 0.0, %v897
    %v899 = vpop.f32.mrb[0].mxu0
    %900 = vmatprep.mubr.f32.mxu0 %v761
    %901 = vmatmul.mubr.f32.gmra.mrb[0].mxu0 %v760
    %v902 = vpop.f32.mrb[0].mxu0
    %v903 = vadd.f32 0.0, %v902
    %v904 = vpop.f32.mrb[0].mxu0
    %905 = vmatprep.mubr.f32.mxu0 %v765
    %906 = vmatmul.mubr.f32.gmra.mrb[0].mxu0 %v764
    %v907 = vpop.f32.mrb[0].mxu0
    %v908 = vadd.f32 0.0, %v907
    %v909 = vpop.f32.mrb[0].mxu0
    %910 = vmatprep.mubr.f32.mxu0 %v769
    %911 = vmatmul.mubr.f32.gmra.mrb[0].mxu0 %v768
    %v912 = vpop.f32.mrb[0].mxu0
    %v913 = vadd.f32 0.0, %v912
    %v914 = vpop.f32.mrb[0].mxu0
    %915 = vmatprep.mubr.f32.mxu0 %v773
    %916 = vmatmul.mubr.f32.gmra.mrb[0].mxu0 %v772
    %v917 = vpop.f32.mrb[0].mxu0
    %v918 = vadd.f32 0.0, %v917
    %v919 = vpop.f32.mrb[0].mxu0
    %920 = vdwg.mxu0
    %921 = vmatprep.subr.mxu0 0.0
    %922 = vmatpush1.msra.mxu0 %v80
    %923 = vmatprep.subr.mxu0 0.0
    %924 = vmatpush1.msra.mxu0 %v81
    %925 = vmatprep.subr.mxu0 0.0
    %926 = vmatpush1.msra.mxu0 %v82
    %927 = vmatprep.subr.mxu0 0.0
    %928 = vmatpush1.msra.mxu0 %v83
    %929 = vmatprep.subr.mxu0 0.0
    %930 = vmatpush1.msra.mxu0 %v84
    %931 = vmatprep.subr.mxu0 0.0
    %932 = vmatpush1.msra.mxu0 %v85
    %933 = vmatprep.subr.mxu0 0.0
    %934 = vmatpush1.msra.mxu0 %v86
    %935 = vmatprep.subr.mxu0 0.0
    %936 = vmatpush1.msra.mxu0 %v87
    %937 = vmatprep.subr.mxu0 0.0
    %938 = vmatpush1.msra.mxu0 %v88
    %939 = vmatprep.subr.mxu0 0.0
    %940 = vmatpush1.msra.mxu0 %v89
    %941 = vmatprep.subr.mxu0 0.0
    %942 = vmatpush1.msra.mxu0 %v90
    %943 = vmatprep.subr.mxu0 0.0
    %944 = vmatpush1.msra.mxu0 %v91
    %945 = vmatprep.subr.mxu0 0.0
    %946 = vmatpush1.msra.mxu0 %v92
    %947 = vmatprep.subr.mxu0 0.0
    %948 = vmatpush1.msra.mxu0 %v93
    %949 = vmatprep.subr.mxu0 0.0
    %950 = vmatpush1.msra.mxu0 %v94
    %951 = vmatprep.subr.mxu0 0.0
    %952 = vmatpush1.msra.mxu0 %v95
    %953 = vmatprep.subr.mxu0 0.0
    %954 = vmatpush1.msra.mxu0 %v96
    %955 = vmatprep.subr.mxu0 0.0
    %956 = vmatpush1.msra.mxu0 %v97
    %957 = vmatprep.subr.mxu0 0.0
    %958 = vmatpush1.msra.mxu0 %v98
    %959 = vmatprep.subr.mxu0 0.0
    %960 = vmatpush1.msra.mxu0 %v99
    %961 = vmatprep.subr.mxu0 0.0
    %962 = vmatpush1.msra.mxu0 %v100
    %963 = vmatprep.subr.mxu0 0.0
    %964 = vmatpush1.msra.mxu0 %v101
    %965 = vmatprep.subr.mxu0 0.0
    %966 = vmatpush1.msra.mxu0 %v102
    %967 = vmatprep.subr.mxu0 0.0
    %968 = vmatpush1.msra.mxu0 %v103
    %969 = vmatprep.subr.mxu0 0.0
    %970 = vmatpush1.msra.mxu0 %v104
    %971 = vmatprep.subr.mxu0 0.0
    %972 = vmatpush1.msra.mxu0 %v105
    %973 = vmatprep.subr.mxu0 0.0
    %974 = vmatpush1.msra.mxu0 %v106
    %975 = vmatprep.subr.mxu0 0.0
    %976 = vmatpush1.msra.mxu0 %v107
    %977 = vmatprep.subr.mxu0 0.0
    %978 = vmatpush1.msra.mxu0 %v108
    %979 = vmatprep.subr.mxu0 0.0
    %980 = vmatpush1.msra.mxu0 %v109
    %981 = vmatprep.subr.mxu0 0.0
    %982 = vmatpush1.msra.mxu0 %v110
    %983 = vmatprep.subr.mxu0 0.0
    %984 = vmatpush1.msra.mxu0 %v111
    %985 = vmatprep.mubr.f32.mxu0 %v715
    %986 = vmatmul.mubr.f32.gmra.mrb[0].mxu0 %v714
    %v987 = vpop.f32.mrb[0].mxu0
    %v988 = vadd.f32 %v843, %v987
    %v989 = vpop.f32.mrb[0].mxu0
    %990 = vmatprep.mubr.f32.mxu0 %v719
    %991 = vmatmul.mubr.f32.gmra.mrb[0].mxu0 %v718
    %v992 = vpop.f32.mrb[0].mxu0
    %v993 = vadd.f32 %v848, %v992
    %v994 = vpop.f32.mrb[0].mxu0
    %995 = vmatprep.mubr.f32.mxu0 %v723
    %996 = vmatmul.mubr.f32.gmra.mrb[0].mxu0 %v722
    %v997 = vpop.f32.mrb[0].mxu0
    %v998 = vadd.f32 %v853, %v997
    %v999 = vpop.f32.mrb[0].mxu0
    %1000 = vmatprep.mubr.f32.mxu0 %v727
    %1001 = vmatmul.mubr.f32.gmra.mrb[0].mxu0 %v726
    %v1002 = vpop.f32.mrb[0].mxu0
    %v1003 = vadd.f32 %v858, %v1002
    %v1004 = vpop.f32.mrb[0].mxu0
    %1005 = vmatprep.mubr.f32.mxu0 %v731
    %1006 = vmatmul.mubr.f32.gmra.mrb[0].mxu0 %v730
    %v1007 = vpop.f32.mrb[0].mxu0
    %v1008 = vadd.f32 %v863, %v1007
    %v1009 = vpop.f32.mrb[0].mxu0
    %1010 = vmatprep.mubr.f32.mxu0 %v735
    %1011 = vmatmul.mubr.f32.gmra.mrb[0].mxu0 %v734
    %v1012 = vpop.f32.mrb[0].mxu0
    %v1013 = vadd.f32 %v868, %v1012
    %v1014 = vpop.f32.mrb[0].mxu0
    %1015 = vmatprep.mubr.f32.mxu0 %v739
    %1016 = vmatmul.mubr.f32.gmra.mrb[0].mxu0 %v738
    %v1017 = vpop.f32.mrb[0].mxu0
    %v1018 = vadd.f32 %v873, %v1017
    %v1019 = vpop.f32.mrb[0].mxu0
    %1020 = vmatprep.mubr.f32.mxu0 %v743
    %1021 = vmatmul.mubr.f32.gmra.mrb[0].mxu0 %v742
    %v1022 = vpop.f32.mrb[0].mxu0
    %v1023 = vadd.f32 %v878, %v1022
    %v1024 = vpop.f32.mrb[0].mxu0
    %1025 = vmatprep.mubr.f32.mxu0 %v747
    %1026 = vmatmul.mubr.f32.gmra.mrb[0].mxu0 %v746
    %v1027 = vpop.f32.mrb[0].mxu0
    %v1028 = vadd.f32 %v883, %v1027
    %v1029 = vpop.f32.mrb[0].mxu0
    %1030 = vmatprep.mubr.f32.mxu0 %v751
    %1031 = vmatmul.mubr.f32.gmra.mrb[0].mxu0 %v750
    %v1032 = vpop.f32.mrb[0].mxu0
    %v1033 = vadd.f32 %v888, %v1032
    %v1034 = vpop.f32.mrb[0].mxu0
    %1035 = vmatprep.mubr.f32.mxu0 %v755
    %1036 = vmatmul.mubr.f32.gmra.mrb[0].mxu0 %v754
    %v1037 = vpop.f32.mrb[0].mxu0
    %v1038 = vadd.f32 %v893, %v1037
    %v1039 = vpop.f32.mrb[0].mxu0
    %1040 = vmatprep.mubr.f32.mxu0 %v759
    %1041 = vmatmul.mubr.f32.gmra.mrb[0].mxu0 %v758
    %v1042 = vpop.f32.mrb[0].mxu0
    %v1043 = vadd.f32 %v898, %v1042
    %v1044 = vpop.f32.mrb[0].mxu0
    %1045 = vmatprep.mubr.f32.mxu0 %v763
    %1046 = vmatmul.mubr.f32.gmra.mrb[0].mxu0 %v762
    %v1047 = vpop.f32.mrb[0].mxu0
    %v1048 = vadd.f32 %v903, %v1047
    %v1049 = vpop.f32.mrb[0].mxu0
    %1050 = vmatprep.mubr.f32.mxu0 %v767
    %1051 = vmatmul.mubr.f32.gmra.mrb[0].mxu0 %v766
    %v1052 = vpop.f32.mrb[0].mxu0
    %v1053 = vadd.f32 %v908, %v1052
    %v1054 = vpop.f32.mrb[0].mxu0
    %1055 = vmatprep.mubr.f32.mxu0 %v771
    %1056 = vmatmul.mubr.f32.gmra.mrb[0].mxu0 %v770
    %v1057 = vpop.f32.mrb[0].mxu0
    %v1058 = vadd.f32 %v913, %v1057
    %v1059 = vpop.f32.mrb[0].mxu0
    %1060 = vmatprep.mubr.f32.mxu0 %v775
    %1061 = vmatmul.mubr.f32.gmra.mrb[0].mxu0 %v774
    %v1062 = vpop.f32.mrb[0].mxu0
    %v1063 = vadd.f32 %v918, %v1062
    %v1064 = vpop.f32.mrb[0].mxu0
    %1065 = vdwg.mxu0
    %s1066 = scalar_lea.vmem %s2, 4
    %v1067 = vld [vmem:[%s1066] sm:$0xf]
    %vm1068 = vcmask 31744
    %v1070 = vsel %vm1068, %v988, 0
    %v1073 = vsel %vm1068, %v993, 0
    %v1076 = vsel %vm1068, %v998, 0
    %v1079 = vsel %vm1068, %v1003, 0
    %v1082 = vsel %vm1068, %v1008, 0
    %v1085 = vsel %vm1068, %v1013, 0
    %v1088 = vsel %vm1068, %v1018, 0
    %v1091 = vsel %vm1068, %v1023, 0
    %v1094 = vsel %vm1068, %v1028, 0
    %v1097 = vsel %vm1068, %v1033, 0
    %v1100 = vsel %vm1068, %v1038, 0
    %v1103 = vsel %vm1068, %v1043, 0
    %v1106 = vsel %vm1068, %v1048, 0
    %v1109 = vsel %vm1068, %v1053, 0
    %v1112 = vsel %vm1068, %v1058, 0
    %v1115 = vsel %vm1068, %v1063, 0
    %vm1117 = vcmask 1043456
    %v1119 = vsel %vm1117, %v1067, 0
    %1121 = vmatprep.subr.mxu0 0.0
    %1122 = vmatpush1.msra.mxu0 %v1119
    %1123 = vmatprep.subr.mxu0 0.0
    %1124 = vmatpush1.msra.mxu0 0.0
    %1125 = vmatprep.subr.mxu0 0.0
    %1126 = vmatpush1.msra.mxu0 0.0
    %1127 = vmatprep.subr.mxu0 0.0
    %1128 = vmatpush1.msra.mxu0 0.0
    %1129 = vmatprep.subr.mxu0 0.0
    %1130 = vmatpush1.msra.mxu0 0.0
    %1131 = vmatprep.subr.mxu0 0.0
    %1132 = vmatpush1.msra.mxu0 0.0
    %1133 = vmatprep.subr.mxu0 0.0
    %1134 = vmatpush1.msra.mxu0 0.0
    %1135 = vmatprep.subr.mxu0 0.0
    %1136 = vmatpush1.msra.mxu0 0.0
    %1137 = vmatprep.subr.mxu0 0.0
    %1138 = vmatpush1.msra.mxu0 0.0
    %1139 = vmatprep.subr.mxu0 0.0
    %1140 = vmatpush1.msra.mxu0 0.0
    %1141 = vmatprep.subr.mxu0 0.0
    %1142 = vmatpush1.msra.mxu0 0.0
    %1143 = vmatprep.subr.mxu0 0.0
    %1144 = vmatpush1.msra.mxu0 0.0
    %1145 = vmatprep.subr.mxu0 0.0
    %1146 = vmatpush1.msra.mxu0 0.0
    %1147 = vmatprep.subr.mxu0 0.0
    %1148 = vmatpush1.msra.mxu0 0.0
    %1149 = vmatprep.subr.mxu0 0.0
    %1150 = vmatpush1.msra.mxu0 0.0
    %1151 = vmatprep.subr.mxu0 0.0
    %1152 = vmatpush1.msra.mxu0 0.0
    %1153 = vmatprep.subr.mxu0 0.0
    %1154 = vmatpush1.msra.mxu0 0.0
    %1155 = vmatprep.subr.mxu0 0.0
    %1156 = vmatpush1.msra.mxu0 0.0
    %1157 = vmatprep.subr.mxu0 0.0
    %1158 = vmatpush1.msra.mxu0 0.0
    %1159 = vmatprep.subr.mxu0 0.0
    %1160 = vmatpush1.msra.mxu0 0.0
    %1161 = vmatprep.subr.mxu0 0.0
    %1162 = vmatpush1.msra.mxu0 0.0
    %1163 = vmatprep.subr.mxu0 0.0
    %1164 = vmatpush1.msra.mxu0 0.0
    %1165 = vmatprep.subr.mxu0 0.0
    %1166 = vmatpush1.msra.mxu0 0.0
    %1167 = vmatprep.subr.mxu0 0.0
    %1168 = vmatpush1.msra.mxu0 0.0
    %1169 = vmatprep.subr.mxu0 0.0
    %1170 = vmatpush1.msra.mxu0 0.0
    %1171 = vmatprep.subr.mxu0 0.0
    %1172 = vmatpush1.msra.mxu0 0.0
    %1173 = vmatprep.subr.mxu0 0.0
    %1174 = vmatpush1.msra.mxu0 0.0
    %1175 = vmatprep.subr.mxu0 0.0
    %1176 = vmatpush1.msra.mxu0 0.0
    %1177 = vmatprep.subr.mxu0 0.0
    %1178 = vmatpush1.msra.mxu0 0.0
    %1179 = vmatprep.subr.mxu0 0.0
    %1180 = vmatpush1.msra.mxu0 0.0
    %1181 = vmatprep.subr.mxu0 0.0
    %1182 = vmatpush1.msra.mxu0 0.0
    %1183 = vmatprep.subr.mxu0 0.0
    %1184 = vmatpush1.msra.mxu0 0.0
    %1185 = vmatprep.mubr.f32.mxu0 0.0
    %1186 = vmatmul.mubr.f32.gmra.mrb[0].mxu0 %v1070
    %v1187 = vpop.f32.mrb[0].mxu0
    %v1188 = vadd.f32 0.0, %v1187
    %v1189 = vpop.f32.mrb[0].mxu0
    %1190 = vmatprep.mubr.f32.mxu0 0.0
    %1191 = vmatmul.mubr.f32.gmra.mrb[0].mxu0 %v1073
    %v1192 = vpop.f32.mrb[0].mxu0
    %v1193 = vadd.f32 0.0, %v1192
    %v1194 = vpop.f32.mrb[0].mxu0
    %1195 = vmatprep.mubr.f32.mxu0 0.0
    %1196 = vmatmul.mubr.f32.gmra.mrb[0].mxu0 %v1076
    %v1197 = vpop.f32.mrb[0].mxu0
    %v1198 = vadd.f32 0.0, %v1197
    %v1199 = vpop.f32.mrb[0].mxu0
    %1200 = vmatprep.mubr.f32.mxu0 0.0
    %1201 = vmatmul.mubr.f32.gmra.mrb[0].mxu0 %v1079
    %v1202 = vpop.f32.mrb[0].mxu0
    %v1203 = vadd.f32 0.0, %v1202
    %v1204 = vpop.f32.mrb[0].mxu0
    %1205 = vmatprep.mubr.f32.mxu0 0.0
    %1206 = vmatmul.mubr.f32.gmra.mrb[0].mxu0 %v1082
    %v1207 = vpop.f32.mrb[0].mxu0
    %v1208 = vadd.f32 0.0, %v1207
    %v1209 = vpop.f32.mrb[0].mxu0
    %1210 = vmatprep.mubr.f32.mxu0 0.0
    %1211 = vmatmul.mubr.f32.gmra.mrb[0].mxu0 %v1085
    %v1212 = vpop.f32.mrb[0].mxu0
    %v1213 = vadd.f32 0.0, %v1212
    %v1214 = vpop.f32.mrb[0].mxu0
    %1215 = vmatprep.mubr.f32.mxu0 0.0
    %1216 = vmatmul.mubr.f32.gmra.mrb[0].mxu0 %v1088
    %v1217 = vpop.f32.mrb[0].mxu0
    %v1218 = vadd.f32 0.0, %v1217
    %v1219 = vpop.f32.mrb[0].mxu0
    %1220 = vmatprep.mubr.f32.mxu0 0.0
    %1221 = vmatmul.mubr.f32.gmra.mrb[0].mxu0 %v1091
    %v1222 = vpop.f32.mrb[0].mxu0
    %v1223 = vadd.f32 0.0, %v1222
    %v1224 = vpop.f32.mrb[0].mxu0
    %1225 = vmatprep.mubr.f32.mxu0 0.0
    %1226 = vmatmul.mubr.f32.gmra.mrb[0].mxu0 %v1094
    %v1227 = vpop.f32.mrb[0].mxu0
    %v1228 = vadd.f32 0.0, %v1227
    %v1229 = vpop.f32.mrb[0].mxu0
    %1230 = vmatprep.mubr.f32.mxu0 0.0
    %1231 = vmatmul.mubr.f32.gmra.mrb[0].mxu0 %v1097
    %v1232 = vpop.f32.mrb[0].mxu0
    %v1233 = vadd.f32 0.0, %v1232
    %v1234 = vpop.f32.mrb[0].mxu0
    %1235 = vmatprep.mubr.f32.mxu0 0.0
    %1236 = vmatmul.mubr.f32.gmra.mrb[0].mxu0 %v1100
    %v1237 = vpop.f32.mrb[0].mxu0
    %v1238 = vadd.f32 0.0, %v1237
    %v1239 = vpop.f32.mrb[0].mxu0
    %1240 = vmatprep.mubr.f32.mxu0 0.0
    %1241 = vmatmul.mubr.f32.gmra.mrb[0].mxu0 %v1103
    %v1242 = vpop.f32.mrb[0].mxu0
    %v1243 = vadd.f32 0.0, %v1242
    %v1244 = vpop.f32.mrb[0].mxu0
    %1245 = vmatprep.mubr.f32.mxu0 0.0
    %1246 = vmatmul.mubr.f32.gmra.mrb[0].mxu0 %v1106
    %v1247 = vpop.f32.mrb[0].mxu0
    %v1248 = vadd.f32 0.0, %v1247
    %v1249 = vpop.f32.mrb[0].mxu0
    %1250 = vmatprep.mubr.f32.mxu0 0.0
    %1251 = vmatmul.mubr.f32.gmra.mrb[0].mxu0 %v1109
    %v1252 = vpop.f32.mrb[0].mxu0
    %v1253 = vadd.f32 0.0, %v1252
    %v1254 = vpop.f32.mrb[0].mxu0
    %1255 = vmatprep.mubr.f32.mxu0 0.0
    %1256 = vmatmul.mubr.f32.gmra.mrb[0].mxu0 %v1112
    %v1257 = vpop.f32.mrb[0].mxu0
    %v1258 = vadd.f32 0.0, %v1257
    %v1259 = vpop.f32.mrb[0].mxu0
    %1260 = vmatprep.mubr.f32.mxu0 0.0
    %1261 = vmatmul.mubr.f32.gmra.mrb[0].mxu0 %v1115
    %v1262 = vpop.f32.mrb[0].mxu0
    %v1263 = vadd.f32 0.0, %v1262
    %v1264 = vpop.f32.mrb[0].mxu0
    %1265 = vdwg.mxu0
    %v1267 = vsel %vm1068, %v521, 0
    %v1270 = vsel %vm1068, %v526, 0
    %v1273 = vsel %vm1068, %v531, 0
    %v1276 = vsel %vm1068, %v536, 0
    %v1279 = vsel %vm1068, %v541, 0
    %v1282 = vsel %vm1068, %v546, 0
    %v1285 = vsel %vm1068, %v551, 0
    %v1288 = vsel %vm1068, %v556, 0
    %v1291 = vsel %vm1068, %v561, 0
    %v1294 = vsel %vm1068, %v566, 0
    %v1297 = vsel %vm1068, %v571, 0
    %v1300 = vsel %vm1068, %v576, 0
    %v1303 = vsel %vm1068, %v581, 0
    %v1306 = vsel %vm1068, %v586, 0
    %v1309 = vsel %vm1068, %v591, 0
    %v1312 = vsel %vm1068, %v596, 0
    %v1315 = vsel %vm1117, %v599, 0
    %1317 = vmatprep.subr.mxu0 0.0
    %1318 = vmatpush1.msra.mxu0 %v1315
    %1319 = vmatprep.subr.mxu0 0.0
    %1320 = vmatpush1.msra.mxu0 0.0
    %1321 = vmatprep.subr.mxu0 0.0
    %1322 = vmatpush1.msra.mxu0 0.0
    %1323 = vmatprep.subr.mxu0 0.0
    %1324 = vmatpush1.msra.mxu0 0.0
    %1325 = vmatprep.subr.mxu0 0.0
    %1326 = vmatpush1.msra.mxu0 0.0
    %1327 = vmatprep.subr.mxu0 0.0
    %1328 = vmatpush1.msra.mxu0 0.0
    %1329 = vmatprep.subr.mxu0 0.0
    %1330 = vmatpush1.msra.mxu0 0.0
    %1331 = vmatprep.subr.mxu0 0.0
    %1332 = vmatpush1.msra.mxu0 0.0
    %1333 = vmatprep.subr.mxu0 0.0
    %1334 = vmatpush1.msra.mxu0 0.0
    %1335 = vmatprep.subr.mxu0 0.0
    %1336 = vmatpush1.msra.mxu0 0.0
    %1337 = vmatprep.subr.mxu0 0.0
    %1338 = vmatpush1.msra.mxu0 0.0
    %1339 = vmatprep.subr.mxu0 0.0
    %1340 = vmatpush1.msra.mxu0 0.0
    %1341 = vmatprep.subr.mxu0 0.0
    %1342 = vmatpush1.msra.mxu0 0.0
    %1343 = vmatprep.subr.mxu0 0.0
    %1344 = vmatpush1.msra.mxu0 0.0
    %1345 = vmatprep.subr.mxu0 0.0
    %1346 = vmatpush1.msra.mxu0 0.0
    %1347 = vmatprep.subr.mxu0 0.0
    %1348 = vmatpush1.msra.mxu0 0.0
    %1349 = vmatprep.subr.mxu0 0.0
    %1350 = vmatpush1.msra.mxu0 0.0
    %1351 = vmatprep.subr.mxu0 0.0
    %1352 = vmatpush1.msra.mxu0 0.0
    %1353 = vmatprep.subr.mxu0 0.0
    %1354 = vmatpush1.msra.mxu0 0.0
    %1355 = vmatprep.subr.mxu0 0.0
    %1356 = vmatpush1.msra.mxu0 0.0
    %1357 = vmatprep.subr.mxu0 0.0
    %1358 = vmatpush1.msra.mxu0 0.0
    %1359 = vmatprep.subr.mxu0 0.0
    %1360 = vmatpush1.msra.mxu0 0.0
    %1361 = vmatprep.subr.mxu0 0.0
    %1362 = vmatpush1.msra.mxu0 0.0
    %1363 = vmatprep.subr.mxu0 0.0
    %1364 = vmatpush1.msra.mxu0 0.0
    %1365 = vmatprep.subr.mxu0 0.0
    %1366 = vmatpush1.msra.mxu0 0.0
    %1367 = vmatprep.subr.mxu0 0.0
    %1368 = vmatpush1.msra.mxu0 0.0
    %1369 = vmatprep.subr.mxu0 0.0
    %1370 = vmatpush1.msra.mxu0 0.0
    %1371 = vmatprep.subr.mxu0 0.0
    %1372 = vmatpush1.msra.mxu0 0.0
    %1373 = vmatprep.subr.mxu0 0.0
    %1374 = vmatpush1.msra.mxu0 0.0
    %1375 = vmatprep.subr.mxu0 0.0
    %1376 = vmatpush1.msra.mxu0 0.0
    %1377 = vmatprep.subr.mxu0 0.0
    %1378 = vmatpush1.msra.mxu0 0.0
    %1379 = vmatprep.subr.mxu0 0.0
    %1380 = vmatpush1.msra.mxu0 0.0
    %1381 = vmatprep.mubr.f32.mxu0 0.0
    %1382 = vmatmul.mubr.f32.gmra.mrb[0].mxu0 %v1267
    %v1383 = vpop.f32.mrb[0].mxu0
    %v1384 = vadd.f32 %v1188, %v1383
    %v1385 = vpop.f32.mrb[0].mxu0
    %1386 = vmatprep.mubr.f32.mxu0 0.0
    %1387 = vmatmul.mubr.f32.gmra.mrb[0].mxu0 %v1270
    %v1388 = vpop.f32.mrb[0].mxu0
    %v1389 = vadd.f32 %v1193, %v1388
    %v1390 = vpop.f32.mrb[0].mxu0
    %1391 = vmatprep.mubr.f32.mxu0 0.0
    %1392 = vmatmul.mubr.f32.gmra.mrb[0].mxu0 %v1273
    %v1393 = vpop.f32.mrb[0].mxu0
    %v1394 = vadd.f32 %v1198, %v1393
    %v1395 = vpop.f32.mrb[0].mxu0
    %1396 = vmatprep.mubr.f32.mxu0 0.0
    %1397 = vmatmul.mubr.f32.gmra.mrb[0].mxu0 %v1276
    %v1398 = vpop.f32.mrb[0].mxu0
    %v1399 = vadd.f32 %v1203, %v1398
    %v1400 = vpop.f32.mrb[0].mxu0
    %1401 = vmatprep.mubr.f32.mxu0 0.0
    %1402 = vmatmul.mubr.f32.gmra.mrb[0].mxu0 %v1279
    %v1403 = vpop.f32.mrb[0].mxu0
    %v1404 = vadd.f32 %v1208, %v1403
    %v1405 = vpop.f32.mrb[0].mxu0
    %1406 = vmatprep.mubr.f32.mxu0 0.0
    %1407 = vmatmul.mubr.f32.gmra.mrb[0].mxu0 %v1282
    %v1408 = vpop.f32.mrb[0].mxu0
    %v1409 = vadd.f32 %v1213, %v1408
    %v1410 = vpop.f32.mrb[0].mxu0
    %1411 = vmatprep.mubr.f32.mxu0 0.0
    %1412 = vmatmul.mubr.f32.gmra.mrb[0].mxu0 %v1285
    %v1413 = vpop.f32.mrb[0].mxu0
    %v1414 = vadd.f32 %v1218, %v1413
    %v1415 = vpop.f32.mrb[0].mxu0
    %1416 = vmatprep.mubr.f32.mxu0 0.0
    %1417 = vmatmul.mubr.f32.gmra.mrb[0].mxu0 %v1288
    %v1418 = vpop.f32.mrb[0].mxu0
    %v1419 = vadd.f32 %v1223, %v1418
    %v1420 = vpop.f32.mrb[0].mxu0
    %1421 = vmatprep.mubr.f32.mxu0 0.0
    %1422 = vmatmul.mubr.f32.gmra.mrb[0].mxu0 %v1291
    %v1423 = vpop.f32.mrb[0].mxu0
    %v1424 = vadd.f32 %v1228, %v1423
    %v1425 = vpop.f32.mrb[0].mxu0
    %1426 = vmatprep.mubr.f32.mxu0 0.0
    %1427 = vmatmul.mubr.f32.gmra.mrb[0].mxu0 %v1294
    %v1428 = vpop.f32.mrb[0].mxu0
    %v1429 = vadd.f32 %v1233, %v1428
    %v1430 = vpop.f32.mrb[0].mxu0
    %1431 = vmatprep.mubr.f32.mxu0 0.0
    %1432 = vmatmul.mubr.f32.gmra.mrb[0].mxu0 %v1297
    %v1433 = vpop.f32.mrb[0].mxu0
    %v1434 = vadd.f32 %v1238, %v1433
    %v1435 = vpop.f32.mrb[0].mxu0
    %1436 = vmatprep.mubr.f32.mxu0 0.0
    %1437 = vmatmul.mubr.f32.gmra.mrb[0].mxu0 %v1300
    %v1438 = vpop.f32.mrb[0].mxu0
    %v1439 = vadd.f32 %v1243, %v1438
    %v1440 = vpop.f32.mrb[0].mxu0
    %1441 = vmatprep.mubr.f32.mxu0 0.0
    %1442 = vmatmul.mubr.f32.gmra.mrb[0].mxu0 %v1303
    %v1443 = vpop.f32.mrb[0].mxu0
    %v1444 = vadd.f32 %v1248, %v1443
    %v1445 = vpop.f32.mrb[0].mxu0
    %1446 = vmatprep.mubr.f32.mxu0 0.0
    %1447 = vmatmul.mubr.f32.gmra.mrb[0].mxu0 %v1306
    %v1448 = vpop.f32.mrb[0].mxu0
    %v1449 = vadd.f32 %v1253, %v1448
    %v1450 = vpop.f32.mrb[0].mxu0
    %1451 = vmatprep.mubr.f32.mxu0 0.0
    %1452 = vmatmul.mubr.f32.gmra.mrb[0].mxu0 %v1309
    %v1453 = vpop.f32.mrb[0].mxu0
    %v1454 = vadd.f32 %v1258, %v1453
    %v1455 = vpop.f32.mrb[0].mxu0
    %1456 = vmatprep.mubr.f32.mxu0 0.0
    %1457 = vmatmul.mubr.f32.gmra.mrb[0].mxu0 %v1312
    %v1458 = vpop.f32.mrb[0].mxu0
    %v1459 = vadd.f32 %v1263, %v1458
    %v1460 = vpop.f32.mrb[0].mxu0
    %1461 = vdwg.mxu0
    %1462 = vset.pattern.permute.xlu0 2
    %1463 = vperm.xlu0 %1462, %v117
    %v1464 = vpop.permute.xlu0 %1463
    %1465 = vset.pattern.permute.xlu0 2
    %1466 = vperm.xlu0 %1465, %v118
    %v1467 = vpop.permute.xlu0 %1466
    %1468 = vset.pattern.permute.xlu0 2
    %1469 = vperm.xlu0 %1468, %v119
    %v1470 = vpop.permute.xlu0 %1469
    %1471 = vset.pattern.permute.xlu0 2
    %1472 = vperm.xlu0 %1471, %v120
    %v1473 = vpop.permute.xlu0 %1472
    %1474 = vset.pattern.permute.xlu0 2
    %1475 = vperm.xlu0 %1474, %v121
    %v1476 = vpop.permute.xlu0 %1475
    %1477 = vset.pattern.permute.xlu0 2
    %1478 = vperm.xlu0 %1477, %v122
    %v1479 = vpop.permute.xlu0 %1478
    %1480 = vset.pattern.permute.xlu0 2
    %1481 = vperm.xlu0 %1480, %v123
    %v1482 = vpop.permute.xlu0 %1481
    %1483 = vset.pattern.permute.xlu0 2
    %1484 = vperm.xlu0 %1483, %v124
    %v1485 = vpop.permute.xlu0 %1484
    %1486 = vset.pattern.permute.xlu0 2
    %1487 = vperm.xlu0 %1486, %v125
    %v1488 = vpop.permute.xlu0 %1487
    %1489 = vset.pattern.permute.xlu0 2
    %1490 = vperm.xlu0 %1489, %v126
    %v1491 = vpop.permute.xlu0 %1490
    %1492 = vset.pattern.permute.xlu0 2
    %1493 = vperm.xlu0 %1492, %v127
    %v1494 = vpop.permute.xlu0 %1493
    %1495 = vset.pattern.permute.xlu0 2
    %1496 = vperm.xlu0 %1495, %v128
    %v1497 = vpop.permute.xlu0 %1496
    %1498 = vset.pattern.permute.xlu0 2
    %1499 = vperm.xlu0 %1498, %v129
    %v1500 = vpop.permute.xlu0 %1499
    %1501 = vset.pattern.permute.xlu0 2
    %1502 = vperm.xlu0 %1501, %v130
    %v1503 = vpop.permute.xlu0 %1502
    %1504 = vset.pattern.permute.xlu0 2
    %1505 = vperm.xlu0 %1504, %v131
    %v1506 = vpop.permute.xlu0 %1505
    %1507 = vset.pattern.permute.xlu0 2
    %1508 = vperm.xlu0 %1507, %v132
    %v1509 = vpop.permute.xlu0 %1508
    %vm1510 = vcmp.eq.s32.totalorder %v113, %v1464
    %vm1511 = vcmp.eq.s32.totalorder %v114, %v1464
    %vm1512 = vcmp.eq.s32.totalorder %v115, %v1464
    %vm1513 = vcmp.eq.s32.totalorder %v116, %v1464
    %vm1514 = vcmp.eq.s32.totalorder %v113, %v1467
    %vm1515 = vcmp.eq.s32.totalorder %v114, %v1467
    %vm1516 = vcmp.eq.s32.totalorder %v115, %v1467
    %vm1517 = vcmp.eq.s32.totalorder %v116, %v1467
    %vm1518 = vcmp.eq.s32.totalorder %v113, %v1470
    %vm1519 = vcmp.eq.s32.totalorder %v114, %v1470
    %vm1520 = vcmp.eq.s32.totalorder %v115, %v1470
    %vm1521 = vcmp.eq.s32.totalorder %v116, %v1470
    %vm1522 = vcmp.eq.s32.totalorder %v113, %v1473
    %vm1523 = vcmp.eq.s32.totalorder %v114, %v1473
    %vm1524 = vcmp.eq.s32.totalorder %v115, %v1473
    %vm1525 = vcmp.eq.s32.totalorder %v116, %v1473
    %vm1526 = vcmp.eq.s32.totalorder %v113, %v1476
    %vm1527 = vcmp.eq.s32.totalorder %v114, %v1476
    %vm1528 = vcmp.eq.s32.totalorder %v115, %v1476
    %vm1529 = vcmp.eq.s32.totalorder %v116, %v1476
    %vm1530 = vcmp.eq.s32.totalorder %v113, %v1479
    %vm1531 = vcmp.eq.s32.totalorder %v114, %v1479
    %vm1532 = vcmp.eq.s32.totalorder %v115, %v1479
    %vm1533 = vcmp.eq.s32.totalorder %v116, %v1479
    %vm1534 = vcmp.eq.s32.totalorder %v113, %v1482
    %vm1535 = vcmp.eq.s32.totalorder %v114, %v1482
    %vm1536 = vcmp.eq.s32.totalorder %v115, %v1482
    %vm1537 = vcmp.eq.s32.totalorder %v116, %v1482
    %vm1538 = vcmp.eq.s32.totalorder %v113, %v1485
    %vm1539 = vcmp.eq.s32.totalorder %v114, %v1485
    %vm1540 = vcmp.eq.s32.totalorder %v115, %v1485
    %vm1541 = vcmp.eq.s32.totalorder %v116, %v1485
    %vm1542 = vcmp.eq.s32.totalorder %v113, %v1488
    %vm1543 = vcmp.eq.s32.totalorder %v114, %v1488
    %vm1544 = vcmp.eq.s32.totalorder %v115, %v1488
    %vm1545 = vcmp.eq.s32.totalorder %v116, %v1488
    %vm1546 = vcmp.eq.s32.totalorder %v113, %v1491
    %vm1547 = vcmp.eq.s32.totalorder %v114, %v1491
    %vm1548 = vcmp.eq.s32.totalorder %v115, %v1491
    %vm1549 = vcmp.eq.s32.totalorder %v116, %v1491
    %vm1550 = vcmp.eq.s32.totalorder %v113, %v1494
    %vm1551 = vcmp.eq.s32.totalorder %v114, %v1494
    %vm1552 = vcmp.eq.s32.totalorder %v115, %v1494
    %vm1553 = vcmp.eq.s32.totalorder %v116, %v1494
    %vm1554 = vcmp.eq.s32.totalorder %v113, %v1497
    %vm1555 = vcmp.eq.s32.totalorder %v114, %v1497
    %vm1556 = vcmp.eq.s32.totalorder %v115, %v1497
    %vm1557 = vcmp.eq.s32.totalorder %v116, %v1497
    %vm1558 = vcmp.eq.s32.totalorder %v113, %v1500
    %vm1559 = vcmp.eq.s32.totalorder %v114, %v1500
    %vm1560 = vcmp.eq.s32.totalorder %v115, %v1500
    %vm1561 = vcmp.eq.s32.totalorder %v116, %v1500
    %vm1562 = vcmp.eq.s32.totalorder %v113, %v1503
    %vm1563 = vcmp.eq.s32.totalorder %v114, %v1503
    %vm1564 = vcmp.eq.s32.totalorder %v115, %v1503
    %vm1565 = vcmp.eq.s32.totalorder %v116, %v1503
    %vm1566 = vcmp.eq.s32.totalorder %v113, %v1506
    %vm1567 = vcmp.eq.s32.totalorder %v114, %v1506
    %vm1568 = vcmp.eq.s32.totalorder %v115, %v1506
    %vm1569 = vcmp.eq.s32.totalorder %v116, %v1506
    %vm1570 = vcmp.eq.s32.totalorder %v113, %v1509
    %vm1571 = vcmp.eq.s32.totalorder %v114, %v1509
    %vm1572 = vcmp.eq.s32.totalorder %v115, %v1509
    %vm1573 = vcmp.eq.s32.totalorder %v116, %v1509
    %v1574 = vsel %vm1510, 1.0, 0.0
    %v1575 = vsel %vm1511, 1.0, 0.0
    %v1576 = vsel %vm1512, 1.0, 0.0
    %v1577 = vsel %vm1513, 1.0, 0.0
    %v1578 = vsel %vm1514, 1.0, 0.0
    %v1579 = vsel %vm1515, 1.0, 0.0
    %v1580 = vsel %vm1516, 1.0, 0.0
    %v1581 = vsel %vm1517, 1.0, 0.0
    %v1582 = vsel %vm1518, 1.0, 0.0
    %v1583 = vsel %vm1519, 1.0, 0.0
    %v1584 = vsel %vm1520, 1.0, 0.0
    %v1585 = vsel %vm1521, 1.0, 0.0
    %v1586 = vsel %vm1522, 1.0, 0.0
    %v1587 = vsel %vm1523, 1.0, 0.0
    %v1588 = vsel %vm1524, 1.0, 0.0
    %v1589 = vsel %vm1525, 1.0, 0.0
    %v1590 = vsel %vm1526, 1.0, 0.0
    %v1591 = vsel %vm1527, 1.0, 0.0
    %v1592 = vsel %vm1528, 1.0, 0.0
    %v1593 = vsel %vm1529, 1.0, 0.0
    %v1594 = vsel %vm1530, 1.0, 0.0
    %v1595 = vsel %vm1531, 1.0, 0.0
    %v1596 = vsel %vm1532, 1.0, 0.0
    %v1597 = vsel %vm1533, 1.0, 0.0
    %v1598 = vsel %vm1534, 1.0, 0.0
    %v1599 = vsel %vm1535, 1.0, 0.0
    %v1600 = vsel %vm1536, 1.0, 0.0
    %v1601 = vsel %vm1537, 1.0, 0.0
    %v1602 = vsel %vm1538, 1.0, 0.0
    %v1603 = vsel %vm1539, 1.0, 0.0
    %v1604 = vsel %vm1540, 1.0, 0.0
    %v1605 = vsel %vm1541, 1.0, 0.0
    %v1606 = vsel %vm1542, 1.0, 0.0
    %v1607 = vsel %vm1543, 1.0, 0.0
    %v1608 = vsel %vm1544, 1.0, 0.0
    %v1609 = vsel %vm1545, 1.0, 0.0
    %v1610 = vsel %vm1546, 1.0, 0.0
    %v1611 = vsel %vm1547, 1.0, 0.0
    %v1612 = vsel %vm1548, 1.0, 0.0
    %v1613 = vsel %vm1549, 1.0, 0.0
    %v1614 = vsel %vm1550, 1.0, 0.0
    %v1615 = vsel %vm1551, 1.0, 0.0
    %v1616 = vsel %vm1552, 1.0, 0.0
    %v1617 = vsel %vm1553, 1.0, 0.0
    %v1618 = vsel %vm1554, 1.0, 0.0
    %v1619 = vsel %vm1555, 1.0, 0.0
    %v1620 = vsel %vm1556, 1.0, 0.0
    %v1621 = vsel %vm1557, 1.0, 0.0
    %v1622 = vsel %vm1558, 1.0, 0.0
    %v1623 = vsel %vm1559, 1.0, 0.0
    %v1624 = vsel %vm1560, 1.0, 0.0
    %v1625 = vsel %vm1561, 1.0, 0.0
    %v1626 = vsel %vm1562, 1.0, 0.0
    %v1627 = vsel %vm1563, 1.0, 0.0
    %v1628 = vsel %vm1564, 1.0, 0.0
    %v1629 = vsel %vm1565, 1.0, 0.0
    %v1630 = vsel %vm1566, 1.0, 0.0
    %v1631 = vsel %vm1567, 1.0, 0.0
    %v1632 = vsel %vm1568, 1.0, 0.0
    %v1633 = vsel %vm1569, 1.0, 0.0
    %v1634 = vsel %vm1570, 1.0, 0.0
    %v1635 = vsel %vm1571, 1.0, 0.0
    %v1636 = vsel %vm1572, 1.0, 0.0
    %v1637 = vsel %vm1573, 1.0, 0.0
    %1638 = vmatprep.subr.mxu0 0.0
    %1639 = vmatpush1.msra.mxu0 %v48
    %1640 = vmatprep.subr.mxu0 0.0
    %1641 = vmatpush1.msra.mxu0 %v49
    %1642 = vmatprep.subr.mxu0 0.0
    %1643 = vmatpush1.msra.mxu0 %v50
    %1644 = vmatprep.subr.mxu0 0.0
    %1645 = vmatpush1.msra.mxu0 %v51
    %1646 = vmatprep.subr.mxu0 0.0
    %1647 = vmatpush1.msra.mxu0 %v52
    %1648 = vmatprep.subr.mxu0 0.0
    %1649 = vmatpush1.msra.mxu0 %v53
    %1650 = vmatprep.subr.mxu0 0.0
    %1651 = vmatpush1.msra.mxu0 %v54
    %1652 = vmatprep.subr.mxu0 0.0
    %1653 = vmatpush1.msra.mxu0 %v55
    %1654 = vmatprep.subr.mxu0 0.0
    %1655 = vmatpush1.msra.mxu0 %v56
    %1656 = vmatprep.subr.mxu0 0.0
    %1657 = vmatpush1.msra.mxu0 %v57
    %1658 = vmatprep.subr.mxu0 0.0
    %1659 = vmatpush1.msra.mxu0 %v58
    %1660 = vmatprep.subr.mxu0 0.0
    %1661 = vmatpush1.msra.mxu0 %v59
    %1662 = vmatprep.subr.mxu0 0.0
    %1663 = vmatpush1.msra.mxu0 %v60
    %1664 = vmatprep.subr.mxu0 0.0
    %1665 = vmatpush1.msra.mxu0 %v61
    %1666 = vmatprep.subr.mxu0 0.0
    %1667 = vmatpush1.msra.mxu0 %v62
    %1668 = vmatprep.subr.mxu0 0.0
    %1669 = vmatpush1.msra.mxu0 %v63
    %1670 = vmatprep.subr.mxu0 0.0
    %1671 = vmatpush1.msra.mxu0 %v64
    %1672 = vmatprep.subr.mxu0 0.0
    %1673 = vmatpush1.msra.mxu0 %v65
    %1674 = vmatprep.subr.mxu0 0.0
    %1675 = vmatpush1.msra.mxu0 %v66
    %1676 = vmatprep.subr.mxu0 0.0
    %1677 = vmatpush1.msra.mxu0 %v67
    %1678 = vmatprep.subr.mxu0 0.0
    %1679 = vmatpush1.msra.mxu0 %v68
    %1680 = vmatprep.subr.mxu0 0.0
    %1681 = vmatpush1.msra.mxu0 %v69
    %1682 = vmatprep.subr.mxu0 0.0
    %1683 = vmatpush1.msra.mxu0 %v70
    %1684 = vmatprep.subr.mxu0 0.0
    %1685 = vmatpush1.msra.mxu0 %v71
    %1686 = vmatprep.subr.mxu0 0.0
    %1687 = vmatpush1.msra.mxu0 %v72
    %1688 = vmatprep.subr.mxu0 0.0
    %1689 = vmatpush1.msra.mxu0 %v73
    %1690 = vmatprep.subr.mxu0 0.0
    %1691 = vmatpush1.msra.mxu0 %v74
    %1692 = vmatprep.subr.mxu0 0.0
    %1693 = vmatpush1.msra.mxu0 %v75
    %1694 = vmatprep.subr.mxu0 0.0
    %1695 = vmatpush1.msra.mxu0 %v76
    %1696 = vmatprep.subr.mxu0 0.0
    %1697 = vmatpush1.msra.mxu0 %v77
    %1698 = vmatprep.subr.mxu0 0.0
    %1699 = vmatpush1.msra.mxu0 %v78
    %1700 = vmatprep.subr.mxu0 0.0
    %1701 = vmatpush1.msra.mxu0 %v79
    %1702 = vmatprep.mubr.f32.mxu0 %v1575
    %1703 = vmatmul.mubr.f32.gmra.mrb[0].mxu0 %v1574
    %v1704 = vpop.f32.mrb[0].mxu0
    %v1705 = vadd.f32 0.0, %v1704
    %v1706 = vpop.f32.mrb[0].mxu0
    %1707 = vmatprep.mubr.f32.mxu0 %v1579
    %1708 = vmatmul.mubr.f32.gmra.mrb[0].mxu0 %v1578
    %v1709 = vpop.f32.mrb[0].mxu0
    %v1710 = vadd.f32 0.0, %v1709
    %v1711 = vpop.f32.mrb[0].mxu0
    %1712 = vmatprep.mubr.f32.mxu0 %v1583
    %1713 = vmatmul.mubr.f32.gmra.mrb[0].mxu0 %v1582
    %v1714 = vpop.f32.mrb[0].mxu0
    %v1715 = vadd.f32 0.0, %v1714
    %v1716 = vpop.f32.mrb[0].mxu0
    %1717 = vmatprep.mubr.f32.mxu0 %v1587
    %1718 = vmatmul.mubr.f32.gmra.mrb[0].mxu0 %v1586
    %v1719 = vpop.f32.mrb[0].mxu0
    %v1720 = vadd.f32 0.0, %v1719
    %v1721 = vpop.f32.mrb[0].mxu0
    %1722 = vmatprep.mubr.f32.mxu0 %v1591
    %1723 = vmatmul.mubr.f32.gmra.mrb[0].mxu0 %v1590
    %v1724 = vpop.f32.mrb[0].mxu0
    %v1725 = vadd.f32 0.0, %v1724
    %v1726 = vpop.f32.mrb[0].mxu0
    %1727 = vmatprep.mubr.f32.mxu0 %v1595
    %1728 = vmatmul.mubr.f32.gmra.mrb[0].mxu0 %v1594
    %v1729 = vpop.f32.mrb[0].mxu0
    %v1730 = vadd.f32 0.0, %v1729
    %v1731 = vpop.f32.mrb[0].mxu0
    %1732 = vmatprep.mubr.f32.mxu0 %v1599
    %1733 = vmatmul.mubr.f32.gmra.mrb[0].mxu0 %v1598
    %v1734 = vpop.f32.mrb[0].mxu0
    %v1735 = vadd.f32 0.0, %v1734
    %v1736 = vpop.f32.mrb[0].mxu0
    %1737 = vmatprep.mubr.f32.mxu0 %v1603
    %1738 = vmatmul.mubr.f32.gmra.mrb[0].mxu0 %v1602
    %v1739 = vpop.f32.mrb[0].mxu0
    %v1740 = vadd.f32 0.0, %v1739
    %v1741 = vpop.f32.mrb[0].mxu0
    %1742 = vmatprep.mubr.f32.mxu0 %v1607
    %1743 = vmatmul.mubr.f32.gmra.mrb[0].mxu0 %v1606
    %v1744 = vpop.f32.mrb[0].mxu0
    %v1745 = vadd.f32 0.0, %v1744
    %v1746 = vpop.f32.mrb[0].mxu0
    %1747 = vmatprep.mubr.f32.mxu0 %v1611
    %1748 = vmatmul.mubr.f32.gmra.mrb[0].mxu0 %v1610
    %v1749 = vpop.f32.mrb[0].mxu0
    %v1750 = vadd.f32 0.0, %v1749
    %v1751 = vpop.f32.mrb[0].mxu0
    %1752 = vmatprep.mubr.f32.mxu0 %v1615
    %1753 = vmatmul.mubr.f32.gmra.mrb[0].mxu0 %v1614
    %v1754 = vpop.f32.mrb[0].mxu0
    %v1755 = vadd.f32 0.0, %v1754
    %v1756 = vpop.f32.mrb[0].mxu0
    %1757 = vmatprep.mubr.f32.mxu0 %v1619
    %1758 = vmatmul.mubr.f32.gmra.mrb[0].mxu0 %v1618
    %v1759 = vpop.f32.mrb[0].mxu0
    %v1760 = vadd.f32 0.0, %v1759
    %v1761 = vpop.f32.mrb[0].mxu0
    %1762 = vmatprep.mubr.f32.mxu0 %v1623
    %1763 = vmatmul.mubr.f32.gmra.mrb[0].mxu0 %v1622
    %v1764 = vpop.f32.mrb[0].mxu0
    %v1765 = vadd.f32 0.0, %v1764
    %v1766 = vpop.f32.mrb[0].mxu0
    %1767 = vmatprep.mubr.f32.mxu0 %v1627
    %1768 = vmatmul.mubr.f32.gmra.mrb[0].mxu0 %v1626
    %v1769 = vpop.f32.mrb[0].mxu0
    %v1770 = vadd.f32 0.0, %v1769
    %v1771 = vpop.f32.mrb[0].mxu0
    %1772 = vmatprep.mubr.f32.mxu0 %v1631
    %1773 = vmatmul.mubr.f32.gmra.mrb[0].mxu0 %v1630
    %v1774 = vpop.f32.mrb[0].mxu0
    %v1775 = vadd.f32 0.0, %v1774
    %v1776 = vpop.f32.mrb[0].mxu0
    %1777 = vmatprep.mubr.f32.mxu0 %v1635
    %1778 = vmatmul.mubr.f32.gmra.mrb[0].mxu0 %v1634
    %v1779 = vpop.f32.mrb[0].mxu0
    %v1780 = vadd.f32 0.0, %v1779
    %v1781 = vpop.f32.mrb[0].mxu0
    %1782 = vdwg.mxu0
    %1783 = vmatprep.subr.mxu0 0.0
    %1784 = vmatpush1.msra.mxu0 %v80
    %1785 = vmatprep.subr.mxu0 0.0
    %1786 = vmatpush1.msra.mxu0 %v81
    %1787 = vmatprep.subr.mxu0 0.0
    %1788 = vmatpush1.msra.mxu0 %v82
    %1789 = vmatprep.subr.mxu0 0.0
    %1790 = vmatpush1.msra.mxu0 %v83
    %1791 = vmatprep.subr.mxu0 0.0
    %1792 = vmatpush1.msra.mxu0 %v84
    %1793 = vmatprep.subr.mxu0 0.0
    %1794 = vmatpush1.msra.mxu0 %v85
    %1795 = vmatprep.subr.mxu0 0.0
    %1796 = vmatpush1.msra.mxu0 %v86
    %1797 = vmatprep.subr.mxu0 0.0
    %1798 = vmatpush1.msra.mxu0 %v87
    %1799 = vmatprep.subr.mxu0 0.0
    %1800 = vmatpush1.msra.mxu0 %v88
    %1801 = vmatprep.subr.mxu0 0.0
    %1802 = vmatpush1.msra.mxu0 %v89
    %1803 = vmatprep.subr.mxu0 0.0
    %1804 = vmatpush1.msra.mxu0 %v90
    %1805 = vmatprep.subr.mxu0 0.0
    %1806 = vmatpush1.msra.mxu0 %v91
    %1807 = vmatprep.subr.mxu0 0.0
    %1808 = vmatpush1.msra.mxu0 %v92
    %1809 = vmatprep.subr.mxu0 0.0
    %1810 = vmatpush1.msra.mxu0 %v93
    %1811 = vmatprep.subr.mxu0 0.0
    %1812 = vmatpush1.msra.mxu0 %v94
    %1813 = vmatprep.subr.mxu0 0.0
    %1814 = vmatpush1.msra.mxu0 %v95
    %1815 = vmatprep.subr.mxu0 0.0
    %1816 = vmatpush1.msra.mxu0 %v96
    %1817 = vmatprep.subr.mxu0 0.0
    %1818 = vmatpush1.msra.mxu0 %v97
    %1819 = vmatprep.subr.mxu0 0.0
    %1820 = vmatpush1.msra.mxu0 %v98
    %1821 = vmatprep.subr.mxu0 0.0
    %1822 = vmatpush1.msra.mxu0 %v99
    %1823 = vmatprep.subr.mxu0 0.0
    %1824 = vmatpush1.msra.mxu0 %v100
    %1825 = vmatprep.subr.mxu0 0.0
    %1826 = vmatpush1.msra.mxu0 %v101
    %1827 = vmatprep.subr.mxu0 0.0
    %1828 = vmatpush1.msra.mxu0 %v102
    %1829 = vmatprep.subr.mxu0 0.0
    %1830 = vmatpush1.msra.mxu0 %v103
    %1831 = vmatprep.subr.mxu0 0.0
    %1832 = vmatpush1.msra.mxu0 %v104
    %1833 = vmatprep.subr.mxu0 0.0
    %1834 = vmatpush1.msra.mxu0 %v105
    %1835 = vmatprep.subr.mxu0 0.0
    %1836 = vmatpush1.msra.mxu0 %v106
    %1837 = vmatprep.subr.mxu0 0.0
    %1838 = vmatpush1.msra.mxu0 %v107
    %1839 = vmatprep.subr.mxu0 0.0
    %1840 = vmatpush1.msra.mxu0 %v108
    %1841 = vmatprep.subr.mxu0 0.0
    %1842 = vmatpush1.msra.mxu0 %v109
    %1843 = vmatprep.subr.mxu0 0.0
    %1844 = vmatpush1.msra.mxu0 %v110
    %1845 = vmatprep.subr.mxu0 0.0
    %1846 = vmatpush1.msra.mxu0 %v111
    %1847 = vmatprep.mubr.f32.mxu0 %v1577
    %1848 = vmatmul.mubr.f32.gmra.mrb[0].mxu0 %v1576
    %v1849 = vpop.f32.mrb[0].mxu0
    %v1850 = vadd.f32 %v1705, %v1849
    %v1851 = vpop.f32.mrb[0].mxu0
    %1852 = vmatprep.mubr.f32.mxu0 %v1581
    %1853 = vmatmul.mubr.f32.gmra.mrb[0].mxu0 %v1580
    %v1854 = vpop.f32.mrb[0].mxu0
    %v1855 = vadd.f32 %v1710, %v1854
    %v1856 = vpop.f32.mrb[0].mxu0
    %1857 = vmatprep.mubr.f32.mxu0 %v1585
    %1858 = vmatmul.mubr.f32.gmra.mrb[0].mxu0 %v1584
    %v1859 = vpop.f32.mrb[0].mxu0
    %v1860 = vadd.f32 %v1715, %v1859
    %v1861 = vpop.f32.mrb[0].mxu0
    %1862 = vmatprep.mubr.f32.mxu0 %v1589
    %1863 = vmatmul.mubr.f32.gmra.mrb[0].mxu0 %v1588
    %v1864 = vpop.f32.mrb[0].mxu0
    %v1865 = vadd.f32 %v1720, %v1864
    %v1866 = vpop.f32.mrb[0].mxu0
    %1867 = vmatprep.mubr.f32.mxu0 %v1593
    %1868 = vmatmul.mubr.f32.gmra.mrb[0].mxu0 %v1592
    %v1869 = vpop.f32.mrb[0].mxu0
    %v1870 = vadd.f32 %v1725, %v1869
    %v1871 = vpop.f32.mrb[0].mxu0
    %1872 = vmatprep.mubr.f32.mxu0 %v1597
    %1873 = vmatmul.mubr.f32.gmra.mrb[0].mxu0 %v1596
    %v1874 = vpop.f32.mrb[0].mxu0
    %v1875 = vadd.f32 %v1730, %v1874
    %v1876 = vpop.f32.mrb[0].mxu0
    %1877 = vmatprep.mubr.f32.mxu0 %v1601
    %1878 = vmatmul.mubr.f32.gmra.mrb[0].mxu0 %v1600
    %v1879 = vpop.f32.mrb[0].mxu0
    %v1880 = vadd.f32 %v1735, %v1879
    %v1881 = vpop.f32.mrb[0].mxu0
    %1882 = vmatprep.mubr.f32.mxu0 %v1605
    %1883 = vmatmul.mubr.f32.gmra.mrb[0].mxu0 %v1604
    %v1884 = vpop.f32.mrb[0].mxu0
    %v1885 = vadd.f32 %v1740, %v1884
    %v1886 = vpop.f32.mrb[0].mxu0
    %1887 = vmatprep.mubr.f32.mxu0 %v1609
    %1888 = vmatmul.mubr.f32.gmra.mrb[0].mxu0 %v1608
    %v1889 = vpop.f32.mrb[0].mxu0
    %v1890 = vadd.f32 %v1745, %v1889
    %v1891 = vpop.f32.mrb[0].mxu0
    %1892 = vmatprep.mubr.f32.mxu0 %v1613
    %1893 = vmatmul.mubr.f32.gmra.mrb[0].mxu0 %v1612
    %v1894 = vpop.f32.mrb[0].mxu0
    %v1895 = vadd.f32 %v1750, %v1894
    %v1896 = vpop.f32.mrb[0].mxu0
    %1897 = vmatprep.mubr.f32.mxu0 %v1617
    %1898 = vmatmul.mubr.f32.gmra.mrb[0].mxu0 %v1616
    %v1899 = vpop.f32.mrb[0].mxu0
    %v1900 = vadd.f32 %v1755, %v1899
    %v1901 = vpop.f32.mrb[0].mxu0
    %1902 = vmatprep.mubr.f32.mxu0 %v1621
    %1903 = vmatmul.mubr.f32.gmra.mrb[0].mxu0 %v1620
    %v1904 = vpop.f32.mrb[0].mxu0
    %v1905 = vadd.f32 %v1760, %v1904
    %v1906 = vpop.f32.mrb[0].mxu0
    %1907 = vmatprep.mubr.f32.mxu0 %v1625
    %1908 = vmatmul.mubr.f32.gmra.mrb[0].mxu0 %v1624
    %v1909 = vpop.f32.mrb[0].mxu0
    %v1910 = vadd.f32 %v1765, %v1909
    %v1911 = vpop.f32.mrb[0].mxu0
    %1912 = vmatprep.mubr.f32.mxu0 %v1629
    %1913 = vmatmul.mubr.f32.gmra.mrb[0].mxu0 %v1628
    %v1914 = vpop.f32.mrb[0].mxu0
    %v1915 = vadd.f32 %v1770, %v1914
    %v1916 = vpop.f32.mrb[0].mxu0
    %1917 = vmatprep.mubr.f32.mxu0 %v1633
    %1918 = vmatmul.mubr.f32.gmra.mrb[0].mxu0 %v1632
    %v1919 = vpop.f32.mrb[0].mxu0
    %v1920 = vadd.f32 %v1775, %v1919
    %v1921 = vpop.f32.mrb[0].mxu0
    %1922 = vmatprep.mubr.f32.mxu0 %v1637
    %1923 = vmatmul.mubr.f32.gmra.mrb[0].mxu0 %v1636
    %v1924 = vpop.f32.mrb[0].mxu0
    %v1925 = vadd.f32 %v1780, %v1924
    %v1926 = vpop.f32.mrb[0].mxu0
    %1927 = vdwg.mxu0
    %s1928 = scalar_lea.vmem %s2, 8
    %v1929 = vld [vmem:[%s1928] sm:$0xf]
    %v1931 = vsel %vm1068, %v1850, 0
    %v1934 = vsel %vm1068, %v1855, 0
    %v1937 = vsel %vm1068, %v1860, 0
    %v1940 = vsel %vm1068, %v1865, 0
    %v1943 = vsel %vm1068, %v1870, 0
    %v1946 = vsel %vm1068, %v1875, 0
    %v1949 = vsel %vm1068, %v1880, 0
    %v1952 = vsel %vm1068, %v1885, 0
    %v1955 = vsel %vm1068, %v1890, 0
    %v1958 = vsel %vm1068, %v1895, 0
    %v1961 = vsel %vm1068, %v1900, 0
    %v1964 = vsel %vm1068, %v1905, 0
    %v1967 = vsel %vm1068, %v1910, 0
    %v1970 = vsel %vm1068, %v1915, 0
    %v1973 = vsel %vm1068, %v1920, 0
    %v1976 = vsel %vm1068, %v1925, 0
    %v1979 = vsel %vm1117, %v1929, 0
    %1981 = vmatprep.subr.mxu0 0.0
    %1982 = vmatpush1.msra.mxu0 %v1979
    %1983 = vmatprep.subr.mxu0 0.0
    %1984 = vmatpush1.msra.mxu0 0.0
    %1985 = vmatprep.subr.mxu0 0.0
    %1986 = vmatpush1.msra.mxu0 0.0
    %1987 = vmatprep.subr.mxu0 0.0
    %1988 = vmatpush1.msra.mxu0 0.0
    %1989 = vmatprep.subr.mxu0 0.0
    %1990 = vmatpush1.msra.mxu0 0.0
    %1991 = vmatprep.subr.mxu0 0.0
    %1992 = vmatpush1.msra.mxu0 0.0
    %1993 = vmatprep.subr.mxu0 0.0
    %1994 = vmatpush1.msra.mxu0 0.0
    %1995 = vmatprep.subr.mxu0 0.0
    %1996 = vmatpush1.msra.mxu0 0.0
    %1997 = vmatprep.subr.mxu0 0.0
    %1998 = vmatpush1.msra.mxu0 0.0
    %1999 = vmatprep.subr.mxu0 0.0
    %2000 = vmatpush1.msra.mxu0 0.0
    %2001 = vmatprep.subr.mxu0 0.0
    %2002 = vmatpush1.msra.mxu0 0.0
    %2003 = vmatprep.subr.mxu0 0.0
    %2004 = vmatpush1.msra.mxu0 0.0
    %2005 = vmatprep.subr.mxu0 0.0
    %2006 = vmatpush1.msra.mxu0 0.0
    %2007 = vmatprep.subr.mxu0 0.0
    %2008 = vmatpush1.msra.mxu0 0.0
    %2009 = vmatprep.subr.mxu0 0.0
    %2010 = vmatpush1.msra.mxu0 0.0
    %2011 = vmatprep.subr.mxu0 0.0
    %2012 = vmatpush1.msra.mxu0 0.0
    %2013 = vmatprep.subr.mxu0 0.0
    %2014 = vmatpush1.msra.mxu0 0.0
    %2015 = vmatprep.subr.mxu0 0.0
    %2016 = vmatpush1.msra.mxu0 0.0
    %2017 = vmatprep.subr.mxu0 0.0
    %2018 = vmatpush1.msra.mxu0 0.0
    %2019 = vmatprep.subr.mxu0 0.0
    %2020 = vmatpush1.msra.mxu0 0.0
    %2021 = vmatprep.subr.mxu0 0.0
    %2022 = vmatpush1.msra.mxu0 0.0
    %2023 = vmatprep.subr.mxu0 0.0
    %2024 = vmatpush1.msra.mxu0 0.0
    %2025 = vmatprep.subr.mxu0 0.0
    %2026 = vmatpush1.msra.mxu0 0.0
    %2027 = vmatprep.subr.mxu0 0.0
    %2028 = vmatpush1.msra.mxu0 0.0
    %2029 = vmatprep.subr.mxu0 0.0
    %2030 = vmatpush1.msra.mxu0 0.0
    %2031 = vmatprep.subr.mxu0 0.0
    %2032 = vmatpush1.msra.mxu0 0.0
    %2033 = vmatprep.subr.mxu0 0.0
    %2034 = vmatpush1.msra.mxu0 0.0
    %2035 = vmatprep.subr.mxu0 0.0
    %2036 = vmatpush1.msra.mxu0 0.0
    %2037 = vmatprep.subr.mxu0 0.0
    %2038 = vmatpush1.msra.mxu0 0.0
    %2039 = vmatprep.subr.mxu0 0.0
    %2040 = vmatpush1.msra.mxu0 0.0
    %2041 = vmatprep.subr.mxu0 0.0
    %2042 = vmatpush1.msra.mxu0 0.0
    %2043 = vmatprep.subr.mxu0 0.0
    %2044 = vmatpush1.msra.mxu0 0.0
    %2045 = vmatprep.mubr.f32.mxu0 0.0
    %2046 = vmatmul.mubr.f32.gmra.mrb[0].mxu0 %v1931
    %v2047 = vpop.f32.mrb[0].mxu0
    %v2048 = vadd.f32 0.0, %v2047
    %v2049 = vpop.f32.mrb[0].mxu0
    %2050 = vmatprep.mubr.f32.mxu0 0.0
    %2051 = vmatmul.mubr.f32.gmra.mrb[0].mxu0 %v1934
    %v2052 = vpop.f32.mrb[0].mxu0
    %v2053 = vadd.f32 0.0, %v2052
    %v2054 = vpop.f32.mrb[0].mxu0
    %2055 = vmatprep.mubr.f32.mxu0 0.0
    %2056 = vmatmul.mubr.f32.gmra.mrb[0].mxu0 %v1937
    %v2057 = vpop.f32.mrb[0].mxu0
    %v2058 = vadd.f32 0.0, %v2057
    %v2059 = vpop.f32.mrb[0].mxu0
    %2060 = vmatprep.mubr.f32.mxu0 0.0
    %2061 = vmatmul.mubr.f32.gmra.mrb[0].mxu0 %v1940
    %v2062 = vpop.f32.mrb[0].mxu0
    %v2063 = vadd.f32 0.0, %v2062
    %v2064 = vpop.f32.mrb[0].mxu0
    %2065 = vmatprep.mubr.f32.mxu0 0.0
    %2066 = vmatmul.mubr.f32.gmra.mrb[0].mxu0 %v1943
    %v2067 = vpop.f32.mrb[0].mxu0
    %v2068 = vadd.f32 0.0, %v2067
    %v2069 = vpop.f32.mrb[0].mxu0
    %2070 = vmatprep.mubr.f32.mxu0 0.0
    %2071 = vmatmul.mubr.f32.gmra.mrb[0].mxu0 %v1946
    %v2072 = vpop.f32.mrb[0].mxu0
    %v2073 = vadd.f32 0.0, %v2072
    %v2074 = vpop.f32.mrb[0].mxu0
    %2075 = vmatprep.mubr.f32.mxu0 0.0
    %2076 = vmatmul.mubr.f32.gmra.mrb[0].mxu0 %v1949
    %v2077 = vpop.f32.mrb[0].mxu0
    %v2078 = vadd.f32 0.0, %v2077
    %v2079 = vpop.f32.mrb[0].mxu0
    %2080 = vmatprep.mubr.f32.mxu0 0.0
    %2081 = vmatmul.mubr.f32.gmra.mrb[0].mxu0 %v1952
    %v2082 = vpop.f32.mrb[0].mxu0
    %v2083 = vadd.f32 0.0, %v2082
    %v2084 = vpop.f32.mrb[0].mxu0
    %2085 = vmatprep.mubr.f32.mxu0 0.0
    %2086 = vmatmul.mubr.f32.gmra.mrb[0].mxu0 %v1955
    %v2087 = vpop.f32.mrb[0].mxu0
    %v2088 = vadd.f32 0.0, %v2087
    %v2089 = vpop.f32.mrb[0].mxu0
    %2090 = vmatprep.mubr.f32.mxu0 0.0
    %2091 = vmatmul.mubr.f32.gmra.mrb[0].mxu0 %v1958
    %v2092 = vpop.f32.mrb[0].mxu0
    %v2093 = vadd.f32 0.0, %v2092
    %v2094 = vpop.f32.mrb[0].mxu0
    %2095 = vmatprep.mubr.f32.mxu0 0.0
    %2096 = vmatmul.mubr.f32.gmra.mrb[0].mxu0 %v1961
    %v2097 = vpop.f32.mrb[0].mxu0
    %v2098 = vadd.f32 0.0, %v2097
    %v2099 = vpop.f32.mrb[0].mxu0
    %2100 = vmatprep.mubr.f32.mxu0 0.0
    %2101 = vmatmul.mubr.f32.gmra.mrb[0].mxu0 %v1964
    %v2102 = vpop.f32.mrb[0].mxu0
    %v2103 = vadd.f32 0.0, %v2102
    %v2104 = vpop.f32.mrb[0].mxu0
    %2105 = vmatprep.mubr.f32.mxu0 0.0
    %2106 = vmatmul.mubr.f32.gmra.mrb[0].mxu0 %v1967
    %v2107 = vpop.f32.mrb[0].mxu0
    %v2108 = vadd.f32 0.0, %v2107
    %v2109 = vpop.f32.mrb[0].mxu0
    %2110 = vmatprep.mubr.f32.mxu0 0.0
    %2111 = vmatmul.mubr.f32.gmra.mrb[0].mxu0 %v1970
    %v2112 = vpop.f32.mrb[0].mxu0
    %v2113 = vadd.f32 0.0, %v2112
    %v2114 = vpop.f32.mrb[0].mxu0
    %2115 = vmatprep.mubr.f32.mxu0 0.0
    %2116 = vmatmul.mubr.f32.gmra.mrb[0].mxu0 %v1973
    %v2117 = vpop.f32.mrb[0].mxu0
    %v2118 = vadd.f32 0.0, %v2117
    %v2119 = vpop.f32.mrb[0].mxu0
    %2120 = vmatprep.mubr.f32.mxu0 0.0
    %2121 = vmatmul.mubr.f32.gmra.mrb[0].mxu0 %v1976
    %v2122 = vpop.f32.mrb[0].mxu0
    %v2123 = vadd.f32 0.0, %v2122
    %v2124 = vpop.f32.mrb[0].mxu0
    %2125 = vdwg.mxu0
    %v2126 = vadd.f32 %v1384, %v2048
    %v2127 = vadd.f32 %v1389, %v2053
    %v2128 = vadd.f32 %v1394, %v2058
    %v2129 = vadd.f32 %v1399, %v2063
    %v2130 = vadd.f32 %v1404, %v2068
    %v2131 = vadd.f32 %v1409, %v2073
    %v2132 = vadd.f32 %v1414, %v2078
    %v2133 = vadd.f32 %v1419, %v2083
    %v2134 = vadd.f32 %v1424, %v2088
    %v2135 = vadd.f32 %v1429, %v2093
    %v2136 = vadd.f32 %v1434, %v2098
    %v2137 = vadd.f32 %v1439, %v2103
    %v2138 = vadd.f32 %v1444, %v2108
    %v2139 = vadd.f32 %v1449, %v2113
    %v2140 = vadd.f32 %v1454, %v2118
    %v2141 = vadd.f32 %v1459, %v2123
    %2142 = vset.pattern.permute.xlu0 3
    %2143 = vperm.xlu0 %2142, %v117
    %v2144 = vpop.permute.xlu0 %2143
    %2145 = vset.pattern.permute.xlu0 3
    %2146 = vperm.xlu0 %2145, %v118
    %v2147 = vpop.permute.xlu0 %2146
    %2148 = vset.pattern.permute.xlu0 3
    %2149 = vperm.xlu0 %2148, %v119
    %v2150 = vpop.permute.xlu0 %2149
    %2151 = vset.pattern.permute.xlu0 3
    %2152 = vperm.xlu0 %2151, %v120
    %v2153 = vpop.permute.xlu0 %2152
    %2154 = vset.pattern.permute.xlu0 3
    %2155 = vperm.xlu0 %2154, %v121
    %v2156 = vpop.permute.xlu0 %2155
    %2157 = vset.pattern.permute.xlu0 3
    %2158 = vperm.xlu0 %2157, %v122
    %v2159 = vpop.permute.xlu0 %2158
    %2160 = vset.pattern.permute.xlu0 3
    %2161 = vperm.xlu0 %2160, %v123
    %v2162 = vpop.permute.xlu0 %2161
    %2163 = vset.pattern.permute.xlu0 3
    %2164 = vperm.xlu0 %2163, %v124
    %v2165 = vpop.permute.xlu0 %2164
    %2166 = vset.pattern.permute.xlu0 3
    %2167 = vperm.xlu0 %2166, %v125
    %v2168 = vpop.permute.xlu0 %2167
    %2169 = vset.pattern.permute.xlu0 3
    %2170 = vperm.xlu0 %2169, %v126
    %v2171 = vpop.permute.xlu0 %2170
    %2172 = vset.pattern.permute.xlu0 3
    %2173 = vperm.xlu0 %2172, %v127
    %v2174 = vpop.permute.xlu0 %2173
    %2175 = vset.pattern.permute.xlu0 3
    %2176 = vperm.xlu0 %2175, %v128
    %v2177 = vpop.permute.xlu0 %2176
    %2178 = vset.pattern.permute.xlu0 3
    %2179 = vperm.xlu0 %2178, %v129
    %v2180 = vpop.permute.xlu0 %2179
    %2181 = vset.pattern.permute.xlu0 3
    %2182 = vperm.xlu0 %2181, %v130
    %v2183 = vpop.permute.xlu0 %2182
    %2184 = vset.pattern.permute.xlu0 3
    %2185 = vperm.xlu0 %2184, %v131
    %v2186 = vpop.permute.xlu0 %2185
    %2187 = vset.pattern.permute.xlu0 3
    %2188 = vperm.xlu0 %2187, %v132
    %v2189 = vpop.permute.xlu0 %2188
    %vm2190 = vcmp.eq.s32.totalorder %v113, %v2144
    %vm2191 = vcmp.eq.s32.totalorder %v114, %v2144
    %vm2192 = vcmp.eq.s32.totalorder %v115, %v2144
    %vm2193 = vcmp.eq.s32.totalorder %v116, %v2144
    %vm2194 = vcmp.eq.s32.totalorder %v113, %v2147
    %vm2195 = vcmp.eq.s32.totalorder %v114, %v2147
    %vm2196 = vcmp.eq.s32.totalorder %v115, %v2147
    %vm2197 = vcmp.eq.s32.totalorder %v116, %v2147
    %vm2198 = vcmp.eq.s32.totalorder %v113, %v2150
    %vm2199 = vcmp.eq.s32.totalorder %v114, %v2150
    %vm2200 = vcmp.eq.s32.totalorder %v115, %v2150
    %vm2201 = vcmp.eq.s32.totalorder %v116, %v2150
    %vm2202 = vcmp.eq.s32.totalorder %v113, %v2153
    %vm2203 = vcmp.eq.s32.totalorder %v114, %v2153
    %vm2204 = vcmp.eq.s32.totalorder %v115, %v2153
    %vm2205 = vcmp.eq.s32.totalorder %v116, %v2153
    %vm2206 = vcmp.eq.s32.totalorder %v113, %v2156
    %vm2207 = vcmp.eq.s32.totalorder %v114, %v2156
    %vm2208 = vcmp.eq.s32.totalorder %v115, %v2156
    %vm2209 = vcmp.eq.s32.totalorder %v116, %v2156
    %vm2210 = vcmp.eq.s32.totalorder %v113, %v2159
    %vm2211 = vcmp.eq.s32.totalorder %v114, %v2159
    %vm2212 = vcmp.eq.s32.totalorder %v115, %v2159
    %vm2213 = vcmp.eq.s32.totalorder %v116, %v2159
    %vm2214 = vcmp.eq.s32.totalorder %v113, %v2162
    %vm2215 = vcmp.eq.s32.totalorder %v114, %v2162
    %vm2216 = vcmp.eq.s32.totalorder %v115, %v2162
    %vm2217 = vcmp.eq.s32.totalorder %v116, %v2162
    %vm2218 = vcmp.eq.s32.totalorder %v113, %v2165
    %vm2219 = vcmp.eq.s32.totalorder %v114, %v2165
    %vm2220 = vcmp.eq.s32.totalorder %v115, %v2165
    %vm2221 = vcmp.eq.s32.totalorder %v116, %v2165
    %vm2222 = vcmp.eq.s32.totalorder %v113, %v2168
    %vm2223 = vcmp.eq.s32.totalorder %v114, %v2168
    %vm2224 = vcmp.eq.s32.totalorder %v115, %v2168
    %vm2225 = vcmp.eq.s32.totalorder %v116, %v2168
    %vm2226 = vcmp.eq.s32.totalorder %v113, %v2171
    %vm2227 = vcmp.eq.s32.totalorder %v114, %v2171
    %vm2228 = vcmp.eq.s32.totalorder %v115, %v2171
    %vm2229 = vcmp.eq.s32.totalorder %v116, %v2171
    %vm2230 = vcmp.eq.s32.totalorder %v113, %v2174
    %vm2231 = vcmp.eq.s32.totalorder %v114, %v2174
    %vm2232 = vcmp.eq.s32.totalorder %v115, %v2174
    %vm2233 = vcmp.eq.s32.totalorder %v116, %v2174
    %vm2234 = vcmp.eq.s32.totalorder %v113, %v2177
    %vm2235 = vcmp.eq.s32.totalorder %v114, %v2177
    %vm2236 = vcmp.eq.s32.totalorder %v115, %v2177
    %vm2237 = vcmp.eq.s32.totalorder %v116, %v2177
    %vm2238 = vcmp.eq.s32.totalorder %v113, %v2180
    %vm2239 = vcmp.eq.s32.totalorder %v114, %v2180
    %vm2240 = vcmp.eq.s32.totalorder %v115, %v2180
    %vm2241 = vcmp.eq.s32.totalorder %v116, %v2180
    %vm2242 = vcmp.eq.s32.totalorder %v113, %v2183
    %vm2243 = vcmp.eq.s32.totalorder %v114, %v2183
    %vm2244 = vcmp.eq.s32.totalorder %v115, %v2183
    %vm2245 = vcmp.eq.s32.totalorder %v116, %v2183
    %vm2246 = vcmp.eq.s32.totalorder %v113, %v2186
    %vm2247 = vcmp.eq.s32.totalorder %v114, %v2186
    %vm2248 = vcmp.eq.s32.totalorder %v115, %v2186
    %vm2249 = vcmp.eq.s32.totalorder %v116, %v2186
    %vm2250 = vcmp.eq.s32.totalorder %v113, %v2189
    %vm2251 = vcmp.eq.s32.totalorder %v114, %v2189
    %vm2252 = vcmp.eq.s32.totalorder %v115, %v2189
    %vm2253 = vcmp.eq.s32.totalorder %v116, %v2189
    %v2254 = vsel %vm2190, 1.0, 0.0
    %v2255 = vsel %vm2191, 1.0, 0.0
    %v2256 = vsel %vm2192, 1.0, 0.0
    %v2257 = vsel %vm2193, 1.0, 0.0
    %v2258 = vsel %vm2194, 1.0, 0.0
    %v2259 = vsel %vm2195, 1.0, 0.0
    %v2260 = vsel %vm2196, 1.0, 0.0
    %v2261 = vsel %vm2197, 1.0, 0.0
    %v2262 = vsel %vm2198, 1.0, 0.0
    %v2263 = vsel %vm2199, 1.0, 0.0
    %v2264 = vsel %vm2200, 1.0, 0.0
    %v2265 = vsel %vm2201, 1.0, 0.0
    %v2266 = vsel %vm2202, 1.0, 0.0
    %v2267 = vsel %vm2203, 1.0, 0.0
    %v2268 = vsel %vm2204, 1.0, 0.0
    %v2269 = vsel %vm2205, 1.0, 0.0
    %v2270 = vsel %vm2206, 1.0, 0.0
    %v2271 = vsel %vm2207, 1.0, 0.0
    %v2272 = vsel %vm2208, 1.0, 0.0
    %v2273 = vsel %vm2209, 1.0, 0.0
    %v2274 = vsel %vm2210, 1.0, 0.0
    %v2275 = vsel %vm2211, 1.0, 0.0
    %v2276 = vsel %vm2212, 1.0, 0.0
    %v2277 = vsel %vm2213, 1.0, 0.0
    %v2278 = vsel %vm2214, 1.0, 0.0
    %v2279 = vsel %vm2215, 1.0, 0.0
    %v2280 = vsel %vm2216, 1.0, 0.0
    %v2281 = vsel %vm2217, 1.0, 0.0
    %v2282 = vsel %vm2218, 1.0, 0.0
    %v2283 = vsel %vm2219, 1.0, 0.0
    %v2284 = vsel %vm2220, 1.0, 0.0
    %v2285 = vsel %vm2221, 1.0, 0.0
    %v2286 = vsel %vm2222, 1.0, 0.0
    %v2287 = vsel %vm2223, 1.0, 0.0
    %v2288 = vsel %vm2224, 1.0, 0.0
    %v2289 = vsel %vm2225, 1.0, 0.0
    %v2290 = vsel %vm2226, 1.0, 0.0
    %v2291 = vsel %vm2227, 1.0, 0.0
    %v2292 = vsel %vm2228, 1.0, 0.0
    %v2293 = vsel %vm2229, 1.0, 0.0
    %v2294 = vsel %vm2230, 1.0, 0.0
    %v2295 = vsel %vm2231, 1.0, 0.0
    %v2296 = vsel %vm2232, 1.0, 0.0
    %v2297 = vsel %vm2233, 1.0, 0.0
    %v2298 = vsel %vm2234, 1.0, 0.0
    %v2299 = vsel %vm2235, 1.0, 0.0
    %v2300 = vsel %vm2236, 1.0, 0.0
    %v2301 = vsel %vm2237, 1.0, 0.0
    %v2302 = vsel %vm2238, 1.0, 0.0
    %v2303 = vsel %vm2239, 1.0, 0.0
    %v2304 = vsel %vm2240, 1.0, 0.0
    %v2305 = vsel %vm2241, 1.0, 0.0
    %v2306 = vsel %vm2242, 1.0, 0.0
    %v2307 = vsel %vm2243, 1.0, 0.0
    %v2308 = vsel %vm2244, 1.0, 0.0
    %v2309 = vsel %vm2245, 1.0, 0.0
    %v2310 = vsel %vm2246, 1.0, 0.0
    %v2311 = vsel %vm2247, 1.0, 0.0
    %v2312 = vsel %vm2248, 1.0, 0.0
    %v2313 = vsel %vm2249, 1.0, 0.0
    %v2314 = vsel %vm2250, 1.0, 0.0
    %v2315 = vsel %vm2251, 1.0, 0.0
    %v2316 = vsel %vm2252, 1.0, 0.0
    %v2317 = vsel %vm2253, 1.0, 0.0
    %2318 = vmatprep.subr.mxu0 0.0
    %2319 = vmatpush1.msra.mxu0 %v48
    %2320 = vmatprep.subr.mxu0 0.0
    %2321 = vmatpush1.msra.mxu0 %v49
    %2322 = vmatprep.subr.mxu0 0.0
    %2323 = vmatpush1.msra.mxu0 %v50
    %2324 = vmatprep.subr.mxu0 0.0
    %2325 = vmatpush1.msra.mxu0 %v51
    %2326 = vmatprep.subr.mxu0 0.0
    %2327 = vmatpush1.msra.mxu0 %v52
    %2328 = vmatprep.subr.mxu0 0.0
    %2329 = vmatpush1.msra.mxu0 %v53
    %2330 = vmatprep.subr.mxu0 0.0
    %2331 = vmatpush1.msra.mxu0 %v54
    %2332 = vmatprep.subr.mxu0 0.0
    %2333 = vmatpush1.msra.mxu0 %v55
    %2334 = vmatprep.subr.mxu0 0.0
    %2335 = vmatpush1.msra.mxu0 %v56
    %2336 = vmatprep.subr.mxu0 0.0
    %2337 = vmatpush1.msra.mxu0 %v57
    %2338 = vmatprep.subr.mxu0 0.0
    %2339 = vmatpush1.msra.mxu0 %v58
    %2340 = vmatprep.subr.mxu0 0.0
    %2341 = vmatpush1.msra.mxu0 %v59
    %2342 = vmatprep.subr.mxu0 0.0
    %2343 = vmatpush1.msra.mxu0 %v60
    %2344 = vmatprep.subr.mxu0 0.0
    %2345 = vmatpush1.msra.mxu0 %v61
    %2346 = vmatprep.subr.mxu0 0.0
    %2347 = vmatpush1.msra.mxu0 %v62
    %2348 = vmatprep.subr.mxu0 0.0
    %2349 = vmatpush1.msra.mxu0 %v63
    %2350 = vmatprep.subr.mxu0 0.0
    %2351 = vmatpush1.msra.mxu0 %v64
    %2352 = vmatprep.subr.mxu0 0.0
    %2353 = vmatpush1.msra.mxu0 %v65
    %2354 = vmatprep.subr.mxu0 0.0
    %2355 = vmatpush1.msra.mxu0 %v66
    %2356 = vmatprep.subr.mxu0 0.0
    %2357 = vmatpush1.msra.mxu0 %v67
    %2358 = vmatprep.subr.mxu0 0.0
    %2359 = vmatpush1.msra.mxu0 %v68
    %2360 = vmatprep.subr.mxu0 0.0
    %2361 = vmatpush1.msra.mxu0 %v69
    %2362 = vmatprep.subr.mxu0 0.0
    %2363 = vmatpush1.msra.mxu0 %v70
    %2364 = vmatprep.subr.mxu0 0.0
    %2365 = vmatpush1.msra.mxu0 %v71
    %2366 = vmatprep.subr.mxu0 0.0
    %2367 = vmatpush1.msra.mxu0 %v72
    %2368 = vmatprep.subr.mxu0 0.0
    %2369 = vmatpush1.msra.mxu0 %v73
    %2370 = vmatprep.subr.mxu0 0.0
    %2371 = vmatpush1.msra.mxu0 %v74
    %2372 = vmatprep.subr.mxu0 0.0
    %2373 = vmatpush1.msra.mxu0 %v75
    %2374 = vmatprep.subr.mxu0 0.0
    %2375 = vmatpush1.msra.mxu0 %v76
    %2376 = vmatprep.subr.mxu0 0.0
    %2377 = vmatpush1.msra.mxu0 %v77
    %2378 = vmatprep.subr.mxu0 0.0
    %2379 = vmatpush1.msra.mxu0 %v78
    %2380 = vmatprep.subr.mxu0 0.0
    %2381 = vmatpush1.msra.mxu0 %v79
    %2382 = vmatprep.mubr.f32.mxu0 %v2255
    %2383 = vmatmul.mubr.f32.gmra.mrb[0].mxu0 %v2254
    %v2384 = vpop.f32.mrb[0].mxu0
    %v2385 = vadd.f32 0.0, %v2384
    %v2386 = vpop.f32.mrb[0].mxu0
    %2387 = vmatprep.mubr.f32.mxu0 %v2259
    %2388 = vmatmul.mubr.f32.gmra.mrb[0].mxu0 %v2258
    %v2389 = vpop.f32.mrb[0].mxu0
    %v2390 = vadd.f32 0.0, %v2389
    %v2391 = vpop.f32.mrb[0].mxu0
    %2392 = vmatprep.mubr.f32.mxu0 %v2263
    %2393 = vmatmul.mubr.f32.gmra.mrb[0].mxu0 %v2262
    %v2394 = vpop.f32.mrb[0].mxu0
    %v2395 = vadd.f32 0.0, %v2394
    %v2396 = vpop.f32.mrb[0].mxu0
    %2397 = vmatprep.mubr.f32.mxu0 %v2267
    %2398 = vmatmul.mubr.f32.gmra.mrb[0].mxu0 %v2266
    %v2399 = vpop.f32.mrb[0].mxu0
    %v2400 = vadd.f32 0.0, %v2399
    %v2401 = vpop.f32.mrb[0].mxu0
    %2402 = vmatprep.mubr.f32.mxu0 %v2271
    %2403 = vmatmul.mubr.f32.gmra.mrb[0].mxu0 %v2270
    %v2404 = vpop.f32.mrb[0].mxu0
    %v2405 = vadd.f32 0.0, %v2404
    %v2406 = vpop.f32.mrb[0].mxu0
    %2407 = vmatprep.mubr.f32.mxu0 %v2275
    %2408 = vmatmul.mubr.f32.gmra.mrb[0].mxu0 %v2274
    %v2409 = vpop.f32.mrb[0].mxu0
    %v2410 = vadd.f32 0.0, %v2409
    %v2411 = vpop.f32.mrb[0].mxu0
    %2412 = vmatprep.mubr.f32.mxu0 %v2279
    %2413 = vmatmul.mubr.f32.gmra.mrb[0].mxu0 %v2278
    %v2414 = vpop.f32.mrb[0].mxu0
    %v2415 = vadd.f32 0.0, %v2414
    %v2416 = vpop.f32.mrb[0].mxu0
    %2417 = vmatprep.mubr.f32.mxu0 %v2283
    %2418 = vmatmul.mubr.f32.gmra.mrb[0].mxu0 %v2282
    %v2419 = vpop.f32.mrb[0].mxu0
    %v2420 = vadd.f32 0.0, %v2419
    %v2421 = vpop.f32.mrb[0].mxu0
    %2422 = vmatprep.mubr.f32.mxu0 %v2287
    %2423 = vmatmul.mubr.f32.gmra.mrb[0].mxu0 %v2286
    %v2424 = vpop.f32.mrb[0].mxu0
    %v2425 = vadd.f32 0.0, %v2424
    %v2426 = vpop.f32.mrb[0].mxu0
    %2427 = vmatprep.mubr.f32.mxu0 %v2291
    %2428 = vmatmul.mubr.f32.gmra.mrb[0].mxu0 %v2290
    %v2429 = vpop.f32.mrb[0].mxu0
    %v2430 = vadd.f32 0.0, %v2429
    %v2431 = vpop.f32.mrb[0].mxu0
    %2432 = vmatprep.mubr.f32.mxu0 %v2295
    %2433 = vmatmul.mubr.f32.gmra.mrb[0].mxu0 %v2294
    %v2434 = vpop.f32.mrb[0].mxu0
    %v2435 = vadd.f32 0.0, %v2434
    %v2436 = vpop.f32.mrb[0].mxu0
    %2437 = vmatprep.mubr.f32.mxu0 %v2299
    %2438 = vmatmul.mubr.f32.gmra.mrb[0].mxu0 %v2298
    %v2439 = vpop.f32.mrb[0].mxu0
    %v2440 = vadd.f32 0.0, %v2439
    %v2441 = vpop.f32.mrb[0].mxu0
    %2442 = vmatprep.mubr.f32.mxu0 %v2303
    %2443 = vmatmul.mubr.f32.gmra.mrb[0].mxu0 %v2302
    %v2444 = vpop.f32.mrb[0].mxu0
    %v2445 = vadd.f32 0.0, %v2444
    %v2446 = vpop.f32.mrb[0].mxu0
    %2447 = vmatprep.mubr.f32.mxu0 %v2307
    %2448 = vmatmul.mubr.f32.gmra.mrb[0].mxu0 %v2306
    %v2449 = vpop.f32.mrb[0].mxu0
    %v2450 = vadd.f32 0.0, %v2449
    %v2451 = vpop.f32.mrb[0].mxu0
    %2452 = vmatprep.mubr.f32.mxu0 %v2311
    %2453 = vmatmul.mubr.f32.gmra.mrb[0].mxu0 %v2310
    %v2454 = vpop.f32.mrb[0].mxu0
    %v2455 = vadd.f32 0.0, %v2454
    %v2456 = vpop.f32.mrb[0].mxu0
    %2457 = vmatprep.mubr.f32.mxu0 %v2315
    %2458 = vmatmul.mubr.f32.gmra.mrb[0].mxu0 %v2314
    %v2459 = vpop.f32.mrb[0].mxu0
    %v2460 = vadd.f32 0.0, %v2459
    %v2461 = vpop.f32.mrb[0].mxu0
    %2462 = vdwg.mxu0
    %2463 = vmatprep.subr.mxu0 0.0
    %2464 = vmatpush1.msra.mxu0 %v80
    %2465 = vmatprep.subr.mxu0 0.0
    %2466 = vmatpush1.msra.mxu0 %v81
    %2467 = vmatprep.subr.mxu0 0.0
    %2468 = vmatpush1.msra.mxu0 %v82
    %2469 = vmatprep.subr.mxu0 0.0
    %2470 = vmatpush1.msra.mxu0 %v83
    %2471 = vmatprep.subr.mxu0 0.0
    %2472 = vmatpush1.msra.mxu0 %v84
    %2473 = vmatprep.subr.mxu0 0.0
    %2474 = vmatpush1.msra.mxu0 %v85
    %2475 = vmatprep.subr.mxu0 0.0
    %2476 = vmatpush1.msra.mxu0 %v86
    %2477 = vmatprep.subr.mxu0 0.0
    %2478 = vmatpush1.msra.mxu0 %v87
    %2479 = vmatprep.subr.mxu0 0.0
    %2480 = vmatpush1.msra.mxu0 %v88
    %2481 = vmatprep.subr.mxu0 0.0
    %2482 = vmatpush1.msra.mxu0 %v89
    %2483 = vmatprep.subr.mxu0 0.0
    %2484 = vmatpush1.msra.mxu0 %v90
    %2485 = vmatprep.subr.mxu0 0.0
    %2486 = vmatpush1.msra.mxu0 %v91
    %2487 = vmatprep.subr.mxu0 0.0
    %2488 = vmatpush1.msra.mxu0 %v92
    %2489 = vmatprep.subr.mxu0 0.0
    %2490 = vmatpush1.msra.mxu0 %v93
    %2491 = vmatprep.subr.mxu0 0.0
    %2492 = vmatpush1.msra.mxu0 %v94
    %2493 = vmatprep.subr.mxu0 0.0
    %2494 = vmatpush1.msra.mxu0 %v95
    %2495 = vmatprep.subr.mxu0 0.0
    %2496 = vmatpush1.msra.mxu0 %v96
    %2497 = vmatprep.subr.mxu0 0.0
    %2498 = vmatpush1.msra.mxu0 %v97
    %2499 = vmatprep.subr.mxu0 0.0
    %2500 = vmatpush1.msra.mxu0 %v98
    %2501 = vmatprep.subr.mxu0 0.0
    %2502 = vmatpush1.msra.mxu0 %v99
    %2503 = vmatprep.subr.mxu0 0.0
    %2504 = vmatpush1.msra.mxu0 %v100
    %2505 = vmatprep.subr.mxu0 0.0
    %2506 = vmatpush1.msra.mxu0 %v101
    %2507 = vmatprep.subr.mxu0 0.0
    %2508 = vmatpush1.msra.mxu0 %v102
    %2509 = vmatprep.subr.mxu0 0.0
    %2510 = vmatpush1.msra.mxu0 %v103
    %2511 = vmatprep.subr.mxu0 0.0
    %2512 = vmatpush1.msra.mxu0 %v104
    %2513 = vmatprep.subr.mxu0 0.0
    %2514 = vmatpush1.msra.mxu0 %v105
    %2515 = vmatprep.subr.mxu0 0.0
    %2516 = vmatpush1.msra.mxu0 %v106
    %2517 = vmatprep.subr.mxu0 0.0
    %2518 = vmatpush1.msra.mxu0 %v107
    %2519 = vmatprep.subr.mxu0 0.0
    %2520 = vmatpush1.msra.mxu0 %v108
    %2521 = vmatprep.subr.mxu0 0.0
    %2522 = vmatpush1.msra.mxu0 %v109
    %2523 = vmatprep.subr.mxu0 0.0
    %2524 = vmatpush1.msra.mxu0 %v110
    %2525 = vmatprep.subr.mxu0 0.0
    %2526 = vmatpush1.msra.mxu0 %v111
    %2527 = vmatprep.mubr.f32.mxu0 %v2257
    %2528 = vmatmul.mubr.f32.gmra.mrb[0].mxu0 %v2256
    %v2529 = vpop.f32.mrb[0].mxu0
    %v2530 = vadd.f32 %v2385, %v2529
    %v2531 = vpop.f32.mrb[0].mxu0
    %2532 = vmatprep.mubr.f32.mxu0 %v2261
    %2533 = vmatmul.mubr.f32.gmra.mrb[0].mxu0 %v2260
    %v2534 = vpop.f32.mrb[0].mxu0
    %v2535 = vadd.f32 %v2390, %v2534
    %v2536 = vpop.f32.mrb[0].mxu0
    %2537 = vmatprep.mubr.f32.mxu0 %v2265
    %2538 = vmatmul.mubr.f32.gmra.mrb[0].mxu0 %v2264
    %v2539 = vpop.f32.mrb[0].mxu0
    %v2540 = vadd.f32 %v2395, %v2539
    %v2541 = vpop.f32.mrb[0].mxu0
    %2542 = vmatprep.mubr.f32.mxu0 %v2269
    %2543 = vmatmul.mubr.f32.gmra.mrb[0].mxu0 %v2268
    %v2544 = vpop.f32.mrb[0].mxu0
    %v2545 = vadd.f32 %v2400, %v2544
    %v2546 = vpop.f32.mrb[0].mxu0
    %2547 = vmatprep.mubr.f32.mxu0 %v2273
    %2548 = vmatmul.mubr.f32.gmra.mrb[0].mxu0 %v2272
    %v2549 = vpop.f32.mrb[0].mxu0
    %v2550 = vadd.f32 %v2405, %v2549
    %v2551 = vpop.f32.mrb[0].mxu0
    %2552 = vmatprep.mubr.f32.mxu0 %v2277
    %2553 = vmatmul.mubr.f32.gmra.mrb[0].mxu0 %v2276
    %v2554 = vpop.f32.mrb[0].mxu0
    %v2555 = vadd.f32 %v2410, %v2554
    %v2556 = vpop.f32.mrb[0].mxu0
    %2557 = vmatprep.mubr.f32.mxu0 %v2281
    %2558 = vmatmul.mubr.f32.gmra.mrb[0].mxu0 %v2280
    %v2559 = vpop.f32.mrb[0].mxu0
    %v2560 = vadd.f32 %v2415, %v2559
    %v2561 = vpop.f32.mrb[0].mxu0
    %2562 = vmatprep.mubr.f32.mxu0 %v2285
    %2563 = vmatmul.mubr.f32.gmra.mrb[0].mxu0 %v2284
    %v2564 = vpop.f32.mrb[0].mxu0
    %v2565 = vadd.f32 %v2420, %v2564
    %v2566 = vpop.f32.mrb[0].mxu0
    %2567 = vmatprep.mubr.f32.mxu0 %v2289
    %2568 = vmatmul.mubr.f32.gmra.mrb[0].mxu0 %v2288
    %v2569 = vpop.f32.mrb[0].mxu0
    %v2570 = vadd.f32 %v2425, %v2569
    %v2571 = vpop.f32.mrb[0].mxu0
    %2572 = vmatprep.mubr.f32.mxu0 %v2293
    %2573 = vmatmul.mubr.f32.gmra.mrb[0].mxu0 %v2292
    %v2574 = vpop.f32.mrb[0].mxu0
    %v2575 = vadd.f32 %v2430, %v2574
    %v2576 = vpop.f32.mrb[0].mxu0
    %2577 = vmatprep.mubr.f32.mxu0 %v2297
    %2578 = vmatmul.mubr.f32.gmra.mrb[0].mxu0 %v2296
    %v2579 = vpop.f32.mrb[0].mxu0
    %v2580 = vadd.f32 %v2435, %v2579
    %v2581 = vpop.f32.mrb[0].mxu0
    %2582 = vmatprep.mubr.f32.mxu0 %v2301
    %2583 = vmatmul.mubr.f32.gmra.mrb[0].mxu0 %v2300
    %v2584 = vpop.f32.mrb[0].mxu0
    %v2585 = vadd.f32 %v2440, %v2584
    %v2586 = vpop.f32.mrb[0].mxu0
    %2587 = vmatprep.mubr.f32.mxu0 %v2305
    %2588 = vmatmul.mubr.f32.gmra.mrb[0].mxu0 %v2304
    %v2589 = vpop.f32.mrb[0].mxu0
    %v2590 = vadd.f32 %v2445, %v2589
    %v2591 = vpop.f32.mrb[0].mxu0
    %2592 = vmatprep.mubr.f32.mxu0 %v2309
    %2593 = vmatmul.mubr.f32.gmra.mrb[0].mxu0 %v2308
    %v2594 = vpop.f32.mrb[0].mxu0
    %v2595 = vadd.f32 %v2450, %v2594
    %v2596 = vpop.f32.mrb[0].mxu0
    %2597 = vmatprep.mubr.f32.mxu0 %v2313
    %2598 = vmatmul.mubr.f32.gmra.mrb[0].mxu0 %v2312
    %v2599 = vpop.f32.mrb[0].mxu0
    %v2600 = vadd.f32 %v2455, %v2599
    %v2601 = vpop.f32.mrb[0].mxu0
    %2602 = vmatprep.mubr.f32.mxu0 %v2317
    %2603 = vmatmul.mubr.f32.gmra.mrb[0].mxu0 %v2316
    %v2604 = vpop.f32.mrb[0].mxu0
    %v2605 = vadd.f32 %v2460, %v2604
    %v2606 = vpop.f32.mrb[0].mxu0
    %2607 = vdwg.mxu0
    %s2608 = scalar_lea.vmem %s2, 12
    %v2609 = vld [vmem:[%s2608] sm:$0xf]
    %v2611 = vsel %vm1068, %v2530, 0
    %v2614 = vsel %vm1068, %v2535, 0
    %v2617 = vsel %vm1068, %v2540, 0
    %v2620 = vsel %vm1068, %v2545, 0
    %v2623 = vsel %vm1068, %v2550, 0
    %v2626 = vsel %vm1068, %v2555, 0
    %v2629 = vsel %vm1068, %v2560, 0
    %v2632 = vsel %vm1068, %v2565, 0
    %v2635 = vsel %vm1068, %v2570, 0
    %v2638 = vsel %vm1068, %v2575, 0
    %v2641 = vsel %vm1068, %v2580, 0
    %v2644 = vsel %vm1068, %v2585, 0
    %v2647 = vsel %vm1068, %v2590, 0
    %v2650 = vsel %vm1068, %v2595, 0
    %v2653 = vsel %vm1068, %v2600, 0
    %v2656 = vsel %vm1068, %v2605, 0
    %v2659 = vsel %vm1117, %v2609, 0
    %2661 = vmatprep.subr.mxu0 0.0
    %2662 = vmatpush1.msra.mxu0 %v2659
    %2663 = vmatprep.subr.mxu0 0.0
    %2664 = vmatpush1.msra.mxu0 0.0
    %2665 = vmatprep.subr.mxu0 0.0
    %2666 = vmatpush1.msra.mxu0 0.0
    %2667 = vmatprep.subr.mxu0 0.0
    %2668 = vmatpush1.msra.mxu0 0.0
    %2669 = vmatprep.subr.mxu0 0.0
    %2670 = vmatpush1.msra.mxu0 0.0
    %2671 = vmatprep.subr.mxu0 0.0
    %2672 = vmatpush1.msra.mxu0 0.0
    %2673 = vmatprep.subr.mxu0 0.0
    %2674 = vmatpush1.msra.mxu0 0.0
    %2675 = vmatprep.subr.mxu0 0.0
    %2676 = vmatpush1.msra.mxu0 0.0
    %2677 = vmatprep.subr.mxu0 0.0
    %2678 = vmatpush1.msra.mxu0 0.0
    %2679 = vmatprep.subr.mxu0 0.0
    %2680 = vmatpush1.msra.mxu0 0.0
    %2681 = vmatprep.subr.mxu0 0.0
    %2682 = vmatpush1.msra.mxu0 0.0
    %2683 = vmatprep.subr.mxu0 0.0
    %2684 = vmatpush1.msra.mxu0 0.0
    %2685 = vmatprep.subr.mxu0 0.0
    %2686 = vmatpush1.msra.mxu0 0.0
    %2687 = vmatprep.subr.mxu0 0.0
    %2688 = vmatpush1.msra.mxu0 0.0
    %2689 = vmatprep.subr.mxu0 0.0
    %2690 = vmatpush1.msra.mxu0 0.0
    %2691 = vmatprep.subr.mxu0 0.0
    %2692 = vmatpush1.msra.mxu0 0.0
    %2693 = vmatprep.subr.mxu0 0.0
    %2694 = vmatpush1.msra.mxu0 0.0
    %2695 = vmatprep.subr.mxu0 0.0
    %2696 = vmatpush1.msra.mxu0 0.0
    %2697 = vmatprep.subr.mxu0 0.0
    %2698 = vmatpush1.msra.mxu0 0.0
    %2699 = vmatprep.subr.mxu0 0.0
    %2700 = vmatpush1.msra.mxu0 0.0
    %2701 = vmatprep.subr.mxu0 0.0
    %2702 = vmatpush1.msra.mxu0 0.0
    %2703 = vmatprep.subr.mxu0 0.0
    %2704 = vmatpush1.msra.mxu0 0.0
    %2705 = vmatprep.subr.mxu0 0.0
    %2706 = vmatpush1.msra.mxu0 0.0
    %2707 = vmatprep.subr.mxu0 0.0
    %2708 = vmatpush1.msra.mxu0 0.0
    %2709 = vmatprep.subr.mxu0 0.0
    %2710 = vmatpush1.msra.mxu0 0.0
    %2711 = vmatprep.subr.mxu0 0.0
    %2712 = vmatpush1.msra.mxu0 0.0
    %2713 = vmatprep.subr.mxu0 0.0
    %2714 = vmatpush1.msra.mxu0 0.0
    %2715 = vmatprep.subr.mxu0 0.0
    %2716 = vmatpush1.msra.mxu0 0.0
    %2717 = vmatprep.subr.mxu0 0.0
    %2718 = vmatpush1.msra.mxu0 0.0
    %2719 = vmatprep.subr.mxu0 0.0
    %2720 = vmatpush1.msra.mxu0 0.0
    %2721 = vmatprep.subr.mxu0 0.0
    %2722 = vmatpush1.msra.mxu0 0.0
    %2723 = vmatprep.subr.mxu0 0.0
    %2724 = vmatpush1.msra.mxu0 0.0
    %2725 = vmatprep.mubr.f32.mxu0 0.0
    %2726 = vmatmul.mubr.f32.gmra.mrb[0].mxu0 %v2611
    %v2727 = vpop.f32.mrb[0].mxu0
    %v2728 = vadd.f32 0.0, %v2727
    %v2729 = vpop.f32.mrb[0].mxu0
    %2730 = vmatprep.mubr.f32.mxu0 0.0
    %2731 = vmatmul.mubr.f32.gmra.mrb[0].mxu0 %v2614
    %v2732 = vpop.f32.mrb[0].mxu0
    %v2733 = vadd.f32 0.0, %v2732
    %v2734 = vpop.f32.mrb[0].mxu0
    %2735 = vmatprep.mubr.f32.mxu0 0.0
    %2736 = vmatmul.mubr.f32.gmra.mrb[0].mxu0 %v2617
    %v2737 = vpop.f32.mrb[0].mxu0
    %v2738 = vadd.f32 0.0, %v2737
    %v2739 = vpop.f32.mrb[0].mxu0
    %2740 = vmatprep.mubr.f32.mxu0 0.0
    %2741 = vmatmul.mubr.f32.gmra.mrb[0].mxu0 %v2620
    %v2742 = vpop.f32.mrb[0].mxu0
    %v2743 = vadd.f32 0.0, %v2742
    %v2744 = vpop.f32.mrb[0].mxu0
    %2745 = vmatprep.mubr.f32.mxu0 0.0
    %2746 = vmatmul.mubr.f32.gmra.mrb[0].mxu0 %v2623
    %v2747 = vpop.f32.mrb[0].mxu0
    %v2748 = vadd.f32 0.0, %v2747
    %v2749 = vpop.f32.mrb[0].mxu0
    %2750 = vmatprep.mubr.f32.mxu0 0.0
    %2751 = vmatmul.mubr.f32.gmra.mrb[0].mxu0 %v2626
    %v2752 = vpop.f32.mrb[0].mxu0
    %v2753 = vadd.f32 0.0, %v2752
    %v2754 = vpop.f32.mrb[0].mxu0
    %2755 = vmatprep.mubr.f32.mxu0 0.0
    %2756 = vmatmul.mubr.f32.gmra.mrb[0].mxu0 %v2629
    %v2757 = vpop.f32.mrb[0].mxu0
    %v2758 = vadd.f32 0.0, %v2757
    %v2759 = vpop.f32.mrb[0].mxu0
    %2760 = vmatprep.mubr.f32.mxu0 0.0
    %2761 = vmatmul.mubr.f32.gmra.mrb[0].mxu0 %v2632
    %v2762 = vpop.f32.mrb[0].mxu0
    %v2763 = vadd.f32 0.0, %v2762
    %v2764 = vpop.f32.mrb[0].mxu0
    %2765 = vmatprep.mubr.f32.mxu0 0.0
    %2766 = vmatmul.mubr.f32.gmra.mrb[0].mxu0 %v2635
    %v2767 = vpop.f32.mrb[0].mxu0
    %v2768 = vadd.f32 0.0, %v2767
    %v2769 = vpop.f32.mrb[0].mxu0
    %2770 = vmatprep.mubr.f32.mxu0 0.0
    %2771 = vmatmul.mubr.f32.gmra.mrb[0].mxu0 %v2638
    %v2772 = vpop.f32.mrb[0].mxu0
    %v2773 = vadd.f32 0.0, %v2772
    %v2774 = vpop.f32.mrb[0].mxu0
    %2775 = vmatprep.mubr.f32.mxu0 0.0
    %2776 = vmatmul.mubr.f32.gmra.mrb[0].mxu0 %v2641
    %v2777 = vpop.f32.mrb[0].mxu0
    %v2778 = vadd.f32 0.0, %v2777
    %v2779 = vpop.f32.mrb[0].mxu0
    %2780 = vmatprep.mubr.f32.mxu0 0.0
    %2781 = vmatmul.mubr.f32.gmra.mrb[0].mxu0 %v2644
    %v2782 = vpop.f32.mrb[0].mxu0
    %v2783 = vadd.f32 0.0, %v2782
    %v2784 = vpop.f32.mrb[0].mxu0
    %2785 = vmatprep.mubr.f32.mxu0 0.0
    %2786 = vmatmul.mubr.f32.gmra.mrb[0].mxu0 %v2647
    %v2787 = vpop.f32.mrb[0].mxu0
    %v2788 = vadd.f32 0.0, %v2787
    %v2789 = vpop.f32.mrb[0].mxu0
    %2790 = vmatprep.mubr.f32.mxu0 0.0
    %2791 = vmatmul.mubr.f32.gmra.mrb[0].mxu0 %v2650
    %v2792 = vpop.f32.mrb[0].mxu0
    %v2793 = vadd.f32 0.0, %v2792
    %v2794 = vpop.f32.mrb[0].mxu0
    %2795 = vmatprep.mubr.f32.mxu0 0.0
    %2796 = vmatmul.mubr.f32.gmra.mrb[0].mxu0 %v2653
    %v2797 = vpop.f32.mrb[0].mxu0
    %v2798 = vadd.f32 0.0, %v2797
    %v2799 = vpop.f32.mrb[0].mxu0
    %2800 = vmatprep.mubr.f32.mxu0 0.0
    %2801 = vmatmul.mubr.f32.gmra.mrb[0].mxu0 %v2656
    %v2802 = vpop.f32.mrb[0].mxu0
    %v2803 = vadd.f32 0.0, %v2802
    %v2804 = vpop.f32.mrb[0].mxu0
    %2805 = vdwg.mxu0
    %v2806 = vadd.f32 %v2126, %v2728
    %v2807 = vadd.f32 %v2127, %v2733
    %v2808 = vadd.f32 %v2128, %v2738
    %v2809 = vadd.f32 %v2129, %v2743
    %v2810 = vadd.f32 %v2130, %v2748
    %v2811 = vadd.f32 %v2131, %v2753
    %v2812 = vadd.f32 %v2132, %v2758
    %v2813 = vadd.f32 %v2133, %v2763
    %v2814 = vadd.f32 %v2134, %v2768
    %v2815 = vadd.f32 %v2135, %v2773
    %v2816 = vadd.f32 %v2136, %v2778
    %v2817 = vadd.f32 %v2137, %v2783
    %v2818 = vadd.f32 %v2138, %v2788
    %v2819 = vadd.f32 %v2139, %v2793
    %v2820 = vadd.f32 %v2140, %v2798
    %v2821 = vadd.f32 %v2141, %v2803
    %2822 = vset.pattern.permute.xlu0 4
    %2823 = vperm.xlu0 %2822, %v117
    %v2824 = vpop.permute.xlu0 %2823
    %2825 = vset.pattern.permute.xlu0 4
    %2826 = vperm.xlu0 %2825, %v118
    %v2827 = vpop.permute.xlu0 %2826
    %2828 = vset.pattern.permute.xlu0 4
    %2829 = vperm.xlu0 %2828, %v119
    %v2830 = vpop.permute.xlu0 %2829
    %2831 = vset.pattern.permute.xlu0 4
    %2832 = vperm.xlu0 %2831, %v120
    %v2833 = vpop.permute.xlu0 %2832
    %2834 = vset.pattern.permute.xlu0 4
    %2835 = vperm.xlu0 %2834, %v121
    %v2836 = vpop.permute.xlu0 %2835
    %2837 = vset.pattern.permute.xlu0 4
    %2838 = vperm.xlu0 %2837, %v122
    %v2839 = vpop.permute.xlu0 %2838
    %2840 = vset.pattern.permute.xlu0 4
    %2841 = vperm.xlu0 %2840, %v123
    %v2842 = vpop.permute.xlu0 %2841
    %2843 = vset.pattern.permute.xlu0 4
    %2844 = vperm.xlu0 %2843, %v124
    %v2845 = vpop.permute.xlu0 %2844
    %2846 = vset.pattern.permute.xlu0 4
    %2847 = vperm.xlu0 %2846, %v125
    %v2848 = vpop.permute.xlu0 %2847
    %2849 = vset.pattern.permute.xlu0 4
    %2850 = vperm.xlu0 %2849, %v126
    %v2851 = vpop.permute.xlu0 %2850
    %2852 = vset.pattern.permute.xlu0 4
    %2853 = vperm.xlu0 %2852, %v127
    %v2854 = vpop.permute.xlu0 %2853
    %2855 = vset.pattern.permute.xlu0 4
    %2856 = vperm.xlu0 %2855, %v128
    %v2857 = vpop.permute.xlu0 %2856
    %2858 = vset.pattern.permute.xlu0 4
    %2859 = vperm.xlu0 %2858, %v129
    %v2860 = vpop.permute.xlu0 %2859
    %2861 = vset.pattern.permute.xlu0 4
    %2862 = vperm.xlu0 %2861, %v130
    %v2863 = vpop.permute.xlu0 %2862
    %2864 = vset.pattern.permute.xlu0 4
    %2865 = vperm.xlu0 %2864, %v131
    %v2866 = vpop.permute.xlu0 %2865
    %2867 = vset.pattern.permute.xlu0 4
    %2868 = vperm.xlu0 %2867, %v132
    %v2869 = vpop.permute.xlu0 %2868
    %vm2870 = vcmp.eq.s32.totalorder %v113, %v2824
    %vm2871 = vcmp.eq.s32.totalorder %v114, %v2824
    %vm2872 = vcmp.eq.s32.totalorder %v115, %v2824
    %vm2873 = vcmp.eq.s32.totalorder %v116, %v2824
    %vm2874 = vcmp.eq.s32.totalorder %v113, %v2827
    %vm2875 = vcmp.eq.s32.totalorder %v114, %v2827
    %vm2876 = vcmp.eq.s32.totalorder %v115, %v2827
    %vm2877 = vcmp.eq.s32.totalorder %v116, %v2827
    %vm2878 = vcmp.eq.s32.totalorder %v113, %v2830
    %vm2879 = vcmp.eq.s32.totalorder %v114, %v2830
    %vm2880 = vcmp.eq.s32.totalorder %v115, %v2830
    %vm2881 = vcmp.eq.s32.totalorder %v116, %v2830
    %vm2882 = vcmp.eq.s32.totalorder %v113, %v2833
    %vm2883 = vcmp.eq.s32.totalorder %v114, %v2833
    %vm2884 = vcmp.eq.s32.totalorder %v115, %v2833
    %vm2885 = vcmp.eq.s32.totalorder %v116, %v2833
    %vm2886 = vcmp.eq.s32.totalorder %v113, %v2836
    %vm2887 = vcmp.eq.s32.totalorder %v114, %v2836
    %vm2888 = vcmp.eq.s32.totalorder %v115, %v2836
    %vm2889 = vcmp.eq.s32.totalorder %v116, %v2836
    %vm2890 = vcmp.eq.s32.totalorder %v113, %v2839
    %vm2891 = vcmp.eq.s32.totalorder %v114, %v2839
    %vm2892 = vcmp.eq.s32.totalorder %v115, %v2839
    %vm2893 = vcmp.eq.s32.totalorder %v116, %v2839
    %vm2894 = vcmp.eq.s32.totalorder %v113, %v2842
    %vm2895 = vcmp.eq.s32.totalorder %v114, %v2842
    %vm2896 = vcmp.eq.s32.totalorder %v115, %v2842
    %vm2897 = vcmp.eq.s32.totalorder %v116, %v2842
    %vm2898 = vcmp.eq.s32.totalorder %v113, %v2845
    %vm2899 = vcmp.eq.s32.totalorder %v114, %v2845
    %vm2900 = vcmp.eq.s32.totalorder %v115, %v2845
    %vm2901 = vcmp.eq.s32.totalorder %v116, %v2845
    %vm2902 = vcmp.eq.s32.totalorder %v113, %v2848
    %vm2903 = vcmp.eq.s32.totalorder %v114, %v2848
    %vm2904 = vcmp.eq.s32.totalorder %v115, %v2848
    %vm2905 = vcmp.eq.s32.totalorder %v116, %v2848
    %vm2906 = vcmp.eq.s32.totalorder %v113, %v2851
    %vm2907 = vcmp.eq.s32.totalorder %v114, %v2851
    %vm2908 = vcmp.eq.s32.totalorder %v115, %v2851
    %vm2909 = vcmp.eq.s32.totalorder %v116, %v2851
    %vm2910 = vcmp.eq.s32.totalorder %v113, %v2854
    %vm2911 = vcmp.eq.s32.totalorder %v114, %v2854
    %vm2912 = vcmp.eq.s32.totalorder %v115, %v2854
    %vm2913 = vcmp.eq.s32.totalorder %v116, %v2854
    %vm2914 = vcmp.eq.s32.totalorder %v113, %v2857
    %vm2915 = vcmp.eq.s32.totalorder %v114, %v2857
    %vm2916 = vcmp.eq.s32.totalorder %v115, %v2857
    %vm2917 = vcmp.eq.s32.totalorder %v116, %v2857
    %vm2918 = vcmp.eq.s32.totalorder %v113, %v2860
    %vm2919 = vcmp.eq.s32.totalorder %v114, %v2860
    %vm2920 = vcmp.eq.s32.totalorder %v115, %v2860
    %vm2921 = vcmp.eq.s32.totalorder %v116, %v2860
    %vm2922 = vcmp.eq.s32.totalorder %v113, %v2863
    %vm2923 = vcmp.eq.s32.totalorder %v114, %v2863
    %vm2924 = vcmp.eq.s32.totalorder %v115, %v2863
    %vm2925 = vcmp.eq.s32.totalorder %v116, %v2863
    %vm2926 = vcmp.eq.s32.totalorder %v113, %v2866
    %vm2927 = vcmp.eq.s32.totalorder %v114, %v2866
    %vm2928 = vcmp.eq.s32.totalorder %v115, %v2866
    %vm2929 = vcmp.eq.s32.totalorder %v116, %v2866
    %vm2930 = vcmp.eq.s32.totalorder %v113, %v2869
    %vm2931 = vcmp.eq.s32.totalorder %v114, %v2869
    %vm2932 = vcmp.eq.s32.totalorder %v115, %v2869
    %vm2933 = vcmp.eq.s32.totalorder %v116, %v2869
    %v2934 = vsel %vm2870, 1.0, 0.0
    %v2935 = vsel %vm2871, 1.0, 0.0
    %v2936 = vsel %vm2872, 1.0, 0.0
    %v2937 = vsel %vm2873, 1.0, 0.0
    %v2938 = vsel %vm2874, 1.0, 0.0
    %v2939 = vsel %vm2875, 1.0, 0.0
    %v2940 = vsel %vm2876, 1.0, 0.0
    %v2941 = vsel %vm2877, 1.0, 0.0
    %v2942 = vsel %vm2878, 1.0, 0.0
    %v2943 = vsel %vm2879, 1.0, 0.0
    %v2944 = vsel %vm2880, 1.0, 0.0
    %v2945 = vsel %vm2881, 1.0, 0.0
    %v2946 = vsel %vm2882, 1.0, 0.0
    %v2947 = vsel %vm2883, 1.0, 0.0
    %v2948 = vsel %vm2884, 1.0, 0.0
    %v2949 = vsel %vm2885, 1.0, 0.0
    %v2950 = vsel %vm2886, 1.0, 0.0
    %v2951 = vsel %vm2887, 1.0, 0.0
    %v2952 = vsel %vm2888, 1.0, 0.0
    %v2953 = vsel %vm2889, 1.0, 0.0
    %v2954 = vsel %vm2890, 1.0, 0.0
    %v2955 = vsel %vm2891, 1.0, 0.0
    %v2956 = vsel %vm2892, 1.0, 0.0
    %v2957 = vsel %vm2893, 1.0, 0.0
    %v2958 = vsel %vm2894, 1.0, 0.0
    %v2959 = vsel %vm2895, 1.0, 0.0
    %v2960 = vsel %vm2896, 1.0, 0.0
    %v2961 = vsel %vm2897, 1.0, 0.0
    %v2962 = vsel %vm2898, 1.0, 0.0
    %v2963 = vsel %vm2899, 1.0, 0.0
    %v2964 = vsel %vm2900, 1.0, 0.0
    %v2965 = vsel %vm2901, 1.0, 0.0
    %v2966 = vsel %vm2902, 1.0, 0.0
    %v2967 = vsel %vm2903, 1.0, 0.0
    %v2968 = vsel %vm2904, 1.0, 0.0
    %v2969 = vsel %vm2905, 1.0, 0.0
    %v2970 = vsel %vm2906, 1.0, 0.0
    %v2971 = vsel %vm2907, 1.0, 0.0
    %v2972 = vsel %vm2908, 1.0, 0.0
    %v2973 = vsel %vm2909, 1.0, 0.0
    %v2974 = vsel %vm2910, 1.0, 0.0
    %v2975 = vsel %vm2911, 1.0, 0.0
    %v2976 = vsel %vm2912, 1.0, 0.0
    %v2977 = vsel %vm2913, 1.0, 0.0
    %v2978 = vsel %vm2914, 1.0, 0.0
    %v2979 = vsel %vm2915, 1.0, 0.0
    %v2980 = vsel %vm2916, 1.0, 0.0
    %v2981 = vsel %vm2917, 1.0, 0.0
    %v2982 = vsel %vm2918, 1.0, 0.0
    %v2983 = vsel %vm2919, 1.0, 0.0
    %v2984 = vsel %vm2920, 1.0, 0.0
    %v2985 = vsel %vm2921, 1.0, 0.0
    %v2986 = vsel %vm2922, 1.0, 0.0
    %v2987 = vsel %vm2923, 1.0, 0.0
    %v2988 = vsel %vm2924, 1.0, 0.0
    %v2989 = vsel %vm2925, 1.0, 0.0
    %v2990 = vsel %vm2926, 1.0, 0.0
    %v2991 = vsel %vm2927, 1.0, 0.0
    %v2992 = vsel %vm2928, 1.0, 0.0
    %v2993 = vsel %vm2929, 1.0, 0.0
    %v2994 = vsel %vm2930, 1.0, 0.0
    %v2995 = vsel %vm2931, 1.0, 0.0
    %v2996 = vsel %vm2932, 1.0, 0.0
    %v2997 = vsel %vm2933, 1.0, 0.0
    %2998 = vmatprep.subr.mxu0 0.0
    %2999 = vmatpush1.msra.mxu0 %v48
    %3000 = vmatprep.subr.mxu0 0.0
    %3001 = vmatpush1.msra.mxu0 %v49
    %3002 = vmatprep.subr.mxu0 0.0
    %3003 = vmatpush1.msra.mxu0 %v50
    %3004 = vmatprep.subr.mxu0 0.0
    %3005 = vmatpush1.msra.mxu0 %v51
    %3006 = vmatprep.subr.mxu0 0.0
    %3007 = vmatpush1.msra.mxu0 %v52
    %3008 = vmatprep.subr.mxu0 0.0
    %3009 = vmatpush1.msra.mxu0 %v53
    %3010 = vmatprep.subr.mxu0 0.0
    %3011 = vmatpush1.msra.mxu0 %v54
    %3012 = vmatprep.subr.mxu0 0.0
    %3013 = vmatpush1.msra.mxu0 %v55
    %3014 = vmatprep.subr.mxu0 0.0
    %3015 = vmatpush1.msra.mxu0 %v56
    %3016 = vmatprep.subr.mxu0 0.0
    %3017 = vmatpush1.msra.mxu0 %v57
    %3018 = vmatprep.subr.mxu0 0.0
    %3019 = vmatpush1.msra.mxu0 %v58
    %3020 = vmatprep.subr.mxu0 0.0
    %3021 = vmatpush1.msra.mxu0 %v59
    %3022 = vmatprep.subr.mxu0 0.0
    %3023 = vmatpush1.msra.mxu0 %v60
    %3024 = vmatprep.subr.mxu0 0.0
    %3025 = vmatpush1.msra.mxu0 %v61
    %3026 = vmatprep.subr.mxu0 0.0
    %3027 = vmatpush1.msra.mxu0 %v62
    %3028 = vmatprep.subr.mxu0 0.0
    %3029 = vmatpush1.msra.mxu0 %v63
    %3030 = vmatprep.subr.mxu0 0.0
    %3031 = vmatpush1.msra.mxu0 %v64
    %3032 = vmatprep.subr.mxu0 0.0
    %3033 = vmatpush1.msra.mxu0 %v65
    %3034 = vmatprep.subr.mxu0 0.0
    %3035 = vmatpush1.msra.mxu0 %v66
    %3036 = vmatprep.subr.mxu0 0.0
    %3037 = vmatpush1.msra.mxu0 %v67
    %3038 = vmatprep.subr.mxu0 0.0
    %3039 = vmatpush1.msra.mxu0 %v68
    %3040 = vmatprep.subr.mxu0 0.0
    %3041 = vmatpush1.msra.mxu0 %v69
    %3042 = vmatprep.subr.mxu0 0.0
    %3043 = vmatpush1.msra.mxu0 %v70
    %3044 = vmatprep.subr.mxu0 0.0
    %3045 = vmatpush1.msra.mxu0 %v71
    %3046 = vmatprep.subr.mxu0 0.0
    %3047 = vmatpush1.msra.mxu0 %v72
    %3048 = vmatprep.subr.mxu0 0.0
    %3049 = vmatpush1.msra.mxu0 %v73
    %3050 = vmatprep.subr.mxu0 0.0
    %3051 = vmatpush1.msra.mxu0 %v74
    %3052 = vmatprep.subr.mxu0 0.0
    %3053 = vmatpush1.msra.mxu0 %v75
    %3054 = vmatprep.subr.mxu0 0.0
    %3055 = vmatpush1.msra.mxu0 %v76
    %3056 = vmatprep.subr.mxu0 0.0
    %3057 = vmatpush1.msra.mxu0 %v77
    %3058 = vmatprep.subr.mxu0 0.0
    %3059 = vmatpush1.msra.mxu0 %v78
    %3060 = vmatprep.subr.mxu0 0.0
    %3061 = vmatpush1.msra.mxu0 %v79
    %3062 = vmatprep.mubr.f32.mxu0 %v2935
    %3063 = vmatmul.mubr.f32.gmra.mrb[0].mxu0 %v2934
    %v3064 = vpop.f32.mrb[0].mxu0
    %v3065 = vadd.f32 0.0, %v3064
    %v3066 = vpop.f32.mrb[0].mxu0
    %3067 = vmatprep.mubr.f32.mxu0 %v2939
    %3068 = vmatmul.mubr.f32.gmra.mrb[0].mxu0 %v2938
    %v3069 = vpop.f32.mrb[0].mxu0
    %v3070 = vadd.f32 0.0, %v3069
    %v3071 = vpop.f32.mrb[0].mxu0
    %3072 = vmatprep.mubr.f32.mxu0 %v2943
    %3073 = vmatmul.mubr.f32.gmra.mrb[0].mxu0 %v2942
    %v3074 = vpop.f32.mrb[0].mxu0
    %v3075 = vadd.f32 0.0, %v3074
    %v3076 = vpop.f32.mrb[0].mxu0
    %3077 = vmatprep.mubr.f32.mxu0 %v2947
    %3078 = vmatmul.mubr.f32.gmra.mrb[0].mxu0 %v2946
    %v3079 = vpop.f32.mrb[0].mxu0
    %v3080 = vadd.f32 0.0, %v3079
    %v3081 = vpop.f32.mrb[0].mxu0
    %3082 = vmatprep.mubr.f32.mxu0 %v2951
    %3083 = vmatmul.mubr.f32.gmra.mrb[0].mxu0 %v2950
    %v3084 = vpop.f32.mrb[0].mxu0
    %v3085 = vadd.f32 0.0, %v3084
    %v3086 = vpop.f32.mrb[0].mxu0
    %3087 = vmatprep.mubr.f32.mxu0 %v2955
    %3088 = vmatmul.mubr.f32.gmra.mrb[0].mxu0 %v2954
    %v3089 = vpop.f32.mrb[0].mxu0
    %v3090 = vadd.f32 0.0, %v3089
    %v3091 = vpop.f32.mrb[0].mxu0
    %3092 = vmatprep.mubr.f32.mxu0 %v2959
    %3093 = vmatmul.mubr.f32.gmra.mrb[0].mxu0 %v2958
    %v3094 = vpop.f32.mrb[0].mxu0
    %v3095 = vadd.f32 0.0, %v3094
    %v3096 = vpop.f32.mrb[0].mxu0
    %3097 = vmatprep.mubr.f32.mxu0 %v2963
    %3098 = vmatmul.mubr.f32.gmra.mrb[0].mxu0 %v2962
    %v3099 = vpop.f32.mrb[0].mxu0
    %v3100 = vadd.f32 0.0, %v3099
    %v3101 = vpop.f32.mrb[0].mxu0
    %3102 = vmatprep.mubr.f32.mxu0 %v2967
    %3103 = vmatmul.mubr.f32.gmra.mrb[0].mxu0 %v2966
    %v3104 = vpop.f32.mrb[0].mxu0
    %v3105 = vadd.f32 0.0, %v3104
    %v3106 = vpop.f32.mrb[0].mxu0
    %3107 = vmatprep.mubr.f32.mxu0 %v2971
    %3108 = vmatmul.mubr.f32.gmra.mrb[0].mxu0 %v2970
    %v3109 = vpop.f32.mrb[0].mxu0
    %v3110 = vadd.f32 0.0, %v3109
    %v3111 = vpop.f32.mrb[0].mxu0
    %3112 = vmatprep.mubr.f32.mxu0 %v2975
    %3113 = vmatmul.mubr.f32.gmra.mrb[0].mxu0 %v2974
    %v3114 = vpop.f32.mrb[0].mxu0
    %v3115 = vadd.f32 0.0, %v3114
    %v3116 = vpop.f32.mrb[0].mxu0
    %3117 = vmatprep.mubr.f32.mxu0 %v2979
    %3118 = vmatmul.mubr.f32.gmra.mrb[0].mxu0 %v2978
    %v3119 = vpop.f32.mrb[0].mxu0
    %v3120 = vadd.f32 0.0, %v3119
    %v3121 = vpop.f32.mrb[0].mxu0
    %3122 = vmatprep.mubr.f32.mxu0 %v2983
    %3123 = vmatmul.mubr.f32.gmra.mrb[0].mxu0 %v2982
    %v3124 = vpop.f32.mrb[0].mxu0
    %v3125 = vadd.f32 0.0, %v3124
    %v3126 = vpop.f32.mrb[0].mxu0
    %3127 = vmatprep.mubr.f32.mxu0 %v2987
    %3128 = vmatmul.mubr.f32.gmra.mrb[0].mxu0 %v2986
    %v3129 = vpop.f32.mrb[0].mxu0
    %v3130 = vadd.f32 0.0, %v3129
    %v3131 = vpop.f32.mrb[0].mxu0
    %3132 = vmatprep.mubr.f32.mxu0 %v2991
    %3133 = vmatmul.mubr.f32.gmra.mrb[0].mxu0 %v2990
    %v3134 = vpop.f32.mrb[0].mxu0
    %v3135 = vadd.f32 0.0, %v3134
    %v3136 = vpop.f32.mrb[0].mxu0
    %3137 = vmatprep.mubr.f32.mxu0 %v2995
    %3138 = vmatmul.mubr.f32.gmra.mrb[0].mxu0 %v2994
    %v3139 = vpop.f32.mrb[0].mxu0
    %v3140 = vadd.f32 0.0, %v3139
    %v3141 = vpop.f32.mrb[0].mxu0
    %3142 = vdwg.mxu0
    %3143 = vmatprep.subr.mxu0 0.0
    %3144 = vmatpush1.msra.mxu0 %v80
    %3145 = vmatprep.subr.mxu0 0.0
    %3146 = vmatpush1.msra.mxu0 %v81
    %3147 = vmatprep.subr.mxu0 0.0
    %3148 = vmatpush1.msra.mxu0 %v82
    %3149 = vmatprep.subr.mxu0 0.0
    %3150 = vmatpush1.msra.mxu0 %v83
    %3151 = vmatprep.subr.mxu0 0.0
    %3152 = vmatpush1.msra.mxu0 %v84
    %3153 = vmatprep.subr.mxu0 0.0
    %3154 = vmatpush1.msra.mxu0 %v85
    %3155 = vmatprep.subr.mxu0 0.0
    %3156 = vmatpush1.msra.mxu0 %v86
    %3157 = vmatprep.subr.mxu0 0.0
    %3158 = vmatpush1.msra.mxu0 %v87
    %3159 = vmatprep.subr.mxu0 0.0
    %3160 = vmatpush1.msra.mxu0 %v88
    %3161 = vmatprep.subr.mxu0 0.0
    %3162 = vmatpush1.msra.mxu0 %v89
    %3163 = vmatprep.subr.mxu0 0.0
    %3164 = vmatpush1.msra.mxu0 %v90
    %3165 = vmatprep.subr.mxu0 0.0
    %3166 = vmatpush1.msra.mxu0 %v91
    %3167 = vmatprep.subr.mxu0 0.0
    %3168 = vmatpush1.msra.mxu0 %v92
    %3169 = vmatprep.subr.mxu0 0.0
    %3170 = vmatpush1.msra.mxu0 %v93
    %3171 = vmatprep.subr.mxu0 0.0
    %3172 = vmatpush1.msra.mxu0 %v94
    %3173 = vmatprep.subr.mxu0 0.0
    %3174 = vmatpush1.msra.mxu0 %v95
    %3175 = vmatprep.subr.mxu0 0.0
    %3176 = vmatpush1.msra.mxu0 %v96
    %3177 = vmatprep.subr.mxu0 0.0
    %3178 = vmatpush1.msra.mxu0 %v97
    %3179 = vmatprep.subr.mxu0 0.0
    %3180 = vmatpush1.msra.mxu0 %v98
    %3181 = vmatprep.subr.mxu0 0.0
    %3182 = vmatpush1.msra.mxu0 %v99
    %3183 = vmatprep.subr.mxu0 0.0
    %3184 = vmatpush1.msra.mxu0 %v100
    %3185 = vmatprep.subr.mxu0 0.0
    %3186 = vmatpush1.msra.mxu0 %v101
    %3187 = vmatprep.subr.mxu0 0.0
    %3188 = vmatpush1.msra.mxu0 %v102
    %3189 = vmatprep.subr.mxu0 0.0
    %3190 = vmatpush1.msra.mxu0 %v103
    %3191 = vmatprep.subr.mxu0 0.0
    %3192 = vmatpush1.msra.mxu0 %v104
    %3193 = vmatprep.subr.mxu0 0.0
    %3194 = vmatpush1.msra.mxu0 %v105
    %3195 = vmatprep.subr.mxu0 0.0
    %3196 = vmatpush1.msra.mxu0 %v106
    %3197 = vmatprep.subr.mxu0 0.0
    %3198 = vmatpush1.msra.mxu0 %v107
    %3199 = vmatprep.subr.mxu0 0.0
    %3200 = vmatpush1.msra.mxu0 %v108
    %3201 = vmatprep.subr.mxu0 0.0
    %3202 = vmatpush1.msra.mxu0 %v109
    %3203 = vmatprep.subr.mxu0 0.0
    %3204 = vmatpush1.msra.mxu0 %v110
    %3205 = vmatprep.subr.mxu0 0.0
    %3206 = vmatpush1.msra.mxu0 %v111
    %3207 = vmatprep.mubr.f32.mxu0 %v2937
    %3208 = vmatmul.mubr.f32.gmra.mrb[0].mxu0 %v2936
    %v3209 = vpop.f32.mrb[0].mxu0
    %v3210 = vadd.f32 %v3065, %v3209
    %v3211 = vpop.f32.mrb[0].mxu0
    %3212 = vmatprep.mubr.f32.mxu0 %v2941
    %3213 = vmatmul.mubr.f32.gmra.mrb[0].mxu0 %v2940
    %v3214 = vpop.f32.mrb[0].mxu0
    %v3215 = vadd.f32 %v3070, %v3214
    %v3216 = vpop.f32.mrb[0].mxu0
    %3217 = vmatprep.mubr.f32.mxu0 %v2945
    %3218 = vmatmul.mubr.f32.gmra.mrb[0].mxu0 %v2944
    %v3219 = vpop.f32.mrb[0].mxu0
    %v3220 = vadd.f32 %v3075, %v3219
    %v3221 = vpop.f32.mrb[0].mxu0
    %3222 = vmatprep.mubr.f32.mxu0 %v2949
    %3223 = vmatmul.mubr.f32.gmra.mrb[0].mxu0 %v2948
    %v3224 = vpop.f32.mrb[0].mxu0
    %v3225 = vadd.f32 %v3080, %v3224
    %v3226 = vpop.f32.mrb[0].mxu0
    %3227 = vmatprep.mubr.f32.mxu0 %v2953
    %3228 = vmatmul.mubr.f32.gmra.mrb[0].mxu0 %v2952
    %v3229 = vpop.f32.mrb[0].mxu0
    %v3230 = vadd.f32 %v3085, %v3229
    %v3231 = vpop.f32.mrb[0].mxu0
    %3232 = vmatprep.mubr.f32.mxu0 %v2957
    %3233 = vmatmul.mubr.f32.gmra.mrb[0].mxu0 %v2956
    %v3234 = vpop.f32.mrb[0].mxu0
    %v3235 = vadd.f32 %v3090, %v3234
    %v3236 = vpop.f32.mrb[0].mxu0
    %3237 = vmatprep.mubr.f32.mxu0 %v2961
    %3238 = vmatmul.mubr.f32.gmra.mrb[0].mxu0 %v2960
    %v3239 = vpop.f32.mrb[0].mxu0
    %v3240 = vadd.f32 %v3095, %v3239
    %v3241 = vpop.f32.mrb[0].mxu0
    %3242 = vmatprep.mubr.f32.mxu0 %v2965
    %3243 = vmatmul.mubr.f32.gmra.mrb[0].mxu0 %v2964
    %v3244 = vpop.f32.mrb[0].mxu0
    %v3245 = vadd.f32 %v3100, %v3244
    %v3246 = vpop.f32.mrb[0].mxu0
    %3247 = vmatprep.mubr.f32.mxu0 %v2969
    %3248 = vmatmul.mubr.f32.gmra.mrb[0].mxu0 %v2968
    %v3249 = vpop.f32.mrb[0].mxu0
    %v3250 = vadd.f32 %v3105, %v3249
    %v3251 = vpop.f32.mrb[0].mxu0
    %3252 = vmatprep.mubr.f32.mxu0 %v2973
    %3253 = vmatmul.mubr.f32.gmra.mrb[0].mxu0 %v2972
    %v3254 = vpop.f32.mrb[0].mxu0
    %v3255 = vadd.f32 %v3110, %v3254
    %v3256 = vpop.f32.mrb[0].mxu0
    %3257 = vmatprep.mubr.f32.mxu0 %v2977
    %3258 = vmatmul.mubr.f32.gmra.mrb[0].mxu0 %v2976
    %v3259 = vpop.f32.mrb[0].mxu0
    %v3260 = vadd.f32 %v3115, %v3259
    %v3261 = vpop.f32.mrb[0].mxu0
    %3262 = vmatprep.mubr.f32.mxu0 %v2981
    %3263 = vmatmul.mubr.f32.gmra.mrb[0].mxu0 %v2980
    %v3264 = vpop.f32.mrb[0].mxu0
    %v3265 = vadd.f32 %v3120, %v3264
    %v3266 = vpop.f32.mrb[0].mxu0
    %3267 = vmatprep.mubr.f32.mxu0 %v2985
    %3268 = vmatmul.mubr.f32.gmra.mrb[0].mxu0 %v2984
    %v3269 = vpop.f32.mrb[0].mxu0
    %v3270 = vadd.f32 %v3125, %v3269
    %v3271 = vpop.f32.mrb[0].mxu0
    %3272 = vmatprep.mubr.f32.mxu0 %v2989
    %3273 = vmatmul.mubr.f32.gmra.mrb[0].mxu0 %v2988
    %v3274 = vpop.f32.mrb[0].mxu0
    %v3275 = vadd.f32 %v3130, %v3274
    %v3276 = vpop.f32.mrb[0].mxu0
    %3277 = vmatprep.mubr.f32.mxu0 %v2993
    %3278 = vmatmul.mubr.f32.gmra.mrb[0].mxu0 %v2992
    %v3279 = vpop.f32.mrb[0].mxu0
    %v3280 = vadd.f32 %v3135, %v3279
    %v3281 = vpop.f32.mrb[0].mxu0
    %3282 = vmatprep.mubr.f32.mxu0 %v2997
    %3283 = vmatmul.mubr.f32.gmra.mrb[0].mxu0 %v2996
    %v3284 = vpop.f32.mrb[0].mxu0
    %v3285 = vadd.f32 %v3140, %v3284
    %v3286 = vpop.f32.mrb[0].mxu0
    %3287 = vdwg.mxu0
    %s3288 = scalar_lea.vmem %s2, 16
    %v3289 = vld [vmem:[%s3288] sm:$0xf]
    %v3291 = vsel %vm1068, %v3210, 0
    %v3294 = vsel %vm1068, %v3215, 0
    %v3297 = vsel %vm1068, %v3220, 0
    %v3300 = vsel %vm1068, %v3225, 0
    %v3303 = vsel %vm1068, %v3230, 0
    %v3306 = vsel %vm1068, %v3235, 0
    %v3309 = vsel %vm1068, %v3240, 0
    %v3312 = vsel %vm1068, %v3245, 0
    %v3315 = vsel %vm1068, %v3250, 0
    %v3318 = vsel %vm1068, %v3255, 0
    %v3321 = vsel %vm1068, %v3260, 0
    %v3324 = vsel %vm1068, %v3265, 0
    %v3327 = vsel %vm1068, %v3270, 0
    %v3330 = vsel %vm1068, %v3275, 0
    %v3333 = vsel %vm1068, %v3280, 0
    %v3336 = vsel %vm1068, %v3285, 0
    %v3339 = vsel %vm1117, %v3289, 0
    %3341 = vmatprep.subr.mxu0 0.0
    %3342 = vmatpush1.msra.mxu0 %v3339
    %3343 = vmatprep.subr.mxu0 0.0
    %3344 = vmatpush1.msra.mxu0 0.0
    %3345 = vmatprep.subr.mxu0 0.0
    %3346 = vmatpush1.msra.mxu0 0.0
    %3347 = vmatprep.subr.mxu0 0.0
    %3348 = vmatpush1.msra.mxu0 0.0
    %3349 = vmatprep.subr.mxu0 0.0
    %3350 = vmatpush1.msra.mxu0 0.0
    %3351 = vmatprep.subr.mxu0 0.0
    %3352 = vmatpush1.msra.mxu0 0.0
    %3353 = vmatprep.subr.mxu0 0.0
    %3354 = vmatpush1.msra.mxu0 0.0
    %3355 = vmatprep.subr.mxu0 0.0
    %3356 = vmatpush1.msra.mxu0 0.0
    %3357 = vmatprep.subr.mxu0 0.0
    %3358 = vmatpush1.msra.mxu0 0.0
    %3359 = vmatprep.subr.mxu0 0.0
    %3360 = vmatpush1.msra.mxu0 0.0
    %3361 = vmatprep.subr.mxu0 0.0
    %3362 = vmatpush1.msra.mxu0 0.0
    %3363 = vmatprep.subr.mxu0 0.0
    %3364 = vmatpush1.msra.mxu0 0.0
    %3365 = vmatprep.subr.mxu0 0.0
    %3366 = vmatpush1.msra.mxu0 0.0
    %3367 = vmatprep.subr.mxu0 0.0
    %3368 = vmatpush1.msra.mxu0 0.0
    %3369 = vmatprep.subr.mxu0 0.0
    %3370 = vmatpush1.msra.mxu0 0.0
    %3371 = vmatprep.subr.mxu0 0.0
    %3372 = vmatpush1.msra.mxu0 0.0
    %3373 = vmatprep.subr.mxu0 0.0
    %3374 = vmatpush1.msra.mxu0 0.0
    %3375 = vmatprep.subr.mxu0 0.0
    %3376 = vmatpush1.msra.mxu0 0.0
    %3377 = vmatprep.subr.mxu0 0.0
    %3378 = vmatpush1.msra.mxu0 0.0
    %3379 = vmatprep.subr.mxu0 0.0
    %3380 = vmatpush1.msra.mxu0 0.0
    %3381 = vmatprep.subr.mxu0 0.0
    %3382 = vmatpush1.msra.mxu0 0.0
    %3383 = vmatprep.subr.mxu0 0.0
    %3384 = vmatpush1.msra.mxu0 0.0
    %3385 = vmatprep.subr.mxu0 0.0
    %3386 = vmatpush1.msra.mxu0 0.0
    %3387 = vmatprep.subr.mxu0 0.0
    %3388 = vmatpush1.msra.mxu0 0.0
    %3389 = vmatprep.subr.mxu0 0.0
    %3390 = vmatpush1.msra.mxu0 0.0
    %3391 = vmatprep.subr.mxu0 0.0
    %3392 = vmatpush1.msra.mxu0 0.0
    %3393 = vmatprep.subr.mxu0 0.0
    %3394 = vmatpush1.msra.mxu0 0.0
    %3395 = vmatprep.subr.mxu0 0.0
    %3396 = vmatpush1.msra.mxu0 0.0
    %3397 = vmatprep.subr.mxu0 0.0
    %3398 = vmatpush1.msra.mxu0 0.0
    %3399 = vmatprep.subr.mxu0 0.0
    %3400 = vmatpush1.msra.mxu0 0.0
    %3401 = vmatprep.subr.mxu0 0.0
    %3402 = vmatpush1.msra.mxu0 0.0
    %3403 = vmatprep.subr.mxu0 0.0
    %3404 = vmatpush1.msra.mxu0 0.0
    %3405 = vmatprep.mubr.f32.mxu0 0.0
    %3406 = vmatmul.mubr.f32.gmra.mrb[0].mxu0 %v3291
    %v3407 = vpop.f32.mrb[0].mxu0
    %v3408 = vadd.f32 0.0, %v3407
    %v3409 = vpop.f32.mrb[0].mxu0
    %3410 = vmatprep.mubr.f32.mxu0 0.0
    %3411 = vmatmul.mubr.f32.gmra.mrb[0].mxu0 %v3294
    %v3412 = vpop.f32.mrb[0].mxu0
    %v3413 = vadd.f32 0.0, %v3412
    %v3414 = vpop.f32.mrb[0].mxu0
    %3415 = vmatprep.mubr.f32.mxu0 0.0
    %3416 = vmatmul.mubr.f32.gmra.mrb[0].mxu0 %v3297
    %v3417 = vpop.f32.mrb[0].mxu0
    %v3418 = vadd.f32 0.0, %v3417
    %v3419 = vpop.f32.mrb[0].mxu0
    %3420 = vmatprep.mubr.f32.mxu0 0.0
    %3421 = vmatmul.mubr.f32.gmra.mrb[0].mxu0 %v3300
    %v3422 = vpop.f32.mrb[0].mxu0
    %v3423 = vadd.f32 0.0, %v3422
    %v3424 = vpop.f32.mrb[0].mxu0
    %3425 = vmatprep.mubr.f32.mxu0 0.0
    %3426 = vmatmul.mubr.f32.gmra.mrb[0].mxu0 %v3303
    %v3427 = vpop.f32.mrb[0].mxu0
    %v3428 = vadd.f32 0.0, %v3427
    %v3429 = vpop.f32.mrb[0].mxu0
    %3430 = vmatprep.mubr.f32.mxu0 0.0
    %3431 = vmatmul.mubr.f32.gmra.mrb[0].mxu0 %v3306
    %v3432 = vpop.f32.mrb[0].mxu0
    %v3433 = vadd.f32 0.0, %v3432
    %v3434 = vpop.f32.mrb[0].mxu0
    %3435 = vmatprep.mubr.f32.mxu0 0.0
    %3436 = vmatmul.mubr.f32.gmra.mrb[0].mxu0 %v3309
    %v3437 = vpop.f32.mrb[0].mxu0
    %v3438 = vadd.f32 0.0, %v3437
    %v3439 = vpop.f32.mrb[0].mxu0
    %3440 = vmatprep.mubr.f32.mxu0 0.0
    %3441 = vmatmul.mubr.f32.gmra.mrb[0].mxu0 %v3312
    %v3442 = vpop.f32.mrb[0].mxu0
    %v3443 = vadd.f32 0.0, %v3442
    %v3444 = vpop.f32.mrb[0].mxu0
    %3445 = vmatprep.mubr.f32.mxu0 0.0
    %3446 = vmatmul.mubr.f32.gmra.mrb[0].mxu0 %v3315
    %v3447 = vpop.f32.mrb[0].mxu0
    %v3448 = vadd.f32 0.0, %v3447
    %v3449 = vpop.f32.mrb[0].mxu0
    %3450 = vmatprep.mubr.f32.mxu0 0.0
    %3451 = vmatmul.mubr.f32.gmra.mrb[0].mxu0 %v3318
    %v3452 = vpop.f32.mrb[0].mxu0
    %v3453 = vadd.f32 0.0, %v3452
    %v3454 = vpop.f32.mrb[0].mxu0
    %3455 = vmatprep.mubr.f32.mxu0 0.0
    %3456 = vmatmul.mubr.f32.gmra.mrb[0].mxu0 %v3321
    %v3457 = vpop.f32.mrb[0].mxu0
    %v3458 = vadd.f32 0.0, %v3457
    %v3459 = vpop.f32.mrb[0].mxu0
    %3460 = vmatprep.mubr.f32.mxu0 0.0
    %3461 = vmatmul.mubr.f32.gmra.mrb[0].mxu0 %v3324
    %v3462 = vpop.f32.mrb[0].mxu0
    %v3463 = vadd.f32 0.0, %v3462
    %v3464 = vpop.f32.mrb[0].mxu0
    %3465 = vmatprep.mubr.f32.mxu0 0.0
    %3466 = vmatmul.mubr.f32.gmra.mrb[0].mxu0 %v3327
    %v3467 = vpop.f32.mrb[0].mxu0
    %v3468 = vadd.f32 0.0, %v3467
    %v3469 = vpop.f32.mrb[0].mxu0
    %3470 = vmatprep.mubr.f32.mxu0 0.0
    %3471 = vmatmul.mubr.f32.gmra.mrb[0].mxu0 %v3330
    %v3472 = vpop.f32.mrb[0].mxu0
    %v3473 = vadd.f32 0.0, %v3472
    %v3474 = vpop.f32.mrb[0].mxu0
    %3475 = vmatprep.mubr.f32.mxu0 0.0
    %3476 = vmatmul.mubr.f32.gmra.mrb[0].mxu0 %v3333
    %v3477 = vpop.f32.mrb[0].mxu0
    %v3478 = vadd.f32 0.0, %v3477
    %v3479 = vpop.f32.mrb[0].mxu0
    %3480 = vmatprep.mubr.f32.mxu0 0.0
    %3481 = vmatmul.mubr.f32.gmra.mrb[0].mxu0 %v3336
    %v3482 = vpop.f32.mrb[0].mxu0
    %v3483 = vadd.f32 0.0, %v3482
    %v3484 = vpop.f32.mrb[0].mxu0
    %3485 = vdwg.mxu0
    %v3486 = vadd.f32 %v2806, %v3408
    %v3487 = vadd.f32 %v2807, %v3413
    %v3488 = vadd.f32 %v2808, %v3418
    %v3489 = vadd.f32 %v2809, %v3423
    %v3490 = vadd.f32 %v2810, %v3428
    %v3491 = vadd.f32 %v2811, %v3433
    %v3492 = vadd.f32 %v2812, %v3438
    %v3493 = vadd.f32 %v2813, %v3443
    %v3494 = vadd.f32 %v2814, %v3448
    %v3495 = vadd.f32 %v2815, %v3453
    %v3496 = vadd.f32 %v2816, %v3458
    %v3497 = vadd.f32 %v2817, %v3463
    %v3498 = vadd.f32 %v2818, %v3468
    %v3499 = vadd.f32 %v2819, %v3473
    %v3500 = vadd.f32 %v2820, %v3478
    %v3501 = vadd.f32 %v2821, %v3483
    %3502 = vset.pattern.permute.xlu0 5
    %3503 = vperm.xlu0 %3502, %v117
    %v3504 = vpop.permute.xlu0 %3503
    %3505 = vset.pattern.permute.xlu0 5
    %3506 = vperm.xlu0 %3505, %v118
    %v3507 = vpop.permute.xlu0 %3506
    %3508 = vset.pattern.permute.xlu0 5
    %3509 = vperm.xlu0 %3508, %v119
    %v3510 = vpop.permute.xlu0 %3509
    %3511 = vset.pattern.permute.xlu0 5
    %3512 = vperm.xlu0 %3511, %v120
    %v3513 = vpop.permute.xlu0 %3512
    %3514 = vset.pattern.permute.xlu0 5
    %3515 = vperm.xlu0 %3514, %v121
    %v3516 = vpop.permute.xlu0 %3515
    %3517 = vset.pattern.permute.xlu0 5
    %3518 = vperm.xlu0 %3517, %v122
    %v3519 = vpop.permute.xlu0 %3518
    %3520 = vset.pattern.permute.xlu0 5
    %3521 = vperm.xlu0 %3520, %v123
    %v3522 = vpop.permute.xlu0 %3521
    %3523 = vset.pattern.permute.xlu0 5
    %3524 = vperm.xlu0 %3523, %v124
    %v3525 = vpop.permute.xlu0 %3524
    %3526 = vset.pattern.permute.xlu0 5
    %3527 = vperm.xlu0 %3526, %v125
    %v3528 = vpop.permute.xlu0 %3527
    %3529 = vset.pattern.permute.xlu0 5
    %3530 = vperm.xlu0 %3529, %v126
    %v3531 = vpop.permute.xlu0 %3530
    %3532 = vset.pattern.permute.xlu0 5
    %3533 = vperm.xlu0 %3532, %v127
    %v3534 = vpop.permute.xlu0 %3533
    %3535 = vset.pattern.permute.xlu0 5
    %3536 = vperm.xlu0 %3535, %v128
    %v3537 = vpop.permute.xlu0 %3536
    %3538 = vset.pattern.permute.xlu0 5
    %3539 = vperm.xlu0 %3538, %v129
    %v3540 = vpop.permute.xlu0 %3539
    %3541 = vset.pattern.permute.xlu0 5
    %3542 = vperm.xlu0 %3541, %v130
    %v3543 = vpop.permute.xlu0 %3542
    %3544 = vset.pattern.permute.xlu0 5
    %3545 = vperm.xlu0 %3544, %v131
    %v3546 = vpop.permute.xlu0 %3545
    %3547 = vset.pattern.permute.xlu0 5
    %3548 = vperm.xlu0 %3547, %v132
    %v3549 = vpop.permute.xlu0 %3548
    %vm3550 = vcmp.eq.s32.totalorder %v113, %v3504
    %vm3551 = vcmp.eq.s32.totalorder %v114, %v3504
    %vm3552 = vcmp.eq.s32.totalorder %v115, %v3504
    %vm3553 = vcmp.eq.s32.totalorder %v116, %v3504
    %vm3554 = vcmp.eq.s32.totalorder %v113, %v3507
    %vm3555 = vcmp.eq.s32.totalorder %v114, %v3507
    %vm3556 = vcmp.eq.s32.totalorder %v115, %v3507
    %vm3557 = vcmp.eq.s32.totalorder %v116, %v3507
    %vm3558 = vcmp.eq.s32.totalorder %v113, %v3510
    %vm3559 = vcmp.eq.s32.totalorder %v114, %v3510
    %vm3560 = vcmp.eq.s32.totalorder %v115, %v3510
    %vm3561 = vcmp.eq.s32.totalorder %v116, %v3510
    %vm3562 = vcmp.eq.s32.totalorder %v113, %v3513
    %vm3563 = vcmp.eq.s32.totalorder %v114, %v3513
    %vm3564 = vcmp.eq.s32.totalorder %v115, %v3513
    %vm3565 = vcmp.eq.s32.totalorder %v116, %v3513
    %vm3566 = vcmp.eq.s32.totalorder %v113, %v3516
    %vm3567 = vcmp.eq.s32.totalorder %v114, %v3516
    %vm3568 = vcmp.eq.s32.totalorder %v115, %v3516
    %vm3569 = vcmp.eq.s32.totalorder %v116, %v3516
    %vm3570 = vcmp.eq.s32.totalorder %v113, %v3519
    %vm3571 = vcmp.eq.s32.totalorder %v114, %v3519
    %vm3572 = vcmp.eq.s32.totalorder %v115, %v3519
    %vm3573 = vcmp.eq.s32.totalorder %v116, %v3519
    %vm3574 = vcmp.eq.s32.totalorder %v113, %v3522
    %vm3575 = vcmp.eq.s32.totalorder %v114, %v3522
    %vm3576 = vcmp.eq.s32.totalorder %v115, %v3522
    %vm3577 = vcmp.eq.s32.totalorder %v116, %v3522
    %vm3578 = vcmp.eq.s32.totalorder %v113, %v3525
    %vm3579 = vcmp.eq.s32.totalorder %v114, %v3525
    %vm3580 = vcmp.eq.s32.totalorder %v115, %v3525
    %vm3581 = vcmp.eq.s32.totalorder %v116, %v3525
    %vm3582 = vcmp.eq.s32.totalorder %v113, %v3528
    %vm3583 = vcmp.eq.s32.totalorder %v114, %v3528
    %vm3584 = vcmp.eq.s32.totalorder %v115, %v3528
    %vm3585 = vcmp.eq.s32.totalorder %v116, %v3528
    %vm3586 = vcmp.eq.s32.totalorder %v113, %v3531
    %vm3587 = vcmp.eq.s32.totalorder %v114, %v3531
    %vm3588 = vcmp.eq.s32.totalorder %v115, %v3531
    %vm3589 = vcmp.eq.s32.totalorder %v116, %v3531
    %vm3590 = vcmp.eq.s32.totalorder %v113, %v3534
    %vm3591 = vcmp.eq.s32.totalorder %v114, %v3534
    %vm3592 = vcmp.eq.s32.totalorder %v115, %v3534
    %vm3593 = vcmp.eq.s32.totalorder %v116, %v3534
    %vm3594 = vcmp.eq.s32.totalorder %v113, %v3537
    %vm3595 = vcmp.eq.s32.totalorder %v114, %v3537
    %vm3596 = vcmp.eq.s32.totalorder %v115, %v3537
    %vm3597 = vcmp.eq.s32.totalorder %v116, %v3537
    %vm3598 = vcmp.eq.s32.totalorder %v113, %v3540
    %vm3599 = vcmp.eq.s32.totalorder %v114, %v3540
    %vm3600 = vcmp.eq.s32.totalorder %v115, %v3540
    %vm3601 = vcmp.eq.s32.totalorder %v116, %v3540
    %vm3602 = vcmp.eq.s32.totalorder %v113, %v3543
    %vm3603 = vcmp.eq.s32.totalorder %v114, %v3543
    %vm3604 = vcmp.eq.s32.totalorder %v115, %v3543
    %vm3605 = vcmp.eq.s32.totalorder %v116, %v3543
    %vm3606 = vcmp.eq.s32.totalorder %v113, %v3546
    %vm3607 = vcmp.eq.s32.totalorder %v114, %v3546
    %vm3608 = vcmp.eq.s32.totalorder %v115, %v3546
    %vm3609 = vcmp.eq.s32.totalorder %v116, %v3546
    %vm3610 = vcmp.eq.s32.totalorder %v113, %v3549
    %vm3611 = vcmp.eq.s32.totalorder %v114, %v3549
    %vm3612 = vcmp.eq.s32.totalorder %v115, %v3549
    %vm3613 = vcmp.eq.s32.totalorder %v116, %v3549
    %v3614 = vsel %vm3550, 1.0, 0.0
    %v3615 = vsel %vm3551, 1.0, 0.0
    %v3616 = vsel %vm3552, 1.0, 0.0
    %v3617 = vsel %vm3553, 1.0, 0.0
    %v3618 = vsel %vm3554, 1.0, 0.0
    %v3619 = vsel %vm3555, 1.0, 0.0
    %v3620 = vsel %vm3556, 1.0, 0.0
    %v3621 = vsel %vm3557, 1.0, 0.0
    %v3622 = vsel %vm3558, 1.0, 0.0
    %v3623 = vsel %vm3559, 1.0, 0.0
    %v3624 = vsel %vm3560, 1.0, 0.0
    %v3625 = vsel %vm3561, 1.0, 0.0
    %v3626 = vsel %vm3562, 1.0, 0.0
    %v3627 = vsel %vm3563, 1.0, 0.0
    %v3628 = vsel %vm3564, 1.0, 0.0
    %v3629 = vsel %vm3565, 1.0, 0.0
    %v3630 = vsel %vm3566, 1.0, 0.0
    %v3631 = vsel %vm3567, 1.0, 0.0
    %v3632 = vsel %vm3568, 1.0, 0.0
    %v3633 = vsel %vm3569, 1.0, 0.0
    %v3634 = vsel %vm3570, 1.0, 0.0
    %v3635 = vsel %vm3571, 1.0, 0.0
    %v3636 = vsel %vm3572, 1.0, 0.0
    %v3637 = vsel %vm3573, 1.0, 0.0
    %v3638 = vsel %vm3574, 1.0, 0.0
    %v3639 = vsel %vm3575, 1.0, 0.0
    %v3640 = vsel %vm3576, 1.0, 0.0
    %v3641 = vsel %vm3577, 1.0, 0.0
    %v3642 = vsel %vm3578, 1.0, 0.0
    %v3643 = vsel %vm3579, 1.0, 0.0
    %v3644 = vsel %vm3580, 1.0, 0.0
    %v3645 = vsel %vm3581, 1.0, 0.0
    %v3646 = vsel %vm3582, 1.0, 0.0
    %v3647 = vsel %vm3583, 1.0, 0.0
    %v3648 = vsel %vm3584, 1.0, 0.0
    %v3649 = vsel %vm3585, 1.0, 0.0
    %v3650 = vsel %vm3586, 1.0, 0.0
    %v3651 = vsel %vm3587, 1.0, 0.0
    %v3652 = vsel %vm3588, 1.0, 0.0
    %v3653 = vsel %vm3589, 1.0, 0.0
    %v3654 = vsel %vm3590, 1.0, 0.0
    %v3655 = vsel %vm3591, 1.0, 0.0
    %v3656 = vsel %vm3592, 1.0, 0.0
    %v3657 = vsel %vm3593, 1.0, 0.0
    %v3658 = vsel %vm3594, 1.0, 0.0
    %v3659 = vsel %vm3595, 1.0, 0.0
    %v3660 = vsel %vm3596, 1.0, 0.0
    %v3661 = vsel %vm3597, 1.0, 0.0
    %v3662 = vsel %vm3598, 1.0, 0.0
    %v3663 = vsel %vm3599, 1.0, 0.0
    %v3664 = vsel %vm3600, 1.0, 0.0
    %v3665 = vsel %vm3601, 1.0, 0.0
    %v3666 = vsel %vm3602, 1.0, 0.0
    %v3667 = vsel %vm3603, 1.0, 0.0
    %v3668 = vsel %vm3604, 1.0, 0.0
    %v3669 = vsel %vm3605, 1.0, 0.0
    %v3670 = vsel %vm3606, 1.0, 0.0
    %v3671 = vsel %vm3607, 1.0, 0.0
    %v3672 = vsel %vm3608, 1.0, 0.0
    %v3673 = vsel %vm3609, 1.0, 0.0
    %v3674 = vsel %vm3610, 1.0, 0.0
    %v3675 = vsel %vm3611, 1.0, 0.0
    %v3676 = vsel %vm3612, 1.0, 0.0
    %v3677 = vsel %vm3613, 1.0, 0.0
    %3678 = vmatprep.subr.mxu0 0.0
    %3679 = vmatpush1.msra.mxu0 %v48
    %3680 = vmatprep.subr.mxu0 0.0
    %3681 = vmatpush1.msra.mxu0 %v49
    %3682 = vmatprep.subr.mxu0 0.0
    %3683 = vmatpush1.msra.mxu0 %v50
    %3684 = vmatprep.subr.mxu0 0.0
    %3685 = vmatpush1.msra.mxu0 %v51
    %3686 = vmatprep.subr.mxu0 0.0
    %3687 = vmatpush1.msra.mxu0 %v52
    %3688 = vmatprep.subr.mxu0 0.0
    %3689 = vmatpush1.msra.mxu0 %v53
    %3690 = vmatprep.subr.mxu0 0.0
    %3691 = vmatpush1.msra.mxu0 %v54
    %3692 = vmatprep.subr.mxu0 0.0
    %3693 = vmatpush1.msra.mxu0 %v55
    %3694 = vmatprep.subr.mxu0 0.0
    %3695 = vmatpush1.msra.mxu0 %v56
    %3696 = vmatprep.subr.mxu0 0.0
    %3697 = vmatpush1.msra.mxu0 %v57
    %3698 = vmatprep.subr.mxu0 0.0
    %3699 = vmatpush1.msra.mxu0 %v58
    %3700 = vmatprep.subr.mxu0 0.0
    %3701 = vmatpush1.msra.mxu0 %v59
    %3702 = vmatprep.subr.mxu0 0.0
    %3703 = vmatpush1.msra.mxu0 %v60
    %3704 = vmatprep.subr.mxu0 0.0
    %3705 = vmatpush1.msra.mxu0 %v61
    %3706 = vmatprep.subr.mxu0 0.0
    %3707 = vmatpush1.msra.mxu0 %v62
    %3708 = vmatprep.subr.mxu0 0.0
    %3709 = vmatpush1.msra.mxu0 %v63
    %3710 = vmatprep.subr.mxu0 0.0
    %3711 = vmatpush1.msra.mxu0 %v64
    %3712 = vmatprep.subr.mxu0 0.0
    %3713 = vmatpush1.msra.mxu0 %v65
    %3714 = vmatprep.subr.mxu0 0.0
    %3715 = vmatpush1.msra.mxu0 %v66
    %3716 = vmatprep.subr.mxu0 0.0
    %3717 = vmatpush1.msra.mxu0 %v67
    %3718 = vmatprep.subr.mxu0 0.0
    %3719 = vmatpush1.msra.mxu0 %v68
    %3720 = vmatprep.subr.mxu0 0.0
    %3721 = vmatpush1.msra.mxu0 %v69
    %3722 = vmatprep.subr.mxu0 0.0
    %3723 = vmatpush1.msra.mxu0 %v70
    %3724 = vmatprep.subr.mxu0 0.0
    %3725 = vmatpush1.msra.mxu0 %v71
    %3726 = vmatprep.subr.mxu0 0.0
    %3727 = vmatpush1.msra.mxu0 %v72
    %3728 = vmatprep.subr.mxu0 0.0
    %3729 = vmatpush1.msra.mxu0 %v73
    %3730 = vmatprep.subr.mxu0 0.0
    %3731 = vmatpush1.msra.mxu0 %v74
    %3732 = vmatprep.subr.mxu0 0.0
    %3733 = vmatpush1.msra.mxu0 %v75
    %3734 = vmatprep.subr.mxu0 0.0
    %3735 = vmatpush1.msra.mxu0 %v76
    %3736 = vmatprep.subr.mxu0 0.0
    %3737 = vmatpush1.msra.mxu0 %v77
    %3738 = vmatprep.subr.mxu0 0.0
    %3739 = vmatpush1.msra.mxu0 %v78
    %3740 = vmatprep.subr.mxu0 0.0
    %3741 = vmatpush1.msra.mxu0 %v79
    %3742 = vmatprep.mubr.f32.mxu0 %v3615
    %3743 = vmatmul.mubr.f32.gmra.mrb[0].mxu0 %v3614
    %v3744 = vpop.f32.mrb[0].mxu0
    %v3745 = vadd.f32 0.0, %v3744
    %v3746 = vpop.f32.mrb[0].mxu0
    %3747 = vmatprep.mubr.f32.mxu0 %v3619
    %3748 = vmatmul.mubr.f32.gmra.mrb[0].mxu0 %v3618
    %v3749 = vpop.f32.mrb[0].mxu0
    %v3750 = vadd.f32 0.0, %v3749
    %v3751 = vpop.f32.mrb[0].mxu0
    %3752 = vmatprep.mubr.f32.mxu0 %v3623
    %3753 = vmatmul.mubr.f32.gmra.mrb[0].mxu0 %v3622
    %v3754 = vpop.f32.mrb[0].mxu0
    %v3755 = vadd.f32 0.0, %v3754
    %v3756 = vpop.f32.mrb[0].mxu0
    %3757 = vmatprep.mubr.f32.mxu0 %v3627
    %3758 = vmatmul.mubr.f32.gmra.mrb[0].mxu0 %v3626
    %v3759 = vpop.f32.mrb[0].mxu0
    %v3760 = vadd.f32 0.0, %v3759
    %v3761 = vpop.f32.mrb[0].mxu0
    %3762 = vmatprep.mubr.f32.mxu0 %v3631
    %3763 = vmatmul.mubr.f32.gmra.mrb[0].mxu0 %v3630
    %v3764 = vpop.f32.mrb[0].mxu0
    %v3765 = vadd.f32 0.0, %v3764
    %v3766 = vpop.f32.mrb[0].mxu0
    %3767 = vmatprep.mubr.f32.mxu0 %v3635
    %3768 = vmatmul.mubr.f32.gmra.mrb[0].mxu0 %v3634
    %v3769 = vpop.f32.mrb[0].mxu0
    %v3770 = vadd.f32 0.0, %v3769
    %v3771 = vpop.f32.mrb[0].mxu0
    %3772 = vmatprep.mubr.f32.mxu0 %v3639
    %3773 = vmatmul.mubr.f32.gmra.mrb[0].mxu0 %v3638
    %v3774 = vpop.f32.mrb[0].mxu0
    %v3775 = vadd.f32 0.0, %v3774
    %v3776 = vpop.f32.mrb[0].mxu0
    %3777 = vmatprep.mubr.f32.mxu0 %v3643
    %3778 = vmatmul.mubr.f32.gmra.mrb[0].mxu0 %v3642
    %v3779 = vpop.f32.mrb[0].mxu0
    %v3780 = vadd.f32 0.0, %v3779
    %v3781 = vpop.f32.mrb[0].mxu0
    %3782 = vmatprep.mubr.f32.mxu0 %v3647
    %3783 = vmatmul.mubr.f32.gmra.mrb[0].mxu0 %v3646
    %v3784 = vpop.f32.mrb[0].mxu0
    %v3785 = vadd.f32 0.0, %v3784
    %v3786 = vpop.f32.mrb[0].mxu0
    %3787 = vmatprep.mubr.f32.mxu0 %v3651
    %3788 = vmatmul.mubr.f32.gmra.mrb[0].mxu0 %v3650
    %v3789 = vpop.f32.mrb[0].mxu0
    %v3790 = vadd.f32 0.0, %v3789
    %v3791 = vpop.f32.mrb[0].mxu0
    %3792 = vmatprep.mubr.f32.mxu0 %v3655
    %3793 = vmatmul.mubr.f32.gmra.mrb[0].mxu0 %v3654
    %v3794 = vpop.f32.mrb[0].mxu0
    %v3795 = vadd.f32 0.0, %v3794
    %v3796 = vpop.f32.mrb[0].mxu0
    %3797 = vmatprep.mubr.f32.mxu0 %v3659
    %3798 = vmatmul.mubr.f32.gmra.mrb[0].mxu0 %v3658
    %v3799 = vpop.f32.mrb[0].mxu0
    %v3800 = vadd.f32 0.0, %v3799
    %v3801 = vpop.f32.mrb[0].mxu0
    %3802 = vmatprep.mubr.f32.mxu0 %v3663
    %3803 = vmatmul.mubr.f32.gmra.mrb[0].mxu0 %v3662
    %v3804 = vpop.f32.mrb[0].mxu0
    %v3805 = vadd.f32 0.0, %v3804
    %v3806 = vpop.f32.mrb[0].mxu0
    %3807 = vmatprep.mubr.f32.mxu0 %v3667
    %3808 = vmatmul.mubr.f32.gmra.mrb[0].mxu0 %v3666
    %v3809 = vpop.f32.mrb[0].mxu0
    %v3810 = vadd.f32 0.0, %v3809
    %v3811 = vpop.f32.mrb[0].mxu0
    %3812 = vmatprep.mubr.f32.mxu0 %v3671
    %3813 = vmatmul.mubr.f32.gmra.mrb[0].mxu0 %v3670
    %v3814 = vpop.f32.mrb[0].mxu0
    %v3815 = vadd.f32 0.0, %v3814
    %v3816 = vpop.f32.mrb[0].mxu0
    %3817 = vmatprep.mubr.f32.mxu0 %v3675
    %3818 = vmatmul.mubr.f32.gmra.mrb[0].mxu0 %v3674
    %v3819 = vpop.f32.mrb[0].mxu0
    %v3820 = vadd.f32 0.0, %v3819
    %v3821 = vpop.f32.mrb[0].mxu0
    %3822 = vdwg.mxu0
    %3823 = vmatprep.subr.mxu0 0.0
    %3824 = vmatpush1.msra.mxu0 %v80
    %3825 = vmatprep.subr.mxu0 0.0
    %3826 = vmatpush1.msra.mxu0 %v81
    %3827 = vmatprep.subr.mxu0 0.0
    %3828 = vmatpush1.msra.mxu0 %v82
    %3829 = vmatprep.subr.mxu0 0.0
    %3830 = vmatpush1.msra.mxu0 %v83
    %3831 = vmatprep.subr.mxu0 0.0
    %3832 = vmatpush1.msra.mxu0 %v84
    %3833 = vmatprep.subr.mxu0 0.0
    %3834 = vmatpush1.msra.mxu0 %v85
    %3835 = vmatprep.subr.mxu0 0.0
    %3836 = vmatpush1.msra.mxu0 %v86
    %3837 = vmatprep.subr.mxu0 0.0
    %3838 = vmatpush1.msra.mxu0 %v87
    %3839 = vmatprep.subr.mxu0 0.0
    %3840 = vmatpush1.msra.mxu0 %v88
    %3841 = vmatprep.subr.mxu0 0.0
    %3842 = vmatpush1.msra.mxu0 %v89
    %3843 = vmatprep.subr.mxu0 0.0
    %3844 = vmatpush1.msra.mxu0 %v90
    %3845 = vmatprep.subr.mxu0 0.0
    %3846 = vmatpush1.msra.mxu0 %v91
    %3847 = vmatprep.subr.mxu0 0.0
    %3848 = vmatpush1.msra.mxu0 %v92
    %3849 = vmatprep.subr.mxu0 0.0
    %3850 = vmatpush1.msra.mxu0 %v93
    %3851 = vmatprep.subr.mxu0 0.0
    %3852 = vmatpush1.msra.mxu0 %v94
    %3853 = vmatprep.subr.mxu0 0.0
    %3854 = vmatpush1.msra.mxu0 %v95
    %3855 = vmatprep.subr.mxu0 0.0
    %3856 = vmatpush1.msra.mxu0 %v96
    %3857 = vmatprep.subr.mxu0 0.0
    %3858 = vmatpush1.msra.mxu0 %v97
    %3859 = vmatprep.subr.mxu0 0.0
    %3860 = vmatpush1.msra.mxu0 %v98
    %3861 = vmatprep.subr.mxu0 0.0
    %3862 = vmatpush1.msra.mxu0 %v99
    %3863 = vmatprep.subr.mxu0 0.0
    %3864 = vmatpush1.msra.mxu0 %v100
    %3865 = vmatprep.subr.mxu0 0.0
    %3866 = vmatpush1.msra.mxu0 %v101
    %3867 = vmatprep.subr.mxu0 0.0
    %3868 = vmatpush1.msra.mxu0 %v102
    %3869 = vmatprep.subr.mxu0 0.0
    %3870 = vmatpush1.msra.mxu0 %v103
    %3871 = vmatprep.subr.mxu0 0.0
    %3872 = vmatpush1.msra.mxu0 %v104
    %3873 = vmatprep.subr.mxu0 0.0
    %3874 = vmatpush1.msra.mxu0 %v105
    %3875 = vmatprep.subr.mxu0 0.0
    %3876 = vmatpush1.msra.mxu0 %v106
    %3877 = vmatprep.subr.mxu0 0.0
    %3878 = vmatpush1.msra.mxu0 %v107
    %3879 = vmatprep.subr.mxu0 0.0
    %3880 = vmatpush1.msra.mxu0 %v108
    %3881 = vmatprep.subr.mxu0 0.0
    %3882 = vmatpush1.msra.mxu0 %v109
    %3883 = vmatprep.subr.mxu0 0.0
    %3884 = vmatpush1.msra.mxu0 %v110
    %3885 = vmatprep.subr.mxu0 0.0
    %3886 = vmatpush1.msra.mxu0 %v111
    %3887 = vmatprep.mubr.f32.mxu0 %v3617
    %3888 = vmatmul.mubr.f32.gmra.mrb[0].mxu0 %v3616
    %v3889 = vpop.f32.mrb[0].mxu0
    %v3890 = vadd.f32 %v3745, %v3889
    %v3891 = vpop.f32.mrb[0].mxu0
    %3892 = vmatprep.mubr.f32.mxu0 %v3621
    %3893 = vmatmul.mubr.f32.gmra.mrb[0].mxu0 %v3620
    %v3894 = vpop.f32.mrb[0].mxu0
    %v3895 = vadd.f32 %v3750, %v3894
    %v3896 = vpop.f32.mrb[0].mxu0
    %3897 = vmatprep.mubr.f32.mxu0 %v3625
    %3898 = vmatmul.mubr.f32.gmra.mrb[0].mxu0 %v3624
    %v3899 = vpop.f32.mrb[0].mxu0
    %v3900 = vadd.f32 %v3755, %v3899
    %v3901 = vpop.f32.mrb[0].mxu0
    %3902 = vmatprep.mubr.f32.mxu0 %v3629
    %3903 = vmatmul.mubr.f32.gmra.mrb[0].mxu0 %v3628
    %v3904 = vpop.f32.mrb[0].mxu0
    %v3905 = vadd.f32 %v3760, %v3904
    %v3906 = vpop.f32.mrb[0].mxu0
    %3907 = vmatprep.mubr.f32.mxu0 %v3633
    %3908 = vmatmul.mubr.f32.gmra.mrb[0].mxu0 %v3632
    %v3909 = vpop.f32.mrb[0].mxu0
    %v3910 = vadd.f32 %v3765, %v3909
    %v3911 = vpop.f32.mrb[0].mxu0
    %3912 = vmatprep.mubr.f32.mxu0 %v3637
    %3913 = vmatmul.mubr.f32.gmra.mrb[0].mxu0 %v3636
    %v3914 = vpop.f32.mrb[0].mxu0
    %v3915 = vadd.f32 %v3770, %v3914
    %v3916 = vpop.f32.mrb[0].mxu0
    %3917 = vmatprep.mubr.f32.mxu0 %v3641
    %3918 = vmatmul.mubr.f32.gmra.mrb[0].mxu0 %v3640
    %v3919 = vpop.f32.mrb[0].mxu0
    %v3920 = vadd.f32 %v3775, %v3919
    %v3921 = vpop.f32.mrb[0].mxu0
    %3922 = vmatprep.mubr.f32.mxu0 %v3645
    %3923 = vmatmul.mubr.f32.gmra.mrb[0].mxu0 %v3644
    %v3924 = vpop.f32.mrb[0].mxu0
    %v3925 = vadd.f32 %v3780, %v3924
    %v3926 = vpop.f32.mrb[0].mxu0
    %3927 = vmatprep.mubr.f32.mxu0 %v3649
    %3928 = vmatmul.mubr.f32.gmra.mrb[0].mxu0 %v3648
    %v3929 = vpop.f32.mrb[0].mxu0
    %v3930 = vadd.f32 %v3785, %v3929
    %v3931 = vpop.f32.mrb[0].mxu0
    %3932 = vmatprep.mubr.f32.mxu0 %v3653
    %3933 = vmatmul.mubr.f32.gmra.mrb[0].mxu0 %v3652
    %v3934 = vpop.f32.mrb[0].mxu0
    %v3935 = vadd.f32 %v3790, %v3934
    %v3936 = vpop.f32.mrb[0].mxu0
    %3937 = vmatprep.mubr.f32.mxu0 %v3657
    %3938 = vmatmul.mubr.f32.gmra.mrb[0].mxu0 %v3656
    %v3939 = vpop.f32.mrb[0].mxu0
    %v3940 = vadd.f32 %v3795, %v3939
    %v3941 = vpop.f32.mrb[0].mxu0
    %3942 = vmatprep.mubr.f32.mxu0 %v3661
    %3943 = vmatmul.mubr.f32.gmra.mrb[0].mxu0 %v3660
    %v3944 = vpop.f32.mrb[0].mxu0
    %v3945 = vadd.f32 %v3800, %v3944
    %v3946 = vpop.f32.mrb[0].mxu0
    %3947 = vmatprep.mubr.f32.mxu0 %v3665
    %3948 = vmatmul.mubr.f32.gmra.mrb[0].mxu0 %v3664
    %v3949 = vpop.f32.mrb[0].mxu0
    %v3950 = vadd.f32 %v3805, %v3949
    %v3951 = vpop.f32.mrb[0].mxu0
    %3952 = vmatprep.mubr.f32.mxu0 %v3669
    %3953 = vmatmul.mubr.f32.gmra.mrb[0].mxu0 %v3668
    %v3954 = vpop.f32.mrb[0].mxu0
    %v3955 = vadd.f32 %v3810, %v3954
    %v3956 = vpop.f32.mrb[0].mxu0
    %3957 = vmatprep.mubr.f32.mxu0 %v3673
    %3958 = vmatmul.mubr.f32.gmra.mrb[0].mxu0 %v3672
    %v3959 = vpop.f32.mrb[0].mxu0
    %v3960 = vadd.f32 %v3815, %v3959
    %v3961 = vpop.f32.mrb[0].mxu0
    %3962 = vmatprep.mubr.f32.mxu0 %v3677
    %3963 = vmatmul.mubr.f32.gmra.mrb[0].mxu0 %v3676
    %v3964 = vpop.f32.mrb[0].mxu0
    %v3965 = vadd.f32 %v3820, %v3964
    %v3966 = vpop.f32.mrb[0].mxu0
    %3967 = vdwg.mxu0
    %s3968 = scalar_lea.vmem %s2, 20
    %v3969 = vld [vmem:[%s3968] sm:$0xf]
    %v3971 = vsel %vm1068, %v3890, 0
    %v3974 = vsel %vm1068, %v3895, 0
    %v3977 = vsel %vm1068, %v3900, 0
    %v3980 = vsel %vm1068, %v3905, 0
    %v3983 = vsel %vm1068, %v3910, 0
    %v3986 = vsel %vm1068, %v3915, 0
    %v3989 = vsel %vm1068, %v3920, 0
    %v3992 = vsel %vm1068, %v3925, 0
    %v3995 = vsel %vm1068, %v3930, 0
    %v3998 = vsel %vm1068, %v3935, 0
    %v4001 = vsel %vm1068, %v3940, 0
    %v4004 = vsel %vm1068, %v3945, 0
    %v4007 = vsel %vm1068, %v3950, 0
    %v4010 = vsel %vm1068, %v3955, 0
    %v4013 = vsel %vm1068, %v3960, 0
    %v4016 = vsel %vm1068, %v3965, 0
    %v4019 = vsel %vm1117, %v3969, 0
    %4021 = vmatprep.subr.mxu0 0.0
    %4022 = vmatpush1.msra.mxu0 %v4019
    %4023 = vmatprep.subr.mxu0 0.0
    %4024 = vmatpush1.msra.mxu0 0.0
    %4025 = vmatprep.subr.mxu0 0.0
    %4026 = vmatpush1.msra.mxu0 0.0
    %4027 = vmatprep.subr.mxu0 0.0
    %4028 = vmatpush1.msra.mxu0 0.0
    %4029 = vmatprep.subr.mxu0 0.0
    %4030 = vmatpush1.msra.mxu0 0.0
    %4031 = vmatprep.subr.mxu0 0.0
    %4032 = vmatpush1.msra.mxu0 0.0
    %4033 = vmatprep.subr.mxu0 0.0
    %4034 = vmatpush1.msra.mxu0 0.0
    %4035 = vmatprep.subr.mxu0 0.0
    %4036 = vmatpush1.msra.mxu0 0.0
    %4037 = vmatprep.subr.mxu0 0.0
    %4038 = vmatpush1.msra.mxu0 0.0
    %4039 = vmatprep.subr.mxu0 0.0
    %4040 = vmatpush1.msra.mxu0 0.0
    %4041 = vmatprep.subr.mxu0 0.0
    %4042 = vmatpush1.msra.mxu0 0.0
    %4043 = vmatprep.subr.mxu0 0.0
    %4044 = vmatpush1.msra.mxu0 0.0
    %4045 = vmatprep.subr.mxu0 0.0
    %4046 = vmatpush1.msra.mxu0 0.0
    %4047 = vmatprep.subr.mxu0 0.0
    %4048 = vmatpush1.msra.mxu0 0.0
    %4049 = vmatprep.subr.mxu0 0.0
    %4050 = vmatpush1.msra.mxu0 0.0
    %4051 = vmatprep.subr.mxu0 0.0
    %4052 = vmatpush1.msra.mxu0 0.0
    %4053 = vmatprep.subr.mxu0 0.0
    %4054 = vmatpush1.msra.mxu0 0.0
    %4055 = vmatprep.subr.mxu0 0.0
    %4056 = vmatpush1.msra.mxu0 0.0
    %4057 = vmatprep.subr.mxu0 0.0
    %4058 = vmatpush1.msra.mxu0 0.0
    %4059 = vmatprep.subr.mxu0 0.0
    %4060 = vmatpush1.msra.mxu0 0.0
    %4061 = vmatprep.subr.mxu0 0.0
    %4062 = vmatpush1.msra.mxu0 0.0
    %4063 = vmatprep.subr.mxu0 0.0
    %4064 = vmatpush1.msra.mxu0 0.0
    %4065 = vmatprep.subr.mxu0 0.0
    %4066 = vmatpush1.msra.mxu0 0.0
    %4067 = vmatprep.subr.mxu0 0.0
    %4068 = vmatpush1.msra.mxu0 0.0
    %4069 = vmatprep.subr.mxu0 0.0
    %4070 = vmatpush1.msra.mxu0 0.0
    %4071 = vmatprep.subr.mxu0 0.0
    %4072 = vmatpush1.msra.mxu0 0.0
    %4073 = vmatprep.subr.mxu0 0.0
    %4074 = vmatpush1.msra.mxu0 0.0
    %4075 = vmatprep.subr.mxu0 0.0
    %4076 = vmatpush1.msra.mxu0 0.0
    %4077 = vmatprep.subr.mxu0 0.0
    %4078 = vmatpush1.msra.mxu0 0.0
    %4079 = vmatprep.subr.mxu0 0.0
    %4080 = vmatpush1.msra.mxu0 0.0
    %4081 = vmatprep.subr.mxu0 0.0
    %4082 = vmatpush1.msra.mxu0 0.0
    %4083 = vmatprep.subr.mxu0 0.0
    %4084 = vmatpush1.msra.mxu0 0.0
    %4085 = vmatprep.mubr.f32.mxu0 0.0
    %4086 = vmatmul.mubr.f32.gmra.mrb[0].mxu0 %v3971
    %v4087 = vpop.f32.mrb[0].mxu0
    %v4088 = vadd.f32 0.0, %v4087
    %v4089 = vpop.f32.mrb[0].mxu0
    %4090 = vmatprep.mubr.f32.mxu0 0.0
    %4091 = vmatmul.mubr.f32.gmra.mrb[0].mxu0 %v3974
    %v4092 = vpop.f32.mrb[0].mxu0
    %v4093 = vadd.f32 0.0, %v4092
    %v4094 = vpop.f32.mrb[0].mxu0
    %4095 = vmatprep.mubr.f32.mxu0 0.0
    %4096 = vmatmul.mubr.f32.gmra.mrb[0].mxu0 %v3977
    %v4097 = vpop.f32.mrb[0].mxu0
    %v4098 = vadd.f32 0.0, %v4097
    %v4099 = vpop.f32.mrb[0].mxu0
    %4100 = vmatprep.mubr.f32.mxu0 0.0
    %4101 = vmatmul.mubr.f32.gmra.mrb[0].mxu0 %v3980
    %v4102 = vpop.f32.mrb[0].mxu0
    %v4103 = vadd.f32 0.0, %v4102
    %v4104 = vpop.f32.mrb[0].mxu0
    %4105 = vmatprep.mubr.f32.mxu0 0.0
    %4106 = vmatmul.mubr.f32.gmra.mrb[0].mxu0 %v3983
    %v4107 = vpop.f32.mrb[0].mxu0
    %v4108 = vadd.f32 0.0, %v4107
    %v4109 = vpop.f32.mrb[0].mxu0
    %4110 = vmatprep.mubr.f32.mxu0 0.0
    %4111 = vmatmul.mubr.f32.gmra.mrb[0].mxu0 %v3986
    %v4112 = vpop.f32.mrb[0].mxu0
    %v4113 = vadd.f32 0.0, %v4112
    %v4114 = vpop.f32.mrb[0].mxu0
    %4115 = vmatprep.mubr.f32.mxu0 0.0
    %4116 = vmatmul.mubr.f32.gmra.mrb[0].mxu0 %v3989
    %v4117 = vpop.f32.mrb[0].mxu0
    %v4118 = vadd.f32 0.0, %v4117
    %v4119 = vpop.f32.mrb[0].mxu0
    %4120 = vmatprep.mubr.f32.mxu0 0.0
    %4121 = vmatmul.mubr.f32.gmra.mrb[0].mxu0 %v3992
    %v4122 = vpop.f32.mrb[0].mxu0
    %v4123 = vadd.f32 0.0, %v4122
    %v4124 = vpop.f32.mrb[0].mxu0
    %4125 = vmatprep.mubr.f32.mxu0 0.0
    %4126 = vmatmul.mubr.f32.gmra.mrb[0].mxu0 %v3995
    %v4127 = vpop.f32.mrb[0].mxu0
    %v4128 = vadd.f32 0.0, %v4127
    %v4129 = vpop.f32.mrb[0].mxu0
    %4130 = vmatprep.mubr.f32.mxu0 0.0
    %4131 = vmatmul.mubr.f32.gmra.mrb[0].mxu0 %v3998
    %v4132 = vpop.f32.mrb[0].mxu0
    %v4133 = vadd.f32 0.0, %v4132
    %v4134 = vpop.f32.mrb[0].mxu0
    %4135 = vmatprep.mubr.f32.mxu0 0.0
    %4136 = vmatmul.mubr.f32.gmra.mrb[0].mxu0 %v4001
    %v4137 = vpop.f32.mrb[0].mxu0
    %v4138 = vadd.f32 0.0, %v4137
    %v4139 = vpop.f32.mrb[0].mxu0
    %4140 = vmatprep.mubr.f32.mxu0 0.0
    %4141 = vmatmul.mubr.f32.gmra.mrb[0].mxu0 %v4004
    %v4142 = vpop.f32.mrb[0].mxu0
    %v4143 = vadd.f32 0.0, %v4142
    %v4144 = vpop.f32.mrb[0].mxu0
    %4145 = vmatprep.mubr.f32.mxu0 0.0
    %4146 = vmatmul.mubr.f32.gmra.mrb[0].mxu0 %v4007
    %v4147 = vpop.f32.mrb[0].mxu0
    %v4148 = vadd.f32 0.0, %v4147
    %v4149 = vpop.f32.mrb[0].mxu0
    %4150 = vmatprep.mubr.f32.mxu0 0.0
    %4151 = vmatmul.mubr.f32.gmra.mrb[0].mxu0 %v4010
    %v4152 = vpop.f32.mrb[0].mxu0
    %v4153 = vadd.f32 0.0, %v4152
    %v4154 = vpop.f32.mrb[0].mxu0
    %4155 = vmatprep.mubr.f32.mxu0 0.0
    %4156 = vmatmul.mubr.f32.gmra.mrb[0].mxu0 %v4013
    %v4157 = vpop.f32.mrb[0].mxu0
    %v4158 = vadd.f32 0.0, %v4157
    %v4159 = vpop.f32.mrb[0].mxu0
    %4160 = vmatprep.mubr.f32.mxu0 0.0
    %4161 = vmatmul.mubr.f32.gmra.mrb[0].mxu0 %v4016
    %v4162 = vpop.f32.mrb[0].mxu0
    %v4163 = vadd.f32 0.0, %v4162
    %v4164 = vpop.f32.mrb[0].mxu0
    %4165 = vdwg.mxu0
    %v4166 = vadd.f32 %v3486, %v4088
    %v4167 = vadd.f32 %v3487, %v4093
    %v4168 = vadd.f32 %v3488, %v4098
    %v4169 = vadd.f32 %v3489, %v4103
    %v4170 = vadd.f32 %v3490, %v4108
    %v4171 = vadd.f32 %v3491, %v4113
    %v4172 = vadd.f32 %v3492, %v4118
    %v4173 = vadd.f32 %v3493, %v4123
    %v4174 = vadd.f32 %v3494, %v4128
    %v4175 = vadd.f32 %v3495, %v4133
    %v4176 = vadd.f32 %v3496, %v4138
    %v4177 = vadd.f32 %v3497, %v4143
    %v4178 = vadd.f32 %v3498, %v4148
    %v4179 = vadd.f32 %v3499, %v4153
    %v4180 = vadd.f32 %v3500, %v4158
    %v4181 = vadd.f32 %v3501, %v4163
    %4182 = vset.pattern.permute.xlu0 6
    %4183 = vperm.xlu0 %4182, %v117
    %v4184 = vpop.permute.xlu0 %4183
    %4185 = vset.pattern.permute.xlu0 6
    %4186 = vperm.xlu0 %4185, %v118
    %v4187 = vpop.permute.xlu0 %4186
    %4188 = vset.pattern.permute.xlu0 6
    %4189 = vperm.xlu0 %4188, %v119
    %v4190 = vpop.permute.xlu0 %4189
    %4191 = vset.pattern.permute.xlu0 6
    %4192 = vperm.xlu0 %4191, %v120
    %v4193 = vpop.permute.xlu0 %4192
    %4194 = vset.pattern.permute.xlu0 6
    %4195 = vperm.xlu0 %4194, %v121
    %v4196 = vpop.permute.xlu0 %4195
    %4197 = vset.pattern.permute.xlu0 6
    %4198 = vperm.xlu0 %4197, %v122
    %v4199 = vpop.permute.xlu0 %4198
    %4200 = vset.pattern.permute.xlu0 6
    %4201 = vperm.xlu0 %4200, %v123
    %v4202 = vpop.permute.xlu0 %4201
    %4203 = vset.pattern.permute.xlu0 6
    %4204 = vperm.xlu0 %4203, %v124
    %v4205 = vpop.permute.xlu0 %4204
    %4206 = vset.pattern.permute.xlu0 6
    %4207 = vperm.xlu0 %4206, %v125
    %v4208 = vpop.permute.xlu0 %4207
    %4209 = vset.pattern.permute.xlu0 6
    %4210 = vperm.xlu0 %4209, %v126
    %v4211 = vpop.permute.xlu0 %4210
    %4212 = vset.pattern.permute.xlu0 6
    %4213 = vperm.xlu0 %4212, %v127
    %v4214 = vpop.permute.xlu0 %4213
    %4215 = vset.pattern.permute.xlu0 6
    %4216 = vperm.xlu0 %4215, %v128
    %v4217 = vpop.permute.xlu0 %4216
    %4218 = vset.pattern.permute.xlu0 6
    %4219 = vperm.xlu0 %4218, %v129
    %v4220 = vpop.permute.xlu0 %4219
    %4221 = vset.pattern.permute.xlu0 6
    %4222 = vperm.xlu0 %4221, %v130
    %v4223 = vpop.permute.xlu0 %4222
    %4224 = vset.pattern.permute.xlu0 6
    %4225 = vperm.xlu0 %4224, %v131
    %v4226 = vpop.permute.xlu0 %4225
    %4227 = vset.pattern.permute.xlu0 6
    %4228 = vperm.xlu0 %4227, %v132
    %v4229 = vpop.permute.xlu0 %4228
    %vm4230 = vcmp.eq.s32.totalorder %v113, %v4184
    %vm4231 = vcmp.eq.s32.totalorder %v114, %v4184
    %vm4232 = vcmp.eq.s32.totalorder %v115, %v4184
    %vm4233 = vcmp.eq.s32.totalorder %v116, %v4184
    %vm4234 = vcmp.eq.s32.totalorder %v113, %v4187
    %vm4235 = vcmp.eq.s32.totalorder %v114, %v4187
    %vm4236 = vcmp.eq.s32.totalorder %v115, %v4187
    %vm4237 = vcmp.eq.s32.totalorder %v116, %v4187
    %vm4238 = vcmp.eq.s32.totalorder %v113, %v4190
    %vm4239 = vcmp.eq.s32.totalorder %v114, %v4190
    %vm4240 = vcmp.eq.s32.totalorder %v115, %v4190
    %vm4241 = vcmp.eq.s32.totalorder %v116, %v4190
    %vm4242 = vcmp.eq.s32.totalorder %v113, %v4193
    %vm4243 = vcmp.eq.s32.totalorder %v114, %v4193
    %vm4244 = vcmp.eq.s32.totalorder %v115, %v4193
    %vm4245 = vcmp.eq.s32.totalorder %v116, %v4193
    %vm4246 = vcmp.eq.s32.totalorder %v113, %v4196
    %vm4247 = vcmp.eq.s32.totalorder %v114, %v4196
    %vm4248 = vcmp.eq.s32.totalorder %v115, %v4196
    %vm4249 = vcmp.eq.s32.totalorder %v116, %v4196
    %vm4250 = vcmp.eq.s32.totalorder %v113, %v4199
    %vm4251 = vcmp.eq.s32.totalorder %v114, %v4199
    %vm4252 = vcmp.eq.s32.totalorder %v115, %v4199
    %vm4253 = vcmp.eq.s32.totalorder %v116, %v4199
    %vm4254 = vcmp.eq.s32.totalorder %v113, %v4202
    %vm4255 = vcmp.eq.s32.totalorder %v114, %v4202
    %vm4256 = vcmp.eq.s32.totalorder %v115, %v4202
    %vm4257 = vcmp.eq.s32.totalorder %v116, %v4202
    %vm4258 = vcmp.eq.s32.totalorder %v113, %v4205
    %vm4259 = vcmp.eq.s32.totalorder %v114, %v4205
    %vm4260 = vcmp.eq.s32.totalorder %v115, %v4205
    %vm4261 = vcmp.eq.s32.totalorder %v116, %v4205
    %vm4262 = vcmp.eq.s32.totalorder %v113, %v4208
    %vm4263 = vcmp.eq.s32.totalorder %v114, %v4208
    %vm4264 = vcmp.eq.s32.totalorder %v115, %v4208
    %vm4265 = vcmp.eq.s32.totalorder %v116, %v4208
    %vm4266 = vcmp.eq.s32.totalorder %v113, %v4211
    %vm4267 = vcmp.eq.s32.totalorder %v114, %v4211
    %vm4268 = vcmp.eq.s32.totalorder %v115, %v4211
    %vm4269 = vcmp.eq.s32.totalorder %v116, %v4211
    %vm4270 = vcmp.eq.s32.totalorder %v113, %v4214
    %vm4271 = vcmp.eq.s32.totalorder %v114, %v4214
    %vm4272 = vcmp.eq.s32.totalorder %v115, %v4214
    %vm4273 = vcmp.eq.s32.totalorder %v116, %v4214
    %vm4274 = vcmp.eq.s32.totalorder %v113, %v4217
    %vm4275 = vcmp.eq.s32.totalorder %v114, %v4217
    %vm4276 = vcmp.eq.s32.totalorder %v115, %v4217
    %vm4277 = vcmp.eq.s32.totalorder %v116, %v4217
    %vm4278 = vcmp.eq.s32.totalorder %v113, %v4220
    %vm4279 = vcmp.eq.s32.totalorder %v114, %v4220
    %vm4280 = vcmp.eq.s32.totalorder %v115, %v4220
    %vm4281 = vcmp.eq.s32.totalorder %v116, %v4220
    %vm4282 = vcmp.eq.s32.totalorder %v113, %v4223
    %vm4283 = vcmp.eq.s32.totalorder %v114, %v4223
    %vm4284 = vcmp.eq.s32.totalorder %v115, %v4223
    %vm4285 = vcmp.eq.s32.totalorder %v116, %v4223
    %vm4286 = vcmp.eq.s32.totalorder %v113, %v4226
    %vm4287 = vcmp.eq.s32.totalorder %v114, %v4226
    %vm4288 = vcmp.eq.s32.totalorder %v115, %v4226
    %vm4289 = vcmp.eq.s32.totalorder %v116, %v4226
    %vm4290 = vcmp.eq.s32.totalorder %v113, %v4229
    %vm4291 = vcmp.eq.s32.totalorder %v114, %v4229
    %vm4292 = vcmp.eq.s32.totalorder %v115, %v4229
    %vm4293 = vcmp.eq.s32.totalorder %v116, %v4229
    %v4294 = vsel %vm4230, 1.0, 0.0
    %v4295 = vsel %vm4231, 1.0, 0.0
    %v4296 = vsel %vm4232, 1.0, 0.0
    %v4297 = vsel %vm4233, 1.0, 0.0
    %v4298 = vsel %vm4234, 1.0, 0.0
    %v4299 = vsel %vm4235, 1.0, 0.0
    %v4300 = vsel %vm4236, 1.0, 0.0
    %v4301 = vsel %vm4237, 1.0, 0.0
    %v4302 = vsel %vm4238, 1.0, 0.0
    %v4303 = vsel %vm4239, 1.0, 0.0
    %v4304 = vsel %vm4240, 1.0, 0.0
    %v4305 = vsel %vm4241, 1.0, 0.0
    %v4306 = vsel %vm4242, 1.0, 0.0
    %v4307 = vsel %vm4243, 1.0, 0.0
    %v4308 = vsel %vm4244, 1.0, 0.0
    %v4309 = vsel %vm4245, 1.0, 0.0
    %v4310 = vsel %vm4246, 1.0, 0.0
    %v4311 = vsel %vm4247, 1.0, 0.0
    %v4312 = vsel %vm4248, 1.0, 0.0
    %v4313 = vsel %vm4249, 1.0, 0.0
    %v4314 = vsel %vm4250, 1.0, 0.0
    %v4315 = vsel %vm4251, 1.0, 0.0
    %v4316 = vsel %vm4252, 1.0, 0.0
    %v4317 = vsel %vm4253, 1.0, 0.0
    %v4318 = vsel %vm4254, 1.0, 0.0
    %v4319 = vsel %vm4255, 1.0, 0.0
    %v4320 = vsel %vm4256, 1.0, 0.0
    %v4321 = vsel %vm4257, 1.0, 0.0
    %v4322 = vsel %vm4258, 1.0, 0.0
    %v4323 = vsel %vm4259, 1.0, 0.0
    %v4324 = vsel %vm4260, 1.0, 0.0
    %v4325 = vsel %vm4261, 1.0, 0.0
    %v4326 = vsel %vm4262, 1.0, 0.0
    %v4327 = vsel %vm4263, 1.0, 0.0
    %v4328 = vsel %vm4264, 1.0, 0.0
    %v4329 = vsel %vm4265, 1.0, 0.0
    %v4330 = vsel %vm4266, 1.0, 0.0
    %v4331 = vsel %vm4267, 1.0, 0.0
    %v4332 = vsel %vm4268, 1.0, 0.0
    %v4333 = vsel %vm4269, 1.0, 0.0
    %v4334 = vsel %vm4270, 1.0, 0.0
    %v4335 = vsel %vm4271, 1.0, 0.0
    %v4336 = vsel %vm4272, 1.0, 0.0
    %v4337 = vsel %vm4273, 1.0, 0.0
    %v4338 = vsel %vm4274, 1.0, 0.0
    %v4339 = vsel %vm4275, 1.0, 0.0
    %v4340 = vsel %vm4276, 1.0, 0.0
    %v4341 = vsel %vm4277, 1.0, 0.0
    %v4342 = vsel %vm4278, 1.0, 0.0
    %v4343 = vsel %vm4279, 1.0, 0.0
    %v4344 = vsel %vm4280, 1.0, 0.0
    %v4345 = vsel %vm4281, 1.0, 0.0
    %v4346 = vsel %vm4282, 1.0, 0.0
    %v4347 = vsel %vm4283, 1.0, 0.0
    %v4348 = vsel %vm4284, 1.0, 0.0
    %v4349 = vsel %vm4285, 1.0, 0.0
    %v4350 = vsel %vm4286, 1.0, 0.0
    %v4351 = vsel %vm4287, 1.0, 0.0
    %v4352 = vsel %vm4288, 1.0, 0.0
    %v4353 = vsel %vm4289, 1.0, 0.0
    %v4354 = vsel %vm4290, 1.0, 0.0
    %v4355 = vsel %vm4291, 1.0, 0.0
    %v4356 = vsel %vm4292, 1.0, 0.0
    %v4357 = vsel %vm4293, 1.0, 0.0
    %4358 = vmatprep.subr.mxu0 0.0
    %4359 = vmatpush1.msra.mxu0 %v48
    %4360 = vmatprep.subr.mxu0 0.0
    %4361 = vmatpush1.msra.mxu0 %v49
    %4362 = vmatprep.subr.mxu0 0.0
    %4363 = vmatpush1.msra.mxu0 %v50
    %4364 = vmatprep.subr.mxu0 0.0
    %4365 = vmatpush1.msra.mxu0 %v51
    %4366 = vmatprep.subr.mxu0 0.0
    %4367 = vmatpush1.msra.mxu0 %v52
    %4368 = vmatprep.subr.mxu0 0.0
    %4369 = vmatpush1.msra.mxu0 %v53
    %4370 = vmatprep.subr.mxu0 0.0
    %4371 = vmatpush1.msra.mxu0 %v54
    %4372 = vmatprep.subr.mxu0 0.0
    %4373 = vmatpush1.msra.mxu0 %v55
    %4374 = vmatprep.subr.mxu0 0.0
    %4375 = vmatpush1.msra.mxu0 %v56
    %4376 = vmatprep.subr.mxu0 0.0
    %4377 = vmatpush1.msra.mxu0 %v57
    %4378 = vmatprep.subr.mxu0 0.0
    %4379 = vmatpush1.msra.mxu0 %v58
    %4380 = vmatprep.subr.mxu0 0.0
    %4381 = vmatpush1.msra.mxu0 %v59
    %4382 = vmatprep.subr.mxu0 0.0
    %4383 = vmatpush1.msra.mxu0 %v60
    %4384 = vmatprep.subr.mxu0 0.0
    %4385 = vmatpush1.msra.mxu0 %v61
    %4386 = vmatprep.subr.mxu0 0.0
    %4387 = vmatpush1.msra.mxu0 %v62
    %4388 = vmatprep.subr.mxu0 0.0
    %4389 = vmatpush1.msra.mxu0 %v63
    %4390 = vmatprep.subr.mxu0 0.0
    %4391 = vmatpush1.msra.mxu0 %v64
    %4392 = vmatprep.subr.mxu0 0.0
    %4393 = vmatpush1.msra.mxu0 %v65
    %4394 = vmatprep.subr.mxu0 0.0
    %4395 = vmatpush1.msra.mxu0 %v66
    %4396 = vmatprep.subr.mxu0 0.0
    %4397 = vmatpush1.msra.mxu0 %v67
    %4398 = vmatprep.subr.mxu0 0.0
    %4399 = vmatpush1.msra.mxu0 %v68
    %4400 = vmatprep.subr.mxu0 0.0
    %4401 = vmatpush1.msra.mxu0 %v69
    %4402 = vmatprep.subr.mxu0 0.0
    %4403 = vmatpush1.msra.mxu0 %v70
    %4404 = vmatprep.subr.mxu0 0.0
    %4405 = vmatpush1.msra.mxu0 %v71
    %4406 = vmatprep.subr.mxu0 0.0
    %4407 = vmatpush1.msra.mxu0 %v72
    %4408 = vmatprep.subr.mxu0 0.0
    %4409 = vmatpush1.msra.mxu0 %v73
    %4410 = vmatprep.subr.mxu0 0.0
    %4411 = vmatpush1.msra.mxu0 %v74
    %4412 = vmatprep.subr.mxu0 0.0
    %4413 = vmatpush1.msra.mxu0 %v75
    %4414 = vmatprep.subr.mxu0 0.0
    %4415 = vmatpush1.msra.mxu0 %v76
    %4416 = vmatprep.subr.mxu0 0.0
    %4417 = vmatpush1.msra.mxu0 %v77
    %4418 = vmatprep.subr.mxu0 0.0
    %4419 = vmatpush1.msra.mxu0 %v78
    %4420 = vmatprep.subr.mxu0 0.0
    %4421 = vmatpush1.msra.mxu0 %v79
    %4422 = vmatprep.mubr.f32.mxu0 %v4295
    %4423 = vmatmul.mubr.f32.gmra.mrb[0].mxu0 %v4294
    %v4424 = vpop.f32.mrb[0].mxu0
    %v4425 = vadd.f32 0.0, %v4424
    %v4426 = vpop.f32.mrb[0].mxu0
    %4427 = vmatprep.mubr.f32.mxu0 %v4299
    %4428 = vmatmul.mubr.f32.gmra.mrb[0].mxu0 %v4298
    %v4429 = vpop.f32.mrb[0].mxu0
    %v4430 = vadd.f32 0.0, %v4429
    %v4431 = vpop.f32.mrb[0].mxu0
    %4432 = vmatprep.mubr.f32.mxu0 %v4303
    %4433 = vmatmul.mubr.f32.gmra.mrb[0].mxu0 %v4302
    %v4434 = vpop.f32.mrb[0].mxu0
    %v4435 = vadd.f32 0.0, %v4434
    %v4436 = vpop.f32.mrb[0].mxu0
    %4437 = vmatprep.mubr.f32.mxu0 %v4307
    %4438 = vmatmul.mubr.f32.gmra.mrb[0].mxu0 %v4306
    %v4439 = vpop.f32.mrb[0].mxu0
    %v4440 = vadd.f32 0.0, %v4439
    %v4441 = vpop.f32.mrb[0].mxu0
    %4442 = vmatprep.mubr.f32.mxu0 %v4311
    %4443 = vmatmul.mubr.f32.gmra.mrb[0].mxu0 %v4310
    %v4444 = vpop.f32.mrb[0].mxu0
    %v4445 = vadd.f32 0.0, %v4444
    %v4446 = vpop.f32.mrb[0].mxu0
    %4447 = vmatprep.mubr.f32.mxu0 %v4315
    %4448 = vmatmul.mubr.f32.gmra.mrb[0].mxu0 %v4314
    %v4449 = vpop.f32.mrb[0].mxu0
    %v4450 = vadd.f32 0.0, %v4449
    %v4451 = vpop.f32.mrb[0].mxu0
    %4452 = vmatprep.mubr.f32.mxu0 %v4319
    %4453 = vmatmul.mubr.f32.gmra.mrb[0].mxu0 %v4318
    %v4454 = vpop.f32.mrb[0].mxu0
    %v4455 = vadd.f32 0.0, %v4454
    %v4456 = vpop.f32.mrb[0].mxu0
    %4457 = vmatprep.mubr.f32.mxu0 %v4323
    %4458 = vmatmul.mubr.f32.gmra.mrb[0].mxu0 %v4322
    %v4459 = vpop.f32.mrb[0].mxu0
    %v4460 = vadd.f32 0.0, %v4459
    %v4461 = vpop.f32.mrb[0].mxu0
    %4462 = vmatprep.mubr.f32.mxu0 %v4327
    %4463 = vmatmul.mubr.f32.gmra.mrb[0].mxu0 %v4326
    %v4464 = vpop.f32.mrb[0].mxu0
    %v4465 = vadd.f32 0.0, %v4464
    %v4466 = vpop.f32.mrb[0].mxu0
    %4467 = vmatprep.mubr.f32.mxu0 %v4331
    %4468 = vmatmul.mubr.f32.gmra.mrb[0].mxu0 %v4330
    %v4469 = vpop.f32.mrb[0].mxu0
    %v4470 = vadd.f32 0.0, %v4469
    %v4471 = vpop.f32.mrb[0].mxu0
    %4472 = vmatprep.mubr.f32.mxu0 %v4335
    %4473 = vmatmul.mubr.f32.gmra.mrb[0].mxu0 %v4334
    %v4474 = vpop.f32.mrb[0].mxu0
    %v4475 = vadd.f32 0.0, %v4474
    %v4476 = vpop.f32.mrb[0].mxu0
    %4477 = vmatprep.mubr.f32.mxu0 %v4339
    %4478 = vmatmul.mubr.f32.gmra.mrb[0].mxu0 %v4338
    %v4479 = vpop.f32.mrb[0].mxu0
    %v4480 = vadd.f32 0.0, %v4479
    %v4481 = vpop.f32.mrb[0].mxu0
    %4482 = vmatprep.mubr.f32.mxu0 %v4343
    %4483 = vmatmul.mubr.f32.gmra.mrb[0].mxu0 %v4342
    %v4484 = vpop.f32.mrb[0].mxu0
    %v4485 = vadd.f32 0.0, %v4484
    %v4486 = vpop.f32.mrb[0].mxu0
    %4487 = vmatprep.mubr.f32.mxu0 %v4347
    %4488 = vmatmul.mubr.f32.gmra.mrb[0].mxu0 %v4346
    %v4489 = vpop.f32.mrb[0].mxu0
    %v4490 = vadd.f32 0.0, %v4489
    %v4491 = vpop.f32.mrb[0].mxu0
    %4492 = vmatprep.mubr.f32.mxu0 %v4351
    %4493 = vmatmul.mubr.f32.gmra.mrb[0].mxu0 %v4350
    %v4494 = vpop.f32.mrb[0].mxu0
    %v4495 = vadd.f32 0.0, %v4494
    %v4496 = vpop.f32.mrb[0].mxu0
    %4497 = vmatprep.mubr.f32.mxu0 %v4355
    %4498 = vmatmul.mubr.f32.gmra.mrb[0].mxu0 %v4354
    %v4499 = vpop.f32.mrb[0].mxu0
    %v4500 = vadd.f32 0.0, %v4499
    %v4501 = vpop.f32.mrb[0].mxu0
    %4502 = vdwg.mxu0
    %4503 = vmatprep.subr.mxu0 0.0
    %4504 = vmatpush1.msra.mxu0 %v80
    %4505 = vmatprep.subr.mxu0 0.0
    %4506 = vmatpush1.msra.mxu0 %v81
    %4507 = vmatprep.subr.mxu0 0.0
    %4508 = vmatpush1.msra.mxu0 %v82
    %4509 = vmatprep.subr.mxu0 0.0
    %4510 = vmatpush1.msra.mxu0 %v83
    %4511 = vmatprep.subr.mxu0 0.0
    %4512 = vmatpush1.msra.mxu0 %v84
    %4513 = vmatprep.subr.mxu0 0.0
    %4514 = vmatpush1.msra.mxu0 %v85
    %4515 = vmatprep.subr.mxu0 0.0
    %4516 = vmatpush1.msra.mxu0 %v86
    %4517 = vmatprep.subr.mxu0 0.0
    %4518 = vmatpush1.msra.mxu0 %v87
    %4519 = vmatprep.subr.mxu0 0.0
    %4520 = vmatpush1.msra.mxu0 %v88
    %4521 = vmatprep.subr.mxu0 0.0
    %4522 = vmatpush1.msra.mxu0 %v89
    %4523 = vmatprep.subr.mxu0 0.0
    %4524 = vmatpush1.msra.mxu0 %v90
    %4525 = vmatprep.subr.mxu0 0.0
    %4526 = vmatpush1.msra.mxu0 %v91
    %4527 = vmatprep.subr.mxu0 0.0
    %4528 = vmatpush1.msra.mxu0 %v92
    %4529 = vmatprep.subr.mxu0 0.0
    %4530 = vmatpush1.msra.mxu0 %v93
    %4531 = vmatprep.subr.mxu0 0.0
    %4532 = vmatpush1.msra.mxu0 %v94
    %4533 = vmatprep.subr.mxu0 0.0
    %4534 = vmatpush1.msra.mxu0 %v95
    %4535 = vmatprep.subr.mxu0 0.0
    %4536 = vmatpush1.msra.mxu0 %v96
    %4537 = vmatprep.subr.mxu0 0.0
    %4538 = vmatpush1.msra.mxu0 %v97
    %4539 = vmatprep.subr.mxu0 0.0
    %4540 = vmatpush1.msra.mxu0 %v98
    %4541 = vmatprep.subr.mxu0 0.0
    %4542 = vmatpush1.msra.mxu0 %v99
    %4543 = vmatprep.subr.mxu0 0.0
    %4544 = vmatpush1.msra.mxu0 %v100
    %4545 = vmatprep.subr.mxu0 0.0
    %4546 = vmatpush1.msra.mxu0 %v101
    %4547 = vmatprep.subr.mxu0 0.0
    %4548 = vmatpush1.msra.mxu0 %v102
    %4549 = vmatprep.subr.mxu0 0.0
    %4550 = vmatpush1.msra.mxu0 %v103
    %4551 = vmatprep.subr.mxu0 0.0
    %4552 = vmatpush1.msra.mxu0 %v104
    %4553 = vmatprep.subr.mxu0 0.0
    %4554 = vmatpush1.msra.mxu0 %v105
    %4555 = vmatprep.subr.mxu0 0.0
    %4556 = vmatpush1.msra.mxu0 %v106
    %4557 = vmatprep.subr.mxu0 0.0
    %4558 = vmatpush1.msra.mxu0 %v107
    %4559 = vmatprep.subr.mxu0 0.0
    %4560 = vmatpush1.msra.mxu0 %v108
    %4561 = vmatprep.subr.mxu0 0.0
    %4562 = vmatpush1.msra.mxu0 %v109
    %4563 = vmatprep.subr.mxu0 0.0
    %4564 = vmatpush1.msra.mxu0 %v110
    %4565 = vmatprep.subr.mxu0 0.0
    %4566 = vmatpush1.msra.mxu0 %v111
    %4567 = vmatprep.mubr.f32.mxu0 %v4297
    %4568 = vmatmul.mubr.f32.gmra.mrb[0].mxu0 %v4296
    %v4569 = vpop.f32.mrb[0].mxu0
    %v4570 = vadd.f32 %v4425, %v4569
    %v4571 = vpop.f32.mrb[0].mxu0
    %4572 = vmatprep.mubr.f32.mxu0 %v4301
    %4573 = vmatmul.mubr.f32.gmra.mrb[0].mxu0 %v4300
    %v4574 = vpop.f32.mrb[0].mxu0
    %v4575 = vadd.f32 %v4430, %v4574
    %v4576 = vpop.f32.mrb[0].mxu0
    %4577 = vmatprep.mubr.f32.mxu0 %v4305
    %4578 = vmatmul.mubr.f32.gmra.mrb[0].mxu0 %v4304
    %v4579 = vpop.f32.mrb[0].mxu0
    %v4580 = vadd.f32 %v4435, %v4579
    %v4581 = vpop.f32.mrb[0].mxu0
    %4582 = vmatprep.mubr.f32.mxu0 %v4309
    %4583 = vmatmul.mubr.f32.gmra.mrb[0].mxu0 %v4308
    %v4584 = vpop.f32.mrb[0].mxu0
    %v4585 = vadd.f32 %v4440, %v4584
    %v4586 = vpop.f32.mrb[0].mxu0
    %4587 = vmatprep.mubr.f32.mxu0 %v4313
    %4588 = vmatmul.mubr.f32.gmra.mrb[0].mxu0 %v4312
    %v4589 = vpop.f32.mrb[0].mxu0
    %v4590 = vadd.f32 %v4445, %v4589
    %v4591 = vpop.f32.mrb[0].mxu0
    %4592 = vmatprep.mubr.f32.mxu0 %v4317
    %4593 = vmatmul.mubr.f32.gmra.mrb[0].mxu0 %v4316
    %v4594 = vpop.f32.mrb[0].mxu0
    %v4595 = vadd.f32 %v4450, %v4594
    %v4596 = vpop.f32.mrb[0].mxu0
    %4597 = vmatprep.mubr.f32.mxu0 %v4321
    %4598 = vmatmul.mubr.f32.gmra.mrb[0].mxu0 %v4320
    %v4599 = vpop.f32.mrb[0].mxu0
    %v4600 = vadd.f32 %v4455, %v4599
    %v4601 = vpop.f32.mrb[0].mxu0
    %4602 = vmatprep.mubr.f32.mxu0 %v4325
    %4603 = vmatmul.mubr.f32.gmra.mrb[0].mxu0 %v4324
    %v4604 = vpop.f32.mrb[0].mxu0
    %v4605 = vadd.f32 %v4460, %v4604
    %v4606 = vpop.f32.mrb[0].mxu0
    %4607 = vmatprep.mubr.f32.mxu0 %v4329
    %4608 = vmatmul.mubr.f32.gmra.mrb[0].mxu0 %v4328
    %v4609 = vpop.f32.mrb[0].mxu0
    %v4610 = vadd.f32 %v4465, %v4609
    %v4611 = vpop.f32.mrb[0].mxu0
    %4612 = vmatprep.mubr.f32.mxu0 %v4333
    %4613 = vmatmul.mubr.f32.gmra.mrb[0].mxu0 %v4332
    %v4614 = vpop.f32.mrb[0].mxu0
    %v4615 = vadd.f32 %v4470, %v4614
    %v4616 = vpop.f32.mrb[0].mxu0
    %4617 = vmatprep.mubr.f32.mxu0 %v4337
    %4618 = vmatmul.mubr.f32.gmra.mrb[0].mxu0 %v4336
    %v4619 = vpop.f32.mrb[0].mxu0
    %v4620 = vadd.f32 %v4475, %v4619
    %v4621 = vpop.f32.mrb[0].mxu0
    %4622 = vmatprep.mubr.f32.mxu0 %v4341
    %4623 = vmatmul.mubr.f32.gmra.mrb[0].mxu0 %v4340
    %v4624 = vpop.f32.mrb[0].mxu0
    %v4625 = vadd.f32 %v4480, %v4624
    %v4626 = vpop.f32.mrb[0].mxu0
    %4627 = vmatprep.mubr.f32.mxu0 %v4345
    %4628 = vmatmul.mubr.f32.gmra.mrb[0].mxu0 %v4344
    %v4629 = vpop.f32.mrb[0].mxu0
    %v4630 = vadd.f32 %v4485, %v4629
    %v4631 = vpop.f32.mrb[0].mxu0
    %4632 = vmatprep.mubr.f32.mxu0 %v4349
    %4633 = vmatmul.mubr.f32.gmra.mrb[0].mxu0 %v4348
    %v4634 = vpop.f32.mrb[0].mxu0
    %v4635 = vadd.f32 %v4490, %v4634
    %v4636 = vpop.f32.mrb[0].mxu0
    %4637 = vmatprep.mubr.f32.mxu0 %v4353
    %4638 = vmatmul.mubr.f32.gmra.mrb[0].mxu0 %v4352
    %v4639 = vpop.f32.mrb[0].mxu0
    %v4640 = vadd.f32 %v4495, %v4639
    %v4641 = vpop.f32.mrb[0].mxu0
    %4642 = vmatprep.mubr.f32.mxu0 %v4357
    %4643 = vmatmul.mubr.f32.gmra.mrb[0].mxu0 %v4356
    %v4644 = vpop.f32.mrb[0].mxu0
    %v4645 = vadd.f32 %v4500, %v4644
    %v4646 = vpop.f32.mrb[0].mxu0
    %4647 = vdwg.mxu0
    %s4648 = scalar_lea.vmem %s2, 24
    %v4649 = vld [vmem:[%s4648] sm:$0xf]
    %v4651 = vsel %vm1068, %v4570, 0
    %v4654 = vsel %vm1068, %v4575, 0
    %v4657 = vsel %vm1068, %v4580, 0
    %v4660 = vsel %vm1068, %v4585, 0
    %v4663 = vsel %vm1068, %v4590, 0
    %v4666 = vsel %vm1068, %v4595, 0
    %v4669 = vsel %vm1068, %v4600, 0
    %v4672 = vsel %vm1068, %v4605, 0
    %v4675 = vsel %vm1068, %v4610, 0
    %v4678 = vsel %vm1068, %v4615, 0
    %v4681 = vsel %vm1068, %v4620, 0
    %v4684 = vsel %vm1068, %v4625, 0
    %v4687 = vsel %vm1068, %v4630, 0
    %v4690 = vsel %vm1068, %v4635, 0
    %v4693 = vsel %vm1068, %v4640, 0
    %v4696 = vsel %vm1068, %v4645, 0
    %v4699 = vsel %vm1117, %v4649, 0
    %4701 = vmatprep.subr.mxu0 0.0
    %4702 = vmatpush1.msra.mxu0 %v4699
    %4703 = vmatprep.subr.mxu0 0.0
    %4704 = vmatpush1.msra.mxu0 0.0
    %4705 = vmatprep.subr.mxu0 0.0
    %4706 = vmatpush1.msra.mxu0 0.0
    %4707 = vmatprep.subr.mxu0 0.0
    %4708 = vmatpush1.msra.mxu0 0.0
    %4709 = vmatprep.subr.mxu0 0.0
    %4710 = vmatpush1.msra.mxu0 0.0
    %4711 = vmatprep.subr.mxu0 0.0
    %4712 = vmatpush1.msra.mxu0 0.0
    %4713 = vmatprep.subr.mxu0 0.0
    %4714 = vmatpush1.msra.mxu0 0.0
    %4715 = vmatprep.subr.mxu0 0.0
    %4716 = vmatpush1.msra.mxu0 0.0
    %4717 = vmatprep.subr.mxu0 0.0
    %4718 = vmatpush1.msra.mxu0 0.0
    %4719 = vmatprep.subr.mxu0 0.0
    %4720 = vmatpush1.msra.mxu0 0.0
    %4721 = vmatprep.subr.mxu0 0.0
    %4722 = vmatpush1.msra.mxu0 0.0
    %4723 = vmatprep.subr.mxu0 0.0
    %4724 = vmatpush1.msra.mxu0 0.0
    %4725 = vmatprep.subr.mxu0 0.0
    %4726 = vmatpush1.msra.mxu0 0.0
    %4727 = vmatprep.subr.mxu0 0.0
    %4728 = vmatpush1.msra.mxu0 0.0
    %4729 = vmatprep.subr.mxu0 0.0
    %4730 = vmatpush1.msra.mxu0 0.0
    %4731 = vmatprep.subr.mxu0 0.0
    %4732 = vmatpush1.msra.mxu0 0.0
    %4733 = vmatprep.subr.mxu0 0.0
    %4734 = vmatpush1.msra.mxu0 0.0
    %4735 = vmatprep.subr.mxu0 0.0
    %4736 = vmatpush1.msra.mxu0 0.0
    %4737 = vmatprep.subr.mxu0 0.0
    %4738 = vmatpush1.msra.mxu0 0.0
    %4739 = vmatprep.subr.mxu0 0.0
    %4740 = vmatpush1.msra.mxu0 0.0
    %4741 = vmatprep.subr.mxu0 0.0
    %4742 = vmatpush1.msra.mxu0 0.0
    %4743 = vmatprep.subr.mxu0 0.0
    %4744 = vmatpush1.msra.mxu0 0.0
    %4745 = vmatprep.subr.mxu0 0.0
    %4746 = vmatpush1.msra.mxu0 0.0
    %4747 = vmatprep.subr.mxu0 0.0
    %4748 = vmatpush1.msra.mxu0 0.0
    %4749 = vmatprep.subr.mxu0 0.0
    %4750 = vmatpush1.msra.mxu0 0.0
    %4751 = vmatprep.subr.mxu0 0.0
    %4752 = vmatpush1.msra.mxu0 0.0
    %4753 = vmatprep.subr.mxu0 0.0
    %4754 = vmatpush1.msra.mxu0 0.0
    %4755 = vmatprep.subr.mxu0 0.0
    %4756 = vmatpush1.msra.mxu0 0.0
    %4757 = vmatprep.subr.mxu0 0.0
    %4758 = vmatpush1.msra.mxu0 0.0
    %4759 = vmatprep.subr.mxu0 0.0
    %4760 = vmatpush1.msra.mxu0 0.0
    %4761 = vmatprep.subr.mxu0 0.0
    %4762 = vmatpush1.msra.mxu0 0.0
    %4763 = vmatprep.subr.mxu0 0.0
    %4764 = vmatpush1.msra.mxu0 0.0
    %4765 = vmatprep.mubr.f32.mxu0 0.0
    %4766 = vmatmul.mubr.f32.gmra.mrb[0].mxu0 %v4651
    %v4767 = vpop.f32.mrb[0].mxu0
    %v4768 = vadd.f32 0.0, %v4767
    %v4769 = vpop.f32.mrb[0].mxu0
    %4770 = vmatprep.mubr.f32.mxu0 0.0
    %4771 = vmatmul.mubr.f32.gmra.mrb[0].mxu0 %v4654
    %v4772 = vpop.f32.mrb[0].mxu0
    %v4773 = vadd.f32 0.0, %v4772
    %v4774 = vpop.f32.mrb[0].mxu0
    %4775 = vmatprep.mubr.f32.mxu0 0.0
    %4776 = vmatmul.mubr.f32.gmra.mrb[0].mxu0 %v4657
    %v4777 = vpop.f32.mrb[0].mxu0
    %v4778 = vadd.f32 0.0, %v4777
    %v4779 = vpop.f32.mrb[0].mxu0
    %4780 = vmatprep.mubr.f32.mxu0 0.0
    %4781 = vmatmul.mubr.f32.gmra.mrb[0].mxu0 %v4660
    %v4782 = vpop.f32.mrb[0].mxu0
    %v4783 = vadd.f32 0.0, %v4782
    %v4784 = vpop.f32.mrb[0].mxu0
    %4785 = vmatprep.mubr.f32.mxu0 0.0
    %4786 = vmatmul.mubr.f32.gmra.mrb[0].mxu0 %v4663
    %v4787 = vpop.f32.mrb[0].mxu0
    %v4788 = vadd.f32 0.0, %v4787
    %v4789 = vpop.f32.mrb[0].mxu0
    %4790 = vmatprep.mubr.f32.mxu0 0.0
    %4791 = vmatmul.mubr.f32.gmra.mrb[0].mxu0 %v4666
    %v4792 = vpop.f32.mrb[0].mxu0
    %v4793 = vadd.f32 0.0, %v4792
    %v4794 = vpop.f32.mrb[0].mxu0
    %4795 = vmatprep.mubr.f32.mxu0 0.0
    %4796 = vmatmul.mubr.f32.gmra.mrb[0].mxu0 %v4669
    %v4797 = vpop.f32.mrb[0].mxu0
    %v4798 = vadd.f32 0.0, %v4797
    %v4799 = vpop.f32.mrb[0].mxu0
    %4800 = vmatprep.mubr.f32.mxu0 0.0
    %4801 = vmatmul.mubr.f32.gmra.mrb[0].mxu0 %v4672
    %v4802 = vpop.f32.mrb[0].mxu0
    %v4803 = vadd.f32 0.0, %v4802
    %v4804 = vpop.f32.mrb[0].mxu0
    %4805 = vmatprep.mubr.f32.mxu0 0.0
    %4806 = vmatmul.mubr.f32.gmra.mrb[0].mxu0 %v4675
    %v4807 = vpop.f32.mrb[0].mxu0
    %v4808 = vadd.f32 0.0, %v4807
    %v4809 = vpop.f32.mrb[0].mxu0
    %4810 = vmatprep.mubr.f32.mxu0 0.0
    %4811 = vmatmul.mubr.f32.gmra.mrb[0].mxu0 %v4678
    %v4812 = vpop.f32.mrb[0].mxu0
    %v4813 = vadd.f32 0.0, %v4812
    %v4814 = vpop.f32.mrb[0].mxu0
    %4815 = vmatprep.mubr.f32.mxu0 0.0
    %4816 = vmatmul.mubr.f32.gmra.mrb[0].mxu0 %v4681
    %v4817 = vpop.f32.mrb[0].mxu0
    %v4818 = vadd.f32 0.0, %v4817
    %v4819 = vpop.f32.mrb[0].mxu0
    %4820 = vmatprep.mubr.f32.mxu0 0.0
    %4821 = vmatmul.mubr.f32.gmra.mrb[0].mxu0 %v4684
    %v4822 = vpop.f32.mrb[0].mxu0
    %v4823 = vadd.f32 0.0, %v4822
    %v4824 = vpop.f32.mrb[0].mxu0
    %4825 = vmatprep.mubr.f32.mxu0 0.0
    %4826 = vmatmul.mubr.f32.gmra.mrb[0].mxu0 %v4687
    %v4827 = vpop.f32.mrb[0].mxu0
    %v4828 = vadd.f32 0.0, %v4827
    %v4829 = vpop.f32.mrb[0].mxu0
    %4830 = vmatprep.mubr.f32.mxu0 0.0
    %4831 = vmatmul.mubr.f32.gmra.mrb[0].mxu0 %v4690
    %v4832 = vpop.f32.mrb[0].mxu0
    %v4833 = vadd.f32 0.0, %v4832
    %v4834 = vpop.f32.mrb[0].mxu0
    %4835 = vmatprep.mubr.f32.mxu0 0.0
    %4836 = vmatmul.mubr.f32.gmra.mrb[0].mxu0 %v4693
    %v4837 = vpop.f32.mrb[0].mxu0
    %v4838 = vadd.f32 0.0, %v4837
    %v4839 = vpop.f32.mrb[0].mxu0
    %4840 = vmatprep.mubr.f32.mxu0 0.0
    %4841 = vmatmul.mubr.f32.gmra.mrb[0].mxu0 %v4696
    %v4842 = vpop.f32.mrb[0].mxu0
    %v4843 = vadd.f32 0.0, %v4842
    %v4844 = vpop.f32.mrb[0].mxu0
    %4845 = vdwg.mxu0
    %v4846 = vadd.f32 %v4166, %v4768
    %v4847 = vadd.f32 %v4167, %v4773
    %v4848 = vadd.f32 %v4168, %v4778
    %v4849 = vadd.f32 %v4169, %v4783
    %v4850 = vadd.f32 %v4170, %v4788
    %v4851 = vadd.f32 %v4171, %v4793
    %v4852 = vadd.f32 %v4172, %v4798
    %v4853 = vadd.f32 %v4173, %v4803
    %v4854 = vadd.f32 %v4174, %v4808
    %v4855 = vadd.f32 %v4175, %v4813
    %v4856 = vadd.f32 %v4176, %v4818
    %v4857 = vadd.f32 %v4177, %v4823
    %v4858 = vadd.f32 %v4178, %v4828
    %v4859 = vadd.f32 %v4179, %v4833
    %v4860 = vadd.f32 %v4180, %v4838
    %v4861 = vadd.f32 %v4181, %v4843
    %4862 = vset.pattern.permute.xlu0 7
    %4863 = vperm.xlu0 %4862, %v117
    %v4864 = vpop.permute.xlu0 %4863
    %4865 = vset.pattern.permute.xlu0 7
    %4866 = vperm.xlu0 %4865, %v118
    %v4867 = vpop.permute.xlu0 %4866
    %4868 = vset.pattern.permute.xlu0 7
    %4869 = vperm.xlu0 %4868, %v119
    %v4870 = vpop.permute.xlu0 %4869
    %4871 = vset.pattern.permute.xlu0 7
    %4872 = vperm.xlu0 %4871, %v120
    %v4873 = vpop.permute.xlu0 %4872
    %4874 = vset.pattern.permute.xlu0 7
    %4875 = vperm.xlu0 %4874, %v121
    %v4876 = vpop.permute.xlu0 %4875
    %4877 = vset.pattern.permute.xlu0 7
    %4878 = vperm.xlu0 %4877, %v122
    %v4879 = vpop.permute.xlu0 %4878
    %4880 = vset.pattern.permute.xlu0 7
    %4881 = vperm.xlu0 %4880, %v123
    %v4882 = vpop.permute.xlu0 %4881
    %4883 = vset.pattern.permute.xlu0 7
    %4884 = vperm.xlu0 %4883, %v124
    %v4885 = vpop.permute.xlu0 %4884
    %4886 = vset.pattern.permute.xlu0 7
    %4887 = vperm.xlu0 %4886, %v125
    %v4888 = vpop.permute.xlu0 %4887
    %4889 = vset.pattern.permute.xlu0 7
    %4890 = vperm.xlu0 %4889, %v126
    %v4891 = vpop.permute.xlu0 %4890
    %4892 = vset.pattern.permute.xlu0 7
    %4893 = vperm.xlu0 %4892, %v127
    %v4894 = vpop.permute.xlu0 %4893
    %4895 = vset.pattern.permute.xlu0 7
    %4896 = vperm.xlu0 %4895, %v128
    %v4897 = vpop.permute.xlu0 %4896
    %4898 = vset.pattern.permute.xlu0 7
    %4899 = vperm.xlu0 %4898, %v129
    %v4900 = vpop.permute.xlu0 %4899
    %4901 = vset.pattern.permute.xlu0 7
    %4902 = vperm.xlu0 %4901, %v130
    %v4903 = vpop.permute.xlu0 %4902
    %4904 = vset.pattern.permute.xlu0 7
    %4905 = vperm.xlu0 %4904, %v131
    %v4906 = vpop.permute.xlu0 %4905
    %4907 = vset.pattern.permute.xlu0 7
    %4908 = vperm.xlu0 %4907, %v132
    %v4909 = vpop.permute.xlu0 %4908
    %vm4910 = vcmp.eq.s32.totalorder %v113, %v4864
    %vm4911 = vcmp.eq.s32.totalorder %v114, %v4864
    %vm4912 = vcmp.eq.s32.totalorder %v115, %v4864
    %vm4913 = vcmp.eq.s32.totalorder %v116, %v4864
    %vm4914 = vcmp.eq.s32.totalorder %v113, %v4867
    %vm4915 = vcmp.eq.s32.totalorder %v114, %v4867
    %vm4916 = vcmp.eq.s32.totalorder %v115, %v4867
    %vm4917 = vcmp.eq.s32.totalorder %v116, %v4867
    %vm4918 = vcmp.eq.s32.totalorder %v113, %v4870
    %vm4919 = vcmp.eq.s32.totalorder %v114, %v4870
    %vm4920 = vcmp.eq.s32.totalorder %v115, %v4870
    %vm4921 = vcmp.eq.s32.totalorder %v116, %v4870
    %vm4922 = vcmp.eq.s32.totalorder %v113, %v4873
    %vm4923 = vcmp.eq.s32.totalorder %v114, %v4873
    %vm4924 = vcmp.eq.s32.totalorder %v115, %v4873
    %vm4925 = vcmp.eq.s32.totalorder %v116, %v4873
    %vm4926 = vcmp.eq.s32.totalorder %v113, %v4876
    %vm4927 = vcmp.eq.s32.totalorder %v114, %v4876
    %vm4928 = vcmp.eq.s32.totalorder %v115, %v4876
    %vm4929 = vcmp.eq.s32.totalorder %v116, %v4876
    %vm4930 = vcmp.eq.s32.totalorder %v113, %v4879
    %vm4931 = vcmp.eq.s32.totalorder %v114, %v4879
    %vm4932 = vcmp.eq.s32.totalorder %v115, %v4879
    %vm4933 = vcmp.eq.s32.totalorder %v116, %v4879
    %vm4934 = vcmp.eq.s32.totalorder %v113, %v4882
    %vm4935 = vcmp.eq.s32.totalorder %v114, %v4882
    %vm4936 = vcmp.eq.s32.totalorder %v115, %v4882
    %vm4937 = vcmp.eq.s32.totalorder %v116, %v4882
    %vm4938 = vcmp.eq.s32.totalorder %v113, %v4885
    %vm4939 = vcmp.eq.s32.totalorder %v114, %v4885
    %vm4940 = vcmp.eq.s32.totalorder %v115, %v4885
    %vm4941 = vcmp.eq.s32.totalorder %v116, %v4885
    %vm4942 = vcmp.eq.s32.totalorder %v113, %v4888
    %vm4943 = vcmp.eq.s32.totalorder %v114, %v4888
    %vm4944 = vcmp.eq.s32.totalorder %v115, %v4888
    %vm4945 = vcmp.eq.s32.totalorder %v116, %v4888
    %vm4946 = vcmp.eq.s32.totalorder %v113, %v4891
    %vm4947 = vcmp.eq.s32.totalorder %v114, %v4891
    %vm4948 = vcmp.eq.s32.totalorder %v115, %v4891
    %vm4949 = vcmp.eq.s32.totalorder %v116, %v4891
    %vm4950 = vcmp.eq.s32.totalorder %v113, %v4894
    %vm4951 = vcmp.eq.s32.totalorder %v114, %v4894
    %vm4952 = vcmp.eq.s32.totalorder %v115, %v4894
    %vm4953 = vcmp.eq.s32.totalorder %v116, %v4894
    %vm4954 = vcmp.eq.s32.totalorder %v113, %v4897
    %vm4955 = vcmp.eq.s32.totalorder %v114, %v4897
    %vm4956 = vcmp.eq.s32.totalorder %v115, %v4897
    %vm4957 = vcmp.eq.s32.totalorder %v116, %v4897
    %vm4958 = vcmp.eq.s32.totalorder %v113, %v4900
    %vm4959 = vcmp.eq.s32.totalorder %v114, %v4900
    %vm4960 = vcmp.eq.s32.totalorder %v115, %v4900
    %vm4961 = vcmp.eq.s32.totalorder %v116, %v4900
    %vm4962 = vcmp.eq.s32.totalorder %v113, %v4903
    %vm4963 = vcmp.eq.s32.totalorder %v114, %v4903
    %vm4964 = vcmp.eq.s32.totalorder %v115, %v4903
    %vm4965 = vcmp.eq.s32.totalorder %v116, %v4903
    %vm4966 = vcmp.eq.s32.totalorder %v113, %v4906
    %vm4967 = vcmp.eq.s32.totalorder %v114, %v4906
    %vm4968 = vcmp.eq.s32.totalorder %v115, %v4906
    %vm4969 = vcmp.eq.s32.totalorder %v116, %v4906
    %vm4970 = vcmp.eq.s32.totalorder %v113, %v4909
    %vm4971 = vcmp.eq.s32.totalorder %v114, %v4909
    %vm4972 = vcmp.eq.s32.totalorder %v115, %v4909
    %vm4973 = vcmp.eq.s32.totalorder %v116, %v4909
    %v4974 = vsel %vm4910, 1.0, 0.0
    %v4975 = vsel %vm4911, 1.0, 0.0
    %v4976 = vsel %vm4912, 1.0, 0.0
    %v4977 = vsel %vm4913, 1.0, 0.0
    %v4978 = vsel %vm4914, 1.0, 0.0
    %v4979 = vsel %vm4915, 1.0, 0.0
    %v4980 = vsel %vm4916, 1.0, 0.0
    %v4981 = vsel %vm4917, 1.0, 0.0
    %v4982 = vsel %vm4918, 1.0, 0.0
    %v4983 = vsel %vm4919, 1.0, 0.0
    %v4984 = vsel %vm4920, 1.0, 0.0
    %v4985 = vsel %vm4921, 1.0, 0.0
    %v4986 = vsel %vm4922, 1.0, 0.0
    %v4987 = vsel %vm4923, 1.0, 0.0
    %v4988 = vsel %vm4924, 1.0, 0.0
    %v4989 = vsel %vm4925, 1.0, 0.0
    %v4990 = vsel %vm4926, 1.0, 0.0
    %v4991 = vsel %vm4927, 1.0, 0.0
    %v4992 = vsel %vm4928, 1.0, 0.0
    %v4993 = vsel %vm4929, 1.0, 0.0
    %v4994 = vsel %vm4930, 1.0, 0.0
    %v4995 = vsel %vm4931, 1.0, 0.0
    %v4996 = vsel %vm4932, 1.0, 0.0
    %v4997 = vsel %vm4933, 1.0, 0.0
    %v4998 = vsel %vm4934, 1.0, 0.0
    %v4999 = vsel %vm4935, 1.0, 0.0
    %v5000 = vsel %vm4936, 1.0, 0.0
    %v5001 = vsel %vm4937, 1.0, 0.0
    %v5002 = vsel %vm4938, 1.0, 0.0
    %v5003 = vsel %vm4939, 1.0, 0.0
    %v5004 = vsel %vm4940, 1.0, 0.0
    %v5005 = vsel %vm4941, 1.0, 0.0
    %v5006 = vsel %vm4942, 1.0, 0.0
    %v5007 = vsel %vm4943, 1.0, 0.0
    %v5008 = vsel %vm4944, 1.0, 0.0
    %v5009 = vsel %vm4945, 1.0, 0.0
    %v5010 = vsel %vm4946, 1.0, 0.0
    %v5011 = vsel %vm4947, 1.0, 0.0
    %v5012 = vsel %vm4948, 1.0, 0.0
    %v5013 = vsel %vm4949, 1.0, 0.0
    %v5014 = vsel %vm4950, 1.0, 0.0
    %v5015 = vsel %vm4951, 1.0, 0.0
    %v5016 = vsel %vm4952, 1.0, 0.0
    %v5017 = vsel %vm4953, 1.0, 0.0
    %v5018 = vsel %vm4954, 1.0, 0.0
    %v5019 = vsel %vm4955, 1.0, 0.0
    %v5020 = vsel %vm4956, 1.0, 0.0
    %v5021 = vsel %vm4957, 1.0, 0.0
    %v5022 = vsel %vm4958, 1.0, 0.0
    %v5023 = vsel %vm4959, 1.0, 0.0
    %v5024 = vsel %vm4960, 1.0, 0.0
    %v5025 = vsel %vm4961, 1.0, 0.0
    %v5026 = vsel %vm4962, 1.0, 0.0
    %v5027 = vsel %vm4963, 1.0, 0.0
    %v5028 = vsel %vm4964, 1.0, 0.0
    %v5029 = vsel %vm4965, 1.0, 0.0
    %v5030 = vsel %vm4966, 1.0, 0.0
    %v5031 = vsel %vm4967, 1.0, 0.0
    %v5032 = vsel %vm4968, 1.0, 0.0
    %v5033 = vsel %vm4969, 1.0, 0.0
    %v5034 = vsel %vm4970, 1.0, 0.0
    %v5035 = vsel %vm4971, 1.0, 0.0
    %v5036 = vsel %vm4972, 1.0, 0.0
    %v5037 = vsel %vm4973, 1.0, 0.0
    %5038 = vmatprep.subr.mxu0 0.0
    %5039 = vmatpush1.msra.mxu0 %v48
    %5040 = vmatprep.subr.mxu0 0.0
    %5041 = vmatpush1.msra.mxu0 %v49
    %5042 = vmatprep.subr.mxu0 0.0
    %5043 = vmatpush1.msra.mxu0 %v50
    %5044 = vmatprep.subr.mxu0 0.0
    %5045 = vmatpush1.msra.mxu0 %v51
    %5046 = vmatprep.subr.mxu0 0.0
    %5047 = vmatpush1.msra.mxu0 %v52
    %5048 = vmatprep.subr.mxu0 0.0
    %5049 = vmatpush1.msra.mxu0 %v53
    %5050 = vmatprep.subr.mxu0 0.0
    %5051 = vmatpush1.msra.mxu0 %v54
    %5052 = vmatprep.subr.mxu0 0.0
    %5053 = vmatpush1.msra.mxu0 %v55
    %5054 = vmatprep.subr.mxu0 0.0
    %5055 = vmatpush1.msra.mxu0 %v56
    %5056 = vmatprep.subr.mxu0 0.0
    %5057 = vmatpush1.msra.mxu0 %v57
    %5058 = vmatprep.subr.mxu0 0.0
    %5059 = vmatpush1.msra.mxu0 %v58
    %5060 = vmatprep.subr.mxu0 0.0
    %5061 = vmatpush1.msra.mxu0 %v59
    %5062 = vmatprep.subr.mxu0 0.0
    %5063 = vmatpush1.msra.mxu0 %v60
    %5064 = vmatprep.subr.mxu0 0.0
    %5065 = vmatpush1.msra.mxu0 %v61
    %5066 = vmatprep.subr.mxu0 0.0
    %5067 = vmatpush1.msra.mxu0 %v62
    %5068 = vmatprep.subr.mxu0 0.0
    %5069 = vmatpush1.msra.mxu0 %v63
    %5070 = vmatprep.subr.mxu0 0.0
    %5071 = vmatpush1.msra.mxu0 %v64
    %5072 = vmatprep.subr.mxu0 0.0
    %5073 = vmatpush1.msra.mxu0 %v65
    %5074 = vmatprep.subr.mxu0 0.0
    %5075 = vmatpush1.msra.mxu0 %v66
    %5076 = vmatprep.subr.mxu0 0.0
    %5077 = vmatpush1.msra.mxu0 %v67
    %5078 = vmatprep.subr.mxu0 0.0
    %5079 = vmatpush1.msra.mxu0 %v68
    %5080 = vmatprep.subr.mxu0 0.0
    %5081 = vmatpush1.msra.mxu0 %v69
    %5082 = vmatprep.subr.mxu0 0.0
    %5083 = vmatpush1.msra.mxu0 %v70
    %5084 = vmatprep.subr.mxu0 0.0
    %5085 = vmatpush1.msra.mxu0 %v71
    %5086 = vmatprep.subr.mxu0 0.0
    %5087 = vmatpush1.msra.mxu0 %v72
    %5088 = vmatprep.subr.mxu0 0.0
    %5089 = vmatpush1.msra.mxu0 %v73
    %5090 = vmatprep.subr.mxu0 0.0
    %5091 = vmatpush1.msra.mxu0 %v74
    %5092 = vmatprep.subr.mxu0 0.0
    %5093 = vmatpush1.msra.mxu0 %v75
    %5094 = vmatprep.subr.mxu0 0.0
    %5095 = vmatpush1.msra.mxu0 %v76
    %5096 = vmatprep.subr.mxu0 0.0
    %5097 = vmatpush1.msra.mxu0 %v77
    %5098 = vmatprep.subr.mxu0 0.0
    %5099 = vmatpush1.msra.mxu0 %v78
    %5100 = vmatprep.subr.mxu0 0.0
    %5101 = vmatpush1.msra.mxu0 %v79
    %5102 = vmatprep.mubr.f32.mxu0 %v4975
    %5103 = vmatmul.mubr.f32.gmra.mrb[0].mxu0 %v4974
    %v5104 = vpop.f32.mrb[0].mxu0
    %v5105 = vadd.f32 0.0, %v5104
    %v5106 = vpop.f32.mrb[0].mxu0
    %5107 = vmatprep.mubr.f32.mxu0 %v4979
    %5108 = vmatmul.mubr.f32.gmra.mrb[0].mxu0 %v4978
    %v5109 = vpop.f32.mrb[0].mxu0
    %v5110 = vadd.f32 0.0, %v5109
    %v5111 = vpop.f32.mrb[0].mxu0
    %5112 = vmatprep.mubr.f32.mxu0 %v4983
    %5113 = vmatmul.mubr.f32.gmra.mrb[0].mxu0 %v4982
    %v5114 = vpop.f32.mrb[0].mxu0
    %v5115 = vadd.f32 0.0, %v5114
    %v5116 = vpop.f32.mrb[0].mxu0
    %5117 = vmatprep.mubr.f32.mxu0 %v4987
    %5118 = vmatmul.mubr.f32.gmra.mrb[0].mxu0 %v4986
    %v5119 = vpop.f32.mrb[0].mxu0
    %v5120 = vadd.f32 0.0, %v5119
    %v5121 = vpop.f32.mrb[0].mxu0
    %5122 = vmatprep.mubr.f32.mxu0 %v4991
    %5123 = vmatmul.mubr.f32.gmra.mrb[0].mxu0 %v4990
    %v5124 = vpop.f32.mrb[0].mxu0
    %v5125 = vadd.f32 0.0, %v5124
    %v5126 = vpop.f32.mrb[0].mxu0
    %5127 = vmatprep.mubr.f32.mxu0 %v4995
    %5128 = vmatmul.mubr.f32.gmra.mrb[0].mxu0 %v4994
    %v5129 = vpop.f32.mrb[0].mxu0
    %v5130 = vadd.f32 0.0, %v5129
    %v5131 = vpop.f32.mrb[0].mxu0
    %5132 = vmatprep.mubr.f32.mxu0 %v4999
    %5133 = vmatmul.mubr.f32.gmra.mrb[0].mxu0 %v4998
    %v5134 = vpop.f32.mrb[0].mxu0
    %v5135 = vadd.f32 0.0, %v5134
    %v5136 = vpop.f32.mrb[0].mxu0
    %5137 = vmatprep.mubr.f32.mxu0 %v5003
    %5138 = vmatmul.mubr.f32.gmra.mrb[0].mxu0 %v5002
    %v5139 = vpop.f32.mrb[0].mxu0
    %v5140 = vadd.f32 0.0, %v5139
    %v5141 = vpop.f32.mrb[0].mxu0
    %5142 = vmatprep.mubr.f32.mxu0 %v5007
    %5143 = vmatmul.mubr.f32.gmra.mrb[0].mxu0 %v5006
    %v5144 = vpop.f32.mrb[0].mxu0
    %v5145 = vadd.f32 0.0, %v5144
    %v5146 = vpop.f32.mrb[0].mxu0
    %5147 = vmatprep.mubr.f32.mxu0 %v5011
    %5148 = vmatmul.mubr.f32.gmra.mrb[0].mxu0 %v5010
    %v5149 = vpop.f32.mrb[0].mxu0
    %v5150 = vadd.f32 0.0, %v5149
    %v5151 = vpop.f32.mrb[0].mxu0
    %5152 = vmatprep.mubr.f32.mxu0 %v5015
    %5153 = vmatmul.mubr.f32.gmra.mrb[0].mxu0 %v5014
    %v5154 = vpop.f32.mrb[0].mxu0
    %v5155 = vadd.f32 0.0, %v5154
    %v5156 = vpop.f32.mrb[0].mxu0
    %5157 = vmatprep.mubr.f32.mxu0 %v5019
    %5158 = vmatmul.mubr.f32.gmra.mrb[0].mxu0 %v5018
    %v5159 = vpop.f32.mrb[0].mxu0
    %v5160 = vadd.f32 0.0, %v5159
    %v5161 = vpop.f32.mrb[0].mxu0
    %5162 = vmatprep.mubr.f32.mxu0 %v5023
    %5163 = vmatmul.mubr.f32.gmra.mrb[0].mxu0 %v5022
    %v5164 = vpop.f32.mrb[0].mxu0
    %v5165 = vadd.f32 0.0, %v5164
    %v5166 = vpop.f32.mrb[0].mxu0
    %5167 = vmatprep.mubr.f32.mxu0 %v5027
    %5168 = vmatmul.mubr.f32.gmra.mrb[0].mxu0 %v5026
    %v5169 = vpop.f32.mrb[0].mxu0
    %v5170 = vadd.f32 0.0, %v5169
    %v5171 = vpop.f32.mrb[0].mxu0
    %5172 = vmatprep.mubr.f32.mxu0 %v5031
    %5173 = vmatmul.mubr.f32.gmra.mrb[0].mxu0 %v5030
    %v5174 = vpop.f32.mrb[0].mxu0
    %v5175 = vadd.f32 0.0, %v5174
    %v5176 = vpop.f32.mrb[0].mxu0
    %5177 = vmatprep.mubr.f32.mxu0 %v5035
    %5178 = vmatmul.mubr.f32.gmra.mrb[0].mxu0 %v5034
    %v5179 = vpop.f32.mrb[0].mxu0
    %v5180 = vadd.f32 0.0, %v5179
    %v5181 = vpop.f32.mrb[0].mxu0
    %5182 = vdwg.mxu0
    %5183 = vmatprep.subr.mxu0 0.0
    %5184 = vmatpush1.msra.mxu0 %v80
    %5185 = vmatprep.subr.mxu0 0.0
    %5186 = vmatpush1.msra.mxu0 %v81
    %5187 = vmatprep.subr.mxu0 0.0
    %5188 = vmatpush1.msra.mxu0 %v82
    %5189 = vmatprep.subr.mxu0 0.0
    %5190 = vmatpush1.msra.mxu0 %v83
    %5191 = vmatprep.subr.mxu0 0.0
    %5192 = vmatpush1.msra.mxu0 %v84
    %5193 = vmatprep.subr.mxu0 0.0
    %5194 = vmatpush1.msra.mxu0 %v85
    %5195 = vmatprep.subr.mxu0 0.0
    %5196 = vmatpush1.msra.mxu0 %v86
    %5197 = vmatprep.subr.mxu0 0.0
    %5198 = vmatpush1.msra.mxu0 %v87
    %5199 = vmatprep.subr.mxu0 0.0
    %5200 = vmatpush1.msra.mxu0 %v88
    %5201 = vmatprep.subr.mxu0 0.0
    %5202 = vmatpush1.msra.mxu0 %v89
    %5203 = vmatprep.subr.mxu0 0.0
    %5204 = vmatpush1.msra.mxu0 %v90
    %5205 = vmatprep.subr.mxu0 0.0
    %5206 = vmatpush1.msra.mxu0 %v91
    %5207 = vmatprep.subr.mxu0 0.0
    %5208 = vmatpush1.msra.mxu0 %v92
    %5209 = vmatprep.subr.mxu0 0.0
    %5210 = vmatpush1.msra.mxu0 %v93
    %5211 = vmatprep.subr.mxu0 0.0
    %5212 = vmatpush1.msra.mxu0 %v94
    %5213 = vmatprep.subr.mxu0 0.0
    %5214 = vmatpush1.msra.mxu0 %v95
    %5215 = vmatprep.subr.mxu0 0.0
    %5216 = vmatpush1.msra.mxu0 %v96
    %5217 = vmatprep.subr.mxu0 0.0
    %5218 = vmatpush1.msra.mxu0 %v97
    %5219 = vmatprep.subr.mxu0 0.0
    %5220 = vmatpush1.msra.mxu0 %v98
    %5221 = vmatprep.subr.mxu0 0.0
    %5222 = vmatpush1.msra.mxu0 %v99
    %5223 = vmatprep.subr.mxu0 0.0
    %5224 = vmatpush1.msra.mxu0 %v100
    %5225 = vmatprep.subr.mxu0 0.0
    %5226 = vmatpush1.msra.mxu0 %v101
    %5227 = vmatprep.subr.mxu0 0.0
    %5228 = vmatpush1.msra.mxu0 %v102
    %5229 = vmatprep.subr.mxu0 0.0
    %5230 = vmatpush1.msra.mxu0 %v103
    %5231 = vmatprep.subr.mxu0 0.0
    %5232 = vmatpush1.msra.mxu0 %v104
    %5233 = vmatprep.subr.mxu0 0.0
    %5234 = vmatpush1.msra.mxu0 %v105
    %5235 = vmatprep.subr.mxu0 0.0
    %5236 = vmatpush1.msra.mxu0 %v106
    %5237 = vmatprep.subr.mxu0 0.0
    %5238 = vmatpush1.msra.mxu0 %v107
    %5239 = vmatprep.subr.mxu0 0.0
    %5240 = vmatpush1.msra.mxu0 %v108
    %5241 = vmatprep.subr.mxu0 0.0
    %5242 = vmatpush1.msra.mxu0 %v109
    %5243 = vmatprep.subr.mxu0 0.0
    %5244 = vmatpush1.msra.mxu0 %v110
    %5245 = vmatprep.subr.mxu0 0.0
    %5246 = vmatpush1.msra.mxu0 %v111
    %5247 = vmatprep.mubr.f32.mxu0 %v4977
    %5248 = vmatmul.mubr.f32.gmra.mrb[0].mxu0 %v4976
    %v5249 = vpop.f32.mrb[0].mxu0
    %v5250 = vadd.f32 %v5105, %v5249
    %v5251 = vpop.f32.mrb[0].mxu0
    %5252 = vmatprep.mubr.f32.mxu0 %v4981
    %5253 = vmatmul.mubr.f32.gmra.mrb[0].mxu0 %v4980
    %v5254 = vpop.f32.mrb[0].mxu0
    %v5255 = vadd.f32 %v5110, %v5254
    %v5256 = vpop.f32.mrb[0].mxu0
    %5257 = vmatprep.mubr.f32.mxu0 %v4985
    %5258 = vmatmul.mubr.f32.gmra.mrb[0].mxu0 %v4984
    %v5259 = vpop.f32.mrb[0].mxu0
    %v5260 = vadd.f32 %v5115, %v5259
    %v5261 = vpop.f32.mrb[0].mxu0
    %5262 = vmatprep.mubr.f32.mxu0 %v4989
    %5263 = vmatmul.mubr.f32.gmra.mrb[0].mxu0 %v4988
    %v5264 = vpop.f32.mrb[0].mxu0
    %v5265 = vadd.f32 %v5120, %v5264
    %v5266 = vpop.f32.mrb[0].mxu0
    %5267 = vmatprep.mubr.f32.mxu0 %v4993
    %5268 = vmatmul.mubr.f32.gmra.mrb[0].mxu0 %v4992
    %v5269 = vpop.f32.mrb[0].mxu0
    %v5270 = vadd.f32 %v5125, %v5269
    %v5271 = vpop.f32.mrb[0].mxu0
    %5272 = vmatprep.mubr.f32.mxu0 %v4997
    %5273 = vmatmul.mubr.f32.gmra.mrb[0].mxu0 %v4996
    %v5274 = vpop.f32.mrb[0].mxu0
    %v5275 = vadd.f32 %v5130, %v5274
    %v5276 = vpop.f32.mrb[0].mxu0
    %5277 = vmatprep.mubr.f32.mxu0 %v5001
    %5278 = vmatmul.mubr.f32.gmra.mrb[0].mxu0 %v5000
    %v5279 = vpop.f32.mrb[0].mxu0
    %v5280 = vadd.f32 %v5135, %v5279
    %v5281 = vpop.f32.mrb[0].mxu0
    %5282 = vmatprep.mubr.f32.mxu0 %v5005
    %5283 = vmatmul.mubr.f32.gmra.mrb[0].mxu0 %v5004
    %v5284 = vpop.f32.mrb[0].mxu0
    %v5285 = vadd.f32 %v5140, %v5284
    %v5286 = vpop.f32.mrb[0].mxu0
    %5287 = vmatprep.mubr.f32.mxu0 %v5009
    %5288 = vmatmul.mubr.f32.gmra.mrb[0].mxu0 %v5008
    %v5289 = vpop.f32.mrb[0].mxu0
    %v5290 = vadd.f32 %v5145, %v5289
    %v5291 = vpop.f32.mrb[0].mxu0
    %5292 = vmatprep.mubr.f32.mxu0 %v5013
    %5293 = vmatmul.mubr.f32.gmra.mrb[0].mxu0 %v5012
    %v5294 = vpop.f32.mrb[0].mxu0
    %v5295 = vadd.f32 %v5150, %v5294
    %v5296 = vpop.f32.mrb[0].mxu0
    %5297 = vmatprep.mubr.f32.mxu0 %v5017
    %5298 = vmatmul.mubr.f32.gmra.mrb[0].mxu0 %v5016
    %v5299 = vpop.f32.mrb[0].mxu0
    %v5300 = vadd.f32 %v5155, %v5299
    %v5301 = vpop.f32.mrb[0].mxu0
    %5302 = vmatprep.mubr.f32.mxu0 %v5021
    %5303 = vmatmul.mubr.f32.gmra.mrb[0].mxu0 %v5020
    %v5304 = vpop.f32.mrb[0].mxu0
    %v5305 = vadd.f32 %v5160, %v5304
    %v5306 = vpop.f32.mrb[0].mxu0
    %5307 = vmatprep.mubr.f32.mxu0 %v5025
    %5308 = vmatmul.mubr.f32.gmra.mrb[0].mxu0 %v5024
    %v5309 = vpop.f32.mrb[0].mxu0
    %v5310 = vadd.f32 %v5165, %v5309
    %v5311 = vpop.f32.mrb[0].mxu0
    %5312 = vmatprep.mubr.f32.mxu0 %v5029
    %5313 = vmatmul.mubr.f32.gmra.mrb[0].mxu0 %v5028
    %v5314 = vpop.f32.mrb[0].mxu0
    %v5315 = vadd.f32 %v5170, %v5314
    %v5316 = vpop.f32.mrb[0].mxu0
    %5317 = vmatprep.mubr.f32.mxu0 %v5033
    %5318 = vmatmul.mubr.f32.gmra.mrb[0].mxu0 %v5032
    %v5319 = vpop.f32.mrb[0].mxu0
    %v5320 = vadd.f32 %v5175, %v5319
    %v5321 = vpop.f32.mrb[0].mxu0
    %5322 = vmatprep.mubr.f32.mxu0 %v5037
    %5323 = vmatmul.mubr.f32.gmra.mrb[0].mxu0 %v5036
    %v5324 = vpop.f32.mrb[0].mxu0
    %v5325 = vadd.f32 %v5180, %v5324
    %v5326 = vpop.f32.mrb[0].mxu0
    %5327 = vdwg.mxu0
    %s5328 = scalar_lea.vmem %s2, 28
    %v5329 = vld [vmem:[%s5328] sm:$0xf]
    %v5331 = vsel %vm1068, %v5250, 0
    %v5334 = vsel %vm1068, %v5255, 0
    %v5337 = vsel %vm1068, %v5260, 0
    %v5340 = vsel %vm1068, %v5265, 0
    %v5343 = vsel %vm1068, %v5270, 0
    %v5346 = vsel %vm1068, %v5275, 0
    %v5349 = vsel %vm1068, %v5280, 0
    %v5352 = vsel %vm1068, %v5285, 0
    %v5355 = vsel %vm1068, %v5290, 0
    %v5358 = vsel %vm1068, %v5295, 0
    %v5361 = vsel %vm1068, %v5300, 0
    %v5364 = vsel %vm1068, %v5305, 0
    %v5367 = vsel %vm1068, %v5310, 0
    %v5370 = vsel %vm1068, %v5315, 0
    %v5373 = vsel %vm1068, %v5320, 0
    %v5376 = vsel %vm1068, %v5325, 0
    %v5379 = vsel %vm1117, %v5329, 0
    %5381 = vmatprep.subr.mxu0 0.0
    %5382 = vmatpush1.msra.mxu0 %v5379
    %5383 = vmatprep.subr.mxu0 0.0
    %5384 = vmatpush1.msra.mxu0 0.0
    %5385 = vmatprep.subr.mxu0 0.0
    %5386 = vmatpush1.msra.mxu0 0.0
    %5387 = vmatprep.subr.mxu0 0.0
    %5388 = vmatpush1.msra.mxu0 0.0
    %5389 = vmatprep.subr.mxu0 0.0
    %5390 = vmatpush1.msra.mxu0 0.0
    %5391 = vmatprep.subr.mxu0 0.0
    %5392 = vmatpush1.msra.mxu0 0.0
    %5393 = vmatprep.subr.mxu0 0.0
    %5394 = vmatpush1.msra.mxu0 0.0
    %5395 = vmatprep.subr.mxu0 0.0
    %5396 = vmatpush1.msra.mxu0 0.0
    %5397 = vmatprep.subr.mxu0 0.0
    %5398 = vmatpush1.msra.mxu0 0.0
    %5399 = vmatprep.subr.mxu0 0.0
    %5400 = vmatpush1.msra.mxu0 0.0
    %5401 = vmatprep.subr.mxu0 0.0
    %5402 = vmatpush1.msra.mxu0 0.0
    %5403 = vmatprep.subr.mxu0 0.0
    %5404 = vmatpush1.msra.mxu0 0.0
    %5405 = vmatprep.subr.mxu0 0.0
    %5406 = vmatpush1.msra.mxu0 0.0
    %5407 = vmatprep.subr.mxu0 0.0
    %5408 = vmatpush1.msra.mxu0 0.0
    %5409 = vmatprep.subr.mxu0 0.0
    %5410 = vmatpush1.msra.mxu0 0.0
    %5411 = vmatprep.subr.mxu0 0.0
    %5412 = vmatpush1.msra.mxu0 0.0
    %5413 = vmatprep.subr.mxu0 0.0
    %5414 = vmatpush1.msra.mxu0 0.0
    %5415 = vmatprep.subr.mxu0 0.0
    %5416 = vmatpush1.msra.mxu0 0.0
    %5417 = vmatprep.subr.mxu0 0.0
    %5418 = vmatpush1.msra.mxu0 0.0
    %5419 = vmatprep.subr.mxu0 0.0
    %5420 = vmatpush1.msra.mxu0 0.0
    %5421 = vmatprep.subr.mxu0 0.0
    %5422 = vmatpush1.msra.mxu0 0.0
    %5423 = vmatprep.subr.mxu0 0.0
    %5424 = vmatpush1.msra.mxu0 0.0
    %5425 = vmatprep.subr.mxu0 0.0
    %5426 = vmatpush1.msra.mxu0 0.0
    %5427 = vmatprep.subr.mxu0 0.0
    %5428 = vmatpush1.msra.mxu0 0.0
    %5429 = vmatprep.subr.mxu0 0.0
    %5430 = vmatpush1.msra.mxu0 0.0
    %5431 = vmatprep.subr.mxu0 0.0
    %5432 = vmatpush1.msra.mxu0 0.0
    %5433 = vmatprep.subr.mxu0 0.0
    %5434 = vmatpush1.msra.mxu0 0.0
    %5435 = vmatprep.subr.mxu0 0.0
    %5436 = vmatpush1.msra.mxu0 0.0
    %5437 = vmatprep.subr.mxu0 0.0
    %5438 = vmatpush1.msra.mxu0 0.0
    %5439 = vmatprep.subr.mxu0 0.0
    %5440 = vmatpush1.msra.mxu0 0.0
    %5441 = vmatprep.subr.mxu0 0.0
    %5442 = vmatpush1.msra.mxu0 0.0
    %5443 = vmatprep.subr.mxu0 0.0
    %5444 = vmatpush1.msra.mxu0 0.0
    %5445 = vmatprep.mubr.f32.mxu0 0.0
    %5446 = vmatmul.mubr.f32.gmra.mrb[0].mxu0 %v5331
    %v5447 = vpop.f32.mrb[0].mxu0
    %v5448 = vadd.f32 0.0, %v5447
    %v5449 = vpop.f32.mrb[0].mxu0
    %5450 = vmatprep.mubr.f32.mxu0 0.0
    %5451 = vmatmul.mubr.f32.gmra.mrb[0].mxu0 %v5334
    %v5452 = vpop.f32.mrb[0].mxu0
    %v5453 = vadd.f32 0.0, %v5452
    %v5454 = vpop.f32.mrb[0].mxu0
    %5455 = vmatprep.mubr.f32.mxu0 0.0
    %5456 = vmatmul.mubr.f32.gmra.mrb[0].mxu0 %v5337
    %v5457 = vpop.f32.mrb[0].mxu0
    %v5458 = vadd.f32 0.0, %v5457
    %v5459 = vpop.f32.mrb[0].mxu0
    %5460 = vmatprep.mubr.f32.mxu0 0.0
    %5461 = vmatmul.mubr.f32.gmra.mrb[0].mxu0 %v5340
    %v5462 = vpop.f32.mrb[0].mxu0
    %v5463 = vadd.f32 0.0, %v5462
    %v5464 = vpop.f32.mrb[0].mxu0
    %5465 = vmatprep.mubr.f32.mxu0 0.0
    %5466 = vmatmul.mubr.f32.gmra.mrb[0].mxu0 %v5343
    %v5467 = vpop.f32.mrb[0].mxu0
    %v5468 = vadd.f32 0.0, %v5467
    %v5469 = vpop.f32.mrb[0].mxu0
    %5470 = vmatprep.mubr.f32.mxu0 0.0
    %5471 = vmatmul.mubr.f32.gmra.mrb[0].mxu0 %v5346
    %v5472 = vpop.f32.mrb[0].mxu0
    %v5473 = vadd.f32 0.0, %v5472
    %v5474 = vpop.f32.mrb[0].mxu0
    %5475 = vmatprep.mubr.f32.mxu0 0.0
    %5476 = vmatmul.mubr.f32.gmra.mrb[0].mxu0 %v5349
    %v5477 = vpop.f32.mrb[0].mxu0
    %v5478 = vadd.f32 0.0, %v5477
    %v5479 = vpop.f32.mrb[0].mxu0
    %5480 = vmatprep.mubr.f32.mxu0 0.0
    %5481 = vmatmul.mubr.f32.gmra.mrb[0].mxu0 %v5352
    %v5482 = vpop.f32.mrb[0].mxu0
    %v5483 = vadd.f32 0.0, %v5482
    %v5484 = vpop.f32.mrb[0].mxu0
    %5485 = vmatprep.mubr.f32.mxu0 0.0
    %5486 = vmatmul.mubr.f32.gmra.mrb[0].mxu0 %v5355
    %v5487 = vpop.f32.mrb[0].mxu0
    %v5488 = vadd.f32 0.0, %v5487
    %v5489 = vpop.f32.mrb[0].mxu0
    %5490 = vmatprep.mubr.f32.mxu0 0.0
    %5491 = vmatmul.mubr.f32.gmra.mrb[0].mxu0 %v5358
    %v5492 = vpop.f32.mrb[0].mxu0
    %v5493 = vadd.f32 0.0, %v5492
    %v5494 = vpop.f32.mrb[0].mxu0
    %5495 = vmatprep.mubr.f32.mxu0 0.0
    %5496 = vmatmul.mubr.f32.gmra.mrb[0].mxu0 %v5361
    %v5497 = vpop.f32.mrb[0].mxu0
    %v5498 = vadd.f32 0.0, %v5497
    %v5499 = vpop.f32.mrb[0].mxu0
    %5500 = vmatprep.mubr.f32.mxu0 0.0
    %5501 = vmatmul.mubr.f32.gmra.mrb[0].mxu0 %v5364
    %v5502 = vpop.f32.mrb[0].mxu0
    %v5503 = vadd.f32 0.0, %v5502
    %v5504 = vpop.f32.mrb[0].mxu0
    %5505 = vmatprep.mubr.f32.mxu0 0.0
    %5506 = vmatmul.mubr.f32.gmra.mrb[0].mxu0 %v5367
    %v5507 = vpop.f32.mrb[0].mxu0
    %v5508 = vadd.f32 0.0, %v5507
    %v5509 = vpop.f32.mrb[0].mxu0
    %5510 = vmatprep.mubr.f32.mxu0 0.0
    %5511 = vmatmul.mubr.f32.gmra.mrb[0].mxu0 %v5370
    %v5512 = vpop.f32.mrb[0].mxu0
    %v5513 = vadd.f32 0.0, %v5512
    %v5514 = vpop.f32.mrb[0].mxu0
    %5515 = vmatprep.mubr.f32.mxu0 0.0
    %5516 = vmatmul.mubr.f32.gmra.mrb[0].mxu0 %v5373
    %v5517 = vpop.f32.mrb[0].mxu0
    %v5518 = vadd.f32 0.0, %v5517
    %v5519 = vpop.f32.mrb[0].mxu0
    %5520 = vmatprep.mubr.f32.mxu0 0.0
    %5521 = vmatmul.mubr.f32.gmra.mrb[0].mxu0 %v5376
    %v5522 = vpop.f32.mrb[0].mxu0
    %v5523 = vadd.f32 0.0, %v5522
    %v5524 = vpop.f32.mrb[0].mxu0
    %5525 = vdwg.mxu0
    %v5526 = vadd.f32 %v4846, %v5448
    %v5527 = vadd.f32 %v4847, %v5453
    %v5528 = vadd.f32 %v4848, %v5458
    %v5529 = vadd.f32 %v4849, %v5463
    %v5530 = vadd.f32 %v4850, %v5468
    %v5531 = vadd.f32 %v4851, %v5473
    %v5532 = vadd.f32 %v4852, %v5478
    %v5533 = vadd.f32 %v4853, %v5483
    %v5534 = vadd.f32 %v4854, %v5488
    %v5535 = vadd.f32 %v4855, %v5493
    %v5536 = vadd.f32 %v4856, %v5498
    %v5537 = vadd.f32 %v4857, %v5503
    %v5538 = vadd.f32 %v4858, %v5508
    %v5539 = vadd.f32 %v4859, %v5513
    %v5540 = vadd.f32 %v4860, %v5518
    %v5541 = vadd.f32 %v4861, %v5523
    %5542 = vset.pattern.permute.xlu0 8
    %5543 = vperm.xlu0 %5542, %v117
    %v5544 = vpop.permute.xlu0 %5543
    %5545 = vset.pattern.permute.xlu0 8
    %5546 = vperm.xlu0 %5545, %v118
    %v5547 = vpop.permute.xlu0 %5546
    %5548 = vset.pattern.permute.xlu0 8
    %5549 = vperm.xlu0 %5548, %v119
    %v5550 = vpop.permute.xlu0 %5549
    %5551 = vset.pattern.permute.xlu0 8
    %5552 = vperm.xlu0 %5551, %v120
    %v5553 = vpop.permute.xlu0 %5552
    %5554 = vset.pattern.permute.xlu0 8
    %5555 = vperm.xlu0 %5554, %v121
    %v5556 = vpop.permute.xlu0 %5555
    %5557 = vset.pattern.permute.xlu0 8
    %5558 = vperm.xlu0 %5557, %v122
    %v5559 = vpop.permute.xlu0 %5558
    %5560 = vset.pattern.permute.xlu0 8
    %5561 = vperm.xlu0 %5560, %v123
    %v5562 = vpop.permute.xlu0 %5561
    %5563 = vset.pattern.permute.xlu0 8
    %5564 = vperm.xlu0 %5563, %v124
    %v5565 = vpop.permute.xlu0 %5564
    %5566 = vset.pattern.permute.xlu0 8
    %5567 = vperm.xlu0 %5566, %v125
    %v5568 = vpop.permute.xlu0 %5567
    %5569 = vset.pattern.permute.xlu0 8
    %5570 = vperm.xlu0 %5569, %v126
    %v5571 = vpop.permute.xlu0 %5570
    %5572 = vset.pattern.permute.xlu0 8
    %5573 = vperm.xlu0 %5572, %v127
    %v5574 = vpop.permute.xlu0 %5573
    %5575 = vset.pattern.permute.xlu0 8
    %5576 = vperm.xlu0 %5575, %v128
    %v5577 = vpop.permute.xlu0 %5576
    %5578 = vset.pattern.permute.xlu0 8
    %5579 = vperm.xlu0 %5578, %v129
    %v5580 = vpop.permute.xlu0 %5579
    %5581 = vset.pattern.permute.xlu0 8
    %5582 = vperm.xlu0 %5581, %v130
    %v5583 = vpop.permute.xlu0 %5582
    %5584 = vset.pattern.permute.xlu0 8
    %5585 = vperm.xlu0 %5584, %v131
    %v5586 = vpop.permute.xlu0 %5585
    %5587 = vset.pattern.permute.xlu0 8
    %5588 = vperm.xlu0 %5587, %v132
    %v5589 = vpop.permute.xlu0 %5588
    %vm5590 = vcmp.eq.s32.totalorder %v113, %v5544
    %vm5591 = vcmp.eq.s32.totalorder %v114, %v5544
    %vm5592 = vcmp.eq.s32.totalorder %v115, %v5544
    %vm5593 = vcmp.eq.s32.totalorder %v116, %v5544
    %vm5594 = vcmp.eq.s32.totalorder %v113, %v5547
    %vm5595 = vcmp.eq.s32.totalorder %v114, %v5547
    %vm5596 = vcmp.eq.s32.totalorder %v115, %v5547
    %vm5597 = vcmp.eq.s32.totalorder %v116, %v5547
    %vm5598 = vcmp.eq.s32.totalorder %v113, %v5550
    %vm5599 = vcmp.eq.s32.totalorder %v114, %v5550
    %vm5600 = vcmp.eq.s32.totalorder %v115, %v5550
    %vm5601 = vcmp.eq.s32.totalorder %v116, %v5550
    %vm5602 = vcmp.eq.s32.totalorder %v113, %v5553
    %vm5603 = vcmp.eq.s32.totalorder %v114, %v5553
    %vm5604 = vcmp.eq.s32.totalorder %v115, %v5553
    %vm5605 = vcmp.eq.s32.totalorder %v116, %v5553
    %vm5606 = vcmp.eq.s32.totalorder %v113, %v5556
    %vm5607 = vcmp.eq.s32.totalorder %v114, %v5556
    %vm5608 = vcmp.eq.s32.totalorder %v115, %v5556
    %vm5609 = vcmp.eq.s32.totalorder %v116, %v5556
    %vm5610 = vcmp.eq.s32.totalorder %v113, %v5559
    %vm5611 = vcmp.eq.s32.totalorder %v114, %v5559
    %vm5612 = vcmp.eq.s32.totalorder %v115, %v5559
    %vm5613 = vcmp.eq.s32.totalorder %v116, %v5559
    %vm5614 = vcmp.eq.s32.totalorder %v113, %v5562
    %vm5615 = vcmp.eq.s32.totalorder %v114, %v5562
    %vm5616 = vcmp.eq.s32.totalorder %v115, %v5562
    %vm5617 = vcmp.eq.s32.totalorder %v116, %v5562
    %vm5618 = vcmp.eq.s32.totalorder %v113, %v5565
    %vm5619 = vcmp.eq.s32.totalorder %v114, %v5565
    %vm5620 = vcmp.eq.s32.totalorder %v115, %v5565
    %vm5621 = vcmp.eq.s32.totalorder %v116, %v5565
    %vm5622 = vcmp.eq.s32.totalorder %v113, %v5568
    %vm5623 = vcmp.eq.s32.totalorder %v114, %v5568
    %vm5624 = vcmp.eq.s32.totalorder %v115, %v5568
    %vm5625 = vcmp.eq.s32.totalorder %v116, %v5568
    %vm5626 = vcmp.eq.s32.totalorder %v113, %v5571
    %vm5627 = vcmp.eq.s32.totalorder %v114, %v5571
    %vm5628 = vcmp.eq.s32.totalorder %v115, %v5571
    %vm5629 = vcmp.eq.s32.totalorder %v116, %v5571
    %vm5630 = vcmp.eq.s32.totalorder %v113, %v5574
    %vm5631 = vcmp.eq.s32.totalorder %v114, %v5574
    %vm5632 = vcmp.eq.s32.totalorder %v115, %v5574
    %vm5633 = vcmp.eq.s32.totalorder %v116, %v5574
    %vm5634 = vcmp.eq.s32.totalorder %v113, %v5577
    %vm5635 = vcmp.eq.s32.totalorder %v114, %v5577
    %vm5636 = vcmp.eq.s32.totalorder %v115, %v5577
    %vm5637 = vcmp.eq.s32.totalorder %v116, %v5577
    %vm5638 = vcmp.eq.s32.totalorder %v113, %v5580
    %vm5639 = vcmp.eq.s32.totalorder %v114, %v5580
    %vm5640 = vcmp.eq.s32.totalorder %v115, %v5580
    %vm5641 = vcmp.eq.s32.totalorder %v116, %v5580
    %vm5642 = vcmp.eq.s32.totalorder %v113, %v5583
    %vm5643 = vcmp.eq.s32.totalorder %v114, %v5583
    %vm5644 = vcmp.eq.s32.totalorder %v115, %v5583
    %vm5645 = vcmp.eq.s32.totalorder %v116, %v5583
    %vm5646 = vcmp.eq.s32.totalorder %v113, %v5586
    %vm5647 = vcmp.eq.s32.totalorder %v114, %v5586
    %vm5648 = vcmp.eq.s32.totalorder %v115, %v5586
    %vm5649 = vcmp.eq.s32.totalorder %v116, %v5586
    %vm5650 = vcmp.eq.s32.totalorder %v113, %v5589
    %vm5651 = vcmp.eq.s32.totalorder %v114, %v5589
    %vm5652 = vcmp.eq.s32.totalorder %v115, %v5589
    %vm5653 = vcmp.eq.s32.totalorder %v116, %v5589
    %v5654 = vsel %vm5590, 1.0, 0.0
    %v5655 = vsel %vm5591, 1.0, 0.0
    %v5656 = vsel %vm5592, 1.0, 0.0
    %v5657 = vsel %vm5593, 1.0, 0.0
    %v5658 = vsel %vm5594, 1.0, 0.0
    %v5659 = vsel %vm5595, 1.0, 0.0
    %v5660 = vsel %vm5596, 1.0, 0.0
    %v5661 = vsel %vm5597, 1.0, 0.0
    %v5662 = vsel %vm5598, 1.0, 0.0
    %v5663 = vsel %vm5599, 1.0, 0.0
    %v5664 = vsel %vm5600, 1.0, 0.0
    %v5665 = vsel %vm5601, 1.0, 0.0
    %v5666 = vsel %vm5602, 1.0, 0.0
    %v5667 = vsel %vm5603, 1.0, 0.0
    %v5668 = vsel %vm5604, 1.0, 0.0
    %v5669 = vsel %vm5605, 1.0, 0.0
    %v5670 = vsel %vm5606, 1.0, 0.0
    %v5671 = vsel %vm5607, 1.0, 0.0
    %v5672 = vsel %vm5608, 1.0, 0.0
    %v5673 = vsel %vm5609, 1.0, 0.0
    %v5674 = vsel %vm5610, 1.0, 0.0
    %v5675 = vsel %vm5611, 1.0, 0.0
    %v5676 = vsel %vm5612, 1.0, 0.0
    %v5677 = vsel %vm5613, 1.0, 0.0
    %v5678 = vsel %vm5614, 1.0, 0.0
    %v5679 = vsel %vm5615, 1.0, 0.0
    %v5680 = vsel %vm5616, 1.0, 0.0
    %v5681 = vsel %vm5617, 1.0, 0.0
    %v5682 = vsel %vm5618, 1.0, 0.0
    %v5683 = vsel %vm5619, 1.0, 0.0
    %v5684 = vsel %vm5620, 1.0, 0.0
    %v5685 = vsel %vm5621, 1.0, 0.0
    %v5686 = vsel %vm5622, 1.0, 0.0
    %v5687 = vsel %vm5623, 1.0, 0.0
    %v5688 = vsel %vm5624, 1.0, 0.0
    %v5689 = vsel %vm5625, 1.0, 0.0
    %v5690 = vsel %vm5626, 1.0, 0.0
    %v5691 = vsel %vm5627, 1.0, 0.0
    %v5692 = vsel %vm5628, 1.0, 0.0
    %v5693 = vsel %vm5629, 1.0, 0.0
    %v5694 = vsel %vm5630, 1.0, 0.0
    %v5695 = vsel %vm5631, 1.0, 0.0
    %v5696 = vsel %vm5632, 1.0, 0.0
    %v5697 = vsel %vm5633, 1.0, 0.0
    %v5698 = vsel %vm5634, 1.0, 0.0
    %v5699 = vsel %vm5635, 1.0, 0.0
    %v5700 = vsel %vm5636, 1.0, 0.0
    %v5701 = vsel %vm5637, 1.0, 0.0
    %v5702 = vsel %vm5638, 1.0, 0.0
    %v5703 = vsel %vm5639, 1.0, 0.0
    %v5704 = vsel %vm5640, 1.0, 0.0
    %v5705 = vsel %vm5641, 1.0, 0.0
    %v5706 = vsel %vm5642, 1.0, 0.0
    %v5707 = vsel %vm5643, 1.0, 0.0
    %v5708 = vsel %vm5644, 1.0, 0.0
    %v5709 = vsel %vm5645, 1.0, 0.0
    %v5710 = vsel %vm5646, 1.0, 0.0
    %v5711 = vsel %vm5647, 1.0, 0.0
    %v5712 = vsel %vm5648, 1.0, 0.0
    %v5713 = vsel %vm5649, 1.0, 0.0
    %v5714 = vsel %vm5650, 1.0, 0.0
    %v5715 = vsel %vm5651, 1.0, 0.0
    %v5716 = vsel %vm5652, 1.0, 0.0
    %v5717 = vsel %vm5653, 1.0, 0.0
    %5718 = vmatprep.subr.mxu0 0.0
    %5719 = vmatpush1.msra.mxu0 %v48
    %5720 = vmatprep.subr.mxu0 0.0
    %5721 = vmatpush1.msra.mxu0 %v49
    %5722 = vmatprep.subr.mxu0 0.0
    %5723 = vmatpush1.msra.mxu0 %v50
    %5724 = vmatprep.subr.mxu0 0.0
    %5725 = vmatpush1.msra.mxu0 %v51
    %5726 = vmatprep.subr.mxu0 0.0
    %5727 = vmatpush1.msra.mxu0 %v52
    %5728 = vmatprep.subr.mxu0 0.0
    %5729 = vmatpush1.msra.mxu0 %v53
    %5730 = vmatprep.subr.mxu0 0.0
    %5731 = vmatpush1.msra.mxu0 %v54
    %5732 = vmatprep.subr.mxu0 0.0
    %5733 = vmatpush1.msra.mxu0 %v55
    %5734 = vmatprep.subr.mxu0 0.0
    %5735 = vmatpush1.msra.mxu0 %v56
    %5736 = vmatprep.subr.mxu0 0.0
    %5737 = vmatpush1.msra.mxu0 %v57
    %5738 = vmatprep.subr.mxu0 0.0
    %5739 = vmatpush1.msra.mxu0 %v58
    %5740 = vmatprep.subr.mxu0 0.0
    %5741 = vmatpush1.msra.mxu0 %v59
    %5742 = vmatprep.subr.mxu0 0.0
    %5743 = vmatpush1.msra.mxu0 %v60
    %5744 = vmatprep.subr.mxu0 0.0
    %5745 = vmatpush1.msra.mxu0 %v61
    %5746 = vmatprep.subr.mxu0 0.0
    %5747 = vmatpush1.msra.mxu0 %v62
    %5748 = vmatprep.subr.mxu0 0.0
    %5749 = vmatpush1.msra.mxu0 %v63
    %5750 = vmatprep.subr.mxu0 0.0
    %5751 = vmatpush1.msra.mxu0 %v64
    %5752 = vmatprep.subr.mxu0 0.0
    %5753 = vmatpush1.msra.mxu0 %v65
    %5754 = vmatprep.subr.mxu0 0.0
    %5755 = vmatpush1.msra.mxu0 %v66
    %5756 = vmatprep.subr.mxu0 0.0
    %5757 = vmatpush1.msra.mxu0 %v67
    %5758 = vmatprep.subr.mxu0 0.0
    %5759 = vmatpush1.msra.mxu0 %v68
    %5760 = vmatprep.subr.mxu0 0.0
    %5761 = vmatpush1.msra.mxu0 %v69
    %5762 = vmatprep.subr.mxu0 0.0
    %5763 = vmatpush1.msra.mxu0 %v70
    %5764 = vmatprep.subr.mxu0 0.0
    %5765 = vmatpush1.msra.mxu0 %v71
    %5766 = vmatprep.subr.mxu0 0.0
    %5767 = vmatpush1.msra.mxu0 %v72
    %5768 = vmatprep.subr.mxu0 0.0
    %5769 = vmatpush1.msra.mxu0 %v73
    %5770 = vmatprep.subr.mxu0 0.0
    %5771 = vmatpush1.msra.mxu0 %v74
    %5772 = vmatprep.subr.mxu0 0.0
    %5773 = vmatpush1.msra.mxu0 %v75
    %5774 = vmatprep.subr.mxu0 0.0
    %5775 = vmatpush1.msra.mxu0 %v76
    %5776 = vmatprep.subr.mxu0 0.0
    %5777 = vmatpush1.msra.mxu0 %v77
    %5778 = vmatprep.subr.mxu0 0.0
    %5779 = vmatpush1.msra.mxu0 %v78
    %5780 = vmatprep.subr.mxu0 0.0
    %5781 = vmatpush1.msra.mxu0 %v79
    %5782 = vmatprep.mubr.f32.mxu0 %v5655
    %5783 = vmatmul.mubr.f32.gmra.mrb[0].mxu0 %v5654
    %v5784 = vpop.f32.mrb[0].mxu0
    %v5785 = vadd.f32 0.0, %v5784
    %v5786 = vpop.f32.mrb[0].mxu0
    %5787 = vmatprep.mubr.f32.mxu0 %v5659
    %5788 = vmatmul.mubr.f32.gmra.mrb[0].mxu0 %v5658
    %v5789 = vpop.f32.mrb[0].mxu0
    %v5790 = vadd.f32 0.0, %v5789
    %v5791 = vpop.f32.mrb[0].mxu0
    %5792 = vmatprep.mubr.f32.mxu0 %v5663
    %5793 = vmatmul.mubr.f32.gmra.mrb[0].mxu0 %v5662
    %v5794 = vpop.f32.mrb[0].mxu0
    %v5795 = vadd.f32 0.0, %v5794
    %v5796 = vpop.f32.mrb[0].mxu0
    %5797 = vmatprep.mubr.f32.mxu0 %v5667
    %5798 = vmatmul.mubr.f32.gmra.mrb[0].mxu0 %v5666
    %v5799 = vpop.f32.mrb[0].mxu0
    %v5800 = vadd.f32 0.0, %v5799
    %v5801 = vpop.f32.mrb[0].mxu0
    %5802 = vmatprep.mubr.f32.mxu0 %v5671
    %5803 = vmatmul.mubr.f32.gmra.mrb[0].mxu0 %v5670
    %v5804 = vpop.f32.mrb[0].mxu0
    %v5805 = vadd.f32 0.0, %v5804
    %v5806 = vpop.f32.mrb[0].mxu0
    %5807 = vmatprep.mubr.f32.mxu0 %v5675
    %5808 = vmatmul.mubr.f32.gmra.mrb[0].mxu0 %v5674
    %v5809 = vpop.f32.mrb[0].mxu0
    %v5810 = vadd.f32 0.0, %v5809
    %v5811 = vpop.f32.mrb[0].mxu0
    %5812 = vmatprep.mubr.f32.mxu0 %v5679
    %5813 = vmatmul.mubr.f32.gmra.mrb[0].mxu0 %v5678
    %v5814 = vpop.f32.mrb[0].mxu0
    %v5815 = vadd.f32 0.0, %v5814
    %v5816 = vpop.f32.mrb[0].mxu0
    %5817 = vmatprep.mubr.f32.mxu0 %v5683
    %5818 = vmatmul.mubr.f32.gmra.mrb[0].mxu0 %v5682
    %v5819 = vpop.f32.mrb[0].mxu0
    %v5820 = vadd.f32 0.0, %v5819
    %v5821 = vpop.f32.mrb[0].mxu0
    %5822 = vmatprep.mubr.f32.mxu0 %v5687
    %5823 = vmatmul.mubr.f32.gmra.mrb[0].mxu0 %v5686
    %v5824 = vpop.f32.mrb[0].mxu0
    %v5825 = vadd.f32 0.0, %v5824
    %v5826 = vpop.f32.mrb[0].mxu0
    %5827 = vmatprep.mubr.f32.mxu0 %v5691
    %5828 = vmatmul.mubr.f32.gmra.mrb[0].mxu0 %v5690
    %v5829 = vpop.f32.mrb[0].mxu0
    %v5830 = vadd.f32 0.0, %v5829
    %v5831 = vpop.f32.mrb[0].mxu0
    %5832 = vmatprep.mubr.f32.mxu0 %v5695
    %5833 = vmatmul.mubr.f32.gmra.mrb[0].mxu0 %v5694
    %v5834 = vpop.f32.mrb[0].mxu0
    %v5835 = vadd.f32 0.0, %v5834
    %v5836 = vpop.f32.mrb[0].mxu0
    %5837 = vmatprep.mubr.f32.mxu0 %v5699
    %5838 = vmatmul.mubr.f32.gmra.mrb[0].mxu0 %v5698
    %v5839 = vpop.f32.mrb[0].mxu0
    %v5840 = vadd.f32 0.0, %v5839
    %v5841 = vpop.f32.mrb[0].mxu0
    %5842 = vmatprep.mubr.f32.mxu0 %v5703
    %5843 = vmatmul.mubr.f32.gmra.mrb[0].mxu0 %v5702
    %v5844 = vpop.f32.mrb[0].mxu0
    %v5845 = vadd.f32 0.0, %v5844
    %v5846 = vpop.f32.mrb[0].mxu0
    %5847 = vmatprep.mubr.f32.mxu0 %v5707
    %5848 = vmatmul.mubr.f32.gmra.mrb[0].mxu0 %v5706
    %v5849 = vpop.f32.mrb[0].mxu0
    %v5850 = vadd.f32 0.0, %v5849
    %v5851 = vpop.f32.mrb[0].mxu0
    %5852 = vmatprep.mubr.f32.mxu0 %v5711
    %5853 = vmatmul.mubr.f32.gmra.mrb[0].mxu0 %v5710
    %v5854 = vpop.f32.mrb[0].mxu0
    %v5855 = vadd.f32 0.0, %v5854
    %v5856 = vpop.f32.mrb[0].mxu0
    %5857 = vmatprep.mubr.f32.mxu0 %v5715
    %5858 = vmatmul.mubr.f32.gmra.mrb[0].mxu0 %v5714
    %v5859 = vpop.f32.mrb[0].mxu0
    %v5860 = vadd.f32 0.0, %v5859
    %v5861 = vpop.f32.mrb[0].mxu0
    %5862 = vdwg.mxu0
    %5863 = vmatprep.subr.mxu0 0.0
    %5864 = vmatpush1.msra.mxu0 %v80
    %5865 = vmatprep.subr.mxu0 0.0
    %5866 = vmatpush1.msra.mxu0 %v81
    %5867 = vmatprep.subr.mxu0 0.0
    %5868 = vmatpush1.msra.mxu0 %v82
    %5869 = vmatprep.subr.mxu0 0.0
    %5870 = vmatpush1.msra.mxu0 %v83
    %5871 = vmatprep.subr.mxu0 0.0
    %5872 = vmatpush1.msra.mxu0 %v84
    %5873 = vmatprep.subr.mxu0 0.0
    %5874 = vmatpush1.msra.mxu0 %v85
    %5875 = vmatprep.subr.mxu0 0.0
    %5876 = vmatpush1.msra.mxu0 %v86
    %5877 = vmatprep.subr.mxu0 0.0
    %5878 = vmatpush1.msra.mxu0 %v87
    %5879 = vmatprep.subr.mxu0 0.0
    %5880 = vmatpush1.msra.mxu0 %v88
    %5881 = vmatprep.subr.mxu0 0.0
    %5882 = vmatpush1.msra.mxu0 %v89
    %5883 = vmatprep.subr.mxu0 0.0
    %5884 = vmatpush1.msra.mxu0 %v90
    %5885 = vmatprep.subr.mxu0 0.0
    %5886 = vmatpush1.msra.mxu0 %v91
    %5887 = vmatprep.subr.mxu0 0.0
    %5888 = vmatpush1.msra.mxu0 %v92
    %5889 = vmatprep.subr.mxu0 0.0
    %5890 = vmatpush1.msra.mxu0 %v93
    %5891 = vmatprep.subr.mxu0 0.0
    %5892 = vmatpush1.msra.mxu0 %v94
    %5893 = vmatprep.subr.mxu0 0.0
    %5894 = vmatpush1.msra.mxu0 %v95
    %5895 = vmatprep.subr.mxu0 0.0
    %5896 = vmatpush1.msra.mxu0 %v96
    %5897 = vmatprep.subr.mxu0 0.0
    %5898 = vmatpush1.msra.mxu0 %v97
    %5899 = vmatprep.subr.mxu0 0.0
    %5900 = vmatpush1.msra.mxu0 %v98
    %5901 = vmatprep.subr.mxu0 0.0
    %5902 = vmatpush1.msra.mxu0 %v99
    %5903 = vmatprep.subr.mxu0 0.0
    %5904 = vmatpush1.msra.mxu0 %v100
    %5905 = vmatprep.subr.mxu0 0.0
    %5906 = vmatpush1.msra.mxu0 %v101
    %5907 = vmatprep.subr.mxu0 0.0
    %5908 = vmatpush1.msra.mxu0 %v102
    %5909 = vmatprep.subr.mxu0 0.0
    %5910 = vmatpush1.msra.mxu0 %v103
    %5911 = vmatprep.subr.mxu0 0.0
    %5912 = vmatpush1.msra.mxu0 %v104
    %5913 = vmatprep.subr.mxu0 0.0
    %5914 = vmatpush1.msra.mxu0 %v105
    %5915 = vmatprep.subr.mxu0 0.0
    %5916 = vmatpush1.msra.mxu0 %v106
    %5917 = vmatprep.subr.mxu0 0.0
    %5918 = vmatpush1.msra.mxu0 %v107
    %5919 = vmatprep.subr.mxu0 0.0
    %5920 = vmatpush1.msra.mxu0 %v108
    %5921 = vmatprep.subr.mxu0 0.0
    %5922 = vmatpush1.msra.mxu0 %v109
    %5923 = vmatprep.subr.mxu0 0.0
    %5924 = vmatpush1.msra.mxu0 %v110
    %5925 = vmatprep.subr.mxu0 0.0
    %5926 = vmatpush1.msra.mxu0 %v111
    %5927 = vmatprep.mubr.f32.mxu0 %v5657
    %5928 = vmatmul.mubr.f32.gmra.mrb[0].mxu0 %v5656
    %v5929 = vpop.f32.mrb[0].mxu0
    %v5930 = vadd.f32 %v5785, %v5929
    %v5931 = vpop.f32.mrb[0].mxu0
    %5932 = vmatprep.mubr.f32.mxu0 %v5661
    %5933 = vmatmul.mubr.f32.gmra.mrb[0].mxu0 %v5660
    %v5934 = vpop.f32.mrb[0].mxu0
    %v5935 = vadd.f32 %v5790, %v5934
    %v5936 = vpop.f32.mrb[0].mxu0
    %5937 = vmatprep.mubr.f32.mxu0 %v5665
    %5938 = vmatmul.mubr.f32.gmra.mrb[0].mxu0 %v5664
    %v5939 = vpop.f32.mrb[0].mxu0
    %v5940 = vadd.f32 %v5795, %v5939
    %v5941 = vpop.f32.mrb[0].mxu0
    %5942 = vmatprep.mubr.f32.mxu0 %v5669
    %5943 = vmatmul.mubr.f32.gmra.mrb[0].mxu0 %v5668
    %v5944 = vpop.f32.mrb[0].mxu0
    %v5945 = vadd.f32 %v5800, %v5944
    %v5946 = vpop.f32.mrb[0].mxu0
    %5947 = vmatprep.mubr.f32.mxu0 %v5673
    %5948 = vmatmul.mubr.f32.gmra.mrb[0].mxu0 %v5672
    %v5949 = vpop.f32.mrb[0].mxu0
    %v5950 = vadd.f32 %v5805, %v5949
    %v5951 = vpop.f32.mrb[0].mxu0
    %5952 = vmatprep.mubr.f32.mxu0 %v5677
    %5953 = vmatmul.mubr.f32.gmra.mrb[0].mxu0 %v5676
    %v5954 = vpop.f32.mrb[0].mxu0
    %v5955 = vadd.f32 %v5810, %v5954
    %v5956 = vpop.f32.mrb[0].mxu0
    %5957 = vmatprep.mubr.f32.mxu0 %v5681
    %5958 = vmatmul.mubr.f32.gmra.mrb[0].mxu0 %v5680
    %v5959 = vpop.f32.mrb[0].mxu0
    %v5960 = vadd.f32 %v5815, %v5959
    %v5961 = vpop.f32.mrb[0].mxu0
    %5962 = vmatprep.mubr.f32.mxu0 %v5685
    %5963 = vmatmul.mubr.f32.gmra.mrb[0].mxu0 %v5684
    %v5964 = vpop.f32.mrb[0].mxu0
    %v5965 = vadd.f32 %v5820, %v5964
    %v5966 = vpop.f32.mrb[0].mxu0
    %5967 = vmatprep.mubr.f32.mxu0 %v5689
    %5968 = vmatmul.mubr.f32.gmra.mrb[0].mxu0 %v5688
    %v5969 = vpop.f32.mrb[0].mxu0
    %v5970 = vadd.f32 %v5825, %v5969
    %v5971 = vpop.f32.mrb[0].mxu0
    %5972 = vmatprep.mubr.f32.mxu0 %v5693
    %5973 = vmatmul.mubr.f32.gmra.mrb[0].mxu0 %v5692
    %v5974 = vpop.f32.mrb[0].mxu0
    %v5975 = vadd.f32 %v5830, %v5974
    %v5976 = vpop.f32.mrb[0].mxu0
    %5977 = vmatprep.mubr.f32.mxu0 %v5697
    %5978 = vmatmul.mubr.f32.gmra.mrb[0].mxu0 %v5696
    %v5979 = vpop.f32.mrb[0].mxu0
    %v5980 = vadd.f32 %v5835, %v5979
    %v5981 = vpop.f32.mrb[0].mxu0
    %5982 = vmatprep.mubr.f32.mxu0 %v5701
    %5983 = vmatmul.mubr.f32.gmra.mrb[0].mxu0 %v5700
    %v5984 = vpop.f32.mrb[0].mxu0
    %v5985 = vadd.f32 %v5840, %v5984
    %v5986 = vpop.f32.mrb[0].mxu0
    %5987 = vmatprep.mubr.f32.mxu0 %v5705
    %5988 = vmatmul.mubr.f32.gmra.mrb[0].mxu0 %v5704
    %v5989 = vpop.f32.mrb[0].mxu0
    %v5990 = vadd.f32 %v5845, %v5989
    %v5991 = vpop.f32.mrb[0].mxu0
    %5992 = vmatprep.mubr.f32.mxu0 %v5709
    %5993 = vmatmul.mubr.f32.gmra.mrb[0].mxu0 %v5708
    %v5994 = vpop.f32.mrb[0].mxu0
    %v5995 = vadd.f32 %v5850, %v5994
    %v5996 = vpop.f32.mrb[0].mxu0
    %5997 = vmatprep.mubr.f32.mxu0 %v5713
    %5998 = vmatmul.mubr.f32.gmra.mrb[0].mxu0 %v5712
    %v5999 = vpop.f32.mrb[0].mxu0
    %v6000 = vadd.f32 %v5855, %v5999
    %v6001 = vpop.f32.mrb[0].mxu0
    %6002 = vmatprep.mubr.f32.mxu0 %v5717
    %6003 = vmatmul.mubr.f32.gmra.mrb[0].mxu0 %v5716
    %v6004 = vpop.f32.mrb[0].mxu0
    %v6005 = vadd.f32 %v5860, %v6004
    %v6006 = vpop.f32.mrb[0].mxu0
    %6007 = vdwg.mxu0
    %s6008 = scalar_lea.vmem %s2, 32
    %v6009 = vld [vmem:[%s6008] sm:$0xf]
    %v6011 = vsel %vm1068, %v5930, 0
    %v6014 = vsel %vm1068, %v5935, 0
    %v6017 = vsel %vm1068, %v5940, 0
    %v6020 = vsel %vm1068, %v5945, 0
    %v6023 = vsel %vm1068, %v5950, 0
    %v6026 = vsel %vm1068, %v5955, 0
    %v6029 = vsel %vm1068, %v5960, 0
    %v6032 = vsel %vm1068, %v5965, 0
    %v6035 = vsel %vm1068, %v5970, 0
    %v6038 = vsel %vm1068, %v5975, 0
    %v6041 = vsel %vm1068, %v5980, 0
    %v6044 = vsel %vm1068, %v5985, 0
    %v6047 = vsel %vm1068, %v5990, 0
    %v6050 = vsel %vm1068, %v5995, 0
    %v6053 = vsel %vm1068, %v6000, 0
    %v6056 = vsel %vm1068, %v6005, 0
    %v6059 = vsel %vm1117, %v6009, 0
    %6061 = vmatprep.subr.mxu0 0.0
    %6062 = vmatpush1.msra.mxu0 %v6059
    %6063 = vmatprep.subr.mxu0 0.0
    %6064 = vmatpush1.msra.mxu0 0.0
    %6065 = vmatprep.subr.mxu0 0.0
    %6066 = vmatpush1.msra.mxu0 0.0
    %6067 = vmatprep.subr.mxu0 0.0
    %6068 = vmatpush1.msra.mxu0 0.0
    %6069 = vmatprep.subr.mxu0 0.0
    %6070 = vmatpush1.msra.mxu0 0.0
    %6071 = vmatprep.subr.mxu0 0.0
    %6072 = vmatpush1.msra.mxu0 0.0
    %6073 = vmatprep.subr.mxu0 0.0
    %6074 = vmatpush1.msra.mxu0 0.0
    %6075 = vmatprep.subr.mxu0 0.0
    %6076 = vmatpush1.msra.mxu0 0.0
    %6077 = vmatprep.subr.mxu0 0.0
    %6078 = vmatpush1.msra.mxu0 0.0
    %6079 = vmatprep.subr.mxu0 0.0
    %6080 = vmatpush1.msra.mxu0 0.0
    %6081 = vmatprep.subr.mxu0 0.0
    %6082 = vmatpush1.msra.mxu0 0.0
    %6083 = vmatprep.subr.mxu0 0.0
    %6084 = vmatpush1.msra.mxu0 0.0
    %6085 = vmatprep.subr.mxu0 0.0
    %6086 = vmatpush1.msra.mxu0 0.0
    %6087 = vmatprep.subr.mxu0 0.0
    %6088 = vmatpush1.msra.mxu0 0.0
    %6089 = vmatprep.subr.mxu0 0.0
    %6090 = vmatpush1.msra.mxu0 0.0
    %6091 = vmatprep.subr.mxu0 0.0
    %6092 = vmatpush1.msra.mxu0 0.0
    %6093 = vmatprep.subr.mxu0 0.0
    %6094 = vmatpush1.msra.mxu0 0.0
    %6095 = vmatprep.subr.mxu0 0.0
    %6096 = vmatpush1.msra.mxu0 0.0
    %6097 = vmatprep.subr.mxu0 0.0
    %6098 = vmatpush1.msra.mxu0 0.0
    %6099 = vmatprep.subr.mxu0 0.0
    %6100 = vmatpush1.msra.mxu0 0.0
    %6101 = vmatprep.subr.mxu0 0.0
    %6102 = vmatpush1.msra.mxu0 0.0
    %6103 = vmatprep.subr.mxu0 0.0
    %6104 = vmatpush1.msra.mxu0 0.0
    %6105 = vmatprep.subr.mxu0 0.0
    %6106 = vmatpush1.msra.mxu0 0.0
    %6107 = vmatprep.subr.mxu0 0.0
    %6108 = vmatpush1.msra.mxu0 0.0
    %6109 = vmatprep.subr.mxu0 0.0
    %6110 = vmatpush1.msra.mxu0 0.0
    %6111 = vmatprep.subr.mxu0 0.0
    %6112 = vmatpush1.msra.mxu0 0.0
    %6113 = vmatprep.subr.mxu0 0.0
    %6114 = vmatpush1.msra.mxu0 0.0
    %6115 = vmatprep.subr.mxu0 0.0
    %6116 = vmatpush1.msra.mxu0 0.0
    %6117 = vmatprep.subr.mxu0 0.0
    %6118 = vmatpush1.msra.mxu0 0.0
    %6119 = vmatprep.subr.mxu0 0.0
    %6120 = vmatpush1.msra.mxu0 0.0
    %6121 = vmatprep.subr.mxu0 0.0
    %6122 = vmatpush1.msra.mxu0 0.0
    %6123 = vmatprep.subr.mxu0 0.0
    %6124 = vmatpush1.msra.mxu0 0.0
    %6125 = vmatprep.mubr.f32.mxu0 0.0
    %6126 = vmatmul.mubr.f32.gmra.mrb[0].mxu0 %v6011
    %v6127 = vpop.f32.mrb[0].mxu0
    %v6128 = vadd.f32 0.0, %v6127
    %v6129 = vpop.f32.mrb[0].mxu0
    %6130 = vmatprep.mubr.f32.mxu0 0.0
    %6131 = vmatmul.mubr.f32.gmra.mrb[0].mxu0 %v6014
    %v6132 = vpop.f32.mrb[0].mxu0
    %v6133 = vadd.f32 0.0, %v6132
    %v6134 = vpop.f32.mrb[0].mxu0
    %6135 = vmatprep.mubr.f32.mxu0 0.0
    %6136 = vmatmul.mubr.f32.gmra.mrb[0].mxu0 %v6017
    %v6137 = vpop.f32.mrb[0].mxu0
    %v6138 = vadd.f32 0.0, %v6137
    %v6139 = vpop.f32.mrb[0].mxu0
    %6140 = vmatprep.mubr.f32.mxu0 0.0
    %6141 = vmatmul.mubr.f32.gmra.mrb[0].mxu0 %v6020
    %v6142 = vpop.f32.mrb[0].mxu0
    %v6143 = vadd.f32 0.0, %v6142
    %v6144 = vpop.f32.mrb[0].mxu0
    %6145 = vmatprep.mubr.f32.mxu0 0.0
    %6146 = vmatmul.mubr.f32.gmra.mrb[0].mxu0 %v6023
    %v6147 = vpop.f32.mrb[0].mxu0
    %v6148 = vadd.f32 0.0, %v6147
    %v6149 = vpop.f32.mrb[0].mxu0
    %6150 = vmatprep.mubr.f32.mxu0 0.0
    %6151 = vmatmul.mubr.f32.gmra.mrb[0].mxu0 %v6026
    %v6152 = vpop.f32.mrb[0].mxu0
    %v6153 = vadd.f32 0.0, %v6152
    %v6154 = vpop.f32.mrb[0].mxu0
    %6155 = vmatprep.mubr.f32.mxu0 0.0
    %6156 = vmatmul.mubr.f32.gmra.mrb[0].mxu0 %v6029
    %v6157 = vpop.f32.mrb[0].mxu0
    %v6158 = vadd.f32 0.0, %v6157
    %v6159 = vpop.f32.mrb[0].mxu0
    %6160 = vmatprep.mubr.f32.mxu0 0.0
    %6161 = vmatmul.mubr.f32.gmra.mrb[0].mxu0 %v6032
    %v6162 = vpop.f32.mrb[0].mxu0
    %v6163 = vadd.f32 0.0, %v6162
    %v6164 = vpop.f32.mrb[0].mxu0
    %6165 = vmatprep.mubr.f32.mxu0 0.0
    %6166 = vmatmul.mubr.f32.gmra.mrb[0].mxu0 %v6035
    %v6167 = vpop.f32.mrb[0].mxu0
    %v6168 = vadd.f32 0.0, %v6167
    %v6169 = vpop.f32.mrb[0].mxu0
    %6170 = vmatprep.mubr.f32.mxu0 0.0
    %6171 = vmatmul.mubr.f32.gmra.mrb[0].mxu0 %v6038
    %v6172 = vpop.f32.mrb[0].mxu0
    %v6173 = vadd.f32 0.0, %v6172
    %v6174 = vpop.f32.mrb[0].mxu0
    %6175 = vmatprep.mubr.f32.mxu0 0.0
    %6176 = vmatmul.mubr.f32.gmra.mrb[0].mxu0 %v6041
    %v6177 = vpop.f32.mrb[0].mxu0
    %v6178 = vadd.f32 0.0, %v6177
    %v6179 = vpop.f32.mrb[0].mxu0
    %6180 = vmatprep.mubr.f32.mxu0 0.0
    %6181 = vmatmul.mubr.f32.gmra.mrb[0].mxu0 %v6044
    %v6182 = vpop.f32.mrb[0].mxu0
    %v6183 = vadd.f32 0.0, %v6182
    %v6184 = vpop.f32.mrb[0].mxu0
    %6185 = vmatprep.mubr.f32.mxu0 0.0
    %6186 = vmatmul.mubr.f32.gmra.mrb[0].mxu0 %v6047
    %v6187 = vpop.f32.mrb[0].mxu0
    %v6188 = vadd.f32 0.0, %v6187
    %v6189 = vpop.f32.mrb[0].mxu0
    %6190 = vmatprep.mubr.f32.mxu0 0.0
    %6191 = vmatmul.mubr.f32.gmra.mrb[0].mxu0 %v6050
    %v6192 = vpop.f32.mrb[0].mxu0
    %v6193 = vadd.f32 0.0, %v6192
    %v6194 = vpop.f32.mrb[0].mxu0
    %6195 = vmatprep.mubr.f32.mxu0 0.0
    %6196 = vmatmul.mubr.f32.gmra.mrb[0].mxu0 %v6053
    %v6197 = vpop.f32.mrb[0].mxu0
    %v6198 = vadd.f32 0.0, %v6197
    %v6199 = vpop.f32.mrb[0].mxu0
    %6200 = vmatprep.mubr.f32.mxu0 0.0
    %6201 = vmatmul.mubr.f32.gmra.mrb[0].mxu0 %v6056
    %v6202 = vpop.f32.mrb[0].mxu0
    %v6203 = vadd.f32 0.0, %v6202
    %v6204 = vpop.f32.mrb[0].mxu0
    %6205 = vdwg.mxu0
    %v6206 = vadd.f32 %v5526, %v6128
    %v6207 = vadd.f32 %v5527, %v6133
    %v6208 = vadd.f32 %v5528, %v6138
    %v6209 = vadd.f32 %v5529, %v6143
    %v6210 = vadd.f32 %v5530, %v6148
    %v6211 = vadd.f32 %v5531, %v6153
    %v6212 = vadd.f32 %v5532, %v6158
    %v6213 = vadd.f32 %v5533, %v6163
    %v6214 = vadd.f32 %v5534, %v6168
    %v6215 = vadd.f32 %v5535, %v6173
    %v6216 = vadd.f32 %v5536, %v6178
    %v6217 = vadd.f32 %v5537, %v6183
    %v6218 = vadd.f32 %v5538, %v6188
    %v6219 = vadd.f32 %v5539, %v6193
    %v6220 = vadd.f32 %v5540, %v6198
    %v6221 = vadd.f32 %v5541, %v6203
    %v6222 = vld [vmem:[%s3] sm:$0x1]
    %v6224 = vlaneseq
    %v6225 = vshrl.u32 %v6224, 7
    %v6226 = vsub.s32 0, %v6225
    %v6227 = vrot.slane %v6222, %v6226
    %v6229 = vadd.f32 %v6206, %v6227
    %v6230 = vadd.f32 %v6207, %v6227
    %v6231 = vadd.f32 %v6208, %v6227
    %v6232 = vadd.f32 %v6209, %v6227
    %v6233 = vadd.f32 %v6210, %v6227
    %v6234 = vadd.f32 %v6211, %v6227
    %v6235 = vadd.f32 %v6212, %v6227
    %v6236 = vadd.f32 %v6213, %v6227
    %v6237 = vadd.f32 %v6214, %v6227
    %v6238 = vadd.f32 %v6215, %v6227
    %v6239 = vadd.f32 %v6216, %v6227
    %v6240 = vadd.f32 %v6217, %v6227
    %v6241 = vadd.f32 %v6218, %v6227
    %v6242 = vadd.f32 %v6219, %v6227
    %v6243 = vadd.f32 %v6220, %v6227
    %v6244 = vadd.f32 %v6221, %v6227
    %vm6245 = vcmask 130048
    %v6246 = vsel %vm6245, %v6229, 0.0
    %v6247 = vsel %vm6245, %v6230, 0.0
    %v6248 = vadd.f32 %v6246, %v6247
    %v6249 = vsel %vm6245, %v6231, 0.0
    %v6250 = vadd.f32 %v6248, %v6249
    %v6251 = vsel %vm6245, %v6232, 0.0
    %v6252 = vadd.f32 %v6250, %v6251
    %v6253 = vsel %vm6245, %v6233, 0.0
    %v6254 = vadd.f32 %v6252, %v6253
    %v6255 = vsel %vm6245, %v6234, 0.0
    %v6256 = vadd.f32 %v6254, %v6255
    %v6257 = vsel %vm6245, %v6235, 0.0
    %v6258 = vadd.f32 %v6256, %v6257
    %v6259 = vsel %vm6245, %v6236, 0.0
    %v6260 = vadd.f32 %v6258, %v6259
    %v6261 = vsel %vm6245, %v6237, 0.0
    %v6262 = vadd.f32 %v6260, %v6261
    %v6263 = vsel %vm6245, %v6238, 0.0
    %v6264 = vadd.f32 %v6262, %v6263
    %v6265 = vsel %vm6245, %v6239, 0.0
    %v6266 = vadd.f32 %v6264, %v6265
    %v6267 = vsel %vm6245, %v6240, 0.0
    %v6268 = vadd.f32 %v6266, %v6267
    %v6269 = vsel %vm6245, %v6241, 0.0
    %v6270 = vadd.f32 %v6268, %v6269
    %v6271 = vsel %vm6245, %v6242, 0.0
    %v6272 = vadd.f32 %v6270, %v6271
    %v6273 = vsel %vm6245, %v6243, 0.0
    %v6274 = vadd.f32 %v6272, %v6273
    %v6275 = vsel %vm6245, %v6244, 0.0
    %v6276 = vadd.f32 %v6274, %v6275
    %v6277 = vrot.slane %v6276, 4
    %v6278 = vadd.f32 %v6276, %v6277
    %v6279 = vrot.slane %v6278, 2
    %v6280 = vadd.f32 %v6278, %v6279
    %v6281 = vrot.slane %v6280, 1
    %v6282 = vadd.f32 %v6280, %v6281
    %v6283 = vrcp.pop 128.0
    %v6284 = vmul.f32 %v6282, %v6283
    %v6285 = vsub.f32 %v6229, %v6284
    %v6286 = vsub.f32 %v6230, %v6284
    %v6287 = vsub.f32 %v6231, %v6284
    %v6288 = vsub.f32 %v6232, %v6284
    %v6289 = vsub.f32 %v6233, %v6284
    %v6290 = vsub.f32 %v6234, %v6284
    %v6291 = vsub.f32 %v6235, %v6284
    %v6292 = vsub.f32 %v6236, %v6284
    %v6293 = vsub.f32 %v6237, %v6284
    %v6294 = vsub.f32 %v6238, %v6284
    %v6295 = vsub.f32 %v6239, %v6284
    %v6296 = vsub.f32 %v6240, %v6284
    %v6297 = vsub.f32 %v6241, %v6284
    %v6298 = vsub.f32 %v6242, %v6284
    %v6299 = vsub.f32 %v6243, %v6284
    %v6300 = vsub.f32 %v6244, %v6284
    %v6301 = vmul.f32 %v6285, %v6285
    %v6302 = vmul.f32 %v6286, %v6286
    %v6303 = vmul.f32 %v6287, %v6287
    %v6304 = vmul.f32 %v6288, %v6288
    %v6305 = vmul.f32 %v6289, %v6289
    %v6306 = vmul.f32 %v6290, %v6290
    %v6307 = vmul.f32 %v6291, %v6291
    %v6308 = vmul.f32 %v6292, %v6292
    %v6309 = vmul.f32 %v6293, %v6293
    %v6310 = vmul.f32 %v6294, %v6294
    %v6311 = vmul.f32 %v6295, %v6295
    %v6312 = vmul.f32 %v6296, %v6296
    %v6313 = vmul.f32 %v6297, %v6297
    %v6314 = vmul.f32 %v6298, %v6298
    %v6315 = vmul.f32 %v6299, %v6299
    %v6316 = vmul.f32 %v6300, %v6300
    %v6317 = vsel %vm6245, %v6301, 0.0
    %v6318 = vsel %vm6245, %v6302, 0.0
    %v6319 = vadd.f32 %v6317, %v6318
    %v6320 = vsel %vm6245, %v6303, 0.0
    %v6321 = vadd.f32 %v6319, %v6320
    %v6322 = vsel %vm6245, %v6304, 0.0
    %v6323 = vadd.f32 %v6321, %v6322
    %v6324 = vsel %vm6245, %v6305, 0.0
    %v6325 = vadd.f32 %v6323, %v6324
    %v6326 = vsel %vm6245, %v6306, 0.0
    %v6327 = vadd.f32 %v6325, %v6326
    %v6328 = vsel %vm6245, %v6307, 0.0
    %v6329 = vadd.f32 %v6327, %v6328
    %v6330 = vsel %vm6245, %v6308, 0.0
    %v6331 = vadd.f32 %v6329, %v6330
    %v6332 = vsel %vm6245, %v6309, 0.0
    %v6333 = vadd.f32 %v6331, %v6332
    %v6334 = vsel %vm6245, %v6310, 0.0
    %v6335 = vadd.f32 %v6333, %v6334
    %v6336 = vsel %vm6245, %v6311, 0.0
    %v6337 = vadd.f32 %v6335, %v6336
    %v6338 = vsel %vm6245, %v6312, 0.0
    %v6339 = vadd.f32 %v6337, %v6338
    %v6340 = vsel %vm6245, %v6313, 0.0
    %v6341 = vadd.f32 %v6339, %v6340
    %v6342 = vsel %vm6245, %v6314, 0.0
    %v6343 = vadd.f32 %v6341, %v6342
    %v6344 = vsel %vm6245, %v6315, 0.0
    %v6345 = vadd.f32 %v6343, %v6344
    %v6346 = vsel %vm6245, %v6316, 0.0
    %v6347 = vadd.f32 %v6345, %v6346
    %v6348 = vrot.slane %v6347, 4
    %v6349 = vadd.f32 %v6347, %v6348
    %v6350 = vrot.slane %v6349, 2
    %v6351 = vadd.f32 %v6349, %v6350
    %v6352 = vrot.slane %v6351, 1
    %v6353 = vadd.f32 %v6351, %v6352
    %v6354 = vmul.f32 %v6353, %v6283
    %v6355 = vadd.f32 %v6354, 1e-05
    %v6356 = vrsqrt.pop %v6355
    %v6357 = vmul.f32 %v6285, %v6356
    %v6358 = vmul.f32 %v6286, %v6356
    %v6359 = vmul.f32 %v6287, %v6356
    %v6360 = vmul.f32 %v6288, %v6356
    %v6361 = vmul.f32 %v6289, %v6356
    %v6362 = vmul.f32 %v6290, %v6356
    %v6363 = vmul.f32 %v6291, %v6356
    %v6364 = vmul.f32 %v6292, %v6356
    %v6365 = vmul.f32 %v6293, %v6356
    %v6366 = vmul.f32 %v6294, %v6356
    %v6367 = vmul.f32 %v6295, %v6356
    %v6368 = vmul.f32 %v6296, %v6356
    %v6369 = vmul.f32 %v6297, %v6356
    %v6370 = vmul.f32 %v6298, %v6356
    %v6371 = vmul.f32 %v6299, %v6356
    %v6372 = vmul.f32 %v6300, %v6356
    %v6373 = vld [vmem:[%s4] sm:$0x1]
    %v6375 = vlaneseq
    %v6376 = vshrl.u32 %v6375, 7
    %v6377 = vsub.s32 0, %v6376
    %v6378 = vrot.slane %v6373, %v6377
    %v6380 = vmul.f32 %v6357, %v6378
    %v6381 = vmul.f32 %v6358, %v6378
    %v6382 = vmul.f32 %v6359, %v6378
    %v6383 = vmul.f32 %v6360, %v6378
    %v6384 = vmul.f32 %v6361, %v6378
    %v6385 = vmul.f32 %v6362, %v6378
    %v6386 = vmul.f32 %v6363, %v6378
    %v6387 = vmul.f32 %v6364, %v6378
    %v6388 = vmul.f32 %v6365, %v6378
    %v6389 = vmul.f32 %v6366, %v6378
    %v6390 = vmul.f32 %v6367, %v6378
    %v6391 = vmul.f32 %v6368, %v6378
    %v6392 = vmul.f32 %v6369, %v6378
    %v6393 = vmul.f32 %v6370, %v6378
    %v6394 = vmul.f32 %v6371, %v6378
    %v6395 = vmul.f32 %v6372, %v6378
    %v6396 = vld [vmem:[%s5] sm:$0x1]
    %v6398 = vlaneseq
    %v6399 = vshrl.u32 %v6398, 7
    %v6400 = vsub.s32 0, %v6399
    %v6401 = vrot.slane %v6396, %v6400
    %v6403 = vadd.f32 %v6380, %v6401
    %v6404 = vadd.f32 %v6381, %v6401
    %v6405 = vadd.f32 %v6382, %v6401
    %v6406 = vadd.f32 %v6383, %v6401
    %v6407 = vadd.f32 %v6384, %v6401
    %v6408 = vadd.f32 %v6385, %v6401
    %v6409 = vadd.f32 %v6386, %v6401
    %v6410 = vadd.f32 %v6387, %v6401
    %v6411 = vadd.f32 %v6388, %v6401
    %v6412 = vadd.f32 %v6389, %v6401
    %v6413 = vadd.f32 %v6390, %v6401
    %v6414 = vadd.f32 %v6391, %v6401
    %v6415 = vadd.f32 %v6392, %v6401
    %v6416 = vadd.f32 %v6393, %v6401
    %v6417 = vadd.f32 %v6394, %v6401
    %v6418 = vadd.f32 %v6395, %v6401
    %v6419 = vmax.f32 %v6403, 0.0
    %v6420 = vmax.f32 %v6404, 0.0
    %v6421 = vmax.f32 %v6405, 0.0
    %v6422 = vmax.f32 %v6406, 0.0
    %v6423 = vmax.f32 %v6407, 0.0
    %v6424 = vmax.f32 %v6408, 0.0
    %v6425 = vmax.f32 %v6409, 0.0
    %v6426 = vmax.f32 %v6410, 0.0
    %v6427 = vmax.f32 %v6411, 0.0
    %v6428 = vmax.f32 %v6412, 0.0
    %v6429 = vmax.f32 %v6413, 0.0
    %v6430 = vmax.f32 %v6414, 0.0
    %v6431 = vmax.f32 %v6415, 0.0
    %v6432 = vmax.f32 %v6416, 0.0
    %v6433 = vmax.f32 %v6417, 0.0
    %v6434 = vmax.f32 %v6418, 0.0
    %v6435 = vld [vmem:[%s6] sm:$0xff]
    %v6436 = vld [vmem:[%s6 + $0x8] sm:$0xff]
    %v6437 = vld [vmem:[%s6 + $0x10] sm:$0xff]
    %v6438 = vld [vmem:[%s6 + $0x18] sm:$0xff]
    %6439 = vset.pattern.permute.xlu0 0
    %6440 = vperm.xlu0 %6439, %v6435
    %v6441 = vpop.permute.xlu0 %6440
    %6442 = vset.pattern.permute.xlu0 0
    %6443 = vperm.xlu0 %6442, %v6436
    %v6444 = vpop.permute.xlu0 %6443
    %6445 = vset.pattern.permute.xlu0 0
    %6446 = vperm.xlu0 %6445, %v6437
    %v6447 = vpop.permute.xlu0 %6446
    %6448 = vset.pattern.permute.xlu0 0
    %6449 = vperm.xlu0 %6448, %v6438
    %v6450 = vpop.permute.xlu0 %6449
    %vm6451 = vcmp.eq.s32.totalorder %v113, %v6441
    %vm6452 = vcmp.eq.s32.totalorder %v113, %v6444
    %vm6453 = vcmp.eq.s32.totalorder %v113, %v6447
    %vm6454 = vcmp.eq.s32.totalorder %v113, %v6450
    %v6455 = vsel %vm6451, 1.0, 0.0
    %v6456 = vsel %vm6452, 1.0, 0.0
    %v6457 = vsel %vm6453, 1.0, 0.0
    %v6458 = vsel %vm6454, 1.0, 0.0
    %6459 = vmatprep.subr.mxu0 0.0
    %6460 = vmatpush1.msra.mxu0 %v6419
    %6461 = vmatprep.subr.mxu0 0.0
    %6462 = vmatpush1.msra.mxu0 %v6420
    %6463 = vmatprep.subr.mxu0 0.0
    %6464 = vmatpush1.msra.mxu0 %v6421
    %6465 = vmatprep.subr.mxu0 0.0
    %6466 = vmatpush1.msra.mxu0 %v6422
    %6467 = vmatprep.subr.mxu0 0.0
    %6468 = vmatpush1.msra.mxu0 %v6423
    %6469 = vmatprep.subr.mxu0 0.0
    %6470 = vmatpush1.msra.mxu0 %v6424
    %6471 = vmatprep.subr.mxu0 0.0
    %6472 = vmatpush1.msra.mxu0 %v6425
    %6473 = vmatprep.subr.mxu0 0.0
    %6474 = vmatpush1.msra.mxu0 %v6426
    %6475 = vmatprep.subr.mxu0 0.0
    %6476 = vmatpush1.msra.mxu0 %v6427
    %6477 = vmatprep.subr.mxu0 0.0
    %6478 = vmatpush1.msra.mxu0 %v6428
    %6479 = vmatprep.subr.mxu0 0.0
    %6480 = vmatpush1.msra.mxu0 %v6429
    %6481 = vmatprep.subr.mxu0 0.0
    %6482 = vmatpush1.msra.mxu0 %v6430
    %6483 = vmatprep.subr.mxu0 0.0
    %6484 = vmatpush1.msra.mxu0 %v6431
    %6485 = vmatprep.subr.mxu0 0.0
    %6486 = vmatpush1.msra.mxu0 %v6432
    %6487 = vmatprep.subr.mxu0 0.0
    %6488 = vmatpush1.msra.mxu0 %v6433
    %6489 = vmatprep.subr.mxu0 0.0
    %6490 = vmatpush1.msra.mxu0 %v6434
    %6491 = vmatprep.subr.mxu0 0.0
    %6492 = vmatpush1.msra.mxu0 0.0
    %6493 = vmatprep.subr.mxu0 0.0
    %6494 = vmatpush1.msra.mxu0 0.0
    %6495 = vmatprep.subr.mxu0 0.0
    %6496 = vmatpush1.msra.mxu0 0.0
    %6497 = vmatprep.subr.mxu0 0.0
    %6498 = vmatpush1.msra.mxu0 0.0
    %6499 = vmatprep.subr.mxu0 0.0
    %6500 = vmatpush1.msra.mxu0 0.0
    %6501 = vmatprep.subr.mxu0 0.0
    %6502 = vmatpush1.msra.mxu0 0.0
    %6503 = vmatprep.subr.mxu0 0.0
    %6504 = vmatpush1.msra.mxu0 0.0
    %6505 = vmatprep.subr.mxu0 0.0
    %6506 = vmatpush1.msra.mxu0 0.0
    %6507 = vmatprep.subr.mxu0 0.0
    %6508 = vmatpush1.msra.mxu0 0.0
    %6509 = vmatprep.subr.mxu0 0.0
    %6510 = vmatpush1.msra.mxu0 0.0
    %6511 = vmatprep.subr.mxu0 0.0
    %6512 = vmatpush1.msra.mxu0 0.0
    %6513 = vmatprep.subr.mxu0 0.0
    %6514 = vmatpush1.msra.mxu0 0.0
    %6515 = vmatprep.subr.mxu0 0.0
    %6516 = vmatpush1.msra.mxu0 0.0
    %6517 = vmatprep.subr.mxu0 0.0
    %6518 = vmatpush1.msra.mxu0 0.0
    %6519 = vmatprep.subr.mxu0 0.0
    %6520 = vmatpush1.msra.mxu0 0.0
    %6521 = vmatprep.subr.mxu0 0.0
    %6522 = vmatpush1.msra.mxu0 0.0
    %6523 = vmatprep.mubr.f32.mxu0 0.0
    %6524 = vmatmul.mubr.f32.gmra.mrb[0].mxu0 %v6455
    %v6525 = vpop.f32.mrb[0].mxu0
    %v6526 = vadd.f32 0.0, %v6525
    %v6527 = vpop.f32.mrb[0].mxu0
    %6528 = vmatprep.mubr.f32.mxu0 0.0
    %6529 = vmatmul.mubr.f32.gmra.mrb[0].mxu0 %v6456
    %v6530 = vpop.f32.mrb[0].mxu0
    %v6531 = vadd.f32 0.0, %v6530
    %v6532 = vpop.f32.mrb[0].mxu0
    %6533 = vmatprep.mubr.f32.mxu0 0.0
    %6534 = vmatmul.mubr.f32.gmra.mrb[0].mxu0 %v6457
    %v6535 = vpop.f32.mrb[0].mxu0
    %v6536 = vadd.f32 0.0, %v6535
    %v6537 = vpop.f32.mrb[0].mxu0
    %6538 = vmatprep.mubr.f32.mxu0 0.0
    %6539 = vmatmul.mubr.f32.gmra.mrb[0].mxu0 %v6458
    %v6540 = vpop.f32.mrb[0].mxu0
    %v6541 = vadd.f32 0.0, %v6540
    %v6542 = vpop.f32.mrb[0].mxu0
    %6543 = vdwg.mxu0
    %v6544 = vld [vmem:[%s7] sm:$0xff]
    %v6545 = vld [vmem:[%s7 + $0x8] sm:$0xff]
    %6546 = vset.pattern.permute.xlu0 1
    %6547 = vperm.xlu0 %6546, %v6435
    %v6548 = vpop.permute.xlu0 %6547
    %6549 = vset.pattern.permute.xlu0 1
    %6550 = vperm.xlu0 %6549, %v6436
    %v6551 = vpop.permute.xlu0 %6550
    %6552 = vset.pattern.permute.xlu0 1
    %6553 = vperm.xlu0 %6552, %v6437
    %v6554 = vpop.permute.xlu0 %6553
    %6555 = vset.pattern.permute.xlu0 1
    %6556 = vperm.xlu0 %6555, %v6438
    %v6557 = vpop.permute.xlu0 %6556
    %vm6558 = vcmp.eq.s32.totalorder %v113, %v6548
    %vm6559 = vcmp.eq.s32.totalorder %v113, %v6551
    %vm6560 = vcmp.eq.s32.totalorder %v113, %v6554
    %vm6561 = vcmp.eq.s32.totalorder %v113, %v6557
    %v6562 = vsel %vm6558, 1.0, 0.0
    %v6563 = vsel %vm6559, 1.0, 0.0
    %v6564 = vsel %vm6560, 1.0, 0.0
    %v6565 = vsel %vm6561, 1.0, 0.0
    %6566 = vmatprep.subr.mxu0 0.0
    %6567 = vmatpush1.msra.mxu0 %v6419
    %6568 = vmatprep.subr.mxu0 0.0
    %6569 = vmatpush1.msra.mxu0 %v6420
    %6570 = vmatprep.subr.mxu0 0.0
    %6571 = vmatpush1.msra.mxu0 %v6421
    %6572 = vmatprep.subr.mxu0 0.0
    %6573 = vmatpush1.msra.mxu0 %v6422
    %6574 = vmatprep.subr.mxu0 0.0
    %6575 = vmatpush1.msra.mxu0 %v6423
    %6576 = vmatprep.subr.mxu0 0.0
    %6577 = vmatpush1.msra.mxu0 %v6424
    %6578 = vmatprep.subr.mxu0 0.0
    %6579 = vmatpush1.msra.mxu0 %v6425
    %6580 = vmatprep.subr.mxu0 0.0
    %6581 = vmatpush1.msra.mxu0 %v6426
    %6582 = vmatprep.subr.mxu0 0.0
    %6583 = vmatpush1.msra.mxu0 %v6427
    %6584 = vmatprep.subr.mxu0 0.0
    %6585 = vmatpush1.msra.mxu0 %v6428
    %6586 = vmatprep.subr.mxu0 0.0
    %6587 = vmatpush1.msra.mxu0 %v6429
    %6588 = vmatprep.subr.mxu0 0.0
    %6589 = vmatpush1.msra.mxu0 %v6430
    %6590 = vmatprep.subr.mxu0 0.0
    %6591 = vmatpush1.msra.mxu0 %v6431
    %6592 = vmatprep.subr.mxu0 0.0
    %6593 = vmatpush1.msra.mxu0 %v6432
    %6594 = vmatprep.subr.mxu0 0.0
    %6595 = vmatpush1.msra.mxu0 %v6433
    %6596 = vmatprep.subr.mxu0 0.0
    %6597 = vmatpush1.msra.mxu0 %v6434
    %6598 = vmatprep.subr.mxu0 0.0
    %6599 = vmatpush1.msra.mxu0 0.0
    %6600 = vmatprep.subr.mxu0 0.0
    %6601 = vmatpush1.msra.mxu0 0.0
    %6602 = vmatprep.subr.mxu0 0.0
    %6603 = vmatpush1.msra.mxu0 0.0
    %6604 = vmatprep.subr.mxu0 0.0
    %6605 = vmatpush1.msra.mxu0 0.0
    %6606 = vmatprep.subr.mxu0 0.0
    %6607 = vmatpush1.msra.mxu0 0.0
    %6608 = vmatprep.subr.mxu0 0.0
    %6609 = vmatpush1.msra.mxu0 0.0
    %6610 = vmatprep.subr.mxu0 0.0
    %6611 = vmatpush1.msra.mxu0 0.0
    %6612 = vmatprep.subr.mxu0 0.0
    %6613 = vmatpush1.msra.mxu0 0.0
    %6614 = vmatprep.subr.mxu0 0.0
    %6615 = vmatpush1.msra.mxu0 0.0
    %6616 = vmatprep.subr.mxu0 0.0
    %6617 = vmatpush1.msra.mxu0 0.0
    %6618 = vmatprep.subr.mxu0 0.0
    %6619 = vmatpush1.msra.mxu0 0.0
    %6620 = vmatprep.subr.mxu0 0.0
    %6621 = vmatpush1.msra.mxu0 0.0
    %6622 = vmatprep.subr.mxu0 0.0
    %6623 = vmatpush1.msra.mxu0 0.0
    %6624 = vmatprep.subr.mxu0 0.0
    %6625 = vmatpush1.msra.mxu0 0.0
    %6626 = vmatprep.subr.mxu0 0.0
    %6627 = vmatpush1.msra.mxu0 0.0
    %6628 = vmatprep.subr.mxu0 0.0
    %6629 = vmatpush1.msra.mxu0 0.0
    %6630 = vmatprep.mubr.f32.mxu0 0.0
    %6631 = vmatmul.mubr.f32.gmra.mrb[0].mxu0 %v6562
    %v6632 = vpop.f32.mrb[0].mxu0
    %v6633 = vadd.f32 0.0, %v6632
    %v6634 = vpop.f32.mrb[0].mxu0
    %6635 = vmatprep.mubr.f32.mxu0 0.0
    %6636 = vmatmul.mubr.f32.gmra.mrb[0].mxu0 %v6563
    %v6637 = vpop.f32.mrb[0].mxu0
    %v6638 = vadd.f32 0.0, %v6637
    %v6639 = vpop.f32.mrb[0].mxu0
    %6640 = vmatprep.mubr.f32.mxu0 0.0
    %6641 = vmatmul.mubr.f32.gmra.mrb[0].mxu0 %v6564
    %v6642 = vpop.f32.mrb[0].mxu0
    %v6643 = vadd.f32 0.0, %v6642
    %v6644 = vpop.f32.mrb[0].mxu0
    %6645 = vmatprep.mubr.f32.mxu0 0.0
    %6646 = vmatmul.mubr.f32.gmra.mrb[0].mxu0 %v6565
    %v6647 = vpop.f32.mrb[0].mxu0
    %v6648 = vadd.f32 0.0, %v6647
    %v6649 = vpop.f32.mrb[0].mxu0
    %6650 = vdwg.mxu0
    %s6651 = scalar_lea.vmem %s7, 16
    %v6652 = vld [vmem:[%s6651] sm:$0xff]
    %v6653 = vld [vmem:[%s6651 + $0x8] sm:$0xff]
    %v6655 = vsel %vm6245, %v6633, 0
    %v6658 = vsel %vm6245, %v6638, 0
    %v6661 = vsel %vm6245, %v6643, 0
    %v6664 = vsel %vm6245, %v6648, 0
    %6666 = vmatprep.subr.mxu0 0.0
    %6667 = vmatpush1.msra.mxu0 %v6652
    %6668 = vmatprep.subr.mxu0 0.0
    %6669 = vmatpush1.msra.mxu0 %v6653
    %6670 = vmatprep.subr.mxu0 0.0
    %6671 = vmatpush1.msra.mxu0 0.0
    %6672 = vmatprep.subr.mxu0 0.0
    %6673 = vmatpush1.msra.mxu0 0.0
    %6674 = vmatprep.subr.mxu0 0.0
    %6675 = vmatpush1.msra.mxu0 0.0
    %6676 = vmatprep.subr.mxu0 0.0
    %6677 = vmatpush1.msra.mxu0 0.0
    %6678 = vmatprep.subr.mxu0 0.0
    %6679 = vmatpush1.msra.mxu0 0.0
    %6680 = vmatprep.subr.mxu0 0.0
    %6681 = vmatpush1.msra.mxu0 0.0
    %6682 = vmatprep.subr.mxu0 0.0
    %6683 = vmatpush1.msra.mxu0 0.0
    %6684 = vmatprep.subr.mxu0 0.0
    %6685 = vmatpush1.msra.mxu0 0.0
    %6686 = vmatprep.subr.mxu0 0.0
    %6687 = vmatpush1.msra.mxu0 0.0
    %6688 = vmatprep.subr.mxu0 0.0
    %6689 = vmatpush1.msra.mxu0 0.0
    %6690 = vmatprep.subr.mxu0 0.0
    %6691 = vmatpush1.msra.mxu0 0.0
    %6692 = vmatprep.subr.mxu0 0.0
    %6693 = vmatpush1.msra.mxu0 0.0
    %6694 = vmatprep.subr.mxu0 0.0
    %6695 = vmatpush1.msra.mxu0 0.0
    %6696 = vmatprep.subr.mxu0 0.0
    %6697 = vmatpush1.msra.mxu0 0.0
    %6698 = vmatprep.subr.mxu0 0.0
    %6699 = vmatpush1.msra.mxu0 0.0
    %6700 = vmatprep.subr.mxu0 0.0
    %6701 = vmatpush1.msra.mxu0 0.0
    %6702 = vmatprep.subr.mxu0 0.0
    %6703 = vmatpush1.msra.mxu0 0.0
    %6704 = vmatprep.subr.mxu0 0.0
    %6705 = vmatpush1.msra.mxu0 0.0
    %6706 = vmatprep.subr.mxu0 0.0
    %6707 = vmatpush1.msra.mxu0 0.0
    %6708 = vmatprep.subr.mxu0 0.0
    %6709 = vmatpush1.msra.mxu0 0.0
    %6710 = vmatprep.subr.mxu0 0.0
    %6711 = vmatpush1.msra.mxu0 0.0
    %6712 = vmatprep.subr.mxu0 0.0
    %6713 = vmatpush1.msra.mxu0 0.0
    %6714 = vmatprep.subr.mxu0 0.0
    %6715 = vmatpush1.msra.mxu0 0.0
    %6716 = vmatprep.subr.mxu0 0.0
    %6717 = vmatpush1.msra.mxu0 0.0
    %6718 = vmatprep.subr.mxu0 0.0
    %6719 = vmatpush1.msra.mxu0 0.0
    %6720 = vmatprep.subr.mxu0 0.0
    %6721 = vmatpush1.msra.mxu0 0.0
    %6722 = vmatprep.subr.mxu0 0.0
    %6723 = vmatpush1.msra.mxu0 0.0
    %6724 = vmatprep.subr.mxu0 0.0
    %6725 = vmatpush1.msra.mxu0 0.0
    %6726 = vmatprep.subr.mxu0 0.0
    %6727 = vmatpush1.msra.mxu0 0.0
    %6728 = vmatprep.subr.mxu0 0.0
    %6729 = vmatpush1.msra.mxu0 0.0
    %6730 = vmatprep.mubr.f32.mxu0 0.0
    %6731 = vmatmul.mubr.f32.gmra.mrb[0].mxu0 %v6655
    %v6732 = vpop.f32.mrb[0].mxu0
    %v6733 = vadd.f32 0.0, %v6732
    %v6734 = vpop.f32.mrb[0].mxu0
    %6735 = vmatprep.mubr.f32.mxu0 0.0
    %6736 = vmatmul.mubr.f32.gmra.mrb[0].mxu0 %v6658
    %v6737 = vpop.f32.mrb[0].mxu0
    %v6738 = vadd.f32 0.0, %v6737
    %v6739 = vpop.f32.mrb[0].mxu0
    %6740 = vmatprep.mubr.f32.mxu0 0.0
    %6741 = vmatmul.mubr.f32.gmra.mrb[0].mxu0 %v6661
    %v6742 = vpop.f32.mrb[0].mxu0
    %v6743 = vadd.f32 0.0, %v6742
    %v6744 = vpop.f32.mrb[0].mxu0
    %6745 = vmatprep.mubr.f32.mxu0 0.0
    %6746 = vmatmul.mubr.f32.gmra.mrb[0].mxu0 %v6664
    %v6747 = vpop.f32.mrb[0].mxu0
    %v6748 = vadd.f32 0.0, %v6747
    %v6749 = vpop.f32.mrb[0].mxu0
    %6750 = vdwg.mxu0
    %v6752 = vsel %vm6245, %v6526, 0
    %v6755 = vsel %vm6245, %v6531, 0
    %v6758 = vsel %vm6245, %v6536, 0
    %v6761 = vsel %vm6245, %v6541, 0
    %6763 = vmatprep.subr.mxu0 0.0
    %6764 = vmatpush1.msra.mxu0 %v6544
    %6765 = vmatprep.subr.mxu0 0.0
    %6766 = vmatpush1.msra.mxu0 %v6545
    %6767 = vmatprep.subr.mxu0 0.0
    %6768 = vmatpush1.msra.mxu0 0.0
    %6769 = vmatprep.subr.mxu0 0.0
    %6770 = vmatpush1.msra.mxu0 0.0
    %6771 = vmatprep.subr.mxu0 0.0
    %6772 = vmatpush1.msra.mxu0 0.0
    %6773 = vmatprep.subr.mxu0 0.0
    %6774 = vmatpush1.msra.mxu0 0.0
    %6775 = vmatprep.subr.mxu0 0.0
    %6776 = vmatpush1.msra.mxu0 0.0
    %6777 = vmatprep.subr.mxu0 0.0
    %6778 = vmatpush1.msra.mxu0 0.0
    %6779 = vmatprep.subr.mxu0 0.0
    %6780 = vmatpush1.msra.mxu0 0.0
    %6781 = vmatprep.subr.mxu0 0.0
    %6782 = vmatpush1.msra.mxu0 0.0
    %6783 = vmatprep.subr.mxu0 0.0
    %6784 = vmatpush1.msra.mxu0 0.0
    %6785 = vmatprep.subr.mxu0 0.0
    %6786 = vmatpush1.msra.mxu0 0.0
    %6787 = vmatprep.subr.mxu0 0.0
    %6788 = vmatpush1.msra.mxu0 0.0
    %6789 = vmatprep.subr.mxu0 0.0
    %6790 = vmatpush1.msra.mxu0 0.0
    %6791 = vmatprep.subr.mxu0 0.0
    %6792 = vmatpush1.msra.mxu0 0.0
    %6793 = vmatprep.subr.mxu0 0.0
    %6794 = vmatpush1.msra.mxu0 0.0
    %6795 = vmatprep.subr.mxu0 0.0
    %6796 = vmatpush1.msra.mxu0 0.0
    %6797 = vmatprep.subr.mxu0 0.0
    %6798 = vmatpush1.msra.mxu0 0.0
    %6799 = vmatprep.subr.mxu0 0.0
    %6800 = vmatpush1.msra.mxu0 0.0
    %6801 = vmatprep.subr.mxu0 0.0
    %6802 = vmatpush1.msra.mxu0 0.0
    %6803 = vmatprep.subr.mxu0 0.0
    %6804 = vmatpush1.msra.mxu0 0.0
    %6805 = vmatprep.subr.mxu0 0.0
    %6806 = vmatpush1.msra.mxu0 0.0
    %6807 = vmatprep.subr.mxu0 0.0
    %6808 = vmatpush1.msra.mxu0 0.0
    %6809 = vmatprep.subr.mxu0 0.0
    %6810 = vmatpush1.msra.mxu0 0.0
    %6811 = vmatprep.subr.mxu0 0.0
    %6812 = vmatpush1.msra.mxu0 0.0
    %6813 = vmatprep.subr.mxu0 0.0
    %6814 = vmatpush1.msra.mxu0 0.0
    %6815 = vmatprep.subr.mxu0 0.0
    %6816 = vmatpush1.msra.mxu0 0.0
    %6817 = vmatprep.subr.mxu0 0.0
    %6818 = vmatpush1.msra.mxu0 0.0
    %6819 = vmatprep.subr.mxu0 0.0
    %6820 = vmatpush1.msra.mxu0 0.0
    %6821 = vmatprep.subr.mxu0 0.0
    %6822 = vmatpush1.msra.mxu0 0.0
    %6823 = vmatprep.subr.mxu0 0.0
    %6824 = vmatpush1.msra.mxu0 0.0
    %6825 = vmatprep.subr.mxu0 0.0
    %6826 = vmatpush1.msra.mxu0 0.0
    %6827 = vmatprep.mubr.f32.mxu0 0.0
    %6828 = vmatmul.mubr.f32.gmra.mrb[0].mxu0 %v6752
    %v6829 = vpop.f32.mrb[0].mxu0
    %v6830 = vadd.f32 %v6733, %v6829
    %v6831 = vpop.f32.mrb[0].mxu0
    %6832 = vmatprep.mubr.f32.mxu0 0.0
    %6833 = vmatmul.mubr.f32.gmra.mrb[0].mxu0 %v6755
    %v6834 = vpop.f32.mrb[0].mxu0
    %v6835 = vadd.f32 %v6738, %v6834
    %v6836 = vpop.f32.mrb[0].mxu0
    %6837 = vmatprep.mubr.f32.mxu0 0.0
    %6838 = vmatmul.mubr.f32.gmra.mrb[0].mxu0 %v6758
    %v6839 = vpop.f32.mrb[0].mxu0
    %v6840 = vadd.f32 %v6743, %v6839
    %v6841 = vpop.f32.mrb[0].mxu0
    %6842 = vmatprep.mubr.f32.mxu0 0.0
    %6843 = vmatmul.mubr.f32.gmra.mrb[0].mxu0 %v6761
    %v6844 = vpop.f32.mrb[0].mxu0
    %v6845 = vadd.f32 %v6748, %v6844
    %v6846 = vpop.f32.mrb[0].mxu0
    %6847 = vdwg.mxu0
    %6848 = vset.pattern.permute.xlu0 2
    %6849 = vperm.xlu0 %6848, %v6435
    %v6850 = vpop.permute.xlu0 %6849
    %6851 = vset.pattern.permute.xlu0 2
    %6852 = vperm.xlu0 %6851, %v6436
    %v6853 = vpop.permute.xlu0 %6852
    %6854 = vset.pattern.permute.xlu0 2
    %6855 = vperm.xlu0 %6854, %v6437
    %v6856 = vpop.permute.xlu0 %6855
    %6857 = vset.pattern.permute.xlu0 2
    %6858 = vperm.xlu0 %6857, %v6438
    %v6859 = vpop.permute.xlu0 %6858
    %vm6860 = vcmp.eq.s32.totalorder %v113, %v6850
    %vm6861 = vcmp.eq.s32.totalorder %v113, %v6853
    %vm6862 = vcmp.eq.s32.totalorder %v113, %v6856
    %vm6863 = vcmp.eq.s32.totalorder %v113, %v6859
    %v6864 = vsel %vm6860, 1.0, 0.0
    %v6865 = vsel %vm6861, 1.0, 0.0
    %v6866 = vsel %vm6862, 1.0, 0.0
    %v6867 = vsel %vm6863, 1.0, 0.0
    %6868 = vmatprep.subr.mxu0 0.0
    %6869 = vmatpush1.msra.mxu0 %v6419
    %6870 = vmatprep.subr.mxu0 0.0
    %6871 = vmatpush1.msra.mxu0 %v6420
    %6872 = vmatprep.subr.mxu0 0.0
    %6873 = vmatpush1.msra.mxu0 %v6421
    %6874 = vmatprep.subr.mxu0 0.0
    %6875 = vmatpush1.msra.mxu0 %v6422
    %6876 = vmatprep.subr.mxu0 0.0
    %6877 = vmatpush1.msra.mxu0 %v6423
    %6878 = vmatprep.subr.mxu0 0.0
    %6879 = vmatpush1.msra.mxu0 %v6424
    %6880 = vmatprep.subr.mxu0 0.0
    %6881 = vmatpush1.msra.mxu0 %v6425
    %6882 = vmatprep.subr.mxu0 0.0
    %6883 = vmatpush1.msra.mxu0 %v6426
    %6884 = vmatprep.subr.mxu0 0.0
    %6885 = vmatpush1.msra.mxu0 %v6427
    %6886 = vmatprep.subr.mxu0 0.0
    %6887 = vmatpush1.msra.mxu0 %v6428
    %6888 = vmatprep.subr.mxu0 0.0
    %6889 = vmatpush1.msra.mxu0 %v6429
    %6890 = vmatprep.subr.mxu0 0.0
    %6891 = vmatpush1.msra.mxu0 %v6430
    %6892 = vmatprep.subr.mxu0 0.0
    %6893 = vmatpush1.msra.mxu0 %v6431
    %6894 = vmatprep.subr.mxu0 0.0
    %6895 = vmatpush1.msra.mxu0 %v6432
    %6896 = vmatprep.subr.mxu0 0.0
    %6897 = vmatpush1.msra.mxu0 %v6433
    %6898 = vmatprep.subr.mxu0 0.0
    %6899 = vmatpush1.msra.mxu0 %v6434
    %6900 = vmatprep.subr.mxu0 0.0
    %6901 = vmatpush1.msra.mxu0 0.0
    %6902 = vmatprep.subr.mxu0 0.0
    %6903 = vmatpush1.msra.mxu0 0.0
    %6904 = vmatprep.subr.mxu0 0.0
    %6905 = vmatpush1.msra.mxu0 0.0
    %6906 = vmatprep.subr.mxu0 0.0
    %6907 = vmatpush1.msra.mxu0 0.0
    %6908 = vmatprep.subr.mxu0 0.0
    %6909 = vmatpush1.msra.mxu0 0.0
    %6910 = vmatprep.subr.mxu0 0.0
    %6911 = vmatpush1.msra.mxu0 0.0
    %6912 = vmatprep.subr.mxu0 0.0
    %6913 = vmatpush1.msra.mxu0 0.0
    %6914 = vmatprep.subr.mxu0 0.0
    %6915 = vmatpush1.msra.mxu0 0.0
    %6916 = vmatprep.subr.mxu0 0.0
    %6917 = vmatpush1.msra.mxu0 0.0
    %6918 = vmatprep.subr.mxu0 0.0
    %6919 = vmatpush1.msra.mxu0 0.0
    %6920 = vmatprep.subr.mxu0 0.0
    %6921 = vmatpush1.msra.mxu0 0.0
    %6922 = vmatprep.subr.mxu0 0.0
    %6923 = vmatpush1.msra.mxu0 0.0
    %6924 = vmatprep.subr.mxu0 0.0
    %6925 = vmatpush1.msra.mxu0 0.0
    %6926 = vmatprep.subr.mxu0 0.0
    %6927 = vmatpush1.msra.mxu0 0.0
    %6928 = vmatprep.subr.mxu0 0.0
    %6929 = vmatpush1.msra.mxu0 0.0
    %6930 = vmatprep.subr.mxu0 0.0
    %6931 = vmatpush1.msra.mxu0 0.0
    %6932 = vmatprep.mubr.f32.mxu0 0.0
    %6933 = vmatmul.mubr.f32.gmra.mrb[0].mxu0 %v6864
    %v6934 = vpop.f32.mrb[0].mxu0
    %v6935 = vadd.f32 0.0, %v6934
    %v6936 = vpop.f32.mrb[0].mxu0
    %6937 = vmatprep.mubr.f32.mxu0 0.0
    %6938 = vmatmul.mubr.f32.gmra.mrb[0].mxu0 %v6865
    %v6939 = vpop.f32.mrb[0].mxu0
    %v6940 = vadd.f32 0.0, %v6939
    %v6941 = vpop.f32.mrb[0].mxu0
    %6942 = vmatprep.mubr.f32.mxu0 0.0
    %6943 = vmatmul.mubr.f32.gmra.mrb[0].mxu0 %v6866
    %v6944 = vpop.f32.mrb[0].mxu0
    %v6945 = vadd.f32 0.0, %v6944
    %v6946 = vpop.f32.mrb[0].mxu0
    %6947 = vmatprep.mubr.f32.mxu0 0.0
    %6948 = vmatmul.mubr.f32.gmra.mrb[0].mxu0 %v6867
    %v6949 = vpop.f32.mrb[0].mxu0
    %v6950 = vadd.f32 0.0, %v6949
    %v6951 = vpop.f32.mrb[0].mxu0
    %6952 = vdwg.mxu0
    %s6953 = scalar_lea.vmem %s7, 32
    %v6954 = vld [vmem:[%s6953] sm:$0xff]
    %v6955 = vld [vmem:[%s6953 + $0x8] sm:$0xff]
    %v6957 = vsel %vm6245, %v6935, 0
    %v6960 = vsel %vm6245, %v6940, 0
    %v6963 = vsel %vm6245, %v6945, 0
    %v6966 = vsel %vm6245, %v6950, 0
    %6968 = vmatprep.subr.mxu0 0.0
    %6969 = vmatpush1.msra.mxu0 %v6954
    %6970 = vmatprep.subr.mxu0 0.0
    %6971 = vmatpush1.msra.mxu0 %v6955
    %6972 = vmatprep.subr.mxu0 0.0
    %6973 = vmatpush1.msra.mxu0 0.0
    %6974 = vmatprep.subr.mxu0 0.0
    %6975 = vmatpush1.msra.mxu0 0.0
    %6976 = vmatprep.subr.mxu0 0.0
    %6977 = vmatpush1.msra.mxu0 0.0
    %6978 = vmatprep.subr.mxu0 0.0
    %6979 = vmatpush1.msra.mxu0 0.0
    %6980 = vmatprep.subr.mxu0 0.0
    %6981 = vmatpush1.msra.mxu0 0.0
    %6982 = vmatprep.subr.mxu0 0.0
    %6983 = vmatpush1.msra.mxu0 0.0
    %6984 = vmatprep.subr.mxu0 0.0
    %6985 = vmatpush1.msra.mxu0 0.0
    %6986 = vmatprep.subr.mxu0 0.0
    %6987 = vmatpush1.msra.mxu0 0.0
    %6988 = vmatprep.subr.mxu0 0.0
    %6989 = vmatpush1.msra.mxu0 0.0
    %6990 = vmatprep.subr.mxu0 0.0
    %6991 = vmatpush1.msra.mxu0 0.0
    %6992 = vmatprep.subr.mxu0 0.0
    %6993 = vmatpush1.msra.mxu0 0.0
    %6994 = vmatprep.subr.mxu0 0.0
    %6995 = vmatpush1.msra.mxu0 0.0
    %6996 = vmatprep.subr.mxu0 0.0
    %6997 = vmatpush1.msra.mxu0 0.0
    %6998 = vmatprep.subr.mxu0 0.0
    %6999 = vmatpush1.msra.mxu0 0.0
    %7000 = vmatprep.subr.mxu0 0.0
    %7001 = vmatpush1.msra.mxu0 0.0
    %7002 = vmatprep.subr.mxu0 0.0
    %7003 = vmatpush1.msra.mxu0 0.0
    %7004 = vmatprep.subr.mxu0 0.0
    %7005 = vmatpush1.msra.mxu0 0.0
    %7006 = vmatprep.subr.mxu0 0.0
    %7007 = vmatpush1.msra.mxu0 0.0
    %7008 = vmatprep.subr.mxu0 0.0
    %7009 = vmatpush1.msra.mxu0 0.0
    %7010 = vmatprep.subr.mxu0 0.0
    %7011 = vmatpush1.msra.mxu0 0.0
    %7012 = vmatprep.subr.mxu0 0.0
    %7013 = vmatpush1.msra.mxu0 0.0
    %7014 = vmatprep.subr.mxu0 0.0
    %7015 = vmatpush1.msra.mxu0 0.0
    %7016 = vmatprep.subr.mxu0 0.0
    %7017 = vmatpush1.msra.mxu0 0.0
    %7018 = vmatprep.subr.mxu0 0.0
    %7019 = vmatpush1.msra.mxu0 0.0
    %7020 = vmatprep.subr.mxu0 0.0
    %7021 = vmatpush1.msra.mxu0 0.0
    %7022 = vmatprep.subr.mxu0 0.0
    %7023 = vmatpush1.msra.mxu0 0.0
    %7024 = vmatprep.subr.mxu0 0.0
    %7025 = vmatpush1.msra.mxu0 0.0
    %7026 = vmatprep.subr.mxu0 0.0
    %7027 = vmatpush1.msra.mxu0 0.0
    %7028 = vmatprep.subr.mxu0 0.0
    %7029 = vmatpush1.msra.mxu0 0.0
    %7030 = vmatprep.subr.mxu0 0.0
    %7031 = vmatpush1.msra.mxu0 0.0
    %7032 = vmatprep.mubr.f32.mxu0 0.0
    %7033 = vmatmul.mubr.f32.gmra.mrb[0].mxu0 %v6957
    %v7034 = vpop.f32.mrb[0].mxu0
    %v7035 = vadd.f32 0.0, %v7034
    %v7036 = vpop.f32.mrb[0].mxu0
    %7037 = vmatprep.mubr.f32.mxu0 0.0
    %7038 = vmatmul.mubr.f32.gmra.mrb[0].mxu0 %v6960
    %v7039 = vpop.f32.mrb[0].mxu0
    %v7040 = vadd.f32 0.0, %v7039
    %v7041 = vpop.f32.mrb[0].mxu0
    %7042 = vmatprep.mubr.f32.mxu0 0.0
    %7043 = vmatmul.mubr.f32.gmra.mrb[0].mxu0 %v6963
    %v7044 = vpop.f32.mrb[0].mxu0
    %v7045 = vadd.f32 0.0, %v7044
    %v7046 = vpop.f32.mrb[0].mxu0
    %7047 = vmatprep.mubr.f32.mxu0 0.0
    %7048 = vmatmul.mubr.f32.gmra.mrb[0].mxu0 %v6966
    %v7049 = vpop.f32.mrb[0].mxu0
    %v7050 = vadd.f32 0.0, %v7049
    %v7051 = vpop.f32.mrb[0].mxu0
    %7052 = vdwg.mxu0
    %v7053 = vadd.f32 %v6830, %v7035
    %v7054 = vadd.f32 %v6835, %v7040
    %v7055 = vadd.f32 %v6840, %v7045
    %v7056 = vadd.f32 %v6845, %v7050
    %7057 = vset.pattern.permute.xlu0 3
    %7058 = vperm.xlu0 %7057, %v6435
    %v7059 = vpop.permute.xlu0 %7058
    %7060 = vset.pattern.permute.xlu0 3
    %7061 = vperm.xlu0 %7060, %v6436
    %v7062 = vpop.permute.xlu0 %7061
    %7063 = vset.pattern.permute.xlu0 3
    %7064 = vperm.xlu0 %7063, %v6437
    %v7065 = vpop.permute.xlu0 %7064
    %7066 = vset.pattern.permute.xlu0 3
    %7067 = vperm.xlu0 %7066, %v6438
    %v7068 = vpop.permute.xlu0 %7067
    %vm7069 = vcmp.eq.s32.totalorder %v113, %v7059
    %vm7070 = vcmp.eq.s32.totalorder %v113, %v7062
    %vm7071 = vcmp.eq.s32.totalorder %v113, %v7065
    %vm7072 = vcmp.eq.s32.totalorder %v113, %v7068
    %v7073 = vsel %vm7069, 1.0, 0.0
    %v7074 = vsel %vm7070, 1.0, 0.0
    %v7075 = vsel %vm7071, 1.0, 0.0
    %v7076 = vsel %vm7072, 1.0, 0.0
    %7077 = vmatprep.subr.mxu0 0.0
    %7078 = vmatpush1.msra.mxu0 %v6419
    %7079 = vmatprep.subr.mxu0 0.0
    %7080 = vmatpush1.msra.mxu0 %v6420
    %7081 = vmatprep.subr.mxu0 0.0
    %7082 = vmatpush1.msra.mxu0 %v6421
    %7083 = vmatprep.subr.mxu0 0.0
    %7084 = vmatpush1.msra.mxu0 %v6422
    %7085 = vmatprep.subr.mxu0 0.0
    %7086 = vmatpush1.msra.mxu0 %v6423
    %7087 = vmatprep.subr.mxu0 0.0
    %7088 = vmatpush1.msra.mxu0 %v6424
    %7089 = vmatprep.subr.mxu0 0.0
    %7090 = vmatpush1.msra.mxu0 %v6425
    %7091 = vmatprep.subr.mxu0 0.0
    %7092 = vmatpush1.msra.mxu0 %v6426
    %7093 = vmatprep.subr.mxu0 0.0
    %7094 = vmatpush1.msra.mxu0 %v6427
    %7095 = vmatprep.subr.mxu0 0.0
    %7096 = vmatpush1.msra.mxu0 %v6428
    %7097 = vmatprep.subr.mxu0 0.0
    %7098 = vmatpush1.msra.mxu0 %v6429
    %7099 = vmatprep.subr.mxu0 0.0
    %7100 = vmatpush1.msra.mxu0 %v6430
    %7101 = vmatprep.subr.mxu0 0.0
    %7102 = vmatpush1.msra.mxu0 %v6431
    %7103 = vmatprep.subr.mxu0 0.0
    %7104 = vmatpush1.msra.mxu0 %v6432
    %7105 = vmatprep.subr.mxu0 0.0
    %7106 = vmatpush1.msra.mxu0 %v6433
    %7107 = vmatprep.subr.mxu0 0.0
    %7108 = vmatpush1.msra.mxu0 %v6434
    %7109 = vmatprep.subr.mxu0 0.0
    %7110 = vmatpush1.msra.mxu0 0.0
    %7111 = vmatprep.subr.mxu0 0.0
    %7112 = vmatpush1.msra.mxu0 0.0
    %7113 = vmatprep.subr.mxu0 0.0
    %7114 = vmatpush1.msra.mxu0 0.0
    %7115 = vmatprep.subr.mxu0 0.0
    %7116 = vmatpush1.msra.mxu0 0.0
    %7117 = vmatprep.subr.mxu0 0.0
    %7118 = vmatpush1.msra.mxu0 0.0
    %7119 = vmatprep.subr.mxu0 0.0
    %7120 = vmatpush1.msra.mxu0 0.0
    %7121 = vmatprep.subr.mxu0 0.0
    %7122 = vmatpush1.msra.mxu0 0.0
    %7123 = vmatprep.subr.mxu0 0.0
    %7124 = vmatpush1.msra.mxu0 0.0
    %7125 = vmatprep.subr.mxu0 0.0
    %7126 = vmatpush1.msra.mxu0 0.0
    %7127 = vmatprep.subr.mxu0 0.0
    %7128 = vmatpush1.msra.mxu0 0.0
    %7129 = vmatprep.subr.mxu0 0.0
    %7130 = vmatpush1.msra.mxu0 0.0
    %7131 = vmatprep.subr.mxu0 0.0
    %7132 = vmatpush1.msra.mxu0 0.0
    %7133 = vmatprep.subr.mxu0 0.0
    %7134 = vmatpush1.msra.mxu0 0.0
    %7135 = vmatprep.subr.mxu0 0.0
    %7136 = vmatpush1.msra.mxu0 0.0
    %7137 = vmatprep.subr.mxu0 0.0
    %7138 = vmatpush1.msra.mxu0 0.0
    %7139 = vmatprep.subr.mxu0 0.0
    %7140 = vmatpush1.msra.mxu0 0.0
    %7141 = vmatprep.mubr.f32.mxu0 0.0
    %7142 = vmatmul.mubr.f32.gmra.mrb[0].mxu0 %v7073
    %v7143 = vpop.f32.mrb[0].mxu0
    %v7144 = vadd.f32 0.0, %v7143
    %v7145 = vpop.f32.mrb[0].mxu0
    %7146 = vmatprep.mubr.f32.mxu0 0.0
    %7147 = vmatmul.mubr.f32.gmra.mrb[0].mxu0 %v7074
    %v7148 = vpop.f32.mrb[0].mxu0
    %v7149 = vadd.f32 0.0, %v7148
    %v7150 = vpop.f32.mrb[0].mxu0
    %7151 = vmatprep.mubr.f32.mxu0 0.0
    %7152 = vmatmul.mubr.f32.gmra.mrb[0].mxu0 %v7075
    %v7153 = vpop.f32.mrb[0].mxu0
    %v7154 = vadd.f32 0.0, %v7153
    %v7155 = vpop.f32.mrb[0].mxu0
    %7156 = vmatprep.mubr.f32.mxu0 0.0
    %7157 = vmatmul.mubr.f32.gmra.mrb[0].mxu0 %v7076
    %v7158 = vpop.f32.mrb[0].mxu0
    %v7159 = vadd.f32 0.0, %v7158
    %v7160 = vpop.f32.mrb[0].mxu0
    %7161 = vdwg.mxu0
    %s7162 = scalar_lea.vmem %s7, 48
    %v7163 = vld [vmem:[%s7162] sm:$0xff]
    %v7164 = vld [vmem:[%s7162 + $0x8] sm:$0xff]
    %v7166 = vsel %vm6245, %v7144, 0
    %v7169 = vsel %vm6245, %v7149, 0
    %v7172 = vsel %vm6245, %v7154, 0
    %v7175 = vsel %vm6245, %v7159, 0
    %7177 = vmatprep.subr.mxu0 0.0
    %7178 = vmatpush1.msra.mxu0 %v7163
    %7179 = vmatprep.subr.mxu0 0.0
    %7180 = vmatpush1.msra.mxu0 %v7164
    %7181 = vmatprep.subr.mxu0 0.0
    %7182 = vmatpush1.msra.mxu0 0.0
    %7183 = vmatprep.subr.mxu0 0.0
    %7184 = vmatpush1.msra.mxu0 0.0
    %7185 = vmatprep.subr.mxu0 0.0
    %7186 = vmatpush1.msra.mxu0 0.0
    %7187 = vmatprep.subr.mxu0 0.0
    %7188 = vmatpush1.msra.mxu0 0.0
    %7189 = vmatprep.subr.mxu0 0.0
    %7190 = vmatpush1.msra.mxu0 0.0
    %7191 = vmatprep.subr.mxu0 0.0
    %7192 = vmatpush1.msra.mxu0 0.0
    %7193 = vmatprep.subr.mxu0 0.0
    %7194 = vmatpush1.msra.mxu0 0.0
    %7195 = vmatprep.subr.mxu0 0.0
    %7196 = vmatpush1.msra.mxu0 0.0
    %7197 = vmatprep.subr.mxu0 0.0
    %7198 = vmatpush1.msra.mxu0 0.0
    %7199 = vmatprep.subr.mxu0 0.0
    %7200 = vmatpush1.msra.mxu0 0.0
    %7201 = vmatprep.subr.mxu0 0.0
    %7202 = vmatpush1.msra.mxu0 0.0
    %7203 = vmatprep.subr.mxu0 0.0
    %7204 = vmatpush1.msra.mxu0 0.0
    %7205 = vmatprep.subr.mxu0 0.0
    %7206 = vmatpush1.msra.mxu0 0.0
    %7207 = vmatprep.subr.mxu0 0.0
    %7208 = vmatpush1.msra.mxu0 0.0
    %7209 = vmatprep.subr.mxu0 0.0
    %7210 = vmatpush1.msra.mxu0 0.0
    %7211 = vmatprep.subr.mxu0 0.0
    %7212 = vmatpush1.msra.mxu0 0.0
    %7213 = vmatprep.subr.mxu0 0.0
    %7214 = vmatpush1.msra.mxu0 0.0
    %7215 = vmatprep.subr.mxu0 0.0
    %7216 = vmatpush1.msra.mxu0 0.0
    %7217 = vmatprep.subr.mxu0 0.0
    %7218 = vmatpush1.msra.mxu0 0.0
    %7219 = vmatprep.subr.mxu0 0.0
    %7220 = vmatpush1.msra.mxu0 0.0
    %7221 = vmatprep.subr.mxu0 0.0
    %7222 = vmatpush1.msra.mxu0 0.0
    %7223 = vmatprep.subr.mxu0 0.0
    %7224 = vmatpush1.msra.mxu0 0.0
    %7225 = vmatprep.subr.mxu0 0.0
    %7226 = vmatpush1.msra.mxu0 0.0
    %7227 = vmatprep.subr.mxu0 0.0
    %7228 = vmatpush1.msra.mxu0 0.0
    %7229 = vmatprep.subr.mxu0 0.0
    %7230 = vmatpush1.msra.mxu0 0.0
    %7231 = vmatprep.subr.mxu0 0.0
    %7232 = vmatpush1.msra.mxu0 0.0
    %7233 = vmatprep.subr.mxu0 0.0
    %7234 = vmatpush1.msra.mxu0 0.0
    %7235 = vmatprep.subr.mxu0 0.0
    %7236 = vmatpush1.msra.mxu0 0.0
    %7237 = vmatprep.subr.mxu0 0.0
    %7238 = vmatpush1.msra.mxu0 0.0
    %7239 = vmatprep.subr.mxu0 0.0
    %7240 = vmatpush1.msra.mxu0 0.0
    %7241 = vmatprep.mubr.f32.mxu0 0.0
    %7242 = vmatmul.mubr.f32.gmra.mrb[0].mxu0 %v7166
    %v7243 = vpop.f32.mrb[0].mxu0
    %v7244 = vadd.f32 0.0, %v7243
    %v7245 = vpop.f32.mrb[0].mxu0
    %7246 = vmatprep.mubr.f32.mxu0 0.0
    %7247 = vmatmul.mubr.f32.gmra.mrb[0].mxu0 %v7169
    %v7248 = vpop.f32.mrb[0].mxu0
    %v7249 = vadd.f32 0.0, %v7248
    %v7250 = vpop.f32.mrb[0].mxu0
    %7251 = vmatprep.mubr.f32.mxu0 0.0
    %7252 = vmatmul.mubr.f32.gmra.mrb[0].mxu0 %v7172
    %v7253 = vpop.f32.mrb[0].mxu0
    %v7254 = vadd.f32 0.0, %v7253
    %v7255 = vpop.f32.mrb[0].mxu0
    %7256 = vmatprep.mubr.f32.mxu0 0.0
    %7257 = vmatmul.mubr.f32.gmra.mrb[0].mxu0 %v7175
    %v7258 = vpop.f32.mrb[0].mxu0
    %v7259 = vadd.f32 0.0, %v7258
    %v7260 = vpop.f32.mrb[0].mxu0
    %7261 = vdwg.mxu0
    %v7262 = vadd.f32 %v7053, %v7244
    %v7263 = vadd.f32 %v7054, %v7249
    %v7264 = vadd.f32 %v7055, %v7254
    %v7265 = vadd.f32 %v7056, %v7259
    %7266 = vset.pattern.permute.xlu0 4
    %7267 = vperm.xlu0 %7266, %v6435
    %v7268 = vpop.permute.xlu0 %7267
    %7269 = vset.pattern.permute.xlu0 4
    %7270 = vperm.xlu0 %7269, %v6436
    %v7271 = vpop.permute.xlu0 %7270
    %7272 = vset.pattern.permute.xlu0 4
    %7273 = vperm.xlu0 %7272, %v6437
    %v7274 = vpop.permute.xlu0 %7273
    %7275 = vset.pattern.permute.xlu0 4
    %7276 = vperm.xlu0 %7275, %v6438
    %v7277 = vpop.permute.xlu0 %7276
    %vm7278 = vcmp.eq.s32.totalorder %v113, %v7268
    %vm7279 = vcmp.eq.s32.totalorder %v113, %v7271
    %vm7280 = vcmp.eq.s32.totalorder %v113, %v7274
    %vm7281 = vcmp.eq.s32.totalorder %v113, %v7277
    %v7282 = vsel %vm7278, 1.0, 0.0
    %v7283 = vsel %vm7279, 1.0, 0.0
    %v7284 = vsel %vm7280, 1.0, 0.0
    %v7285 = vsel %vm7281, 1.0, 0.0
    %7286 = vmatprep.subr.mxu0 0.0
    %7287 = vmatpush1.msra.mxu0 %v6419
    %7288 = vmatprep.subr.mxu0 0.0
    %7289 = vmatpush1.msra.mxu0 %v6420
    %7290 = vmatprep.subr.mxu0 0.0
    %7291 = vmatpush1.msra.mxu0 %v6421
    %7292 = vmatprep.subr.mxu0 0.0
    %7293 = vmatpush1.msra.mxu0 %v6422
    %7294 = vmatprep.subr.mxu0 0.0
    %7295 = vmatpush1.msra.mxu0 %v6423
    %7296 = vmatprep.subr.mxu0 0.0
    %7297 = vmatpush1.msra.mxu0 %v6424
    %7298 = vmatprep.subr.mxu0 0.0
    %7299 = vmatpush1.msra.mxu0 %v6425
    %7300 = vmatprep.subr.mxu0 0.0
    %7301 = vmatpush1.msra.mxu0 %v6426
    %7302 = vmatprep.subr.mxu0 0.0
    %7303 = vmatpush1.msra.mxu0 %v6427
    %7304 = vmatprep.subr.mxu0 0.0
    %7305 = vmatpush1.msra.mxu0 %v6428
    %7306 = vmatprep.subr.mxu0 0.0
    %7307 = vmatpush1.msra.mxu0 %v6429
    %7308 = vmatprep.subr.mxu0 0.0
    %7309 = vmatpush1.msra.mxu0 %v6430
    %7310 = vmatprep.subr.mxu0 0.0
    %7311 = vmatpush1.msra.mxu0 %v6431
    %7312 = vmatprep.subr.mxu0 0.0
    %7313 = vmatpush1.msra.mxu0 %v6432
    %7314 = vmatprep.subr.mxu0 0.0
    %7315 = vmatpush1.msra.mxu0 %v6433
    %7316 = vmatprep.subr.mxu0 0.0
    %7317 = vmatpush1.msra.mxu0 %v6434
    %7318 = vmatprep.subr.mxu0 0.0
    %7319 = vmatpush1.msra.mxu0 0.0
    %7320 = vmatprep.subr.mxu0 0.0
    %7321 = vmatpush1.msra.mxu0 0.0
    %7322 = vmatprep.subr.mxu0 0.0
    %7323 = vmatpush1.msra.mxu0 0.0
    %7324 = vmatprep.subr.mxu0 0.0
    %7325 = vmatpush1.msra.mxu0 0.0
    %7326 = vmatprep.subr.mxu0 0.0
    %7327 = vmatpush1.msra.mxu0 0.0
    %7328 = vmatprep.subr.mxu0 0.0
    %7329 = vmatpush1.msra.mxu0 0.0
    %7330 = vmatprep.subr.mxu0 0.0
    %7331 = vmatpush1.msra.mxu0 0.0
    %7332 = vmatprep.subr.mxu0 0.0
    %7333 = vmatpush1.msra.mxu0 0.0
    %7334 = vmatprep.subr.mxu0 0.0
    %7335 = vmatpush1.msra.mxu0 0.0
    %7336 = vmatprep.subr.mxu0 0.0
    %7337 = vmatpush1.msra.mxu0 0.0
    %7338 = vmatprep.subr.mxu0 0.0
    %7339 = vmatpush1.msra.mxu0 0.0
    %7340 = vmatprep.subr.mxu0 0.0
    %7341 = vmatpush1.msra.mxu0 0.0
    %7342 = vmatprep.subr.mxu0 0.0
    %7343 = vmatpush1.msra.mxu0 0.0
    %7344 = vmatprep.subr.mxu0 0.0
    %7345 = vmatpush1.msra.mxu0 0.0
    %7346 = vmatprep.subr.mxu0 0.0
    %7347 = vmatpush1.msra.mxu0 0.0
    %7348 = vmatprep.subr.mxu0 0.0
    %7349 = vmatpush1.msra.mxu0 0.0
    %7350 = vmatprep.mubr.f32.mxu0 0.0
    %7351 = vmatmul.mubr.f32.gmra.mrb[0].mxu0 %v7282
    %v7352 = vpop.f32.mrb[0].mxu0
    %v7353 = vadd.f32 0.0, %v7352
    %v7354 = vpop.f32.mrb[0].mxu0
    %7355 = vmatprep.mubr.f32.mxu0 0.0
    %7356 = vmatmul.mubr.f32.gmra.mrb[0].mxu0 %v7283
    %v7357 = vpop.f32.mrb[0].mxu0
    %v7358 = vadd.f32 0.0, %v7357
    %v7359 = vpop.f32.mrb[0].mxu0
    %7360 = vmatprep.mubr.f32.mxu0 0.0
    %7361 = vmatmul.mubr.f32.gmra.mrb[0].mxu0 %v7284
    %v7362 = vpop.f32.mrb[0].mxu0
    %v7363 = vadd.f32 0.0, %v7362
    %v7364 = vpop.f32.mrb[0].mxu0
    %7365 = vmatprep.mubr.f32.mxu0 0.0
    %7366 = vmatmul.mubr.f32.gmra.mrb[0].mxu0 %v7285
    %v7367 = vpop.f32.mrb[0].mxu0
    %v7368 = vadd.f32 0.0, %v7367
    %v7369 = vpop.f32.mrb[0].mxu0
    %7370 = vdwg.mxu0
    %s7371 = scalar_lea.vmem %s7, 64
    %v7372 = vld [vmem:[%s7371] sm:$0xff]
    %v7373 = vld [vmem:[%s7371 + $0x8] sm:$0xff]
    %v7375 = vsel %vm6245, %v7353, 0
    %v7378 = vsel %vm6245, %v7358, 0
    %v7381 = vsel %vm6245, %v7363, 0
    %v7384 = vsel %vm6245, %v7368, 0
    %7386 = vmatprep.subr.mxu0 0.0
    %7387 = vmatpush1.msra.mxu0 %v7372
    %7388 = vmatprep.subr.mxu0 0.0
    %7389 = vmatpush1.msra.mxu0 %v7373
    %7390 = vmatprep.subr.mxu0 0.0
    %7391 = vmatpush1.msra.mxu0 0.0
    %7392 = vmatprep.subr.mxu0 0.0
    %7393 = vmatpush1.msra.mxu0 0.0
    %7394 = vmatprep.subr.mxu0 0.0
    %7395 = vmatpush1.msra.mxu0 0.0
    %7396 = vmatprep.subr.mxu0 0.0
    %7397 = vmatpush1.msra.mxu0 0.0
    %7398 = vmatprep.subr.mxu0 0.0
    %7399 = vmatpush1.msra.mxu0 0.0
    %7400 = vmatprep.subr.mxu0 0.0
    %7401 = vmatpush1.msra.mxu0 0.0
    %7402 = vmatprep.subr.mxu0 0.0
    %7403 = vmatpush1.msra.mxu0 0.0
    %7404 = vmatprep.subr.mxu0 0.0
    %7405 = vmatpush1.msra.mxu0 0.0
    %7406 = vmatprep.subr.mxu0 0.0
    %7407 = vmatpush1.msra.mxu0 0.0
    %7408 = vmatprep.subr.mxu0 0.0
    %7409 = vmatpush1.msra.mxu0 0.0
    %7410 = vmatprep.subr.mxu0 0.0
    %7411 = vmatpush1.msra.mxu0 0.0
    %7412 = vmatprep.subr.mxu0 0.0
    %7413 = vmatpush1.msra.mxu0 0.0
    %7414 = vmatprep.subr.mxu0 0.0
    %7415 = vmatpush1.msra.mxu0 0.0
    %7416 = vmatprep.subr.mxu0 0.0
    %7417 = vmatpush1.msra.mxu0 0.0
    %7418 = vmatprep.subr.mxu0 0.0
    %7419 = vmatpush1.msra.mxu0 0.0
    %7420 = vmatprep.subr.mxu0 0.0
    %7421 = vmatpush1.msra.mxu0 0.0
    %7422 = vmatprep.subr.mxu0 0.0
    %7423 = vmatpush1.msra.mxu0 0.0
    %7424 = vmatprep.subr.mxu0 0.0
    %7425 = vmatpush1.msra.mxu0 0.0
    %7426 = vmatprep.subr.mxu0 0.0
    %7427 = vmatpush1.msra.mxu0 0.0
    %7428 = vmatprep.subr.mxu0 0.0
    %7429 = vmatpush1.msra.mxu0 0.0
    %7430 = vmatprep.subr.mxu0 0.0
    %7431 = vmatpush1.msra.mxu0 0.0
    %7432 = vmatprep.subr.mxu0 0.0
    %7433 = vmatpush1.msra.mxu0 0.0
    %7434 = vmatprep.subr.mxu0 0.0
    %7435 = vmatpush1.msra.mxu0 0.0
    %7436 = vmatprep.subr.mxu0 0.0
    %7437 = vmatpush1.msra.mxu0 0.0
    %7438 = vmatprep.subr.mxu0 0.0
    %7439 = vmatpush1.msra.mxu0 0.0
    %7440 = vmatprep.subr.mxu0 0.0
    %7441 = vmatpush1.msra.mxu0 0.0
    %7442 = vmatprep.subr.mxu0 0.0
    %7443 = vmatpush1.msra.mxu0 0.0
    %7444 = vmatprep.subr.mxu0 0.0
    %7445 = vmatpush1.msra.mxu0 0.0
    %7446 = vmatprep.subr.mxu0 0.0
    %7447 = vmatpush1.msra.mxu0 0.0
    %7448 = vmatprep.subr.mxu0 0.0
    %7449 = vmatpush1.msra.mxu0 0.0
    %7450 = vmatprep.mubr.f32.mxu0 0.0
    %7451 = vmatmul.mubr.f32.gmra.mrb[0].mxu0 %v7375
    %v7452 = vpop.f32.mrb[0].mxu0
    %v7453 = vadd.f32 0.0, %v7452
    %v7454 = vpop.f32.mrb[0].mxu0
    %7455 = vmatprep.mubr.f32.mxu0 0.0
    %7456 = vmatmul.mubr.f32.gmra.mrb[0].mxu0 %v7378
    %v7457 = vpop.f32.mrb[0].mxu0
    %v7458 = vadd.f32 0.0, %v7457
    %v7459 = vpop.f32.mrb[0].mxu0
    %7460 = vmatprep.mubr.f32.mxu0 0.0
    %7461 = vmatmul.mubr.f32.gmra.mrb[0].mxu0 %v7381
    %v7462 = vpop.f32.mrb[0].mxu0
    %v7463 = vadd.f32 0.0, %v7462
    %v7464 = vpop.f32.mrb[0].mxu0
    %7465 = vmatprep.mubr.f32.mxu0 0.0
    %7466 = vmatmul.mubr.f32.gmra.mrb[0].mxu0 %v7384
    %v7467 = vpop.f32.mrb[0].mxu0
    %v7468 = vadd.f32 0.0, %v7467
    %v7469 = vpop.f32.mrb[0].mxu0
    %7470 = vdwg.mxu0
    %v7471 = vadd.f32 %v7262, %v7453
    %v7472 = vadd.f32 %v7263, %v7458
    %v7473 = vadd.f32 %v7264, %v7463
    %v7474 = vadd.f32 %v7265, %v7468
    %7475 = vset.pattern.permute.xlu0 5
    %7476 = vperm.xlu0 %7475, %v6435
    %v7477 = vpop.permute.xlu0 %7476
    %7478 = vset.pattern.permute.xlu0 5
    %7479 = vperm.xlu0 %7478, %v6436
    %v7480 = vpop.permute.xlu0 %7479
    %7481 = vset.pattern.permute.xlu0 5
    %7482 = vperm.xlu0 %7481, %v6437
    %v7483 = vpop.permute.xlu0 %7482
    %7484 = vset.pattern.permute.xlu0 5
    %7485 = vperm.xlu0 %7484, %v6438
    %v7486 = vpop.permute.xlu0 %7485
    %vm7487 = vcmp.eq.s32.totalorder %v113, %v7477
    %vm7488 = vcmp.eq.s32.totalorder %v113, %v7480
    %vm7489 = vcmp.eq.s32.totalorder %v113, %v7483
    %vm7490 = vcmp.eq.s32.totalorder %v113, %v7486
    %v7491 = vsel %vm7487, 1.0, 0.0
    %v7492 = vsel %vm7488, 1.0, 0.0
    %v7493 = vsel %vm7489, 1.0, 0.0
    %v7494 = vsel %vm7490, 1.0, 0.0
    %7495 = vmatprep.subr.mxu0 0.0
    %7496 = vmatpush1.msra.mxu0 %v6419
    %7497 = vmatprep.subr.mxu0 0.0
    %7498 = vmatpush1.msra.mxu0 %v6420
    %7499 = vmatprep.subr.mxu0 0.0
    %7500 = vmatpush1.msra.mxu0 %v6421
    %7501 = vmatprep.subr.mxu0 0.0
    %7502 = vmatpush1.msra.mxu0 %v6422
    %7503 = vmatprep.subr.mxu0 0.0
    %7504 = vmatpush1.msra.mxu0 %v6423
    %7505 = vmatprep.subr.mxu0 0.0
    %7506 = vmatpush1.msra.mxu0 %v6424
    %7507 = vmatprep.subr.mxu0 0.0
    %7508 = vmatpush1.msra.mxu0 %v6425
    %7509 = vmatprep.subr.mxu0 0.0
    %7510 = vmatpush1.msra.mxu0 %v6426
    %7511 = vmatprep.subr.mxu0 0.0
    %7512 = vmatpush1.msra.mxu0 %v6427
    %7513 = vmatprep.subr.mxu0 0.0
    %7514 = vmatpush1.msra.mxu0 %v6428
    %7515 = vmatprep.subr.mxu0 0.0
    %7516 = vmatpush1.msra.mxu0 %v6429
    %7517 = vmatprep.subr.mxu0 0.0
    %7518 = vmatpush1.msra.mxu0 %v6430
    %7519 = vmatprep.subr.mxu0 0.0
    %7520 = vmatpush1.msra.mxu0 %v6431
    %7521 = vmatprep.subr.mxu0 0.0
    %7522 = vmatpush1.msra.mxu0 %v6432
    %7523 = vmatprep.subr.mxu0 0.0
    %7524 = vmatpush1.msra.mxu0 %v6433
    %7525 = vmatprep.subr.mxu0 0.0
    %7526 = vmatpush1.msra.mxu0 %v6434
    %7527 = vmatprep.subr.mxu0 0.0
    %7528 = vmatpush1.msra.mxu0 0.0
    %7529 = vmatprep.subr.mxu0 0.0
    %7530 = vmatpush1.msra.mxu0 0.0
    %7531 = vmatprep.subr.mxu0 0.0
    %7532 = vmatpush1.msra.mxu0 0.0
    %7533 = vmatprep.subr.mxu0 0.0
    %7534 = vmatpush1.msra.mxu0 0.0
    %7535 = vmatprep.subr.mxu0 0.0
    %7536 = vmatpush1.msra.mxu0 0.0
    %7537 = vmatprep.subr.mxu0 0.0
    %7538 = vmatpush1.msra.mxu0 0.0
    %7539 = vmatprep.subr.mxu0 0.0
    %7540 = vmatpush1.msra.mxu0 0.0
    %7541 = vmatprep.subr.mxu0 0.0
    %7542 = vmatpush1.msra.mxu0 0.0
    %7543 = vmatprep.subr.mxu0 0.0
    %7544 = vmatpush1.msra.mxu0 0.0
    %7545 = vmatprep.subr.mxu0 0.0
    %7546 = vmatpush1.msra.mxu0 0.0
    %7547 = vmatprep.subr.mxu0 0.0
    %7548 = vmatpush1.msra.mxu0 0.0
    %7549 = vmatprep.subr.mxu0 0.0
    %7550 = vmatpush1.msra.mxu0 0.0
    %7551 = vmatprep.subr.mxu0 0.0
    %7552 = vmatpush1.msra.mxu0 0.0
    %7553 = vmatprep.subr.mxu0 0.0
    %7554 = vmatpush1.msra.mxu0 0.0
    %7555 = vmatprep.subr.mxu0 0.0
    %7556 = vmatpush1.msra.mxu0 0.0
    %7557 = vmatprep.subr.mxu0 0.0
    %7558 = vmatpush1.msra.mxu0 0.0
    %7559 = vmatprep.mubr.f32.mxu0 0.0
    %7560 = vmatmul.mubr.f32.gmra.mrb[0].mxu0 %v7491
    %v7561 = vpop.f32.mrb[0].mxu0
    %v7562 = vadd.f32 0.0, %v7561
    %v7563 = vpop.f32.mrb[0].mxu0
    %7564 = vmatprep.mubr.f32.mxu0 0.0
    %7565 = vmatmul.mubr.f32.gmra.mrb[0].mxu0 %v7492
    %v7566 = vpop.f32.mrb[0].mxu0
    %v7567 = vadd.f32 0.0, %v7566
    %v7568 = vpop.f32.mrb[0].mxu0
    %7569 = vmatprep.mubr.f32.mxu0 0.0
    %7570 = vmatmul.mubr.f32.gmra.mrb[0].mxu0 %v7493
    %v7571 = vpop.f32.mrb[0].mxu0
    %v7572 = vadd.f32 0.0, %v7571
    %v7573 = vpop.f32.mrb[0].mxu0
    %7574 = vmatprep.mubr.f32.mxu0 0.0
    %7575 = vmatmul.mubr.f32.gmra.mrb[0].mxu0 %v7494
    %v7576 = vpop.f32.mrb[0].mxu0
    %v7577 = vadd.f32 0.0, %v7576
    %v7578 = vpop.f32.mrb[0].mxu0
    %7579 = vdwg.mxu0
    %s7580 = scalar_lea.vmem %s7, 80
    %v7581 = vld [vmem:[%s7580] sm:$0xff]
    %v7582 = vld [vmem:[%s7580 + $0x8] sm:$0xff]
    %v7584 = vsel %vm6245, %v7562, 0
    %v7587 = vsel %vm6245, %v7567, 0
    %v7590 = vsel %vm6245, %v7572, 0
    %v7593 = vsel %vm6245, %v7577, 0
    %7595 = vmatprep.subr.mxu0 0.0
    %7596 = vmatpush1.msra.mxu0 %v7581
    %7597 = vmatprep.subr.mxu0 0.0
    %7598 = vmatpush1.msra.mxu0 %v7582
    %7599 = vmatprep.subr.mxu0 0.0
    %7600 = vmatpush1.msra.mxu0 0.0
    %7601 = vmatprep.subr.mxu0 0.0
    %7602 = vmatpush1.msra.mxu0 0.0
    %7603 = vmatprep.subr.mxu0 0.0
    %7604 = vmatpush1.msra.mxu0 0.0
    %7605 = vmatprep.subr.mxu0 0.0
    %7606 = vmatpush1.msra.mxu0 0.0
    %7607 = vmatprep.subr.mxu0 0.0
    %7608 = vmatpush1.msra.mxu0 0.0
    %7609 = vmatprep.subr.mxu0 0.0
    %7610 = vmatpush1.msra.mxu0 0.0
    %7611 = vmatprep.subr.mxu0 0.0
    %7612 = vmatpush1.msra.mxu0 0.0
    %7613 = vmatprep.subr.mxu0 0.0
    %7614 = vmatpush1.msra.mxu0 0.0
    %7615 = vmatprep.subr.mxu0 0.0
    %7616 = vmatpush1.msra.mxu0 0.0
    %7617 = vmatprep.subr.mxu0 0.0
    %7618 = vmatpush1.msra.mxu0 0.0
    %7619 = vmatprep.subr.mxu0 0.0
    %7620 = vmatpush1.msra.mxu0 0.0
    %7621 = vmatprep.subr.mxu0 0.0
    %7622 = vmatpush1.msra.mxu0 0.0
    %7623 = vmatprep.subr.mxu0 0.0
    %7624 = vmatpush1.msra.mxu0 0.0
    %7625 = vmatprep.subr.mxu0 0.0
    %7626 = vmatpush1.msra.mxu0 0.0
    %7627 = vmatprep.subr.mxu0 0.0
    %7628 = vmatpush1.msra.mxu0 0.0
    %7629 = vmatprep.subr.mxu0 0.0
    %7630 = vmatpush1.msra.mxu0 0.0
    %7631 = vmatprep.subr.mxu0 0.0
    %7632 = vmatpush1.msra.mxu0 0.0
    %7633 = vmatprep.subr.mxu0 0.0
    %7634 = vmatpush1.msra.mxu0 0.0
    %7635 = vmatprep.subr.mxu0 0.0
    %7636 = vmatpush1.msra.mxu0 0.0
    %7637 = vmatprep.subr.mxu0 0.0
    %7638 = vmatpush1.msra.mxu0 0.0
    %7639 = vmatprep.subr.mxu0 0.0
    %7640 = vmatpush1.msra.mxu0 0.0
    %7641 = vmatprep.subr.mxu0 0.0
    %7642 = vmatpush1.msra.mxu0 0.0
    %7643 = vmatprep.subr.mxu0 0.0
    %7644 = vmatpush1.msra.mxu0 0.0
    %7645 = vmatprep.subr.mxu0 0.0
    %7646 = vmatpush1.msra.mxu0 0.0
    %7647 = vmatprep.subr.mxu0 0.0
    %7648 = vmatpush1.msra.mxu0 0.0
    %7649 = vmatprep.subr.mxu0 0.0
    %7650 = vmatpush1.msra.mxu0 0.0
    %7651 = vmatprep.subr.mxu0 0.0
    %7652 = vmatpush1.msra.mxu0 0.0
    %7653 = vmatprep.subr.mxu0 0.0
    %7654 = vmatpush1.msra.mxu0 0.0
    %7655 = vmatprep.subr.mxu0 0.0
    %7656 = vmatpush1.msra.mxu0 0.0
    %7657 = vmatprep.subr.mxu0 0.0
    %7658 = vmatpush1.msra.mxu0 0.0
    %7659 = vmatprep.mubr.f32.mxu0 0.0
    %7660 = vmatmul.mubr.f32.gmra.mrb[0].mxu0 %v7584
    %v7661 = vpop.f32.mrb[0].mxu0
    %v7662 = vadd.f32 0.0, %v7661
    %v7663 = vpop.f32.mrb[0].mxu0
    %7664 = vmatprep.mubr.f32.mxu0 0.0
    %7665 = vmatmul.mubr.f32.gmra.mrb[0].mxu0 %v7587
    %v7666 = vpop.f32.mrb[0].mxu0
    %v7667 = vadd.f32 0.0, %v7666
    %v7668 = vpop.f32.mrb[0].mxu0
    %7669 = vmatprep.mubr.f32.mxu0 0.0
    %7670 = vmatmul.mubr.f32.gmra.mrb[0].mxu0 %v7590
    %v7671 = vpop.f32.mrb[0].mxu0
    %v7672 = vadd.f32 0.0, %v7671
    %v7673 = vpop.f32.mrb[0].mxu0
    %7674 = vmatprep.mubr.f32.mxu0 0.0
    %7675 = vmatmul.mubr.f32.gmra.mrb[0].mxu0 %v7593
    %v7676 = vpop.f32.mrb[0].mxu0
    %v7677 = vadd.f32 0.0, %v7676
    %v7678 = vpop.f32.mrb[0].mxu0
    %7679 = vdwg.mxu0
    %v7680 = vadd.f32 %v7471, %v7662
    %v7681 = vadd.f32 %v7472, %v7667
    %v7682 = vadd.f32 %v7473, %v7672
    %v7683 = vadd.f32 %v7474, %v7677
    %7684 = vset.pattern.permute.xlu0 6
    %7685 = vperm.xlu0 %7684, %v6435
    %v7686 = vpop.permute.xlu0 %7685
    %7687 = vset.pattern.permute.xlu0 6
    %7688 = vperm.xlu0 %7687, %v6436
    %v7689 = vpop.permute.xlu0 %7688
    %7690 = vset.pattern.permute.xlu0 6
    %7691 = vperm.xlu0 %7690, %v6437
    %v7692 = vpop.permute.xlu0 %7691
    %7693 = vset.pattern.permute.xlu0 6
    %7694 = vperm.xlu0 %7693, %v6438
    %v7695 = vpop.permute.xlu0 %7694
    %vm7696 = vcmp.eq.s32.totalorder %v113, %v7686
    %vm7697 = vcmp.eq.s32.totalorder %v113, %v7689
    %vm7698 = vcmp.eq.s32.totalorder %v113, %v7692
    %vm7699 = vcmp.eq.s32.totalorder %v113, %v7695
    %v7700 = vsel %vm7696, 1.0, 0.0
    %v7701 = vsel %vm7697, 1.0, 0.0
    %v7702 = vsel %vm7698, 1.0, 0.0
    %v7703 = vsel %vm7699, 1.0, 0.0
    %7704 = vmatprep.subr.mxu0 0.0
    %7705 = vmatpush1.msra.mxu0 %v6419
    %7706 = vmatprep.subr.mxu0 0.0
    %7707 = vmatpush1.msra.mxu0 %v6420
    %7708 = vmatprep.subr.mxu0 0.0
    %7709 = vmatpush1.msra.mxu0 %v6421
    %7710 = vmatprep.subr.mxu0 0.0
    %7711 = vmatpush1.msra.mxu0 %v6422
    %7712 = vmatprep.subr.mxu0 0.0
    %7713 = vmatpush1.msra.mxu0 %v6423
    %7714 = vmatprep.subr.mxu0 0.0
    %7715 = vmatpush1.msra.mxu0 %v6424
    %7716 = vmatprep.subr.mxu0 0.0
    %7717 = vmatpush1.msra.mxu0 %v6425
    %7718 = vmatprep.subr.mxu0 0.0
    %7719 = vmatpush1.msra.mxu0 %v6426
    %7720 = vmatprep.subr.mxu0 0.0
    %7721 = vmatpush1.msra.mxu0 %v6427
    %7722 = vmatprep.subr.mxu0 0.0
    %7723 = vmatpush1.msra.mxu0 %v6428
    %7724 = vmatprep.subr.mxu0 0.0
    %7725 = vmatpush1.msra.mxu0 %v6429
    %7726 = vmatprep.subr.mxu0 0.0
    %7727 = vmatpush1.msra.mxu0 %v6430
    %7728 = vmatprep.subr.mxu0 0.0
    %7729 = vmatpush1.msra.mxu0 %v6431
    %7730 = vmatprep.subr.mxu0 0.0
    %7731 = vmatpush1.msra.mxu0 %v6432
    %7732 = vmatprep.subr.mxu0 0.0
    %7733 = vmatpush1.msra.mxu0 %v6433
    %7734 = vmatprep.subr.mxu0 0.0
    %7735 = vmatpush1.msra.mxu0 %v6434
    %7736 = vmatprep.subr.mxu0 0.0
    %7737 = vmatpush1.msra.mxu0 0.0
    %7738 = vmatprep.subr.mxu0 0.0
    %7739 = vmatpush1.msra.mxu0 0.0
    %7740 = vmatprep.subr.mxu0 0.0
    %7741 = vmatpush1.msra.mxu0 0.0
    %7742 = vmatprep.subr.mxu0 0.0
    %7743 = vmatpush1.msra.mxu0 0.0
    %7744 = vmatprep.subr.mxu0 0.0
    %7745 = vmatpush1.msra.mxu0 0.0
    %7746 = vmatprep.subr.mxu0 0.0
    %7747 = vmatpush1.msra.mxu0 0.0
    %7748 = vmatprep.subr.mxu0 0.0
    %7749 = vmatpush1.msra.mxu0 0.0
    %7750 = vmatprep.subr.mxu0 0.0
    %7751 = vmatpush1.msra.mxu0 0.0
    %7752 = vmatprep.subr.mxu0 0.0
    %7753 = vmatpush1.msra.mxu0 0.0
    %7754 = vmatprep.subr.mxu0 0.0
    %7755 = vmatpush1.msra.mxu0 0.0
    %7756 = vmatprep.subr.mxu0 0.0
    %7757 = vmatpush1.msra.mxu0 0.0
    %7758 = vmatprep.subr.mxu0 0.0
    %7759 = vmatpush1.msra.mxu0 0.0
    %7760 = vmatprep.subr.mxu0 0.0
    %7761 = vmatpush1.msra.mxu0 0.0
    %7762 = vmatprep.subr.mxu0 0.0
    %7763 = vmatpush1.msra.mxu0 0.0
    %7764 = vmatprep.subr.mxu0 0.0
    %7765 = vmatpush1.msra.mxu0 0.0
    %7766 = vmatprep.subr.mxu0 0.0
    %7767 = vmatpush1.msra.mxu0 0.0
    %7768 = vmatprep.mubr.f32.mxu0 0.0
    %7769 = vmatmul.mubr.f32.gmra.mrb[0].mxu0 %v7700
    %v7770 = vpop.f32.mrb[0].mxu0
    %v7771 = vadd.f32 0.0, %v7770
    %v7772 = vpop.f32.mrb[0].mxu0
    %7773 = vmatprep.mubr.f32.mxu0 0.0
    %7774 = vmatmul.mubr.f32.gmra.mrb[0].mxu0 %v7701
    %v7775 = vpop.f32.mrb[0].mxu0
    %v7776 = vadd.f32 0.0, %v7775
    %v7777 = vpop.f32.mrb[0].mxu0
    %7778 = vmatprep.mubr.f32.mxu0 0.0
    %7779 = vmatmul.mubr.f32.gmra.mrb[0].mxu0 %v7702
    %v7780 = vpop.f32.mrb[0].mxu0
    %v7781 = vadd.f32 0.0, %v7780
    %v7782 = vpop.f32.mrb[0].mxu0
    %7783 = vmatprep.mubr.f32.mxu0 0.0
    %7784 = vmatmul.mubr.f32.gmra.mrb[0].mxu0 %v7703
    %v7785 = vpop.f32.mrb[0].mxu0
    %v7786 = vadd.f32 0.0, %v7785
    %v7787 = vpop.f32.mrb[0].mxu0
    %7788 = vdwg.mxu0
    %s7789 = scalar_lea.vmem %s7, 96
    %v7790 = vld [vmem:[%s7789] sm:$0xff]
    %v7791 = vld [vmem:[%s7789 + $0x8] sm:$0xff]
    %v7793 = vsel %vm6245, %v7771, 0
    %v7796 = vsel %vm6245, %v7776, 0
    %v7799 = vsel %vm6245, %v7781, 0
    %v7802 = vsel %vm6245, %v7786, 0
    %7804 = vmatprep.subr.mxu0 0.0
    %7805 = vmatpush1.msra.mxu0 %v7790
    %7806 = vmatprep.subr.mxu0 0.0
    %7807 = vmatpush1.msra.mxu0 %v7791
    %7808 = vmatprep.subr.mxu0 0.0
    %7809 = vmatpush1.msra.mxu0 0.0
    %7810 = vmatprep.subr.mxu0 0.0
    %7811 = vmatpush1.msra.mxu0 0.0
    %7812 = vmatprep.subr.mxu0 0.0
    %7813 = vmatpush1.msra.mxu0 0.0
    %7814 = vmatprep.subr.mxu0 0.0
    %7815 = vmatpush1.msra.mxu0 0.0
    %7816 = vmatprep.subr.mxu0 0.0
    %7817 = vmatpush1.msra.mxu0 0.0
    %7818 = vmatprep.subr.mxu0 0.0
    %7819 = vmatpush1.msra.mxu0 0.0
    %7820 = vmatprep.subr.mxu0 0.0
    %7821 = vmatpush1.msra.mxu0 0.0
    %7822 = vmatprep.subr.mxu0 0.0
    %7823 = vmatpush1.msra.mxu0 0.0
    %7824 = vmatprep.subr.mxu0 0.0
    %7825 = vmatpush1.msra.mxu0 0.0
    %7826 = vmatprep.subr.mxu0 0.0
    %7827 = vmatpush1.msra.mxu0 0.0
    %7828 = vmatprep.subr.mxu0 0.0
    %7829 = vmatpush1.msra.mxu0 0.0
    %7830 = vmatprep.subr.mxu0 0.0
    %7831 = vmatpush1.msra.mxu0 0.0
    %7832 = vmatprep.subr.mxu0 0.0
    %7833 = vmatpush1.msra.mxu0 0.0
    %7834 = vmatprep.subr.mxu0 0.0
    %7835 = vmatpush1.msra.mxu0 0.0
    %7836 = vmatprep.subr.mxu0 0.0
    %7837 = vmatpush1.msra.mxu0 0.0
    %7838 = vmatprep.subr.mxu0 0.0
    %7839 = vmatpush1.msra.mxu0 0.0
    %7840 = vmatprep.subr.mxu0 0.0
    %7841 = vmatpush1.msra.mxu0 0.0
    %7842 = vmatprep.subr.mxu0 0.0
    %7843 = vmatpush1.msra.mxu0 0.0
    %7844 = vmatprep.subr.mxu0 0.0
    %7845 = vmatpush1.msra.mxu0 0.0
    %7846 = vmatprep.subr.mxu0 0.0
    %7847 = vmatpush1.msra.mxu0 0.0
    %7848 = vmatprep.subr.mxu0 0.0
    %7849 = vmatpush1.msra.mxu0 0.0
    %7850 = vmatprep.subr.mxu0 0.0
    %7851 = vmatpush1.msra.mxu0 0.0
    %7852 = vmatprep.subr.mxu0 0.0
    %7853 = vmatpush1.msra.mxu0 0.0
    %7854 = vmatprep.subr.mxu0 0.0
    %7855 = vmatpush1.msra.mxu0 0.0
    %7856 = vmatprep.subr.mxu0 0.0
    %7857 = vmatpush1.msra.mxu0 0.0
    %7858 = vmatprep.subr.mxu0 0.0
    %7859 = vmatpush1.msra.mxu0 0.0
    %7860 = vmatprep.subr.mxu0 0.0
    %7861 = vmatpush1.msra.mxu0 0.0
    %7862 = vmatprep.subr.mxu0 0.0
    %7863 = vmatpush1.msra.mxu0 0.0
    %7864 = vmatprep.subr.mxu0 0.0
    %7865 = vmatpush1.msra.mxu0 0.0
    %7866 = vmatprep.subr.mxu0 0.0
    %7867 = vmatpush1.msra.mxu0 0.0
    %7868 = vmatprep.mubr.f32.mxu0 0.0
    %7869 = vmatmul.mubr.f32.gmra.mrb[0].mxu0 %v7793
    %v7870 = vpop.f32.mrb[0].mxu0
    %v7871 = vadd.f32 0.0, %v7870
    %v7872 = vpop.f32.mrb[0].mxu0
    %7873 = vmatprep.mubr.f32.mxu0 0.0
    %7874 = vmatmul.mubr.f32.gmra.mrb[0].mxu0 %v7796
    %v7875 = vpop.f32.mrb[0].mxu0
    %v7876 = vadd.f32 0.0, %v7875
    %v7877 = vpop.f32.mrb[0].mxu0
    %7878 = vmatprep.mubr.f32.mxu0 0.0
    %7879 = vmatmul.mubr.f32.gmra.mrb[0].mxu0 %v7799
    %v7880 = vpop.f32.mrb[0].mxu0
    %v7881 = vadd.f32 0.0, %v7880
    %v7882 = vpop.f32.mrb[0].mxu0
    %7883 = vmatprep.mubr.f32.mxu0 0.0
    %7884 = vmatmul.mubr.f32.gmra.mrb[0].mxu0 %v7802
    %v7885 = vpop.f32.mrb[0].mxu0
    %v7886 = vadd.f32 0.0, %v7885
    %v7887 = vpop.f32.mrb[0].mxu0
    %7888 = vdwg.mxu0
    %v7889 = vadd.f32 %v7680, %v7871
    %v7890 = vadd.f32 %v7681, %v7876
    %v7891 = vadd.f32 %v7682, %v7881
    %v7892 = vadd.f32 %v7683, %v7886
    %7893 = vset.pattern.permute.xlu0 7
    %7894 = vperm.xlu0 %7893, %v6435
    %v7895 = vpop.permute.xlu0 %7894
    %7896 = vset.pattern.permute.xlu0 7
    %7897 = vperm.xlu0 %7896, %v6436
    %v7898 = vpop.permute.xlu0 %7897
    %7899 = vset.pattern.permute.xlu0 7
    %7900 = vperm.xlu0 %7899, %v6437
    %v7901 = vpop.permute.xlu0 %7900
    %7902 = vset.pattern.permute.xlu0 7
    %7903 = vperm.xlu0 %7902, %v6438
    %v7904 = vpop.permute.xlu0 %7903
    %vm7905 = vcmp.eq.s32.totalorder %v113, %v7895
    %vm7906 = vcmp.eq.s32.totalorder %v113, %v7898
    %vm7907 = vcmp.eq.s32.totalorder %v113, %v7901
    %vm7908 = vcmp.eq.s32.totalorder %v113, %v7904
    %v7909 = vsel %vm7905, 1.0, 0.0
    %v7910 = vsel %vm7906, 1.0, 0.0
    %v7911 = vsel %vm7907, 1.0, 0.0
    %v7912 = vsel %vm7908, 1.0, 0.0
    %7913 = vmatprep.subr.mxu0 0.0
    %7914 = vmatpush1.msra.mxu0 %v6419
    %7915 = vmatprep.subr.mxu0 0.0
    %7916 = vmatpush1.msra.mxu0 %v6420
    %7917 = vmatprep.subr.mxu0 0.0
    %7918 = vmatpush1.msra.mxu0 %v6421
    %7919 = vmatprep.subr.mxu0 0.0
    %7920 = vmatpush1.msra.mxu0 %v6422
    %7921 = vmatprep.subr.mxu0 0.0
    %7922 = vmatpush1.msra.mxu0 %v6423
    %7923 = vmatprep.subr.mxu0 0.0
    %7924 = vmatpush1.msra.mxu0 %v6424
    %7925 = vmatprep.subr.mxu0 0.0
    %7926 = vmatpush1.msra.mxu0 %v6425
    %7927 = vmatprep.subr.mxu0 0.0
    %7928 = vmatpush1.msra.mxu0 %v6426
    %7929 = vmatprep.subr.mxu0 0.0
    %7930 = vmatpush1.msra.mxu0 %v6427
    %7931 = vmatprep.subr.mxu0 0.0
    %7932 = vmatpush1.msra.mxu0 %v6428
    %7933 = vmatprep.subr.mxu0 0.0
    %7934 = vmatpush1.msra.mxu0 %v6429
    %7935 = vmatprep.subr.mxu0 0.0
    %7936 = vmatpush1.msra.mxu0 %v6430
    %7937 = vmatprep.subr.mxu0 0.0
    %7938 = vmatpush1.msra.mxu0 %v6431
    %7939 = vmatprep.subr.mxu0 0.0
    %7940 = vmatpush1.msra.mxu0 %v6432
    %7941 = vmatprep.subr.mxu0 0.0
    %7942 = vmatpush1.msra.mxu0 %v6433
    %7943 = vmatprep.subr.mxu0 0.0
    %7944 = vmatpush1.msra.mxu0 %v6434
    %7945 = vmatprep.subr.mxu0 0.0
    %7946 = vmatpush1.msra.mxu0 0.0
    %7947 = vmatprep.subr.mxu0 0.0
    %7948 = vmatpush1.msra.mxu0 0.0
    %7949 = vmatprep.subr.mxu0 0.0
    %7950 = vmatpush1.msra.mxu0 0.0
    %7951 = vmatprep.subr.mxu0 0.0
    %7952 = vmatpush1.msra.mxu0 0.0
    %7953 = vmatprep.subr.mxu0 0.0
    %7954 = vmatpush1.msra.mxu0 0.0
    %7955 = vmatprep.subr.mxu0 0.0
    %7956 = vmatpush1.msra.mxu0 0.0
    %7957 = vmatprep.subr.mxu0 0.0
    %7958 = vmatpush1.msra.mxu0 0.0
    %7959 = vmatprep.subr.mxu0 0.0
    %7960 = vmatpush1.msra.mxu0 0.0
    %7961 = vmatprep.subr.mxu0 0.0
    %7962 = vmatpush1.msra.mxu0 0.0
    %7963 = vmatprep.subr.mxu0 0.0
    %7964 = vmatpush1.msra.mxu0 0.0
    %7965 = vmatprep.subr.mxu0 0.0
    %7966 = vmatpush1.msra.mxu0 0.0
    %7967 = vmatprep.subr.mxu0 0.0
    %7968 = vmatpush1.msra.mxu0 0.0
    %7969 = vmatprep.subr.mxu0 0.0
    %7970 = vmatpush1.msra.mxu0 0.0
    %7971 = vmatprep.subr.mxu0 0.0
    %7972 = vmatpush1.msra.mxu0 0.0
    %7973 = vmatprep.subr.mxu0 0.0
    %7974 = vmatpush1.msra.mxu0 0.0
    %7975 = vmatprep.subr.mxu0 0.0
    %7976 = vmatpush1.msra.mxu0 0.0
    %7977 = vmatprep.mubr.f32.mxu0 0.0
    %7978 = vmatmul.mubr.f32.gmra.mrb[0].mxu0 %v7909
    %v7979 = vpop.f32.mrb[0].mxu0
    %v7980 = vadd.f32 0.0, %v7979
    %v7981 = vpop.f32.mrb[0].mxu0
    %7982 = vmatprep.mubr.f32.mxu0 0.0
    %7983 = vmatmul.mubr.f32.gmra.mrb[0].mxu0 %v7910
    %v7984 = vpop.f32.mrb[0].mxu0
    %v7985 = vadd.f32 0.0, %v7984
    %v7986 = vpop.f32.mrb[0].mxu0
    %7987 = vmatprep.mubr.f32.mxu0 0.0
    %7988 = vmatmul.mubr.f32.gmra.mrb[0].mxu0 %v7911
    %v7989 = vpop.f32.mrb[0].mxu0
    %v7990 = vadd.f32 0.0, %v7989
    %v7991 = vpop.f32.mrb[0].mxu0
    %7992 = vmatprep.mubr.f32.mxu0 0.0
    %7993 = vmatmul.mubr.f32.gmra.mrb[0].mxu0 %v7912
    %v7994 = vpop.f32.mrb[0].mxu0
    %v7995 = vadd.f32 0.0, %v7994
    %v7996 = vpop.f32.mrb[0].mxu0
    %7997 = vdwg.mxu0
    %s7998 = scalar_lea.vmem %s7, 112
    %v7999 = vld [vmem:[%s7998] sm:$0xff]
    %v8000 = vld [vmem:[%s7998 + $0x8] sm:$0xff]
    %v8002 = vsel %vm6245, %v7980, 0
    %v8005 = vsel %vm6245, %v7985, 0
    %v8008 = vsel %vm6245, %v7990, 0
    %v8011 = vsel %vm6245, %v7995, 0
    %8013 = vmatprep.subr.mxu0 0.0
    %8014 = vmatpush1.msra.mxu0 %v7999
    %8015 = vmatprep.subr.mxu0 0.0
    %8016 = vmatpush1.msra.mxu0 %v8000
    %8017 = vmatprep.subr.mxu0 0.0
    %8018 = vmatpush1.msra.mxu0 0.0
    %8019 = vmatprep.subr.mxu0 0.0
    %8020 = vmatpush1.msra.mxu0 0.0
    %8021 = vmatprep.subr.mxu0 0.0
    %8022 = vmatpush1.msra.mxu0 0.0
    %8023 = vmatprep.subr.mxu0 0.0
    %8024 = vmatpush1.msra.mxu0 0.0
    %8025 = vmatprep.subr.mxu0 0.0
    %8026 = vmatpush1.msra.mxu0 0.0
    %8027 = vmatprep.subr.mxu0 0.0
    %8028 = vmatpush1.msra.mxu0 0.0
    %8029 = vmatprep.subr.mxu0 0.0
    %8030 = vmatpush1.msra.mxu0 0.0
    %8031 = vmatprep.subr.mxu0 0.0
    %8032 = vmatpush1.msra.mxu0 0.0
    %8033 = vmatprep.subr.mxu0 0.0
    %8034 = vmatpush1.msra.mxu0 0.0
    %8035 = vmatprep.subr.mxu0 0.0
    %8036 = vmatpush1.msra.mxu0 0.0
    %8037 = vmatprep.subr.mxu0 0.0
    %8038 = vmatpush1.msra.mxu0 0.0
    %8039 = vmatprep.subr.mxu0 0.0
    %8040 = vmatpush1.msra.mxu0 0.0
    %8041 = vmatprep.subr.mxu0 0.0
    %8042 = vmatpush1.msra.mxu0 0.0
    %8043 = vmatprep.subr.mxu0 0.0
    %8044 = vmatpush1.msra.mxu0 0.0
    %8045 = vmatprep.subr.mxu0 0.0
    %8046 = vmatpush1.msra.mxu0 0.0
    %8047 = vmatprep.subr.mxu0 0.0
    %8048 = vmatpush1.msra.mxu0 0.0
    %8049 = vmatprep.subr.mxu0 0.0
    %8050 = vmatpush1.msra.mxu0 0.0
    %8051 = vmatprep.subr.mxu0 0.0
    %8052 = vmatpush1.msra.mxu0 0.0
    %8053 = vmatprep.subr.mxu0 0.0
    %8054 = vmatpush1.msra.mxu0 0.0
    %8055 = vmatprep.subr.mxu0 0.0
    %8056 = vmatpush1.msra.mxu0 0.0
    %8057 = vmatprep.subr.mxu0 0.0
    %8058 = vmatpush1.msra.mxu0 0.0
    %8059 = vmatprep.subr.mxu0 0.0
    %8060 = vmatpush1.msra.mxu0 0.0
    %8061 = vmatprep.subr.mxu0 0.0
    %8062 = vmatpush1.msra.mxu0 0.0
    %8063 = vmatprep.subr.mxu0 0.0
    %8064 = vmatpush1.msra.mxu0 0.0
    %8065 = vmatprep.subr.mxu0 0.0
    %8066 = vmatpush1.msra.mxu0 0.0
    %8067 = vmatprep.subr.mxu0 0.0
    %8068 = vmatpush1.msra.mxu0 0.0
    %8069 = vmatprep.subr.mxu0 0.0
    %8070 = vmatpush1.msra.mxu0 0.0
    %8071 = vmatprep.subr.mxu0 0.0
    %8072 = vmatpush1.msra.mxu0 0.0
    %8073 = vmatprep.subr.mxu0 0.0
    %8074 = vmatpush1.msra.mxu0 0.0
    %8075 = vmatprep.subr.mxu0 0.0
    %8076 = vmatpush1.msra.mxu0 0.0
    %8077 = vmatprep.mubr.f32.mxu0 0.0
    %8078 = vmatmul.mubr.f32.gmra.mrb[0].mxu0 %v8002
    %v8079 = vpop.f32.mrb[0].mxu0
    %v8080 = vadd.f32 0.0, %v8079
    %v8081 = vpop.f32.mrb[0].mxu0
    %8082 = vmatprep.mubr.f32.mxu0 0.0
    %8083 = vmatmul.mubr.f32.gmra.mrb[0].mxu0 %v8005
    %v8084 = vpop.f32.mrb[0].mxu0
    %v8085 = vadd.f32 0.0, %v8084
    %v8086 = vpop.f32.mrb[0].mxu0
    %8087 = vmatprep.mubr.f32.mxu0 0.0
    %8088 = vmatmul.mubr.f32.gmra.mrb[0].mxu0 %v8008
    %v8089 = vpop.f32.mrb[0].mxu0
    %v8090 = vadd.f32 0.0, %v8089
    %v8091 = vpop.f32.mrb[0].mxu0
    %8092 = vmatprep.mubr.f32.mxu0 0.0
    %8093 = vmatmul.mubr.f32.gmra.mrb[0].mxu0 %v8011
    %v8094 = vpop.f32.mrb[0].mxu0
    %v8095 = vadd.f32 0.0, %v8094
    %v8096 = vpop.f32.mrb[0].mxu0
    %8097 = vdwg.mxu0
    %v8098 = vadd.f32 %v7889, %v8080
    %v8099 = vadd.f32 %v7890, %v8085
    %v8100 = vadd.f32 %v7891, %v8090
    %v8101 = vadd.f32 %v7892, %v8095
    %8102 = vset.pattern.permute.xlu0 8
    %8103 = vperm.xlu0 %8102, %v6435
    %v8104 = vpop.permute.xlu0 %8103
    %8105 = vset.pattern.permute.xlu0 8
    %8106 = vperm.xlu0 %8105, %v6436
    %v8107 = vpop.permute.xlu0 %8106
    %8108 = vset.pattern.permute.xlu0 8
    %8109 = vperm.xlu0 %8108, %v6437
    %v8110 = vpop.permute.xlu0 %8109
    %8111 = vset.pattern.permute.xlu0 8
    %8112 = vperm.xlu0 %8111, %v6438
    %v8113 = vpop.permute.xlu0 %8112
    %vm8114 = vcmp.eq.s32.totalorder %v113, %v8104
    %vm8115 = vcmp.eq.s32.totalorder %v113, %v8107
    %vm8116 = vcmp.eq.s32.totalorder %v113, %v8110
    %vm8117 = vcmp.eq.s32.totalorder %v113, %v8113
    %v8118 = vsel %vm8114, 1.0, 0.0
    %v8119 = vsel %vm8115, 1.0, 0.0
    %v8120 = vsel %vm8116, 1.0, 0.0
    %v8121 = vsel %vm8117, 1.0, 0.0
    %8122 = vmatprep.subr.mxu0 0.0
    %8123 = vmatpush1.msra.mxu0 %v6419
    %8124 = vmatprep.subr.mxu0 0.0
    %8125 = vmatpush1.msra.mxu0 %v6420
    %8126 = vmatprep.subr.mxu0 0.0
    %8127 = vmatpush1.msra.mxu0 %v6421
    %8128 = vmatprep.subr.mxu0 0.0
    %8129 = vmatpush1.msra.mxu0 %v6422
    %8130 = vmatprep.subr.mxu0 0.0
    %8131 = vmatpush1.msra.mxu0 %v6423
    %8132 = vmatprep.subr.mxu0 0.0
    %8133 = vmatpush1.msra.mxu0 %v6424
    %8134 = vmatprep.subr.mxu0 0.0
    %8135 = vmatpush1.msra.mxu0 %v6425
    %8136 = vmatprep.subr.mxu0 0.0
    %8137 = vmatpush1.msra.mxu0 %v6426
    %8138 = vmatprep.subr.mxu0 0.0
    %8139 = vmatpush1.msra.mxu0 %v6427
    %8140 = vmatprep.subr.mxu0 0.0
    %8141 = vmatpush1.msra.mxu0 %v6428
    %8142 = vmatprep.subr.mxu0 0.0
    %8143 = vmatpush1.msra.mxu0 %v6429
    %8144 = vmatprep.subr.mxu0 0.0
    %8145 = vmatpush1.msra.mxu0 %v6430
    %8146 = vmatprep.subr.mxu0 0.0
    %8147 = vmatpush1.msra.mxu0 %v6431
    %8148 = vmatprep.subr.mxu0 0.0
    %8149 = vmatpush1.msra.mxu0 %v6432
    %8150 = vmatprep.subr.mxu0 0.0
    %8151 = vmatpush1.msra.mxu0 %v6433
    %8152 = vmatprep.subr.mxu0 0.0
    %8153 = vmatpush1.msra.mxu0 %v6434
    %8154 = vmatprep.subr.mxu0 0.0
    %8155 = vmatpush1.msra.mxu0 0.0
    %8156 = vmatprep.subr.mxu0 0.0
    %8157 = vmatpush1.msra.mxu0 0.0
    %8158 = vmatprep.subr.mxu0 0.0
    %8159 = vmatpush1.msra.mxu0 0.0
    %8160 = vmatprep.subr.mxu0 0.0
    %8161 = vmatpush1.msra.mxu0 0.0
    %8162 = vmatprep.subr.mxu0 0.0
    %8163 = vmatpush1.msra.mxu0 0.0
    %8164 = vmatprep.subr.mxu0 0.0
    %8165 = vmatpush1.msra.mxu0 0.0
    %8166 = vmatprep.subr.mxu0 0.0
    %8167 = vmatpush1.msra.mxu0 0.0
    %8168 = vmatprep.subr.mxu0 0.0
    %8169 = vmatpush1.msra.mxu0 0.0
    %8170 = vmatprep.subr.mxu0 0.0
    %8171 = vmatpush1.msra.mxu0 0.0
    %8172 = vmatprep.subr.mxu0 0.0
    %8173 = vmatpush1.msra.mxu0 0.0
    %8174 = vmatprep.subr.mxu0 0.0
    %8175 = vmatpush1.msra.mxu0 0.0
    %8176 = vmatprep.subr.mxu0 0.0
    %8177 = vmatpush1.msra.mxu0 0.0
    %8178 = vmatprep.subr.mxu0 0.0
    %8179 = vmatpush1.msra.mxu0 0.0
    %8180 = vmatprep.subr.mxu0 0.0
    %8181 = vmatpush1.msra.mxu0 0.0
    %8182 = vmatprep.subr.mxu0 0.0
    %8183 = vmatpush1.msra.mxu0 0.0
    %8184 = vmatprep.subr.mxu0 0.0
    %8185 = vmatpush1.msra.mxu0 0.0
    %8186 = vmatprep.mubr.f32.mxu0 0.0
    %8187 = vmatmul.mubr.f32.gmra.mrb[0].mxu0 %v8118
    %v8188 = vpop.f32.mrb[0].mxu0
    %v8189 = vadd.f32 0.0, %v8188
    %v8190 = vpop.f32.mrb[0].mxu0
    %8191 = vmatprep.mubr.f32.mxu0 0.0
    %8192 = vmatmul.mubr.f32.gmra.mrb[0].mxu0 %v8119
    %v8193 = vpop.f32.mrb[0].mxu0
    %v8194 = vadd.f32 0.0, %v8193
    %v8195 = vpop.f32.mrb[0].mxu0
    %8196 = vmatprep.mubr.f32.mxu0 0.0
    %8197 = vmatmul.mubr.f32.gmra.mrb[0].mxu0 %v8120
    %v8198 = vpop.f32.mrb[0].mxu0
    %v8199 = vadd.f32 0.0, %v8198
    %v8200 = vpop.f32.mrb[0].mxu0
    %8201 = vmatprep.mubr.f32.mxu0 0.0
    %8202 = vmatmul.mubr.f32.gmra.mrb[0].mxu0 %v8121
    %v8203 = vpop.f32.mrb[0].mxu0
    %v8204 = vadd.f32 0.0, %v8203
    %v8205 = vpop.f32.mrb[0].mxu0
    %8206 = vdwg.mxu0
    %s8207 = scalar_lea.vmem %s7, 128
    %v8208 = vld [vmem:[%s8207] sm:$0xff]
    %v8209 = vld [vmem:[%s8207 + $0x8] sm:$0xff]
    %v8211 = vsel %vm6245, %v8189, 0
    %v8214 = vsel %vm6245, %v8194, 0
    %v8217 = vsel %vm6245, %v8199, 0
    %v8220 = vsel %vm6245, %v8204, 0
    %8222 = vmatprep.subr.mxu0 0.0
    %8223 = vmatpush1.msra.mxu0 %v8208
    %8224 = vmatprep.subr.mxu0 0.0
    %8225 = vmatpush1.msra.mxu0 %v8209
    %8226 = vmatprep.subr.mxu0 0.0
    %8227 = vmatpush1.msra.mxu0 0.0
    %8228 = vmatprep.subr.mxu0 0.0
    %8229 = vmatpush1.msra.mxu0 0.0
    %8230 = vmatprep.subr.mxu0 0.0
    %8231 = vmatpush1.msra.mxu0 0.0
    %8232 = vmatprep.subr.mxu0 0.0
    %8233 = vmatpush1.msra.mxu0 0.0
    %8234 = vmatprep.subr.mxu0 0.0
    %8235 = vmatpush1.msra.mxu0 0.0
    %8236 = vmatprep.subr.mxu0 0.0
    %8237 = vmatpush1.msra.mxu0 0.0
    %8238 = vmatprep.subr.mxu0 0.0
    %8239 = vmatpush1.msra.mxu0 0.0
    %8240 = vmatprep.subr.mxu0 0.0
    %8241 = vmatpush1.msra.mxu0 0.0
    %8242 = vmatprep.subr.mxu0 0.0
    %8243 = vmatpush1.msra.mxu0 0.0
    %8244 = vmatprep.subr.mxu0 0.0
    %8245 = vmatpush1.msra.mxu0 0.0
    %8246 = vmatprep.subr.mxu0 0.0
    %8247 = vmatpush1.msra.mxu0 0.0
    %8248 = vmatprep.subr.mxu0 0.0
    %8249 = vmatpush1.msra.mxu0 0.0
    %8250 = vmatprep.subr.mxu0 0.0
    %8251 = vmatpush1.msra.mxu0 0.0
    %8252 = vmatprep.subr.mxu0 0.0
    %8253 = vmatpush1.msra.mxu0 0.0
    %8254 = vmatprep.subr.mxu0 0.0
    %8255 = vmatpush1.msra.mxu0 0.0
    %8256 = vmatprep.subr.mxu0 0.0
    %8257 = vmatpush1.msra.mxu0 0.0
    %8258 = vmatprep.subr.mxu0 0.0
    %8259 = vmatpush1.msra.mxu0 0.0
    %8260 = vmatprep.subr.mxu0 0.0
    %8261 = vmatpush1.msra.mxu0 0.0
    %8262 = vmatprep.subr.mxu0 0.0
    %8263 = vmatpush1.msra.mxu0 0.0
    %8264 = vmatprep.subr.mxu0 0.0
    %8265 = vmatpush1.msra.mxu0 0.0
    %8266 = vmatprep.subr.mxu0 0.0
    %8267 = vmatpush1.msra.mxu0 0.0
    %8268 = vmatprep.subr.mxu0 0.0
    %8269 = vmatpush1.msra.mxu0 0.0
    %8270 = vmatprep.subr.mxu0 0.0
    %8271 = vmatpush1.msra.mxu0 0.0
    %8272 = vmatprep.subr.mxu0 0.0
    %8273 = vmatpush1.msra.mxu0 0.0
    %8274 = vmatprep.subr.mxu0 0.0
    %8275 = vmatpush1.msra.mxu0 0.0
    %8276 = vmatprep.subr.mxu0 0.0
    %8277 = vmatpush1.msra.mxu0 0.0
    %8278 = vmatprep.subr.mxu0 0.0
    %8279 = vmatpush1.msra.mxu0 0.0
    %8280 = vmatprep.subr.mxu0 0.0
    %8281 = vmatpush1.msra.mxu0 0.0
    %8282 = vmatprep.subr.mxu0 0.0
    %8283 = vmatpush1.msra.mxu0 0.0
    %8284 = vmatprep.subr.mxu0 0.0
    %8285 = vmatpush1.msra.mxu0 0.0
    %8286 = vmatprep.mubr.f32.mxu0 0.0
    %8287 = vmatmul.mubr.f32.gmra.mrb[0].mxu0 %v8211
    %v8288 = vpop.f32.mrb[0].mxu0
    %v8289 = vadd.f32 0.0, %v8288
    %v8290 = vpop.f32.mrb[0].mxu0
    %8291 = vmatprep.mubr.f32.mxu0 0.0
    %8292 = vmatmul.mubr.f32.gmra.mrb[0].mxu0 %v8214
    %v8293 = vpop.f32.mrb[0].mxu0
    %v8294 = vadd.f32 0.0, %v8293
    %v8295 = vpop.f32.mrb[0].mxu0
    %8296 = vmatprep.mubr.f32.mxu0 0.0
    %8297 = vmatmul.mubr.f32.gmra.mrb[0].mxu0 %v8217
    %v8298 = vpop.f32.mrb[0].mxu0
    %v8299 = vadd.f32 0.0, %v8298
    %v8300 = vpop.f32.mrb[0].mxu0
    %8301 = vmatprep.mubr.f32.mxu0 0.0
    %8302 = vmatmul.mubr.f32.gmra.mrb[0].mxu0 %v8220
    %v8303 = vpop.f32.mrb[0].mxu0
    %v8304 = vadd.f32 0.0, %v8303
    %v8305 = vpop.f32.mrb[0].mxu0
    %8306 = vdwg.mxu0
    %v8307 = vadd.f32 %v8098, %v8289
    %v8308 = vadd.f32 %v8099, %v8294
    %v8309 = vadd.f32 %v8100, %v8299
    %v8310 = vadd.f32 %v8101, %v8304
    %v8311 = vld [vmem:[%s8] sm:$0x1]
    %v8313 = vlaneseq
    %v8314 = vshrl.u32 %v8313, 7
    %v8315 = vsub.s32 0, %v8314
    %v8316 = vrot.slane %v8311, %v8315
    %v8318 = vadd.f32 %v8307, %v8316
    %v8319 = vadd.f32 %v8308, %v8316
    %v8320 = vadd.f32 %v8309, %v8316
    %v8321 = vadd.f32 %v8310, %v8316
    %v8322 = vsel %vm6245, %v8318, 0.0
    %v8323 = vsel %vm6245, %v8319, 0.0
    %v8324 = vadd.f32 %v8322, %v8323
    %v8325 = vsel %vm6245, %v8320, 0.0
    %v8326 = vadd.f32 %v8324, %v8325
    %v8327 = vsel %vm6245, %v8321, 0.0
    %v8328 = vadd.f32 %v8326, %v8327
    %v8329 = vrot.slane %v8328, 4
    %v8330 = vadd.f32 %v8328, %v8329
    %v8331 = vrot.slane %v8330, 2
    %v8332 = vadd.f32 %v8330, %v8331
    %v8333 = vrot.slane %v8332, 1
    %v8334 = vadd.f32 %v8332, %v8333
    %v8335 = vrcp.pop 32.0
    %v8336 = vmul.f32 %v8334, %v8335
    %v8337 = vsub.f32 %v8318, %v8336
    %v8338 = vsub.f32 %v8319, %v8336
    %v8339 = vsub.f32 %v8320, %v8336
    %v8340 = vsub.f32 %v8321, %v8336
    %v8341 = vmul.f32 %v8337, %v8337
    %v8342 = vmul.f32 %v8338, %v8338
    %v8343 = vmul.f32 %v8339, %v8339
    %v8344 = vmul.f32 %v8340, %v8340
    %v8345 = vsel %vm6245, %v8341, 0.0
    %v8346 = vsel %vm6245, %v8342, 0.0
    %v8347 = vadd.f32 %v8345, %v8346
    %v8348 = vsel %vm6245, %v8343, 0.0
    %v8349 = vadd.f32 %v8347, %v8348
    %v8350 = vsel %vm6245, %v8344, 0.0
    %v8351 = vadd.f32 %v8349, %v8350
    %v8352 = vrot.slane %v8351, 4
    %v8353 = vadd.f32 %v8351, %v8352
    %v8354 = vrot.slane %v8353, 2
    %v8355 = vadd.f32 %v8353, %v8354
    %v8356 = vrot.slane %v8355, 1
    %v8357 = vadd.f32 %v8355, %v8356
    %v8358 = vmul.f32 %v8357, %v8335
    %v8359 = vadd.f32 %v8358, 1e-05
    %v8360 = vrsqrt.pop %v8359
    %v8361 = vmul.f32 %v8337, %v8360
    %v8362 = vmul.f32 %v8338, %v8360
    %v8363 = vmul.f32 %v8339, %v8360
    %v8364 = vmul.f32 %v8340, %v8360
    %v8365 = vld [vmem:[%s9] sm:$0x1]
    %v8367 = vlaneseq
    %v8368 = vshrl.u32 %v8367, 7
    %v8369 = vsub.s32 0, %v8368
    %v8370 = vrot.slane %v8365, %v8369
    %v8372 = vmul.f32 %v8361, %v8370
    %v8373 = vmul.f32 %v8362, %v8370
    %v8374 = vmul.f32 %v8363, %v8370
    %v8375 = vmul.f32 %v8364, %v8370
    %v8376 = vld [vmem:[%s10] sm:$0x1]
    %v8378 = vlaneseq
    %v8379 = vshrl.u32 %v8378, 7
    %v8380 = vsub.s32 0, %v8379
    %v8381 = vrot.slane %v8376, %v8380
    %v8383 = vadd.f32 %v8372, %v8381
    %v8384 = vadd.f32 %v8373, %v8381
    %v8385 = vadd.f32 %v8374, %v8381
    %v8386 = vadd.f32 %v8375, %v8381
    %v8387 = vmax.f32 %v8383, 0.0
    %v8388 = vmax.f32 %v8384, 0.0
    %v8389 = vmax.f32 %v8385, 0.0
    %v8390 = vmax.f32 %v8386, 0.0
    %v8391 = vld [vmem:[%s11] sm:$0x3]
    %vm8392 = vcmask 261120
    %v8394 = vsel %vm8392, %v8391, 0
    %8396 = vmatprep.subr.mxu0 0.0
    %8397 = vmatpush1.msra.mxu0 %v8387
    %8398 = vmatprep.subr.mxu0 0.0
    %8399 = vmatpush1.msra.mxu0 %v8388
    %8400 = vmatprep.subr.mxu0 0.0
    %8401 = vmatpush1.msra.mxu0 %v8389
    %8402 = vmatprep.subr.mxu0 0.0
    %8403 = vmatpush1.msra.mxu0 %v8390
    %8404 = vmatprep.subr.mxu0 0.0
    %8405 = vmatpush1.msra.mxu0 0.0
    %8406 = vmatprep.subr.mxu0 0.0
    %8407 = vmatpush1.msra.mxu0 0.0
    %8408 = vmatprep.subr.mxu0 0.0
    %8409 = vmatpush1.msra.mxu0 0.0
    %8410 = vmatprep.subr.mxu0 0.0
    %8411 = vmatpush1.msra.mxu0 0.0
    %8412 = vmatprep.subr.mxu0 0.0
    %8413 = vmatpush1.msra.mxu0 0.0
    %8414 = vmatprep.subr.mxu0 0.0
    %8415 = vmatpush1.msra.mxu0 0.0
    %8416 = vmatprep.subr.mxu0 0.0
    %8417 = vmatpush1.msra.mxu0 0.0
    %8418 = vmatprep.subr.mxu0 0.0
    %8419 = vmatpush1.msra.mxu0 0.0
    %8420 = vmatprep.subr.mxu0 0.0
    %8421 = vmatpush1.msra.mxu0 0.0
    %8422 = vmatprep.subr.mxu0 0.0
    %8423 = vmatpush1.msra.mxu0 0.0
    %8424 = vmatprep.subr.mxu0 0.0
    %8425 = vmatpush1.msra.mxu0 0.0
    %8426 = vmatprep.subr.mxu0 0.0
    %8427 = vmatpush1.msra.mxu0 0.0
    %8428 = vmatprep.subr.mxu0 0.0
    %8429 = vmatpush1.msra.mxu0 0.0
    %8430 = vmatprep.subr.mxu0 0.0
    %8431 = vmatpush1.msra.mxu0 0.0
    %8432 = vmatprep.subr.mxu0 0.0
    %8433 = vmatpush1.msra.mxu0 0.0
    %8434 = vmatprep.subr.mxu0 0.0
    %8435 = vmatpush1.msra.mxu0 0.0
    %8436 = vmatprep.subr.mxu0 0.0
    %8437 = vmatpush1.msra.mxu0 0.0
    %8438 = vmatprep.subr.mxu0 0.0
    %8439 = vmatpush1.msra.mxu0 0.0
    %8440 = vmatprep.subr.mxu0 0.0
    %8441 = vmatpush1.msra.mxu0 0.0
    %8442 = vmatprep.subr.mxu0 0.0
    %8443 = vmatpush1.msra.mxu0 0.0
    %8444 = vmatprep.subr.mxu0 0.0
    %8445 = vmatpush1.msra.mxu0 0.0
    %8446 = vmatprep.subr.mxu0 0.0
    %8447 = vmatpush1.msra.mxu0 0.0
    %8448 = vmatprep.subr.mxu0 0.0
    %8449 = vmatpush1.msra.mxu0 0.0
    %8450 = vmatprep.subr.mxu0 0.0
    %8451 = vmatpush1.msra.mxu0 0.0
    %8452 = vmatprep.subr.mxu0 0.0
    %8453 = vmatpush1.msra.mxu0 0.0
    %8454 = vmatprep.subr.mxu0 0.0
    %8455 = vmatpush1.msra.mxu0 0.0
    %8456 = vmatprep.subr.mxu0 0.0
    %8457 = vmatpush1.msra.mxu0 0.0
    %8458 = vmatprep.subr.mxu0 0.0
    %8459 = vmatpush1.msra.mxu0 0.0
    %8460 = vmatprep.mubr.f32.mxu0 0.0
    %8461 = vmatmul.mubr.f32.gmra.mrb[0].mxu0 %v8394
    %v8462 = vpop.f32.mrb[0].mxu0
    %v8463 = vadd.f32 0.0, %v8462
    %v8464 = vpop.f32.mrb[0].mxu0
    %8465 = vdwg.mxu0
    %v8466 = vld [vmem:[%s12] sm:$0xff]
    %v8467 = vld [vmem:[%s12 + $0x8] sm:$0xff]
    %v8468 = vld [vmem:[%s13] sm:$0x1]
    %v8470 = vlaneseq
    %v8471 = vshrl.u32 %v8470, 7
    %v8472 = vsub.s32 0, %v8471
    %v8473 = vrot.slane %v8468, %v8472
    %v8476 = vsel %vm6245, %v8463, 0
    %8478 = vmatprep.subr.mxu0 0.0
    %8479 = vmatpush1.msra.mxu0 %v8466
    %8480 = vmatprep.subr.mxu0 0.0
    %8481 = vmatpush1.msra.mxu0 %v8467
    %8482 = vmatprep.subr.mxu0 0.0
    %8483 = vmatpush1.msra.mxu0 0.0
    %8484 = vmatprep.subr.mxu0 0.0
    %8485 = vmatpush1.msra.mxu0 0.0
    %8486 = vmatprep.subr.mxu0 0.0
    %8487 = vmatpush1.msra.mxu0 0.0
    %8488 = vmatprep.subr.mxu0 0.0
    %8489 = vmatpush1.msra.mxu0 0.0
    %8490 = vmatprep.subr.mxu0 0.0
    %8491 = vmatpush1.msra.mxu0 0.0
    %8492 = vmatprep.subr.mxu0 0.0
    %8493 = vmatpush1.msra.mxu0 0.0
    %8494 = vmatprep.subr.mxu0 0.0
    %8495 = vmatpush1.msra.mxu0 0.0
    %8496 = vmatprep.subr.mxu0 0.0
    %8497 = vmatpush1.msra.mxu0 0.0
    %8498 = vmatprep.subr.mxu0 0.0
    %8499 = vmatpush1.msra.mxu0 0.0
    %8500 = vmatprep.subr.mxu0 0.0
    %8501 = vmatpush1.msra.mxu0 0.0
    %8502 = vmatprep.subr.mxu0 0.0
    %8503 = vmatpush1.msra.mxu0 0.0
    %8504 = vmatprep.subr.mxu0 0.0
    %8505 = vmatpush1.msra.mxu0 0.0
    %8506 = vmatprep.subr.mxu0 0.0
    %8507 = vmatpush1.msra.mxu0 0.0
    %8508 = vmatprep.subr.mxu0 0.0
    %8509 = vmatpush1.msra.mxu0 0.0
    %8510 = vmatprep.subr.mxu0 0.0
    %8511 = vmatpush1.msra.mxu0 0.0
    %8512 = vmatprep.subr.mxu0 0.0
    %8513 = vmatpush1.msra.mxu0 0.0
    %8514 = vmatprep.subr.mxu0 0.0
    %8515 = vmatpush1.msra.mxu0 0.0
    %8516 = vmatprep.subr.mxu0 0.0
    %8517 = vmatpush1.msra.mxu0 0.0
    %8518 = vmatprep.subr.mxu0 0.0
    %8519 = vmatpush1.msra.mxu0 0.0
    %8520 = vmatprep.subr.mxu0 0.0
    %8521 = vmatpush1.msra.mxu0 0.0
    %8522 = vmatprep.subr.mxu0 0.0
    %8523 = vmatpush1.msra.mxu0 0.0
    %8524 = vmatprep.subr.mxu0 0.0
    %8525 = vmatpush1.msra.mxu0 0.0
    %8526 = vmatprep.subr.mxu0 0.0
    %8527 = vmatpush1.msra.mxu0 0.0
    %8528 = vmatprep.subr.mxu0 0.0
    %8529 = vmatpush1.msra.mxu0 0.0
    %8530 = vmatprep.subr.mxu0 0.0
    %8531 = vmatpush1.msra.mxu0 0.0
    %8532 = vmatprep.subr.mxu0 0.0
    %8533 = vmatpush1.msra.mxu0 0.0
    %8534 = vmatprep.subr.mxu0 0.0
    %8535 = vmatpush1.msra.mxu0 0.0
    %8536 = vmatprep.subr.mxu0 0.0
    %8537 = vmatpush1.msra.mxu0 0.0
    %8538 = vmatprep.subr.mxu0 0.0
    %8539 = vmatpush1.msra.mxu0 0.0
    %8540 = vmatprep.subr.mxu0 0.0
    %8541 = vmatpush1.msra.mxu0 0.0
    %8542 = vmatprep.mubr.f32.mxu0 0.0
    %8543 = vmatmul.mubr.f32.gmra.mrb[0].mxu0 %v8476
    %v8544 = vpop.f32.mrb[0].mxu0
    %v8545 = vadd.f32 %v8473, %v8544
    %v8546 = vpop.f32.mrb[0].mxu0
    %8547 = vdwg.mxu0
    %vm8548 = vcmask 74752
    %8549 = vst.msk [vmem:[#allocation2] sm:$0x3] %vm8548, %v8545
    // Predicated region
    $region58: #{clf_forward.1} parent=1 // pred_check
      _
    $region59: #{clf_forward.1} parent=1 // pred_check_branch
      %8551 = sbr.rel (0) target = $region61
    $region60: #{clf_forward.1} parent=1 // pred_region
      %s8553 = ssub.s32 32, 32
      %8554 = vsyncadd [#allocation3], %s8553
      %s8556 = sshll.u32 [#allocation2], 4
      %s8557 = int_to_ptr.vmem [resolvable:$true] %s8556
      %8559 = dma.vmem_to_hbm [thread:$0]  %s8557, 32, %s14, [#allocation3]
    $region61: #{clf_forward.1} parent=1 // pred_fallthru
      _
    // Predicated region
    $region62: #{clf_forward.1} parent=1 // pred_check
      _
    $region63: #{clf_forward.1} parent=1 // pred_check_branch
      %8561 = sbr.rel (0) target = $region65
    $region64: #{clf_forward.1} parent=1 // pred_region
      %8562 = dma.done [#allocation3], 32
    $region65: #{clf_forward.1} parent=1 // pred_fallthru
      _
    %8563 = vsyncpa [#allocation3], 1

</llo_original>
